<compile_context>
chip_gen: v7x
topology: tpu7x:2x2x1
jax: 0.10.0
libtpu: 0.0.40
codegen_flags: <defaults>
</compile_context>

<pallas_src>
import functools
import math

import jax
import jax.numpy as jnp
from jax.experimental import pallas as pl
from jax.experimental.pallas import tpu as pltpu

D_MODEL = 32
N_HEADS = 4
D_HEAD = D_MODEL // N_HEADS
D_FF = 64
NUM_LAYERS = 2
EPS = 1e-5
NEG_INF = -1e9


# ---------------------------------------------------------------- kernel helpers
def _layer_norm(v, g, b):
    mu = jnp.mean(v, axis=-1, keepdims=True)
    var = jnp.mean((v - mu) ** 2, axis=-1, keepdims=True)
    return (v - mu) * jax.lax.rsqrt(var + EPS) * g + b


def _attend(q, k, v, add_mask, w_o):
    """Multi-head attention with the 1/sqrt(d_head) scale already folded into q.

    q: (R, D)   k, v: (C, D)   add_mask: (R, C) additive (0 keep / -1e9 masked)
    w_o: (D, D) output projection.  Per-head results are accumulated directly
    through the corresponding W_o row-slice, so no concatenate is needed.
    """
    out = jnp.zeros((q.shape[0], D_MODEL), jnp.float32)
    for h in range(N_HEADS):
        lo, hi = h * D_HEAD, (h + 1) * D_HEAD
        # q @ k.T without an explicit transpose (contract on the head dim).
        s = jax.lax.dot_general(
            q[:, lo:hi], k[:, lo:hi],
            dimension_numbers=(((1,), (1,)), ((), ())),
            preferred_element_type=jnp.float32) + add_mask
        s = s - jnp.max(s, axis=-1, keepdims=True)
        p = jnp.exp(s)
        p = p * pl.reciprocal(jnp.sum(p, axis=-1, keepdims=True), approx=True)
        head = jnp.dot(p, v[:, lo:hi], preferred_element_type=jnp.float32)
        out = out + jnp.dot(head, w_o[lo:hi, :], preferred_element_type=jnp.float32)
    return out


# ---------------------------------------------------------------- fused kernel
def decoder_kernel(x_ref, mem_ref, smask_ref, cmask_ref,
                   wqkv_ref, wout_ref, w1_ref, w2_ref,
                   battn_ref, bffn_ref, ln_ref, o_ref, *, num_layers):
    x = x_ref[...].astype(jnp.float32)            # (B*T, D)
    mem = mem_ref[...].astype(jnp.float32)        # (B*S, D)
    self_mask = smask_ref[...]                    # (B*T, B*T) additive, block-diag
    cross_mask = cmask_ref[...]                   # (B*T, B*S) additive, block-diag
    w_qkv = wqkv_ref[...]                         # (2, D, 3D)  [self, cross], Wq scaled
    w_out = wout_ref[...]                         # (2, D, D)
    w1 = w1_ref[...]                              # (D, D_FF)
    w2 = w2_ref[...]                              # (D_FF, D)
    b_attn = battn_ref[...]                       # (2, 4D) = [bq*scale | bk | bv | bo]
    b_ffn = bffn_ref[...]                         # (1, D_FF + D) = [b1 | b2]
    ln = ln_ref[...]                              # (8, D) = [g0,g1,g2,g_fin,b0,b1,b2,b_fin]

    b1 = b_ffn[0, :D_FF]
    b2 = b_ffn[0, D_FF:D_FF + D_MODEL]

    # Cross-attention K/V depend only on the (shared) weights and the encoder
    # memory -> compute once, reuse in every layer.
    mem_kv = jnp.dot(mem, w_qkv[1, :, D_MODEL:],
                     preferred_element_type=jnp.float32) + b_attn[1, D_MODEL:3 * D_MODEL]
    mem_k = mem_kv[:, :D_MODEL]
    mem_v = mem_kv[:, D_MODEL:]

    # TODO(synk): dropout inside the SublayerConnections is omitted (eval-mode identity).
    for _ in range(num_layers):   # weight-shared layers -> simple unrolled loop
        # sublayer 0: masked self-attention (pre-norm + residual)
        n0 = _layer_norm(x, ln[0], ln[4])
        qkv = jnp.dot(n0, w_qkv[0], preferred_element_type=jnp.float32) \
            + b_attn[0, :3 * D_MODEL]
        x = x + _attend(qkv[:, :D_MODEL], qkv[:, D_MODEL:2 * D_MODEL],
                        qkv[:, 2 * D_MODEL:], self_mask, w_out[0]) \
              + b_attn[0, 3 * D_MODEL:]

        # sublayer 1: cross-attention over encoder memory
        n1 = _layer_norm(x, ln[1], ln[5])
        q = jnp.dot(n1, w_qkv[1, :, :D_MODEL],
                    preferred_element_type=jnp.float32) + b_attn[1, :D_MODEL]
        x = x + _attend(q, mem_k, mem_v, cross_mask, w_out[1]) + b_attn[1, 3 * D_MODEL:]

        # sublayer 2: position-wise feed-forward
        n2 = _layer_norm(x, ln[2], ln[6])
        hdn = jnp.maximum(
            jnp.dot(n2, w1, preferred_element_type=jnp.float32) + b1, 0.0)
        x = x + jnp.dot(hdn, w2, preferred_element_type=jnp.float32) + b2

    # final LayerNorm of the Decoder
    o_ref[...] = _layer_norm(x, ln[3], ln[7]).astype(o_ref.dtype)


# ---------------------------------------------------------------- wrapper-side prep
def _block_additive_mask(mask_bqk):
    """(B, Q, K) keep-mask (1=keep / 0=masked) -> (B*Q, B*K) additive mask.

    Cross-batch positions and masked positions get -1e9 (block-diagonal layout),
    so the kernel does a plain `scores + mask` instead of compare+select.
    """
    B, Q, K = mask_bqk.shape
    eye = jnp.eye(B, dtype=mask_bqk.dtype)[:, None, :, None]        # (B,1,B,1)
    keep = eye * mask_bqk[:, :, None, :]                            # (B,Q,B,K)
    return jnp.where(keep > 0, 0.0, NEG_INF).astype(jnp.float32).reshape(B * Q, B * K)


def pack_params(p):
    """Pack the 'natural' per-module params into a few lane-dense buffers and
    fold the 1/sqrt(d_head) attention scale into Wq / bq."""
    scale = 1.0 / math.sqrt(D_HEAD)

    def pack_attn(W, bvec):                     # W: (4,D,D)=[Wq,Wk,Wv,Wo]; b: (4,D)
        w_qkv = jnp.concatenate([W[0] * scale, W[1], W[2]], axis=-1)     # (D, 3D)
        b = jnp.concatenate([bvec[0] * scale, bvec[1], bvec[2], bvec[3]])  # (4D,)
        return w_qkv, W[3], b

    wqkv_s, wo_s, b_s = pack_attn(p["w_self"], p["b_self"])
    wqkv_c, wo_c, b_c = pack_attn(p["w_cross"], p["b_cross"])
    return {
        "w_qkv": jnp.stack([wqkv_s, wqkv_c]),                         # (2, D, 3D)
        "w_out": jnp.stack([wo_s, wo_c]),                             # (2, D, D)
        "b_attn": jnp.stack([b_s, b_c]),                              # (2, 4D) = (2,128)
        "w1": p["w1"], "w2": p["w2"],
        "b_ffn": jnp.concatenate([p["b1"], p["b2"]], axis=-1),        # (1, D_FF + D)
        "ln": jnp.concatenate([p["ln_g"], p["final_ln_g"],
                               p["ln_b"], p["final_ln_b"]], axis=0),  # (8, D)
    }


def decoder_forward(x, memory, src_mask, trg_mask, params, num_layers=NUM_LAYERS):
    B, T, D = x.shape
    S = memory.shape[1]
    pk = pack_params(params)

    self_mask = _block_additive_mask(trg_mask)                               # (B*T, B*T)
    cross_mask = _block_additive_mask(jnp.broadcast_to(src_mask, (B, T, S)))  # (B*T, B*S)

    x2 = x.reshape(B * T, D)
    mem2 = memory.reshape(B * S, D)

    vmem = lambda: pl.BlockSpec(memory_space=pltpu.MemorySpace.VMEM)
    out = pl.pallas_call(
        functools.partial(decoder_kernel, num_layers=num_layers),
        out_shape=jax.ShapeDtypeStruct((B * T, D), x.dtype),
        in_specs=[vmem() for _ in range(11)],   # whole (tiny) arrays resident in VMEM
        out_specs=vmem(),
    )(x2, mem2, self_mask, cross_mask,
      pk["w_qkv"], pk["w_out"], pk["w1"], pk["w2"],
      pk["b_attn"], pk["b_ffn"], pk["ln"])
    return out.reshape(B, T, D)


# ---------------------------------------------------------------- pure-JAX reference
def decoder_reference(x, memory, src_mask, trg_mask, p, num_layers=NUM_LAYERS):
    def ln_(v, g, b):
        mu = v.mean(-1, keepdims=True)
        var = ((v - mu) ** 2).mean(-1, keepdims=True)
        return (v - mu) * jax.lax.rsqrt(var + EPS) * g + b

    def mha(q_in, kv_in, mask, W, bvec):
        q = q_in @ W[0] + bvec[0]
        k = kv_in @ W[1] + bvec[1]
        v = kv_in @ W[2] + bvec[2]
        B_, Tq, _ = q.shape
        Tk = k.shape[1]
        qh = q.reshape(B_, Tq, N_HEADS, D_HEAD).transpose(0, 2, 1, 3)
        kh = k.reshape(B_, Tk, N_HEADS, D_HEAD).transpose(0, 2, 1, 3)
        vh = v.reshape(B_, Tk, N_HEADS, D_HEAD).transpose(0, 2, 1, 3)
        s = jnp.einsum("bhqd,bhkd->bhqk", qh, kh) / math.sqrt(D_HEAD)
        s = jnp.where(mask[:, None] > 0, s, NEG_INF)
        pr = jax.nn.softmax(s, axis=-1)
        o = jnp.einsum("bhqk,bhkd->bhqd", pr, vh)
        o = o.transpose(0, 2, 1, 3).reshape(B_, Tq, D_MODEL)
        return o @ W[3] + bvec[3]

    for _ in range(num_layers):
        n0 = ln_(x, p["ln_g"][0], p["ln_b"][0])
        x = x + mha(n0, n0, trg_mask, p["w_self"], p["b_self"])
        n1 = ln_(x, p["ln_g"][1], p["ln_b"][1])
        x = x + mha(n1, memory, src_mask, p["w_cross"], p["b_cross"])
        n2 = ln_(x, p["ln_g"][2], p["ln_b"][2])
        h = jax.nn.relu(n2 @ p["w1"] + p["b1"][0])
        x = x + h @ p["w2"] + p["b2"][0]
    return ln_(x, p["final_ln_g"][0], p["final_ln_b"][0])


# ---------------------------------------------------------------- param init
def init_params(key):
    ks = jax.random.split(key, 6)
    scale = 0.02
    return {
        "w_self": scale * jax.random.normal(ks[0], (4, D_MODEL, D_MODEL), jnp.float32),
        "b_self": jnp.zeros((4, D_MODEL), jnp.float32),
        "w_cross": scale * jax.random.normal(ks[1], (4, D_MODEL, D_MODEL), jnp.float32),
        "b_cross": jnp.zeros((4, D_MODEL), jnp.float32),
        "w1": scale * jax.random.normal(ks[2], (D_MODEL, D_FF), jnp.float32),
        "b1": jnp.zeros((1, D_FF), jnp.float32),
        "w2": scale * jax.random.normal(ks[3], (D_FF, D_MODEL), jnp.float32),
        "b2": jnp.zeros((1, D_MODEL), jnp.float32),
        "ln_g": jnp.ones((3, D_MODEL), jnp.float32),
        "ln_b": jnp.zeros((3, D_MODEL), jnp.float32),
        "final_ln_g": jnp.ones((1, D_MODEL), jnp.float32),
        "final_ln_b": jnp.zeros((1, D_MODEL), jnp.float32),
    }


if __name__ == "__main__":
    B, T, S = 2, 8, 8
    key = jax.random.PRNGKey(0)
    kx, km, kp = jax.random.split(key, 3)

    x = jax.random.normal(kx, (B, T, D_MODEL), jnp.float32)
    memory = jax.random.normal(km, (B, S, D_MODEL), jnp.float32)

    # src_mask: batch 0 attends to all S positions, batch 1 only to the first 6.
    lengths = jnp.array([S, 6])
    src_mask = (jnp.arange(S)[None, None, :] < lengths[:, None, None]).astype(jnp.float32)
    # trg_mask: causal (lower-triangular) mask shared across batch.
    trg_mask = jnp.broadcast_to(
        jnp.tril(jnp.ones((T, T), jnp.float32))[None], (B, T, T))

    params = init_params(kp)

    out = decoder_forward(x, memory, src_mask, trg_mask, params)
    out = jax.block_until_ready(out)

    ref = decoder_reference(x, memory, src_mask, trg_mask, params)

    assert out.shape == (B, T, D_MODEL)
    assert bool(jnp.all(jnp.isfinite(out)))
    assert bool(jnp.allclose(out, ref, atol=2e-2, rtol=2e-2))
    print("KERNEL_OK")
</pallas_src>

<mosaic_0001>
module attributes {stable_mosaic.version = 11 : i64} {
  func.func @decoder_kernel(%arg0: memref<16x32xf32, #tpu.memory_space<vmem>>, %arg1: memref<16x32xf32, #tpu.memory_space<vmem>>, %arg2: memref<16x16xf32, #tpu.memory_space<vmem>>, %arg3: memref<16x16xf32, #tpu.memory_space<vmem>>, %arg4: memref<2x32x96xf32, #tpu.memory_space<vmem>>, %arg5: memref<2x32x32xf32, #tpu.memory_space<vmem>>, %arg6: memref<32x64xf32, #tpu.memory_space<vmem>>, %arg7: memref<64x32xf32, #tpu.memory_space<vmem>>, %arg8: memref<2x128xf32, #tpu.memory_space<vmem>>, %arg9: memref<1x96xf32, #tpu.memory_space<vmem>>, %arg10: memref<8x32xf32, #tpu.memory_space<vmem>>, %arg11: memref<16x32xf32, #tpu.memory_space<vmem>>) attributes {dimension_semantics = [], scalar_prefetch = 0 : i64, scratch_operands = 0 : i64, tpu.core_type = #tpu.core_type<tc>} {
    %c0 = arith.constant 0 : index
    %c0_0 = arith.constant 0 : index
    %0 = vector.load %arg0[%c0, %c0_0] : memref<16x32xf32, #tpu.memory_space<vmem>>, vector<16x32xf32>
    %c0_1 = arith.constant 0 : index
    %c0_2 = arith.constant 0 : index
    %1 = vector.load %arg1[%c0_1, %c0_2] : memref<16x32xf32, #tpu.memory_space<vmem>>, vector<16x32xf32>
    %c0_3 = arith.constant 0 : index
    %c0_4 = arith.constant 0 : index
    %2 = vector.load %arg2[%c0_3, %c0_4] : memref<16x16xf32, #tpu.memory_space<vmem>>, vector<16x16xf32>
    %c0_5 = arith.constant 0 : index
    %c0_6 = arith.constant 0 : index
    %3 = vector.load %arg3[%c0_5, %c0_6] : memref<16x16xf32, #tpu.memory_space<vmem>>, vector<16x16xf32>
    %c0_7 = arith.constant 0 : index
    %c0_8 = arith.constant 0 : index
    %c0_9 = arith.constant 0 : index
    %4 = vector.load %arg4[%c0_7, %c0_8, %c0_9] : memref<2x32x96xf32, #tpu.memory_space<vmem>>, vector<2x32x96xf32>
    %c0_10 = arith.constant 0 : index
    %c0_11 = arith.constant 0 : index
    %c0_12 = arith.constant 0 : index
    %5 = vector.load %arg5[%c0_10, %c0_11, %c0_12] : memref<2x32x32xf32, #tpu.memory_space<vmem>>, vector<2x32x32xf32>
    %c0_13 = arith.constant 0 : index
    %c0_14 = arith.constant 0 : index
    %6 = vector.load %arg6[%c0_13, %c0_14] : memref<32x64xf32, #tpu.memory_space<vmem>>, vector<32x64xf32>
    %c0_15 = arith.constant 0 : index
    %c0_16 = arith.constant 0 : index
    %7 = vector.load %arg7[%c0_15, %c0_16] : memref<64x32xf32, #tpu.memory_space<vmem>>, vector<64x32xf32>
    %c0_17 = arith.constant 0 : index
    %c0_18 = arith.constant 0 : index
    %8 = vector.load %arg8[%c0_17, %c0_18] : memref<2x128xf32, #tpu.memory_space<vmem>>, vector<2x128xf32>
    %c0_19 = arith.constant 0 : index
    %c0_20 = arith.constant 0 : index
    %9 = vector.load %arg9[%c0_19, %c0_20] : memref<1x96xf32, #tpu.memory_space<vmem>>, vector<1x96xf32>
    %c0_21 = arith.constant 0 : index
    %c0_22 = arith.constant 0 : index
    %10 = vector.load %arg10[%c0_21, %c0_22] : memref<8x32xf32, #tpu.memory_space<vmem>>, vector<8x32xf32>
    %11 = vector.extract_strided_slice %9 {offsets = [0, 0], sizes = [1, 64], strides = [1, 1]} : vector<1x96xf32> to vector<1x64xf32>
    %12 = vector.shape_cast %11 : vector<1x64xf32> to vector<64xf32>
    %13 = vector.extract_strided_slice %9 {offsets = [0, 64], sizes = [1, 32], strides = [1, 1]} : vector<1x96xf32> to vector<1x32xf32>
    %14 = vector.shape_cast %13 : vector<1x32xf32> to vector<32xf32>
    %15 = vector.extract_strided_slice %4 {offsets = [1, 0, 32], sizes = [1, 32, 64], strides = [1, 1, 1]} : vector<2x32x96xf32> to vector<1x32x64xf32>
    %16 = vector.shape_cast %15 : vector<1x32x64xf32> to vector<32x64xf32>
    %cst = arith.constant dense<0.000000e+00> : vector<16x64xf32>
    %17 = tpu.matmul %1, %16, %cst {dimension_numbers = #tpu.dot_dimension_numbers<[1], [0], [0], [1], [0, 0, 1, 1], [], []>} : vector<16x32xf32>, vector<32x64xf32>, vector<16x64xf32> -> vector<16x64xf32>
    %18 = vector.extract_strided_slice %8 {offsets = [1, 32], sizes = [1, 64], strides = [1, 1]} : vector<2x128xf32> to vector<1x64xf32>
    %19 = vector.shape_cast %18 : vector<1x64xf32> to vector<64xf32>
    %20 = vector.shape_cast %19 : vector<64xf32> to vector<1x64xf32>
    %21 = vector.broadcast %20 : vector<1x64xf32> to vector<16x64xf32>
    %22 = arith.addf %17, %21 : vector<16x64xf32>
    %23 = vector.extract_strided_slice %22 {offsets = [0, 0], sizes = [16, 32], strides = [1, 1]} : vector<16x64xf32> to vector<16x32xf32>
    %24 = vector.extract_strided_slice %22 {offsets = [0, 32], sizes = [16, 32], strides = [1, 1]} : vector<16x64xf32> to vector<16x32xf32>
    %25 = vector.extract_strided_slice %10 {offsets = [0, 0], sizes = [1, 32], strides = [1, 1]} : vector<8x32xf32> to vector<1x32xf32>
    %26 = vector.shape_cast %25 : vector<1x32xf32> to vector<32xf32>
    %27 = vector.extract_strided_slice %10 {offsets = [4, 0], sizes = [1, 32], strides = [1, 1]} : vector<8x32xf32> to vector<1x32xf32>
    %28 = vector.shape_cast %27 : vector<1x32xf32> to vector<32xf32>
    %cst_23 = arith.constant dense<0.000000e+00> : vector<16xf32>
    %29 = vector.multi_reduction <add>, %0, %cst_23 [1] : vector<16x32xf32> to vector<16xf32>
    %30 = vector.shape_cast %29 : vector<16xf32> to vector<16x1xf32>
    %cst_24 = arith.constant 3.200000e+01 : f32
    %31 = vector.broadcast %cst_24 : f32 to vector<16x1xf32>
    %32 = arith.divf %30, %31 : vector<16x1xf32>
    %33 = vector.broadcast %32 : vector<16x1xf32> to vector<16x32xf32>
    %34 = arith.subf %0, %33 : vector<16x32xf32>
    %35 = arith.mulf %34, %34 : vector<16x32xf32>
    %cst_25 = arith.constant dense<0.000000e+00> : vector<16xf32>
    %36 = vector.multi_reduction <add>, %35, %cst_25 [1] : vector<16x32xf32> to vector<16xf32>
    %37 = vector.shape_cast %36 : vector<16xf32> to vector<16x1xf32>
    %cst_26 = arith.constant 3.200000e+01 : f32
    %38 = vector.broadcast %cst_26 : f32 to vector<16x1xf32>
    %39 = arith.divf %37, %38 : vector<16x1xf32>
    %40 = vector.broadcast %32 : vector<16x1xf32> to vector<16x32xf32>
    %41 = arith.subf %0, %40 : vector<16x32xf32>
    %cst_27 = arith.constant 9.99999974E-6 : f32
    %42 = vector.broadcast %cst_27 : f32 to vector<16x1xf32>
    %43 = arith.addf %39, %42 : vector<16x1xf32>
    %44 = math.rsqrt %43 : vector<16x1xf32>
    %45 = vector.broadcast %44 : vector<16x1xf32> to vector<16x32xf32>
    %46 = arith.mulf %41, %45 : vector<16x32xf32>
    %47 = vector.shape_cast %26 : vector<32xf32> to vector<1x32xf32>
    %48 = vector.broadcast %47 : vector<1x32xf32> to vector<16x32xf32>
    %49 = arith.mulf %46, %48 : vector<16x32xf32>
    %50 = vector.shape_cast %28 : vector<32xf32> to vector<1x32xf32>
    %51 = vector.broadcast %50 : vector<1x32xf32> to vector<16x32xf32>
    %52 = arith.addf %49, %51 : vector<16x32xf32>
    %53 = vector.extract_strided_slice %4 {offsets = [0, 0, 0], sizes = [1, 32, 96], strides = [1, 1, 1]} : vector<2x32x96xf32> to vector<1x32x96xf32>
    %54 = vector.shape_cast %53 : vector<1x32x96xf32> to vector<32x96xf32>
    %cst_28 = arith.constant dense<0.000000e+00> : vector<16x96xf32>
    %55 = tpu.matmul %52, %54, %cst_28 {dimension_numbers = #tpu.dot_dimension_numbers<[1], [0], [0], [1], [0, 0, 1, 1], [], []>} : vector<16x32xf32>, vector<32x96xf32>, vector<16x96xf32> -> vector<16x96xf32>
    %56 = vector.extract_strided_slice %8 {offsets = [0, 0], sizes = [1, 96], strides = [1, 1]} : vector<2x128xf32> to vector<1x96xf32>
    %57 = vector.shape_cast %56 : vector<1x96xf32> to vector<96xf32>
    %58 = vector.shape_cast %57 : vector<96xf32> to vector<1x96xf32>
    %59 = vector.broadcast %58 : vector<1x96xf32> to vector<16x96xf32>
    %60 = arith.addf %55, %59 : vector<16x96xf32>
    %61 = vector.extract_strided_slice %60 {offsets = [0, 0], sizes = [16, 32], strides = [1, 1]} : vector<16x96xf32> to vector<16x32xf32>
    %62 = vector.extract_strided_slice %60 {offsets = [0, 32], sizes = [16, 32], strides = [1, 1]} : vector<16x96xf32> to vector<16x32xf32>
    %63 = vector.extract_strided_slice %60 {offsets = [0, 64], sizes = [16, 32], strides = [1, 1]} : vector<16x96xf32> to vector<16x32xf32>
    %64 = vector.extract_strided_slice %5 {offsets = [0, 0, 0], sizes = [1, 32, 32], strides = [1, 1, 1]} : vector<2x32x32xf32> to vector<1x32x32xf32>
    %65 = vector.shape_cast %64 : vector<1x32x32xf32> to vector<32x32xf32>
    %cst_29 = arith.constant 0.000000e+00 : f32
    %66 = vector.broadcast %cst_29 : f32 to vector<16x32xf32>
    %67 = vector.extract_strided_slice %61 {offsets = [0, 0], sizes = [16, 8], strides = [1, 1]} : vector<16x32xf32> to vector<16x8xf32>
    %68 = vector.extract_strided_slice %62 {offsets = [0, 0], sizes = [16, 8], strides = [1, 1]} : vector<16x32xf32> to vector<16x8xf32>
    %cst_30 = arith.constant dense<0.000000e+00> : vector<16x16xf32>
    %69 = tpu.matmul %67, %68, %cst_30 {dimension_numbers = #tpu.dot_dimension_numbers<[1], [1], [0], [0], [0, 0, 1, 0], [], []>} : vector<16x8xf32>, vector<16x8xf32>, vector<16x16xf32> -> vector<16x16xf32>
    %70 = arith.addf %69, %2 : vector<16x16xf32>
    %cst_31 = arith.constant dense<0xFF800000> : vector<16xf32>
    %71 = vector.multi_reduction <maximumf>, %70, %cst_31 [1] : vector<16x16xf32> to vector<16xf32>
    %72 = vector.shape_cast %71 : vector<16xf32> to vector<16x1xf32>
    %73 = vector.broadcast %72 : vector<16x1xf32> to vector<16x16xf32>
    %74 = arith.subf %70, %73 : vector<16x16xf32>
    %75 = math.exp %74 : vector<16x16xf32>
    %cst_32 = arith.constant dense<0.000000e+00> : vector<16xf32>
    %76 = vector.multi_reduction <add>, %75, %cst_32 [1] : vector<16x16xf32> to vector<16xf32>
    %77 = vector.shape_cast %76 : vector<16xf32> to vector<16x1xf32>
    %78 = tpu.reciprocal %77 {approx = true} : vector<16x1xf32> -> vector<16x1xf32>
    %79 = vector.broadcast %78 : vector<16x1xf32> to vector<16x16xf32>
    %80 = arith.mulf %75, %79 : vector<16x16xf32>
    %81 = vector.extract_strided_slice %63 {offsets = [0, 0], sizes = [16, 8], strides = [1, 1]} : vector<16x32xf32> to vector<16x8xf32>
    %cst_33 = arith.constant dense<0.000000e+00> : vector<16x8xf32>
    %82 = tpu.matmul %80, %81, %cst_33 {dimension_numbers = #tpu.dot_dimension_numbers<[1], [0], [0], [1], [0, 0, 1, 1], [], []>} : vector<16x16xf32>, vector<16x8xf32>, vector<16x8xf32> -> vector<16x8xf32>
    %83 = vector.extract_strided_slice %65 {offsets = [0, 0], sizes = [8, 32], strides = [1, 1]} : vector<32x32xf32> to vector<8x32xf32>
    %cst_34 = arith.constant dense<0.000000e+00> : vector<16x32xf32>
    %84 = tpu.matmul %82, %83, %cst_34 {dimension_numbers = #tpu.dot_dimension_numbers<[1], [0], [0], [1], [0, 0, 1, 1], [], []>} : vector<16x8xf32>, vector<8x32xf32>, vector<16x32xf32> -> vector<16x32xf32>
    %85 = arith.addf %66, %84 : vector<16x32xf32>
    %86 = vector.extract_strided_slice %61 {offsets = [0, 8], sizes = [16, 8], strides = [1, 1]} : vector<16x32xf32> to vector<16x8xf32>
    %87 = vector.extract_strided_slice %62 {offsets = [0, 8], sizes = [16, 8], strides = [1, 1]} : vector<16x32xf32> to vector<16x8xf32>
    %cst_35 = arith.constant dense<0.000000e+00> : vector<16x16xf32>
    %88 = tpu.matmul %86, %87, %cst_35 {dimension_numbers = #tpu.dot_dimension_numbers<[1], [1], [0], [0], [0, 0, 1, 0], [], []>} : vector<16x8xf32>, vector<16x8xf32>, vector<16x16xf32> -> vector<16x16xf32>
    %89 = arith.addf %88, %2 : vector<16x16xf32>
    %cst_36 = arith.constant dense<0xFF800000> : vector<16xf32>
    %90 = vector.multi_reduction <maximumf>, %89, %cst_36 [1] : vector<16x16xf32> to vector<16xf32>
    %91 = vector.shape_cast %90 : vector<16xf32> to vector<16x1xf32>
    %92 = vector.broadcast %91 : vector<16x1xf32> to vector<16x16xf32>
    %93 = arith.subf %89, %92 : vector<16x16xf32>
    %94 = math.exp %93 : vector<16x16xf32>
    %cst_37 = arith.constant dense<0.000000e+00> : vector<16xf32>
    %95 = vector.multi_reduction <add>, %94, %cst_37 [1] : vector<16x16xf32> to vector<16xf32>
    %96 = vector.shape_cast %95 : vector<16xf32> to vector<16x1xf32>
    %97 = tpu.reciprocal %96 {approx = true} : vector<16x1xf32> -> vector<16x1xf32>
    %98 = vector.broadcast %97 : vector<16x1xf32> to vector<16x16xf32>
    %99 = arith.mulf %94, %98 : vector<16x16xf32>
    %100 = vector.extract_strided_slice %63 {offsets = [0, 8], sizes = [16, 8], strides = [1, 1]} : vector<16x32xf32> to vector<16x8xf32>
    %cst_38 = arith.constant dense<0.000000e+00> : vector<16x8xf32>
    %101 = tpu.matmul %99, %100, %cst_38 {dimension_numbers = #tpu.dot_dimension_numbers<[1], [0], [0], [1], [0, 0, 1, 1], [], []>} : vector<16x16xf32>, vector<16x8xf32>, vector<16x8xf32> -> vector<16x8xf32>
    %102 = vector.extract_strided_slice %65 {offsets = [8, 0], sizes = [8, 32], strides = [1, 1]} : vector<32x32xf32> to vector<8x32xf32>
    %cst_39 = arith.constant dense<0.000000e+00> : vector<16x32xf32>
    %103 = tpu.matmul %101, %102, %cst_39 {dimension_numbers = #tpu.dot_dimension_numbers<[1], [0], [0], [1], [0, 0, 1, 1], [], []>} : vector<16x8xf32>, vector<8x32xf32>, vector<16x32xf32> -> vector<16x32xf32>
    %104 = arith.addf %85, %103 : vector<16x32xf32>
    %105 = vector.extract_strided_slice %61 {offsets = [0, 16], sizes = [16, 8], strides = [1, 1]} : vector<16x32xf32> to vector<16x8xf32>
    %106 = vector.extract_strided_slice %62 {offsets = [0, 16], sizes = [16, 8], strides = [1, 1]} : vector<16x32xf32> to vector<16x8xf32>
    %cst_40 = arith.constant dense<0.000000e+00> : vector<16x16xf32>
    %107 = tpu.matmul %105, %106, %cst_40 {dimension_numbers = #tpu.dot_dimension_numbers<[1], [1], [0], [0], [0, 0, 1, 0], [], []>} : vector<16x8xf32>, vector<16x8xf32>, vector<16x16xf32> -> vector<16x16xf32>
    %108 = arith.addf %107, %2 : vector<16x16xf32>
    %cst_41 = arith.constant dense<0xFF800000> : vector<16xf32>
    %109 = vector.multi_reduction <maximumf>, %108, %cst_41 [1] : vector<16x16xf32> to vector<16xf32>
    %110 = vector.shape_cast %109 : vector<16xf32> to vector<16x1xf32>
    %111 = vector.broadcast %110 : vector<16x1xf32> to vector<16x16xf32>
    %112 = arith.subf %108, %111 : vector<16x16xf32>
    %113 = math.exp %112 : vector<16x16xf32>
    %cst_42 = arith.constant dense<0.000000e+00> : vector<16xf32>
    %114 = vector.multi_reduction <add>, %113, %cst_42 [1] : vector<16x16xf32> to vector<16xf32>
    %115 = vector.shape_cast %114 : vector<16xf32> to vector<16x1xf32>
    %116 = tpu.reciprocal %115 {approx = true} : vector<16x1xf32> -> vector<16x1xf32>
    %117 = vector.broadcast %116 : vector<16x1xf32> to vector<16x16xf32>
    %118 = arith.mulf %113, %117 : vector<16x16xf32>
    %119 = vector.extract_strided_slice %63 {offsets = [0, 16], sizes = [16, 8], strides = [1, 1]} : vector<16x32xf32> to vector<16x8xf32>
    %cst_43 = arith.constant dense<0.000000e+00> : vector<16x8xf32>
    %120 = tpu.matmul %118, %119, %cst_43 {dimension_numbers = #tpu.dot_dimension_numbers<[1], [0], [0], [1], [0, 0, 1, 1], [], []>} : vector<16x16xf32>, vector<16x8xf32>, vector<16x8xf32> -> vector<16x8xf32>
    %121 = vector.extract_strided_slice %65 {offsets = [16, 0], sizes = [8, 32], strides = [1, 1]} : vector<32x32xf32> to vector<8x32xf32>
    %cst_44 = arith.constant dense<0.000000e+00> : vector<16x32xf32>
    %122 = tpu.matmul %120, %121, %cst_44 {dimension_numbers = #tpu.dot_dimension_numbers<[1], [0], [0], [1], [0, 0, 1, 1], [], []>} : vector<16x8xf32>, vector<8x32xf32>, vector<16x32xf32> -> vector<16x32xf32>
    %123 = arith.addf %104, %122 : vector<16x32xf32>
    %124 = vector.extract_strided_slice %61 {offsets = [0, 24], sizes = [16, 8], strides = [1, 1]} : vector<16x32xf32> to vector<16x8xf32>
    %125 = vector.extract_strided_slice %62 {offsets = [0, 24], sizes = [16, 8], strides = [1, 1]} : vector<16x32xf32> to vector<16x8xf32>
    %cst_45 = arith.constant dense<0.000000e+00> : vector<16x16xf32>
    %126 = tpu.matmul %124, %125, %cst_45 {dimension_numbers = #tpu.dot_dimension_numbers<[1], [1], [0], [0], [0, 0, 1, 0], [], []>} : vector<16x8xf32>, vector<16x8xf32>, vector<16x16xf32> -> vector<16x16xf32>
    %127 = arith.addf %126, %2 : vector<16x16xf32>
    %cst_46 = arith.constant dense<0xFF800000> : vector<16xf32>
    %128 = vector.multi_reduction <maximumf>, %127, %cst_46 [1] : vector<16x16xf32> to vector<16xf32>
    %129 = vector.shape_cast %128 : vector<16xf32> to vector<16x1xf32>
    %130 = vector.broadcast %129 : vector<16x1xf32> to vector<16x16xf32>
    %131 = arith.subf %127, %130 : vector<16x16xf32>
    %132 = math.exp %131 : vector<16x16xf32>
    %cst_47 = arith.constant dense<0.000000e+00> : vector<16xf32>
    %133 = vector.multi_reduction <add>, %132, %cst_47 [1] : vector<16x16xf32> to vector<16xf32>
    %134 = vector.shape_cast %133 : vector<16xf32> to vector<16x1xf32>
    %135 = tpu.reciprocal %134 {approx = true} : vector<16x1xf32> -> vector<16x1xf32>
    %136 = vector.broadcast %135 : vector<16x1xf32> to vector<16x16xf32>
    %137 = arith.mulf %132, %136 : vector<16x16xf32>
    %138 = vector.extract_strided_slice %63 {offsets = [0, 24], sizes = [16, 8], strides = [1, 1]} : vector<16x32xf32> to vector<16x8xf32>
    %cst_48 = arith.constant dense<0.000000e+00> : vector<16x8xf32>
    %139 = tpu.matmul %137, %138, %cst_48 {dimension_numbers = #tpu.dot_dimension_numbers<[1], [0], [0], [1], [0, 0, 1, 1], [], []>} : vector<16x16xf32>, vector<16x8xf32>, vector<16x8xf32> -> vector<16x8xf32>
    %140 = vector.extract_strided_slice %65 {offsets = [24, 0], sizes = [8, 32], strides = [1, 1]} : vector<32x32xf32> to vector<8x32xf32>
    %cst_49 = arith.constant dense<0.000000e+00> : vector<16x32xf32>
    %141 = tpu.matmul %139, %140, %cst_49 {dimension_numbers = #tpu.dot_dimension_numbers<[1], [0], [0], [1], [0, 0, 1, 1], [], []>} : vector<16x8xf32>, vector<8x32xf32>, vector<16x32xf32> -> vector<16x32xf32>
    %142 = arith.addf %123, %141 : vector<16x32xf32>
    %143 = arith.addf %0, %142 : vector<16x32xf32>
    %144 = vector.extract_strided_slice %8 {offsets = [0, 96], sizes = [1, 32], strides = [1, 1]} : vector<2x128xf32> to vector<1x32xf32>
    %145 = vector.shape_cast %144 : vector<1x32xf32> to vector<32xf32>
    %146 = vector.shape_cast %145 : vector<32xf32> to vector<1x32xf32>
    %147 = vector.broadcast %146 : vector<1x32xf32> to vector<16x32xf32>
    %148 = arith.addf %143, %147 : vector<16x32xf32>
    %149 = vector.extract_strided_slice %10 {offsets = [1, 0], sizes = [1, 32], strides = [1, 1]} : vector<8x32xf32> to vector<1x32xf32>
    %150 = vector.shape_cast %149 : vector<1x32xf32> to vector<32xf32>
    %151 = vector.extract_strided_slice %10 {offsets = [5, 0], sizes = [1, 32], strides = [1, 1]} : vector<8x32xf32> to vector<1x32xf32>
    %152 = vector.shape_cast %151 : vector<1x32xf32> to vector<32xf32>
    %cst_50 = arith.constant dense<0.000000e+00> : vector<16xf32>
    %153 = vector.multi_reduction <add>, %148, %cst_50 [1] : vector<16x32xf32> to vector<16xf32>
    %154 = vector.shape_cast %153 : vector<16xf32> to vector<16x1xf32>
    %cst_51 = arith.constant 3.200000e+01 : f32
    %155 = vector.broadcast %cst_51 : f32 to vector<16x1xf32>
    %156 = arith.divf %154, %155 : vector<16x1xf32>
    %157 = vector.broadcast %156 : vector<16x1xf32> to vector<16x32xf32>
    %158 = arith.subf %148, %157 : vector<16x32xf32>
    %159 = arith.mulf %158, %158 : vector<16x32xf32>
    %cst_52 = arith.constant dense<0.000000e+00> : vector<16xf32>
    %160 = vector.multi_reduction <add>, %159, %cst_52 [1] : vector<16x32xf32> to vector<16xf32>
    %161 = vector.shape_cast %160 : vector<16xf32> to vector<16x1xf32>
    %cst_53 = arith.constant 3.200000e+01 : f32
    %162 = vector.broadcast %cst_53 : f32 to vector<16x1xf32>
    %163 = arith.divf %161, %162 : vector<16x1xf32>
    %164 = vector.broadcast %156 : vector<16x1xf32> to vector<16x32xf32>
    %165 = arith.subf %148, %164 : vector<16x32xf32>
    %cst_54 = arith.constant 9.99999974E-6 : f32
    %166 = vector.broadcast %cst_54 : f32 to vector<16x1xf32>
    %167 = arith.addf %163, %166 : vector<16x1xf32>
    %168 = math.rsqrt %167 : vector<16x1xf32>
    %169 = vector.broadcast %168 : vector<16x1xf32> to vector<16x32xf32>
    %170 = arith.mulf %165, %169 : vector<16x32xf32>
    %171 = vector.shape_cast %150 : vector<32xf32> to vector<1x32xf32>
    %172 = vector.broadcast %171 : vector<1x32xf32> to vector<16x32xf32>
    %173 = arith.mulf %170, %172 : vector<16x32xf32>
    %174 = vector.shape_cast %152 : vector<32xf32> to vector<1x32xf32>
    %175 = vector.broadcast %174 : vector<1x32xf32> to vector<16x32xf32>
    %176 = arith.addf %173, %175 : vector<16x32xf32>
    %177 = vector.extract_strided_slice %4 {offsets = [1, 0, 0], sizes = [1, 32, 32], strides = [1, 1, 1]} : vector<2x32x96xf32> to vector<1x32x32xf32>
    %178 = vector.shape_cast %177 : vector<1x32x32xf32> to vector<32x32xf32>
    %cst_55 = arith.constant dense<0.000000e+00> : vector<16x32xf32>
    %179 = tpu.matmul %176, %178, %cst_55 {dimension_numbers = #tpu.dot_dimension_numbers<[1], [0], [0], [1], [0, 0, 1, 1], [], []>} : vector<16x32xf32>, vector<32x32xf32>, vector<16x32xf32> -> vector<16x32xf32>
    %180 = vector.extract_strided_slice %8 {offsets = [1, 0], sizes = [1, 32], strides = [1, 1]} : vector<2x128xf32> to vector<1x32xf32>
    %181 = vector.shape_cast %180 : vector<1x32xf32> to vector<32xf32>
    %182 = vector.shape_cast %181 : vector<32xf32> to vector<1x32xf32>
    %183 = vector.broadcast %182 : vector<1x32xf32> to vector<16x32xf32>
    %184 = arith.addf %179, %183 : vector<16x32xf32>
    %185 = vector.extract_strided_slice %5 {offsets = [1, 0, 0], sizes = [1, 32, 32], strides = [1, 1, 1]} : vector<2x32x32xf32> to vector<1x32x32xf32>
    %186 = vector.shape_cast %185 : vector<1x32x32xf32> to vector<32x32xf32>
    %cst_56 = arith.constant 0.000000e+00 : f32
    %187 = vector.broadcast %cst_56 : f32 to vector<16x32xf32>
    %188 = vector.extract_strided_slice %184 {offsets = [0, 0], sizes = [16, 8], strides = [1, 1]} : vector<16x32xf32> to vector<16x8xf32>
    %189 = vector.extract_strided_slice %23 {offsets = [0, 0], sizes = [16, 8], strides = [1, 1]} : vector<16x32xf32> to vector<16x8xf32>
    %cst_57 = arith.constant dense<0.000000e+00> : vector<16x16xf32>
    %190 = tpu.matmul %188, %189, %cst_57 {dimension_numbers = #tpu.dot_dimension_numbers<[1], [1], [0], [0], [0, 0, 1, 0], [], []>} : vector<16x8xf32>, vector<16x8xf32>, vector<16x16xf32> -> vector<16x16xf32>
    %191 = arith.addf %190, %3 : vector<16x16xf32>
    %cst_58 = arith.constant dense<0xFF800000> : vector<16xf32>
    %192 = vector.multi_reduction <maximumf>, %191, %cst_58 [1] : vector<16x16xf32> to vector<16xf32>
    %193 = vector.shape_cast %192 : vector<16xf32> to vector<16x1xf32>
    %194 = vector.broadcast %193 : vector<16x1xf32> to vector<16x16xf32>
    %195 = arith.subf %191, %194 : vector<16x16xf32>
    %196 = math.exp %195 : vector<16x16xf32>
    %cst_59 = arith.constant dense<0.000000e+00> : vector<16xf32>
    %197 = vector.multi_reduction <add>, %196, %cst_59 [1] : vector<16x16xf32> to vector<16xf32>
    %198 = vector.shape_cast %197 : vector<16xf32> to vector<16x1xf32>
    %199 = tpu.reciprocal %198 {approx = true} : vector<16x1xf32> -> vector<16x1xf32>
    %200 = vector.broadcast %199 : vector<16x1xf32> to vector<16x16xf32>
    %201 = arith.mulf %196, %200 : vector<16x16xf32>
    %202 = vector.extract_strided_slice %24 {offsets = [0, 0], sizes = [16, 8], strides = [1, 1]} : vector<16x32xf32> to vector<16x8xf32>
    %cst_60 = arith.constant dense<0.000000e+00> : vector<16x8xf32>
    %203 = tpu.matmul %201, %202, %cst_60 {dimension_numbers = #tpu.dot_dimension_numbers<[1], [0], [0], [1], [0, 0, 1, 1], [], []>} : vector<16x16xf32>, vector<16x8xf32>, vector<16x8xf32> -> vector<16x8xf32>
    %204 = vector.extract_strided_slice %186 {offsets = [0, 0], sizes = [8, 32], strides = [1, 1]} : vector<32x32xf32> to vector<8x32xf32>
    %cst_61 = arith.constant dense<0.000000e+00> : vector<16x32xf32>
    %205 = tpu.matmul %203, %204, %cst_61 {dimension_numbers = #tpu.dot_dimension_numbers<[1], [0], [0], [1], [0, 0, 1, 1], [], []>} : vector<16x8xf32>, vector<8x32xf32>, vector<16x32xf32> -> vector<16x32xf32>
    %206 = arith.addf %187, %205 : vector<16x32xf32>
    %207 = vector.extract_strided_slice %184 {offsets = [0, 8], sizes = [16, 8], strides = [1, 1]} : vector<16x32xf32> to vector<16x8xf32>
    %208 = vector.extract_strided_slice %23 {offsets = [0, 8], sizes = [16, 8], strides = [1, 1]} : vector<16x32xf32> to vector<16x8xf32>
    %cst_62 = arith.constant dense<0.000000e+00> : vector<16x16xf32>
    %209 = tpu.matmul %207, %208, %cst_62 {dimension_numbers = #tpu.dot_dimension_numbers<[1], [1], [0], [0], [0, 0, 1, 0], [], []>} : vector<16x8xf32>, vector<16x8xf32>, vector<16x16xf32> -> vector<16x16xf32>
    %210 = arith.addf %209, %3 : vector<16x16xf32>
    %cst_63 = arith.constant dense<0xFF800000> : vector<16xf32>
    %211 = vector.multi_reduction <maximumf>, %210, %cst_63 [1] : vector<16x16xf32> to vector<16xf32>
    %212 = vector.shape_cast %211 : vector<16xf32> to vector<16x1xf32>
    %213 = vector.broadcast %212 : vector<16x1xf32> to vector<16x16xf32>
    %214 = arith.subf %210, %213 : vector<16x16xf32>
    %215 = math.exp %214 : vector<16x16xf32>
    %cst_64 = arith.constant dense<0.000000e+00> : vector<16xf32>
    %216 = vector.multi_reduction <add>, %215, %cst_64 [1] : vector<16x16xf32> to vector<16xf32>
    %217 = vector.shape_cast %216 : vector<16xf32> to vector<16x1xf32>
    %218 = tpu.reciprocal %217 {approx = true} : vector<16x1xf32> -> vector<16x1xf32>
    %219 = vector.broadcast %218 : vector<16x1xf32> to vector<16x16xf32>
    %220 = arith.mulf %215, %219 : vector<16x16xf32>
    %221 = vector.extract_strided_slice %24 {offsets = [0, 8], sizes = [16, 8], strides = [1, 1]} : vector<16x32xf32> to vector<16x8xf32>
    %cst_65 = arith.constant dense<0.000000e+00> : vector<16x8xf32>
    %222 = tpu.matmul %220, %221, %cst_65 {dimension_numbers = #tpu.dot_dimension_numbers<[1], [0], [0], [1], [0, 0, 1, 1], [], []>} : vector<16x16xf32>, vector<16x8xf32>, vector<16x8xf32> -> vector<16x8xf32>
    %223 = vector.extract_strided_slice %186 {offsets = [8, 0], sizes = [8, 32], strides = [1, 1]} : vector<32x32xf32> to vector<8x32xf32>
    %cst_66 = arith.constant dense<0.000000e+00> : vector<16x32xf32>
    %224 = tpu.matmul %222, %223, %cst_66 {dimension_numbers = #tpu.dot_dimension_numbers<[1], [0], [0], [1], [0, 0, 1, 1], [], []>} : vector<16x8xf32>, vector<8x32xf32>, vector<16x32xf32> -> vector<16x32xf32>
    %225 = arith.addf %206, %224 : vector<16x32xf32>
    %226 = vector.extract_strided_slice %184 {offsets = [0, 16], sizes = [16, 8], strides = [1, 1]} : vector<16x32xf32> to vector<16x8xf32>
    %227 = vector.extract_strided_slice %23 {offsets = [0, 16], sizes = [16, 8], strides = [1, 1]} : vector<16x32xf32> to vector<16x8xf32>
    %cst_67 = arith.constant dense<0.000000e+00> : vector<16x16xf32>
    %228 = tpu.matmul %226, %227, %cst_67 {dimension_numbers = #tpu.dot_dimension_numbers<[1], [1], [0], [0], [0, 0, 1, 0], [], []>} : vector<16x8xf32>, vector<16x8xf32>, vector<16x16xf32> -> vector<16x16xf32>
    %229 = arith.addf %228, %3 : vector<16x16xf32>
    %cst_68 = arith.constant dense<0xFF800000> : vector<16xf32>
    %230 = vector.multi_reduction <maximumf>, %229, %cst_68 [1] : vector<16x16xf32> to vector<16xf32>
    %231 = vector.shape_cast %230 : vector<16xf32> to vector<16x1xf32>
    %232 = vector.broadcast %231 : vector<16x1xf32> to vector<16x16xf32>
    %233 = arith.subf %229, %232 : vector<16x16xf32>
    %234 = math.exp %233 : vector<16x16xf32>
    %cst_69 = arith.constant dense<0.000000e+00> : vector<16xf32>
    %235 = vector.multi_reduction <add>, %234, %cst_69 [1] : vector<16x16xf32> to vector<16xf32>
    %236 = vector.shape_cast %235 : vector<16xf32> to vector<16x1xf32>
    %237 = tpu.reciprocal %236 {approx = true} : vector<16x1xf32> -> vector<16x1xf32>
    %238 = vector.broadcast %237 : vector<16x1xf32> to vector<16x16xf32>
    %239 = arith.mulf %234, %238 : vector<16x16xf32>
    %240 = vector.extract_strided_slice %24 {offsets = [0, 16], sizes = [16, 8], strides = [1, 1]} : vector<16x32xf32> to vector<16x8xf32>
    %cst_70 = arith.constant dense<0.000000e+00> : vector<16x8xf32>
    %241 = tpu.matmul %239, %240, %cst_70 {dimension_numbers = #tpu.dot_dimension_numbers<[1], [0], [0], [1], [0, 0, 1, 1], [], []>} : vector<16x16xf32>, vector<16x8xf32>, vector<16x8xf32> -> vector<16x8xf32>
    %242 = vector.extract_strided_slice %186 {offsets = [16, 0], sizes = [8, 32], strides = [1, 1]} : vector<32x32xf32> to vector<8x32xf32>
    %cst_71 = arith.constant dense<0.000000e+00> : vector<16x32xf32>
    %243 = tpu.matmul %241, %242, %cst_71 {dimension_numbers = #tpu.dot_dimension_numbers<[1], [0], [0], [1], [0, 0, 1, 1], [], []>} : vector<16x8xf32>, vector<8x32xf32>, vector<16x32xf32> -> vector<16x32xf32>
    %244 = arith.addf %225, %243 : vector<16x32xf32>
    %245 = vector.extract_strided_slice %184 {offsets = [0, 24], sizes = [16, 8], strides = [1, 1]} : vector<16x32xf32> to vector<16x8xf32>
    %246 = vector.extract_strided_slice %23 {offsets = [0, 24], sizes = [16, 8], strides = [1, 1]} : vector<16x32xf32> to vector<16x8xf32>
    %cst_72 = arith.constant dense<0.000000e+00> : vector<16x16xf32>
    %247 = tpu.matmul %245, %246, %cst_72 {dimension_numbers = #tpu.dot_dimension_numbers<[1], [1], [0], [0], [0, 0, 1, 0], [], []>} : vector<16x8xf32>, vector<16x8xf32>, vector<16x16xf32> -> vector<16x16xf32>
    %248 = arith.addf %247, %3 : vector<16x16xf32>
    %cst_73 = arith.constant dense<0xFF800000> : vector<16xf32>
    %249 = vector.multi_reduction <maximumf>, %248, %cst_73 [1] : vector<16x16xf32> to vector<16xf32>
    %250 = vector.shape_cast %249 : vector<16xf32> to vector<16x1xf32>
    %251 = vector.broadcast %250 : vector<16x1xf32> to vector<16x16xf32>
    %252 = arith.subf %248, %251 : vector<16x16xf32>
    %253 = math.exp %252 : vector<16x16xf32>
    %cst_74 = arith.constant dense<0.000000e+00> : vector<16xf32>
    %254 = vector.multi_reduction <add>, %253, %cst_74 [1] : vector<16x16xf32> to vector<16xf32>
    %255 = vector.shape_cast %254 : vector<16xf32> to vector<16x1xf32>
    %256 = tpu.reciprocal %255 {approx = true} : vector<16x1xf32> -> vector<16x1xf32>
    %257 = vector.broadcast %256 : vector<16x1xf32> to vector<16x16xf32>
    %258 = arith.mulf %253, %257 : vector<16x16xf32>
    %259 = vector.extract_strided_slice %24 {offsets = [0, 24], sizes = [16, 8], strides = [1, 1]} : vector<16x32xf32> to vector<16x8xf32>
    %cst_75 = arith.constant dense<0.000000e+00> : vector<16x8xf32>
    %260 = tpu.matmul %258, %259, %cst_75 {dimension_numbers = #tpu.dot_dimension_numbers<[1], [0], [0], [1], [0, 0, 1, 1], [], []>} : vector<16x16xf32>, vector<16x8xf32>, vector<16x8xf32> -> vector<16x8xf32>
    %261 = vector.extract_strided_slice %186 {offsets = [24, 0], sizes = [8, 32], strides = [1, 1]} : vector<32x32xf32> to vector<8x32xf32>
    %cst_76 = arith.constant dense<0.000000e+00> : vector<16x32xf32>
    %262 = tpu.matmul %260, %261, %cst_76 {dimension_numbers = #tpu.dot_dimension_numbers<[1], [0], [0], [1], [0, 0, 1, 1], [], []>} : vector<16x8xf32>, vector<8x32xf32>, vector<16x32xf32> -> vector<16x32xf32>
    %263 = arith.addf %244, %262 : vector<16x32xf32>
    %264 = arith.addf %148, %263 : vector<16x32xf32>
    %265 = vector.extract_strided_slice %8 {offsets = [1, 96], sizes = [1, 32], strides = [1, 1]} : vector<2x128xf32> to vector<1x32xf32>
    %266 = vector.shape_cast %265 : vector<1x32xf32> to vector<32xf32>
    %267 = vector.shape_cast %266 : vector<32xf32> to vector<1x32xf32>
    %268 = vector.broadcast %267 : vector<1x32xf32> to vector<16x32xf32>
    %269 = arith.addf %264, %268 : vector<16x32xf32>
    %270 = vector.extract_strided_slice %10 {offsets = [2, 0], sizes = [1, 32], strides = [1, 1]} : vector<8x32xf32> to vector<1x32xf32>
    %271 = vector.shape_cast %270 : vector<1x32xf32> to vector<32xf32>
    %272 = vector.extract_strided_slice %10 {offsets = [6, 0], sizes = [1, 32], strides = [1, 1]} : vector<8x32xf32> to vector<1x32xf32>
    %273 = vector.shape_cast %272 : vector<1x32xf32> to vector<32xf32>
    %cst_77 = arith.constant dense<0.000000e+00> : vector<16xf32>
    %274 = vector.multi_reduction <add>, %269, %cst_77 [1] : vector<16x32xf32> to vector<16xf32>
    %275 = vector.shape_cast %274 : vector<16xf32> to vector<16x1xf32>
    %cst_78 = arith.constant 3.200000e+01 : f32
    %276 = vector.broadcast %cst_78 : f32 to vector<16x1xf32>
    %277 = arith.divf %275, %276 : vector<16x1xf32>
    %278 = vector.broadcast %277 : vector<16x1xf32> to vector<16x32xf32>
    %279 = arith.subf %269, %278 : vector<16x32xf32>
    %280 = arith.mulf %279, %279 : vector<16x32xf32>
    %cst_79 = arith.constant dense<0.000000e+00> : vector<16xf32>
    %281 = vector.multi_reduction <add>, %280, %cst_79 [1] : vector<16x32xf32> to vector<16xf32>
    %282 = vector.shape_cast %281 : vector<16xf32> to vector<16x1xf32>
    %cst_80 = arith.constant 3.200000e+01 : f32
    %283 = vector.broadcast %cst_80 : f32 to vector<16x1xf32>
    %284 = arith.divf %282, %283 : vector<16x1xf32>
    %285 = vector.broadcast %277 : vector<16x1xf32> to vector<16x32xf32>
    %286 = arith.subf %269, %285 : vector<16x32xf32>
    %cst_81 = arith.constant 9.99999974E-6 : f32
    %287 = vector.broadcast %cst_81 : f32 to vector<16x1xf32>
    %288 = arith.addf %284, %287 : vector<16x1xf32>
    %289 = math.rsqrt %288 : vector<16x1xf32>
    %290 = vector.broadcast %289 : vector<16x1xf32> to vector<16x32xf32>
    %291 = arith.mulf %286, %290 : vector<16x32xf32>
    %292 = vector.shape_cast %271 : vector<32xf32> to vector<1x32xf32>
    %293 = vector.broadcast %292 : vector<1x32xf32> to vector<16x32xf32>
    %294 = arith.mulf %291, %293 : vector<16x32xf32>
    %295 = vector.shape_cast %273 : vector<32xf32> to vector<1x32xf32>
    %296 = vector.broadcast %295 : vector<1x32xf32> to vector<16x32xf32>
    %297 = arith.addf %294, %296 : vector<16x32xf32>
    %cst_82 = arith.constant dense<0.000000e+00> : vector<16x64xf32>
    %298 = tpu.matmul %297, %6, %cst_82 {dimension_numbers = #tpu.dot_dimension_numbers<[1], [0], [0], [1], [0, 0, 1, 1], [], []>} : vector<16x32xf32>, vector<32x64xf32>, vector<16x64xf32> -> vector<16x64xf32>
    %299 = vector.shape_cast %12 : vector<64xf32> to vector<1x64xf32>
    %300 = vector.broadcast %299 : vector<1x64xf32> to vector<16x64xf32>
    %301 = arith.addf %298, %300 : vector<16x64xf32>
    %cst_83 = arith.constant 0.000000e+00 : f32
    %302 = vector.broadcast %cst_83 : f32 to vector<16x64xf32>
    %303 = arith.maximumf %301, %302 : vector<16x64xf32>
    %cst_84 = arith.constant dense<0.000000e+00> : vector<16x32xf32>
    %304 = tpu.matmul %303, %7, %cst_84 {dimension_numbers = #tpu.dot_dimension_numbers<[1], [0], [0], [1], [0, 0, 1, 1], [], []>} : vector<16x64xf32>, vector<64x32xf32>, vector<16x32xf32> -> vector<16x32xf32>
    %305 = arith.addf %269, %304 : vector<16x32xf32>
    %306 = vector.shape_cast %14 : vector<32xf32> to vector<1x32xf32>
    %307 = vector.broadcast %306 : vector<1x32xf32> to vector<16x32xf32>
    %308 = arith.addf %305, %307 : vector<16x32xf32>
    %309 = vector.extract_strided_slice %10 {offsets = [0, 0], sizes = [1, 32], strides = [1, 1]} : vector<8x32xf32> to vector<1x32xf32>
    %310 = vector.shape_cast %309 : vector<1x32xf32> to vector<32xf32>
    %311 = vector.extract_strided_slice %10 {offsets = [4, 0], sizes = [1, 32], strides = [1, 1]} : vector<8x32xf32> to vector<1x32xf32>
    %312 = vector.shape_cast %311 : vector<1x32xf32> to vector<32xf32>
    %cst_85 = arith.constant dense<0.000000e+00> : vector<16xf32>
    %313 = vector.multi_reduction <add>, %308, %cst_85 [1] : vector<16x32xf32> to vector<16xf32>
    %314 = vector.shape_cast %313 : vector<16xf32> to vector<16x1xf32>
    %cst_86 = arith.constant 3.200000e+01 : f32
    %315 = vector.broadcast %cst_86 : f32 to vector<16x1xf32>
    %316 = arith.divf %314, %315 : vector<16x1xf32>
    %317 = vector.broadcast %316 : vector<16x1xf32> to vector<16x32xf32>
    %318 = arith.subf %308, %317 : vector<16x32xf32>
    %319 = arith.mulf %318, %318 : vector<16x32xf32>
    %cst_87 = arith.constant dense<0.000000e+00> : vector<16xf32>
    %320 = vector.multi_reduction <add>, %319, %cst_87 [1] : vector<16x32xf32> to vector<16xf32>
    %321 = vector.shape_cast %320 : vector<16xf32> to vector<16x1xf32>
    %cst_88 = arith.constant 3.200000e+01 : f32
    %322 = vector.broadcast %cst_88 : f32 to vector<16x1xf32>
    %323 = arith.divf %321, %322 : vector<16x1xf32>
    %324 = vector.broadcast %316 : vector<16x1xf32> to vector<16x32xf32>
    %325 = arith.subf %308, %324 : vector<16x32xf32>
    %cst_89 = arith.constant 9.99999974E-6 : f32
    %326 = vector.broadcast %cst_89 : f32 to vector<16x1xf32>
    %327 = arith.addf %323, %326 : vector<16x1xf32>
    %328 = math.rsqrt %327 : vector<16x1xf32>
    %329 = vector.broadcast %328 : vector<16x1xf32> to vector<16x32xf32>
    %330 = arith.mulf %325, %329 : vector<16x32xf32>
    %331 = vector.shape_cast %310 : vector<32xf32> to vector<1x32xf32>
    %332 = vector.broadcast %331 : vector<1x32xf32> to vector<16x32xf32>
    %333 = arith.mulf %330, %332 : vector<16x32xf32>
    %334 = vector.shape_cast %312 : vector<32xf32> to vector<1x32xf32>
    %335 = vector.broadcast %334 : vector<1x32xf32> to vector<16x32xf32>
    %336 = arith.addf %333, %335 : vector<16x32xf32>
    %337 = vector.extract_strided_slice %4 {offsets = [0, 0, 0], sizes = [1, 32, 96], strides = [1, 1, 1]} : vector<2x32x96xf32> to vector<1x32x96xf32>
    %338 = vector.shape_cast %337 : vector<1x32x96xf32> to vector<32x96xf32>
    %cst_90 = arith.constant dense<0.000000e+00> : vector<16x96xf32>
    %339 = tpu.matmul %336, %338, %cst_90 {dimension_numbers = #tpu.dot_dimension_numbers<[1], [0], [0], [1], [0, 0, 1, 1], [], []>} : vector<16x32xf32>, vector<32x96xf32>, vector<16x96xf32> -> vector<16x96xf32>
    %340 = vector.extract_strided_slice %8 {offsets = [0, 0], sizes = [1, 96], strides = [1, 1]} : vector<2x128xf32> to vector<1x96xf32>
    %341 = vector.shape_cast %340 : vector<1x96xf32> to vector<96xf32>
    %342 = vector.shape_cast %341 : vector<96xf32> to vector<1x96xf32>
    %343 = vector.broadcast %342 : vector<1x96xf32> to vector<16x96xf32>
    %344 = arith.addf %339, %343 : vector<16x96xf32>
    %345 = vector.extract_strided_slice %344 {offsets = [0, 0], sizes = [16, 32], strides = [1, 1]} : vector<16x96xf32> to vector<16x32xf32>
    %346 = vector.extract_strided_slice %344 {offsets = [0, 32], sizes = [16, 32], strides = [1, 1]} : vector<16x96xf32> to vector<16x32xf32>
    %347 = vector.extract_strided_slice %344 {offsets = [0, 64], sizes = [16, 32], strides = [1, 1]} : vector<16x96xf32> to vector<16x32xf32>
    %348 = vector.extract_strided_slice %5 {offsets = [0, 0, 0], sizes = [1, 32, 32], strides = [1, 1, 1]} : vector<2x32x32xf32> to vector<1x32x32xf32>
    %349 = vector.shape_cast %348 : vector<1x32x32xf32> to vector<32x32xf32>
    %cst_91 = arith.constant 0.000000e+00 : f32
    %350 = vector.broadcast %cst_91 : f32 to vector<16x32xf32>
    %351 = vector.extract_strided_slice %345 {offsets = [0, 0], sizes = [16, 8], strides = [1, 1]} : vector<16x32xf32> to vector<16x8xf32>
    %352 = vector.extract_strided_slice %346 {offsets = [0, 0], sizes = [16, 8], strides = [1, 1]} : vector<16x32xf32> to vector<16x8xf32>
    %cst_92 = arith.constant dense<0.000000e+00> : vector<16x16xf32>
    %353 = tpu.matmul %351, %352, %cst_92 {dimension_numbers = #tpu.dot_dimension_numbers<[1], [1], [0], [0], [0, 0, 1, 0], [], []>} : vector<16x8xf32>, vector<16x8xf32>, vector<16x16xf32> -> vector<16x16xf32>
    %354 = arith.addf %353, %2 : vector<16x16xf32>
    %cst_93 = arith.constant dense<0xFF800000> : vector<16xf32>
    %355 = vector.multi_reduction <maximumf>, %354, %cst_93 [1] : vector<16x16xf32> to vector<16xf32>
    %356 = vector.shape_cast %355 : vector<16xf32> to vector<16x1xf32>
    %357 = vector.broadcast %356 : vector<16x1xf32> to vector<16x16xf32>
    %358 = arith.subf %354, %357 : vector<16x16xf32>
    %359 = math.exp %358 : vector<16x16xf32>
    %cst_94 = arith.constant dense<0.000000e+00> : vector<16xf32>
    %360 = vector.multi_reduction <add>, %359, %cst_94 [1] : vector<16x16xf32> to vector<16xf32>
    %361 = vector.shape_cast %360 : vector<16xf32> to vector<16x1xf32>
    %362 = tpu.reciprocal %361 {approx = true} : vector<16x1xf32> -> vector<16x1xf32>
    %363 = vector.broadcast %362 : vector<16x1xf32> to vector<16x16xf32>
    %364 = arith.mulf %359, %363 : vector<16x16xf32>
    %365 = vector.extract_strided_slice %347 {offsets = [0, 0], sizes = [16, 8], strides = [1, 1]} : vector<16x32xf32> to vector<16x8xf32>
    %cst_95 = arith.constant dense<0.000000e+00> : vector<16x8xf32>
    %366 = tpu.matmul %364, %365, %cst_95 {dimension_numbers = #tpu.dot_dimension_numbers<[1], [0], [0], [1], [0, 0, 1, 1], [], []>} : vector<16x16xf32>, vector<16x8xf32>, vector<16x8xf32> -> vector<16x8xf32>
    %367 = vector.extract_strided_slice %349 {offsets = [0, 0], sizes = [8, 32], strides = [1, 1]} : vector<32x32xf32> to vector<8x32xf32>
    %cst_96 = arith.constant dense<0.000000e+00> : vector<16x32xf32>
    %368 = tpu.matmul %366, %367, %cst_96 {dimension_numbers = #tpu.dot_dimension_numbers<[1], [0], [0], [1], [0, 0, 1, 1], [], []>} : vector<16x8xf32>, vector<8x32xf32>, vector<16x32xf32> -> vector<16x32xf32>
    %369 = arith.addf %350, %368 : vector<16x32xf32>
    %370 = vector.extract_strided_slice %345 {offsets = [0, 8], sizes = [16, 8], strides = [1, 1]} : vector<16x32xf32> to vector<16x8xf32>
    %371 = vector.extract_strided_slice %346 {offsets = [0, 8], sizes = [16, 8], strides = [1, 1]} : vector<16x32xf32> to vector<16x8xf32>
    %cst_97 = arith.constant dense<0.000000e+00> : vector<16x16xf32>
    %372 = tpu.matmul %370, %371, %cst_97 {dimension_numbers = #tpu.dot_dimension_numbers<[1], [1], [0], [0], [0, 0, 1, 0], [], []>} : vector<16x8xf32>, vector<16x8xf32>, vector<16x16xf32> -> vector<16x16xf32>
    %373 = arith.addf %372, %2 : vector<16x16xf32>
    %cst_98 = arith.constant dense<0xFF800000> : vector<16xf32>
    %374 = vector.multi_reduction <maximumf>, %373, %cst_98 [1] : vector<16x16xf32> to vector<16xf32>
    %375 = vector.shape_cast %374 : vector<16xf32> to vector<16x1xf32>
    %376 = vector.broadcast %375 : vector<16x1xf32> to vector<16x16xf32>
    %377 = arith.subf %373, %376 : vector<16x16xf32>
    %378 = math.exp %377 : vector<16x16xf32>
    %cst_99 = arith.constant dense<0.000000e+00> : vector<16xf32>
    %379 = vector.multi_reduction <add>, %378, %cst_99 [1] : vector<16x16xf32> to vector<16xf32>
    %380 = vector.shape_cast %379 : vector<16xf32> to vector<16x1xf32>
    %381 = tpu.reciprocal %380 {approx = true} : vector<16x1xf32> -> vector<16x1xf32>
    %382 = vector.broadcast %381 : vector<16x1xf32> to vector<16x16xf32>
    %383 = arith.mulf %378, %382 : vector<16x16xf32>
    %384 = vector.extract_strided_slice %347 {offsets = [0, 8], sizes = [16, 8], strides = [1, 1]} : vector<16x32xf32> to vector<16x8xf32>
    %cst_100 = arith.constant dense<0.000000e+00> : vector<16x8xf32>
    %385 = tpu.matmul %383, %384, %cst_100 {dimension_numbers = #tpu.dot_dimension_numbers<[1], [0], [0], [1], [0, 0, 1, 1], [], []>} : vector<16x16xf32>, vector<16x8xf32>, vector<16x8xf32> -> vector<16x8xf32>
    %386 = vector.extract_strided_slice %349 {offsets = [8, 0], sizes = [8, 32], strides = [1, 1]} : vector<32x32xf32> to vector<8x32xf32>
    %cst_101 = arith.constant dense<0.000000e+00> : vector<16x32xf32>
    %387 = tpu.matmul %385, %386, %cst_101 {dimension_numbers = #tpu.dot_dimension_numbers<[1], [0], [0], [1], [0, 0, 1, 1], [], []>} : vector<16x8xf32>, vector<8x32xf32>, vector<16x32xf32> -> vector<16x32xf32>
    %388 = arith.addf %369, %387 : vector<16x32xf32>
    %389 = vector.extract_strided_slice %345 {offsets = [0, 16], sizes = [16, 8], strides = [1, 1]} : vector<16x32xf32> to vector<16x8xf32>
    %390 = vector.extract_strided_slice %346 {offsets = [0, 16], sizes = [16, 8], strides = [1, 1]} : vector<16x32xf32> to vector<16x8xf32>
    %cst_102 = arith.constant dense<0.000000e+00> : vector<16x16xf32>
    %391 = tpu.matmul %389, %390, %cst_102 {dimension_numbers = #tpu.dot_dimension_numbers<[1], [1], [0], [0], [0, 0, 1, 0], [], []>} : vector<16x8xf32>, vector<16x8xf32>, vector<16x16xf32> -> vector<16x16xf32>
    %392 = arith.addf %391, %2 : vector<16x16xf32>
    %cst_103 = arith.constant dense<0xFF800000> : vector<16xf32>
    %393 = vector.multi_reduction <maximumf>, %392, %cst_103 [1] : vector<16x16xf32> to vector<16xf32>
    %394 = vector.shape_cast %393 : vector<16xf32> to vector<16x1xf32>
    %395 = vector.broadcast %394 : vector<16x1xf32> to vector<16x16xf32>
    %396 = arith.subf %392, %395 : vector<16x16xf32>
    %397 = math.exp %396 : vector<16x16xf32>
    %cst_104 = arith.constant dense<0.000000e+00> : vector<16xf32>
    %398 = vector.multi_reduction <add>, %397, %cst_104 [1] : vector<16x16xf32> to vector<16xf32>
    %399 = vector.shape_cast %398 : vector<16xf32> to vector<16x1xf32>
    %400 = tpu.reciprocal %399 {approx = true} : vector<16x1xf32> -> vector<16x1xf32>
    %401 = vector.broadcast %400 : vector<16x1xf32> to vector<16x16xf32>
    %402 = arith.mulf %397, %401 : vector<16x16xf32>
    %403 = vector.extract_strided_slice %347 {offsets = [0, 16], sizes = [16, 8], strides = [1, 1]} : vector<16x32xf32> to vector<16x8xf32>
    %cst_105 = arith.constant dense<0.000000e+00> : vector<16x8xf32>
    %404 = tpu.matmul %402, %403, %cst_105 {dimension_numbers = #tpu.dot_dimension_numbers<[1], [0], [0], [1], [0, 0, 1, 1], [], []>} : vector<16x16xf32>, vector<16x8xf32>, vector<16x8xf32> -> vector<16x8xf32>
    %405 = vector.extract_strided_slice %349 {offsets = [16, 0], sizes = [8, 32], strides = [1, 1]} : vector<32x32xf32> to vector<8x32xf32>
    %cst_106 = arith.constant dense<0.000000e+00> : vector<16x32xf32>
    %406 = tpu.matmul %404, %405, %cst_106 {dimension_numbers = #tpu.dot_dimension_numbers<[1], [0], [0], [1], [0, 0, 1, 1], [], []>} : vector<16x8xf32>, vector<8x32xf32>, vector<16x32xf32> -> vector<16x32xf32>
    %407 = arith.addf %388, %406 : vector<16x32xf32>
    %408 = vector.extract_strided_slice %345 {offsets = [0, 24], sizes = [16, 8], strides = [1, 1]} : vector<16x32xf32> to vector<16x8xf32>
    %409 = vector.extract_strided_slice %346 {offsets = [0, 24], sizes = [16, 8], strides = [1, 1]} : vector<16x32xf32> to vector<16x8xf32>
    %cst_107 = arith.constant dense<0.000000e+00> : vector<16x16xf32>
    %410 = tpu.matmul %408, %409, %cst_107 {dimension_numbers = #tpu.dot_dimension_numbers<[1], [1], [0], [0], [0, 0, 1, 0], [], []>} : vector<16x8xf32>, vector<16x8xf32>, vector<16x16xf32> -> vector<16x16xf32>
    %411 = arith.addf %410, %2 : vector<16x16xf32>
    %cst_108 = arith.constant dense<0xFF800000> : vector<16xf32>
    %412 = vector.multi_reduction <maximumf>, %411, %cst_108 [1] : vector<16x16xf32> to vector<16xf32>
    %413 = vector.shape_cast %412 : vector<16xf32> to vector<16x1xf32>
    %414 = vector.broadcast %413 : vector<16x1xf32> to vector<16x16xf32>
    %415 = arith.subf %411, %414 : vector<16x16xf32>
    %416 = math.exp %415 : vector<16x16xf32>
    %cst_109 = arith.constant dense<0.000000e+00> : vector<16xf32>
    %417 = vector.multi_reduction <add>, %416, %cst_109 [1] : vector<16x16xf32> to vector<16xf32>
    %418 = vector.shape_cast %417 : vector<16xf32> to vector<16x1xf32>
    %419 = tpu.reciprocal %418 {approx = true} : vector<16x1xf32> -> vector<16x1xf32>
    %420 = vector.broadcast %419 : vector<16x1xf32> to vector<16x16xf32>
    %421 = arith.mulf %416, %420 : vector<16x16xf32>
    %422 = vector.extract_strided_slice %347 {offsets = [0, 24], sizes = [16, 8], strides = [1, 1]} : vector<16x32xf32> to vector<16x8xf32>
    %cst_110 = arith.constant dense<0.000000e+00> : vector<16x8xf32>
    %423 = tpu.matmul %421, %422, %cst_110 {dimension_numbers = #tpu.dot_dimension_numbers<[1], [0], [0], [1], [0, 0, 1, 1], [], []>} : vector<16x16xf32>, vector<16x8xf32>, vector<16x8xf32> -> vector<16x8xf32>
    %424 = vector.extract_strided_slice %349 {offsets = [24, 0], sizes = [8, 32], strides = [1, 1]} : vector<32x32xf32> to vector<8x32xf32>
    %cst_111 = arith.constant dense<0.000000e+00> : vector<16x32xf32>
    %425 = tpu.matmul %423, %424, %cst_111 {dimension_numbers = #tpu.dot_dimension_numbers<[1], [0], [0], [1], [0, 0, 1, 1], [], []>} : vector<16x8xf32>, vector<8x32xf32>, vector<16x32xf32> -> vector<16x32xf32>
    %426 = arith.addf %407, %425 : vector<16x32xf32>
    %427 = arith.addf %308, %426 : vector<16x32xf32>
    %428 = vector.extract_strided_slice %8 {offsets = [0, 96], sizes = [1, 32], strides = [1, 1]} : vector<2x128xf32> to vector<1x32xf32>
    %429 = vector.shape_cast %428 : vector<1x32xf32> to vector<32xf32>
    %430 = vector.shape_cast %429 : vector<32xf32> to vector<1x32xf32>
    %431 = vector.broadcast %430 : vector<1x32xf32> to vector<16x32xf32>
    %432 = arith.addf %427, %431 : vector<16x32xf32>
    %433 = vector.extract_strided_slice %10 {offsets = [1, 0], sizes = [1, 32], strides = [1, 1]} : vector<8x32xf32> to vector<1x32xf32>
    %434 = vector.shape_cast %433 : vector<1x32xf32> to vector<32xf32>
    %435 = vector.extract_strided_slice %10 {offsets = [5, 0], sizes = [1, 32], strides = [1, 1]} : vector<8x32xf32> to vector<1x32xf32>
    %436 = vector.shape_cast %435 : vector<1x32xf32> to vector<32xf32>
    %cst_112 = arith.constant dense<0.000000e+00> : vector<16xf32>
    %437 = vector.multi_reduction <add>, %432, %cst_112 [1] : vector<16x32xf32> to vector<16xf32>
    %438 = vector.shape_cast %437 : vector<16xf32> to vector<16x1xf32>
    %cst_113 = arith.constant 3.200000e+01 : f32
    %439 = vector.broadcast %cst_113 : f32 to vector<16x1xf32>
    %440 = arith.divf %438, %439 : vector<16x1xf32>
    %441 = vector.broadcast %440 : vector<16x1xf32> to vector<16x32xf32>
    %442 = arith.subf %432, %441 : vector<16x32xf32>
    %443 = arith.mulf %442, %442 : vector<16x32xf32>
    %cst_114 = arith.constant dense<0.000000e+00> : vector<16xf32>
    %444 = vector.multi_reduction <add>, %443, %cst_114 [1] : vector<16x32xf32> to vector<16xf32>
    %445 = vector.shape_cast %444 : vector<16xf32> to vector<16x1xf32>
    %cst_115 = arith.constant 3.200000e+01 : f32
    %446 = vector.broadcast %cst_115 : f32 to vector<16x1xf32>
    %447 = arith.divf %445, %446 : vector<16x1xf32>
    %448 = vector.broadcast %440 : vector<16x1xf32> to vector<16x32xf32>
    %449 = arith.subf %432, %448 : vector<16x32xf32>
    %cst_116 = arith.constant 9.99999974E-6 : f32
    %450 = vector.broadcast %cst_116 : f32 to vector<16x1xf32>
    %451 = arith.addf %447, %450 : vector<16x1xf32>
    %452 = math.rsqrt %451 : vector<16x1xf32>
    %453 = vector.broadcast %452 : vector<16x1xf32> to vector<16x32xf32>
    %454 = arith.mulf %449, %453 : vector<16x32xf32>
    %455 = vector.shape_cast %434 : vector<32xf32> to vector<1x32xf32>
    %456 = vector.broadcast %455 : vector<1x32xf32> to vector<16x32xf32>
    %457 = arith.mulf %454, %456 : vector<16x32xf32>
    %458 = vector.shape_cast %436 : vector<32xf32> to vector<1x32xf32>
    %459 = vector.broadcast %458 : vector<1x32xf32> to vector<16x32xf32>
    %460 = arith.addf %457, %459 : vector<16x32xf32>
    %461 = vector.extract_strided_slice %4 {offsets = [1, 0, 0], sizes = [1, 32, 32], strides = [1, 1, 1]} : vector<2x32x96xf32> to vector<1x32x32xf32>
    %462 = vector.shape_cast %461 : vector<1x32x32xf32> to vector<32x32xf32>
    %cst_117 = arith.constant dense<0.000000e+00> : vector<16x32xf32>
    %463 = tpu.matmul %460, %462, %cst_117 {dimension_numbers = #tpu.dot_dimension_numbers<[1], [0], [0], [1], [0, 0, 1, 1], [], []>} : vector<16x32xf32>, vector<32x32xf32>, vector<16x32xf32> -> vector<16x32xf32>
    %464 = vector.extract_strided_slice %8 {offsets = [1, 0], sizes = [1, 32], strides = [1, 1]} : vector<2x128xf32> to vector<1x32xf32>
    %465 = vector.shape_cast %464 : vector<1x32xf32> to vector<32xf32>
    %466 = vector.shape_cast %465 : vector<32xf32> to vector<1x32xf32>
    %467 = vector.broadcast %466 : vector<1x32xf32> to vector<16x32xf32>
    %468 = arith.addf %463, %467 : vector<16x32xf32>
    %469 = vector.extract_strided_slice %5 {offsets = [1, 0, 0], sizes = [1, 32, 32], strides = [1, 1, 1]} : vector<2x32x32xf32> to vector<1x32x32xf32>
    %470 = vector.shape_cast %469 : vector<1x32x32xf32> to vector<32x32xf32>
    %cst_118 = arith.constant 0.000000e+00 : f32
    %471 = vector.broadcast %cst_118 : f32 to vector<16x32xf32>
    %472 = vector.extract_strided_slice %468 {offsets = [0, 0], sizes = [16, 8], strides = [1, 1]} : vector<16x32xf32> to vector<16x8xf32>
    %473 = vector.extract_strided_slice %23 {offsets = [0, 0], sizes = [16, 8], strides = [1, 1]} : vector<16x32xf32> to vector<16x8xf32>
    %cst_119 = arith.constant dense<0.000000e+00> : vector<16x16xf32>
    %474 = tpu.matmul %472, %473, %cst_119 {dimension_numbers = #tpu.dot_dimension_numbers<[1], [1], [0], [0], [0, 0, 1, 0], [], []>} : vector<16x8xf32>, vector<16x8xf32>, vector<16x16xf32> -> vector<16x16xf32>
    %475 = arith.addf %474, %3 : vector<16x16xf32>
    %cst_120 = arith.constant dense<0xFF800000> : vector<16xf32>
    %476 = vector.multi_reduction <maximumf>, %475, %cst_120 [1] : vector<16x16xf32> to vector<16xf32>
    %477 = vector.shape_cast %476 : vector<16xf32> to vector<16x1xf32>
    %478 = vector.broadcast %477 : vector<16x1xf32> to vector<16x16xf32>
    %479 = arith.subf %475, %478 : vector<16x16xf32>
    %480 = math.exp %479 : vector<16x16xf32>
    %cst_121 = arith.constant dense<0.000000e+00> : vector<16xf32>
    %481 = vector.multi_reduction <add>, %480, %cst_121 [1] : vector<16x16xf32> to vector<16xf32>
    %482 = vector.shape_cast %481 : vector<16xf32> to vector<16x1xf32>
    %483 = tpu.reciprocal %482 {approx = true} : vector<16x1xf32> -> vector<16x1xf32>
    %484 = vector.broadcast %483 : vector<16x1xf32> to vector<16x16xf32>
    %485 = arith.mulf %480, %484 : vector<16x16xf32>
    %486 = vector.extract_strided_slice %24 {offsets = [0, 0], sizes = [16, 8], strides = [1, 1]} : vector<16x32xf32> to vector<16x8xf32>
    %cst_122 = arith.constant dense<0.000000e+00> : vector<16x8xf32>
    %487 = tpu.matmul %485, %486, %cst_122 {dimension_numbers = #tpu.dot_dimension_numbers<[1], [0], [0], [1], [0, 0, 1, 1], [], []>} : vector<16x16xf32>, vector<16x8xf32>, vector<16x8xf32> -> vector<16x8xf32>
    %488 = vector.extract_strided_slice %470 {offsets = [0, 0], sizes = [8, 32], strides = [1, 1]} : vector<32x32xf32> to vector<8x32xf32>
    %cst_123 = arith.constant dense<0.000000e+00> : vector<16x32xf32>
    %489 = tpu.matmul %487, %488, %cst_123 {dimension_numbers = #tpu.dot_dimension_numbers<[1], [0], [0], [1], [0, 0, 1, 1], [], []>} : vector<16x8xf32>, vector<8x32xf32>, vector<16x32xf32> -> vector<16x32xf32>
    %490 = arith.addf %471, %489 : vector<16x32xf32>
    %491 = vector.extract_strided_slice %468 {offsets = [0, 8], sizes = [16, 8], strides = [1, 1]} : vector<16x32xf32> to vector<16x8xf32>
    %492 = vector.extract_strided_slice %23 {offsets = [0, 8], sizes = [16, 8], strides = [1, 1]} : vector<16x32xf32> to vector<16x8xf32>
    %cst_124 = arith.constant dense<0.000000e+00> : vector<16x16xf32>
    %493 = tpu.matmul %491, %492, %cst_124 {dimension_numbers = #tpu.dot_dimension_numbers<[1], [1], [0], [0], [0, 0, 1, 0], [], []>} : vector<16x8xf32>, vector<16x8xf32>, vector<16x16xf32> -> vector<16x16xf32>
    %494 = arith.addf %493, %3 : vector<16x16xf32>
    %cst_125 = arith.constant dense<0xFF800000> : vector<16xf32>
    %495 = vector.multi_reduction <maximumf>, %494, %cst_125 [1] : vector<16x16xf32> to vector<16xf32>
    %496 = vector.shape_cast %495 : vector<16xf32> to vector<16x1xf32>
    %497 = vector.broadcast %496 : vector<16x1xf32> to vector<16x16xf32>
    %498 = arith.subf %494, %497 : vector<16x16xf32>
    %499 = math.exp %498 : vector<16x16xf32>
    %cst_126 = arith.constant dense<0.000000e+00> : vector<16xf32>
    %500 = vector.multi_reduction <add>, %499, %cst_126 [1] : vector<16x16xf32> to vector<16xf32>
    %501 = vector.shape_cast %500 : vector<16xf32> to vector<16x1xf32>
    %502 = tpu.reciprocal %501 {approx = true} : vector<16x1xf32> -> vector<16x1xf32>
    %503 = vector.broadcast %502 : vector<16x1xf32> to vector<16x16xf32>
    %504 = arith.mulf %499, %503 : vector<16x16xf32>
    %505 = vector.extract_strided_slice %24 {offsets = [0, 8], sizes = [16, 8], strides = [1, 1]} : vector<16x32xf32> to vector<16x8xf32>
    %cst_127 = arith.constant dense<0.000000e+00> : vector<16x8xf32>
    %506 = tpu.matmul %504, %505, %cst_127 {dimension_numbers = #tpu.dot_dimension_numbers<[1], [0], [0], [1], [0, 0, 1, 1], [], []>} : vector<16x16xf32>, vector<16x8xf32>, vector<16x8xf32> -> vector<16x8xf32>
    %507 = vector.extract_strided_slice %470 {offsets = [8, 0], sizes = [8, 32], strides = [1, 1]} : vector<32x32xf32> to vector<8x32xf32>
    %cst_128 = arith.constant dense<0.000000e+00> : vector<16x32xf32>
    %508 = tpu.matmul %506, %507, %cst_128 {dimension_numbers = #tpu.dot_dimension_numbers<[1], [0], [0], [1], [0, 0, 1, 1], [], []>} : vector<16x8xf32>, vector<8x32xf32>, vector<16x32xf32> -> vector<16x32xf32>
    %509 = arith.addf %490, %508 : vector<16x32xf32>
    %510 = vector.extract_strided_slice %468 {offsets = [0, 16], sizes = [16, 8], strides = [1, 1]} : vector<16x32xf32> to vector<16x8xf32>
    %511 = vector.extract_strided_slice %23 {offsets = [0, 16], sizes = [16, 8], strides = [1, 1]} : vector<16x32xf32> to vector<16x8xf32>
    %cst_129 = arith.constant dense<0.000000e+00> : vector<16x16xf32>
    %512 = tpu.matmul %510, %511, %cst_129 {dimension_numbers = #tpu.dot_dimension_numbers<[1], [1], [0], [0], [0, 0, 1, 0], [], []>} : vector<16x8xf32>, vector<16x8xf32>, vector<16x16xf32> -> vector<16x16xf32>
    %513 = arith.addf %512, %3 : vector<16x16xf32>
    %cst_130 = arith.constant dense<0xFF800000> : vector<16xf32>
    %514 = vector.multi_reduction <maximumf>, %513, %cst_130 [1] : vector<16x16xf32> to vector<16xf32>
    %515 = vector.shape_cast %514 : vector<16xf32> to vector<16x1xf32>
    %516 = vector.broadcast %515 : vector<16x1xf32> to vector<16x16xf32>
    %517 = arith.subf %513, %516 : vector<16x16xf32>
    %518 = math.exp %517 : vector<16x16xf32>
    %cst_131 = arith.constant dense<0.000000e+00> : vector<16xf32>
    %519 = vector.multi_reduction <add>, %518, %cst_131 [1] : vector<16x16xf32> to vector<16xf32>
    %520 = vector.shape_cast %519 : vector<16xf32> to vector<16x1xf32>
    %521 = tpu.reciprocal %520 {approx = true} : vector<16x1xf32> -> vector<16x1xf32>
    %522 = vector.broadcast %521 : vector<16x1xf32> to vector<16x16xf32>
    %523 = arith.mulf %518, %522 : vector<16x16xf32>
    %524 = vector.extract_strided_slice %24 {offsets = [0, 16], sizes = [16, 8], strides = [1, 1]} : vector<16x32xf32> to vector<16x8xf32>
    %cst_132 = arith.constant dense<0.000000e+00> : vector<16x8xf32>
    %525 = tpu.matmul %523, %524, %cst_132 {dimension_numbers = #tpu.dot_dimension_numbers<[1], [0], [0], [1], [0, 0, 1, 1], [], []>} : vector<16x16xf32>, vector<16x8xf32>, vector<16x8xf32> -> vector<16x8xf32>
    %526 = vector.extract_strided_slice %470 {offsets = [16, 0], sizes = [8, 32], strides = [1, 1]} : vector<32x32xf32> to vector<8x32xf32>
    %cst_133 = arith.constant dense<0.000000e+00> : vector<16x32xf32>
    %527 = tpu.matmul %525, %526, %cst_133 {dimension_numbers = #tpu.dot_dimension_numbers<[1], [0], [0], [1], [0, 0, 1, 1], [], []>} : vector<16x8xf32>, vector<8x32xf32>, vector<16x32xf32> -> vector<16x32xf32>
    %528 = arith.addf %509, %527 : vector<16x32xf32>
    %529 = vector.extract_strided_slice %468 {offsets = [0, 24], sizes = [16, 8], strides = [1, 1]} : vector<16x32xf32> to vector<16x8xf32>
    %530 = vector.extract_strided_slice %23 {offsets = [0, 24], sizes = [16, 8], strides = [1, 1]} : vector<16x32xf32> to vector<16x8xf32>
    %cst_134 = arith.constant dense<0.000000e+00> : vector<16x16xf32>
    %531 = tpu.matmul %529, %530, %cst_134 {dimension_numbers = #tpu.dot_dimension_numbers<[1], [1], [0], [0], [0, 0, 1, 0], [], []>} : vector<16x8xf32>, vector<16x8xf32>, vector<16x16xf32> -> vector<16x16xf32>
    %532 = arith.addf %531, %3 : vector<16x16xf32>
    %cst_135 = arith.constant dense<0xFF800000> : vector<16xf32>
    %533 = vector.multi_reduction <maximumf>, %532, %cst_135 [1] : vector<16x16xf32> to vector<16xf32>
    %534 = vector.shape_cast %533 : vector<16xf32> to vector<16x1xf32>
    %535 = vector.broadcast %534 : vector<16x1xf32> to vector<16x16xf32>
    %536 = arith.subf %532, %535 : vector<16x16xf32>
    %537 = math.exp %536 : vector<16x16xf32>
    %cst_136 = arith.constant dense<0.000000e+00> : vector<16xf32>
    %538 = vector.multi_reduction <add>, %537, %cst_136 [1] : vector<16x16xf32> to vector<16xf32>
    %539 = vector.shape_cast %538 : vector<16xf32> to vector<16x1xf32>
    %540 = tpu.reciprocal %539 {approx = true} : vector<16x1xf32> -> vector<16x1xf32>
    %541 = vector.broadcast %540 : vector<16x1xf32> to vector<16x16xf32>
    %542 = arith.mulf %537, %541 : vector<16x16xf32>
    %543 = vector.extract_strided_slice %24 {offsets = [0, 24], sizes = [16, 8], strides = [1, 1]} : vector<16x32xf32> to vector<16x8xf32>
    %cst_137 = arith.constant dense<0.000000e+00> : vector<16x8xf32>
    %544 = tpu.matmul %542, %543, %cst_137 {dimension_numbers = #tpu.dot_dimension_numbers<[1], [0], [0], [1], [0, 0, 1, 1], [], []>} : vector<16x16xf32>, vector<16x8xf32>, vector<16x8xf32> -> vector<16x8xf32>
    %545 = vector.extract_strided_slice %470 {offsets = [24, 0], sizes = [8, 32], strides = [1, 1]} : vector<32x32xf32> to vector<8x32xf32>
    %cst_138 = arith.constant dense<0.000000e+00> : vector<16x32xf32>
    %546 = tpu.matmul %544, %545, %cst_138 {dimension_numbers = #tpu.dot_dimension_numbers<[1], [0], [0], [1], [0, 0, 1, 1], [], []>} : vector<16x8xf32>, vector<8x32xf32>, vector<16x32xf32> -> vector<16x32xf32>
    %547 = arith.addf %528, %546 : vector<16x32xf32>
    %548 = arith.addf %432, %547 : vector<16x32xf32>
    %549 = vector.extract_strided_slice %8 {offsets = [1, 96], sizes = [1, 32], strides = [1, 1]} : vector<2x128xf32> to vector<1x32xf32>
    %550 = vector.shape_cast %549 : vector<1x32xf32> to vector<32xf32>
    %551 = vector.shape_cast %550 : vector<32xf32> to vector<1x32xf32>
    %552 = vector.broadcast %551 : vector<1x32xf32> to vector<16x32xf32>
    %553 = arith.addf %548, %552 : vector<16x32xf32>
    %554 = vector.extract_strided_slice %10 {offsets = [2, 0], sizes = [1, 32], strides = [1, 1]} : vector<8x32xf32> to vector<1x32xf32>
    %555 = vector.shape_cast %554 : vector<1x32xf32> to vector<32xf32>
    %556 = vector.extract_strided_slice %10 {offsets = [6, 0], sizes = [1, 32], strides = [1, 1]} : vector<8x32xf32> to vector<1x32xf32>
    %557 = vector.shape_cast %556 : vector<1x32xf32> to vector<32xf32>
    %cst_139 = arith.constant dense<0.000000e+00> : vector<16xf32>
    %558 = vector.multi_reduction <add>, %553, %cst_139 [1] : vector<16x32xf32> to vector<16xf32>
    %559 = vector.shape_cast %558 : vector<16xf32> to vector<16x1xf32>
    %cst_140 = arith.constant 3.200000e+01 : f32
    %560 = vector.broadcast %cst_140 : f32 to vector<16x1xf32>
    %561 = arith.divf %559, %560 : vector<16x1xf32>
    %562 = vector.broadcast %561 : vector<16x1xf32> to vector<16x32xf32>
    %563 = arith.subf %553, %562 : vector<16x32xf32>
    %564 = arith.mulf %563, %563 : vector<16x32xf32>
    %cst_141 = arith.constant dense<0.000000e+00> : vector<16xf32>
    %565 = vector.multi_reduction <add>, %564, %cst_141 [1] : vector<16x32xf32> to vector<16xf32>
    %566 = vector.shape_cast %565 : vector<16xf32> to vector<16x1xf32>
    %cst_142 = arith.constant 3.200000e+01 : f32
    %567 = vector.broadcast %cst_142 : f32 to vector<16x1xf32>
    %568 = arith.divf %566, %567 : vector<16x1xf32>
    %569 = vector.broadcast %561 : vector<16x1xf32> to vector<16x32xf32>
    %570 = arith.subf %553, %569 : vector<16x32xf32>
    %cst_143 = arith.constant 9.99999974E-6 : f32
    %571 = vector.broadcast %cst_143 : f32 to vector<16x1xf32>
    %572 = arith.addf %568, %571 : vector<16x1xf32>
    %573 = math.rsqrt %572 : vector<16x1xf32>
    %574 = vector.broadcast %573 : vector<16x1xf32> to vector<16x32xf32>
    %575 = arith.mulf %570, %574 : vector<16x32xf32>
    %576 = vector.shape_cast %555 : vector<32xf32> to vector<1x32xf32>
    %577 = vector.broadcast %576 : vector<1x32xf32> to vector<16x32xf32>
    %578 = arith.mulf %575, %577 : vector<16x32xf32>
    %579 = vector.shape_cast %557 : vector<32xf32> to vector<1x32xf32>
    %580 = vector.broadcast %579 : vector<1x32xf32> to vector<16x32xf32>
    %581 = arith.addf %578, %580 : vector<16x32xf32>
    %cst_144 = arith.constant dense<0.000000e+00> : vector<16x64xf32>
    %582 = tpu.matmul %581, %6, %cst_144 {dimension_numbers = #tpu.dot_dimension_numbers<[1], [0], [0], [1], [0, 0, 1, 1], [], []>} : vector<16x32xf32>, vector<32x64xf32>, vector<16x64xf32> -> vector<16x64xf32>
    %583 = vector.shape_cast %12 : vector<64xf32> to vector<1x64xf32>
    %584 = vector.broadcast %583 : vector<1x64xf32> to vector<16x64xf32>
    %585 = arith.addf %582, %584 : vector<16x64xf32>
    %cst_145 = arith.constant 0.000000e+00 : f32
    %586 = vector.broadcast %cst_145 : f32 to vector<16x64xf32>
    %587 = arith.maximumf %585, %586 : vector<16x64xf32>
    %cst_146 = arith.constant dense<0.000000e+00> : vector<16x32xf32>
    %588 = tpu.matmul %587, %7, %cst_146 {dimension_numbers = #tpu.dot_dimension_numbers<[1], [0], [0], [1], [0, 0, 1, 1], [], []>} : vector<16x64xf32>, vector<64x32xf32>, vector<16x32xf32> -> vector<16x32xf32>
    %589 = arith.addf %553, %588 : vector<16x32xf32>
    %590 = vector.shape_cast %14 : vector<32xf32> to vector<1x32xf32>
    %591 = vector.broadcast %590 : vector<1x32xf32> to vector<16x32xf32>
    %592 = arith.addf %589, %591 : vector<16x32xf32>
    %593 = vector.extract_strided_slice %10 {offsets = [3, 0], sizes = [1, 32], strides = [1, 1]} : vector<8x32xf32> to vector<1x32xf32>
    %594 = vector.shape_cast %593 : vector<1x32xf32> to vector<32xf32>
    %595 = vector.extract_strided_slice %10 {offsets = [7, 0], sizes = [1, 32], strides = [1, 1]} : vector<8x32xf32> to vector<1x32xf32>
    %596 = vector.shape_cast %595 : vector<1x32xf32> to vector<32xf32>
    %cst_147 = arith.constant dense<0.000000e+00> : vector<16xf32>
    %597 = vector.multi_reduction <add>, %592, %cst_147 [1] : vector<16x32xf32> to vector<16xf32>
    %598 = vector.shape_cast %597 : vector<16xf32> to vector<16x1xf32>
    %cst_148 = arith.constant 3.200000e+01 : f32
    %599 = vector.broadcast %cst_148 : f32 to vector<16x1xf32>
    %600 = arith.divf %598, %599 : vector<16x1xf32>
    %601 = vector.broadcast %600 : vector<16x1xf32> to vector<16x32xf32>
    %602 = arith.subf %592, %601 : vector<16x32xf32>
    %603 = arith.mulf %602, %602 : vector<16x32xf32>
    %cst_149 = arith.constant dense<0.000000e+00> : vector<16xf32>
    %604 = vector.multi_reduction <add>, %603, %cst_149 [1] : vector<16x32xf32> to vector<16xf32>
    %605 = vector.shape_cast %604 : vector<16xf32> to vector<16x1xf32>
    %cst_150 = arith.constant 3.200000e+01 : f32
    %606 = vector.broadcast %cst_150 : f32 to vector<16x1xf32>
    %607 = arith.divf %605, %606 : vector<16x1xf32>
    %608 = vector.broadcast %600 : vector<16x1xf32> to vector<16x32xf32>
    %609 = arith.subf %592, %608 : vector<16x32xf32>
    %cst_151 = arith.constant 9.99999974E-6 : f32
    %610 = vector.broadcast %cst_151 : f32 to vector<16x1xf32>
    %611 = arith.addf %607, %610 : vector<16x1xf32>
    %612 = math.rsqrt %611 : vector<16x1xf32>
    %613 = vector.broadcast %612 : vector<16x1xf32> to vector<16x32xf32>
    %614 = arith.mulf %609, %613 : vector<16x32xf32>
    %615 = vector.shape_cast %594 : vector<32xf32> to vector<1x32xf32>
    %616 = vector.broadcast %615 : vector<1x32xf32> to vector<16x32xf32>
    %617 = arith.mulf %614, %616 : vector<16x32xf32>
    %618 = vector.shape_cast %596 : vector<32xf32> to vector<1x32xf32>
    %619 = vector.broadcast %618 : vector<1x32xf32> to vector<16x32xf32>
    %620 = arith.addf %617, %619 : vector<16x32xf32>
    %c0_152 = arith.constant 0 : index
    %c0_153 = arith.constant 0 : index
    %621 = vector.load %arg11[%c0_152, %c0_153] : memref<16x32xf32, #tpu.memory_space<vmem>>, vector<16x32xf32>
    tpu.vector_store %arg11[%c0_152, %c0_153], %620 {strides = array<i32>} : memref<16x32xf32, #tpu.memory_space<vmem>>, vector<16x32xf32>,
    return
  }
}

</mosaic_0001>

<llo_original>
// kernel: tpu_custom_call.1
$region0: #{tpu_custom_call.1}
  #allocation0 [shape = 'u32[]', space=smem, size = 0x4, offset = 0x4, fixed_abs, tag = 'smem constant byte address 0x4 - core index']
  #allocation1 [shape = 'u32[144,128]{1,0:T(1,128)}', space=vmem, size = 0x12000, scoped, tag = 'internal scratch']
  %s0 = inlined_call_operand.hbm [shape: f32[16,32], index: 0, kind: input, shape index: {}]
  %s1 = inlined_call_operand.hbm [shape: f32[16,32], index: 1, kind: input, shape index: {}]
  %s2 = inlined_call_operand.hbm [shape: f32[16,16], index: 2, kind: input, shape index: {}]
  %s3 = inlined_call_operand.hbm [shape: f32[16,16], index: 3, kind: input, shape index: {}]
  %s4 = inlined_call_operand.vmem [shape: f32[2,32,96], index: 4, kind: input, shape index: {}]
  %s5 = inlined_call_operand.hbm [shape: f32[2,32,32], index: 5, kind: input, shape index: {}]
  %s6 = inlined_call_operand.vmem [shape: f32[32,64], index: 6, kind: input, shape index: {}]
  %s7 = inlined_call_operand.vmem [shape: f32[64,32], index: 7, kind: input, shape index: {}]
  %s8 = inlined_call_operand.vmem [shape: f32[2,128], index: 8, kind: input, shape index: {}]
  %s9 = inlined_call_operand.vmem [shape: f32[1,96], index: 9, kind: input, shape index: {}]
  %s10 = inlined_call_operand.vmem [shape: f32[8,32], index: 10, kind: input, shape index: {}]
  %s11 = inlined_call_operand.hbm [shape: f32[16,32], index: 11, kind: output, shape index: {}]
  %s12 = sld [smem:[#allocation0]]
  $region74: #{tpu_custom_call.1} parent=0
    _
  %s14 = ssub.s32 1, %s12
  %s15 = scalar_select 0, %s14, %s12
  $region1: #{tpu_custom_call.1} parent=0
    #allocation2 [shape = 'u8[8192]{0}', space=vmem, size = 0x2000, scoped, tag = 'input window, operand 0, single buffered']
    #allocation3 [shape = 's32[1]{0}', space=sflag, size = 0x4, scoped, tag = 'scoped memory for tpu_custom_call.1']
    #allocation4 [shape = 's32[1]{0}', space=sflag, size = 0x4, scoped, tag = 'scoped memory for tpu_custom_call.1']
    #allocation5 [shape = 'u8[8192]{0}', space=vmem, size = 0x2000, scoped, tag = 'input window, operand 1, single buffered']
    #allocation6 [shape = 's32[1]{0}', space=sflag, size = 0x4, scoped, tag = 'scoped memory for tpu_custom_call.1']
    #allocation7 [shape = 'u8[8192]{0}', space=vmem, size = 0x2000, scoped, tag = 'input window, operand 2, single buffered']
    #allocation8 [shape = 'u8[8192]{0}', space=vmem, size = 0x2000, scoped, tag = 'input window, operand 3, single buffered']
    #allocation9 [shape = 's32[1]{0}', space=sflag, size = 0x4, scoped, tag = 'scoped memory for tpu_custom_call.1']
    #allocation10 [shape = 'u8[32768]{0}', space=vmem, size = 0x8000, scoped, tag = 'input window, operand 5, single buffered']
    #allocation11 [shape = 'u8[8192]{0}', space=vmem, size = 0x2000, scoped, tag = 'output window, operand 0, single buffered']
    %16 = vsyncpa [#allocation3], 0
    %17 = vsyncpa [#allocation6], 0
    %18 = vsyncpa [#allocation9], 0
    %19 = vsyncpa [#allocation4], 0
    // Predicated region
    $region2: #{tpu_custom_call.1} parent=1 // pred_check
      _
    $region3: #{tpu_custom_call.1} parent=1 // pred_check_branch
      %21 = sbr.rel (0) target = $region5
    $region4: #{tpu_custom_call.1} parent=1 // pred_region
      %s23 = ssub.s32 256, 256
      %24 = vsyncadd [#allocation3], %s23
      %s25 = sshll.u32 [#allocation2], 4
      %s26 = int_to_ptr.vmem [resolvable:$true] %s25
      %31 = dma.hbm_to_vmem [thread:$0]  %s0, 256, %s26, [#allocation3], 128, 128, 8
    $region5: #{tpu_custom_call.1} parent=1 // pred_fallthru
      _
    // Predicated region
    $region6: #{tpu_custom_call.1} parent=1 // pred_check
      _
    $region7: #{tpu_custom_call.1} parent=1 // pred_check_branch
      %33 = sbr.rel (0) target = $region9
    $region8: #{tpu_custom_call.1} parent=1 // pred_region
      %s35 = ssub.s32 256, 256
      %36 = vsyncadd [#allocation6], %s35
      %s37 = sshll.u32 [#allocation5], 4
      %s38 = int_to_ptr.vmem [resolvable:$true] %s37
      %43 = dma.hbm_to_vmem [thread:$0]  %s1, 256, %s38, [#allocation6], 128, 128, 8
    $region9: #{tpu_custom_call.1} parent=1 // pred_fallthru
      _
    // Predicated region
    $region10: #{tpu_custom_call.1} parent=1 // pred_check
      _
    $region11: #{tpu_custom_call.1} parent=1 // pred_check_branch
      %45 = sbr.rel (0) target = $region13
    $region12: #{tpu_custom_call.1} parent=1 // pred_region
      %s47 = ssub.s32 256, 256
      %48 = vsyncadd [#allocation6], %s47
      %s49 = sshll.u32 [#allocation7], 4
      %s50 = int_to_ptr.vmem [resolvable:$true] %s49
      %55 = dma.hbm_to_vmem [thread:$0]  %s2, 256, %s50, [#allocation6], 128, 128, 8
    $region13: #{tpu_custom_call.1} parent=1 // pred_fallthru
      _
    // Predicated region
    $region14: #{tpu_custom_call.1} parent=1 // pred_check
      _
    $region15: #{tpu_custom_call.1} parent=1 // pred_check_branch
      %57 = sbr.rel (0) target = $region17
    $region16: #{tpu_custom_call.1} parent=1 // pred_region
      %s59 = ssub.s32 256, 256
      %60 = vsyncadd [#allocation9], %s59
      %s61 = sshll.u32 [#allocation8], 4
      %s62 = int_to_ptr.vmem [resolvable:$true] %s61
      %67 = dma.hbm_to_vmem [thread:$0]  %s3, 256, %s62, [#allocation9], 128, 128, 8
    $region17: #{tpu_custom_call.1} parent=1 // pred_fallthru
      _
    // Predicated region
    $region18: #{tpu_custom_call.1} parent=1 // pred_check
      _
    $region19: #{tpu_custom_call.1} parent=1 // pred_check_branch
      %69 = sbr.rel (0) target = $region21
    $region20: #{tpu_custom_call.1} parent=1 // pred_region
      _
    $region21: #{tpu_custom_call.1} parent=1 // pred_fallthru
      _
    // Predicated region
    $region22: #{tpu_custom_call.1} parent=1 // pred_check
      _
    $region23: #{tpu_custom_call.1} parent=1 // pred_check_branch
      %71 = sbr.rel (0) target = $region25
    $region24: #{tpu_custom_call.1} parent=1 // pred_region
      %s73 = ssub.s32 1024, 1024
      %74 = vsyncadd [#allocation9], %s73
      %s75 = sshll.u32 [#allocation10], 4
      %s76 = int_to_ptr.vmem [resolvable:$true] %s75
      %81 = dma.hbm_to_vmem [thread:$0]  %s5, 1024, %s76, [#allocation9], 128, 128, 8
    $region25: #{tpu_custom_call.1} parent=1 // pred_fallthru
      _
    // Predicated region
    $region26: #{tpu_custom_call.1} parent=1 // pred_check
      _
    $region27: #{tpu_custom_call.1} parent=1 // pred_check_branch
      %83 = sbr.rel (0) target = $region29
    $region28: #{tpu_custom_call.1} parent=1 // pred_region
      _
    $region29: #{tpu_custom_call.1} parent=1 // pred_fallthru
      _
    // Predicated region
    $region30: #{tpu_custom_call.1} parent=1 // pred_check
      _
    $region31: #{tpu_custom_call.1} parent=1 // pred_check_branch
      %85 = sbr.rel (0) target = $region33
    $region32: #{tpu_custom_call.1} parent=1 // pred_region
      _
    $region33: #{tpu_custom_call.1} parent=1 // pred_fallthru
      _
    // Predicated region
    $region34: #{tpu_custom_call.1} parent=1 // pred_check
      _
    $region35: #{tpu_custom_call.1} parent=1 // pred_check_branch
      %87 = sbr.rel (0) target = $region37
    $region36: #{tpu_custom_call.1} parent=1 // pred_region
      _
    $region37: #{tpu_custom_call.1} parent=1 // pred_fallthru
      _
    // Predicated region
    $region38: #{tpu_custom_call.1} parent=1 // pred_check
      _
    $region39: #{tpu_custom_call.1} parent=1 // pred_check_branch
      %89 = sbr.rel (0) target = $region41
    $region40: #{tpu_custom_call.1} parent=1 // pred_region
      _
    $region41: #{tpu_custom_call.1} parent=1 // pred_fallthru
      _
    // Predicated region
    $region42: #{tpu_custom_call.1} parent=1 // pred_check
      _
    $region43: #{tpu_custom_call.1} parent=1 // pred_check_branch
      %91 = sbr.rel (0) target = $region45
    $region44: #{tpu_custom_call.1} parent=1 // pred_region
      _
    $region45: #{tpu_custom_call.1} parent=1 // pred_fallthru
      _
    // Predicated region
    $region46: #{tpu_custom_call.1} parent=1 // pred_check
      _
    $region47: #{tpu_custom_call.1} parent=1 // pred_check_branch
      %93 = sbr.rel (0) target = $region49
    $region48: #{tpu_custom_call.1} parent=1 // pred_region
      %94 = dma.done [#allocation3], 256
    $region49: #{tpu_custom_call.1} parent=1 // pred_fallthru
      _
    // Predicated region
    $region50: #{tpu_custom_call.1} parent=1 // pred_check
      _
    $region51: #{tpu_custom_call.1} parent=1 // pred_check_branch
      %96 = sbr.rel (0) target = $region53
    $region52: #{tpu_custom_call.1} parent=1 // pred_region
      %97 = dma.done [#allocation6], 256
    $region53: #{tpu_custom_call.1} parent=1 // pred_fallthru
      _
    // Predicated region
    $region54: #{tpu_custom_call.1} parent=1 // pred_check
      _
    $region55: #{tpu_custom_call.1} parent=1 // pred_check_branch
      %99 = sbr.rel (0) target = $region57
    $region56: #{tpu_custom_call.1} parent=1 // pred_region
      %100 = dma.done [#allocation6], 256
    $region57: #{tpu_custom_call.1} parent=1 // pred_fallthru
      _
    // Predicated region
    $region58: #{tpu_custom_call.1} parent=1 // pred_check
      _
    $region59: #{tpu_custom_call.1} parent=1 // pred_check_branch
      %102 = sbr.rel (0) target = $region61
    $region60: #{tpu_custom_call.1} parent=1 // pred_region
      %103 = dma.done [#allocation9], 256
    $region61: #{tpu_custom_call.1} parent=1 // pred_fallthru
      _
    // Predicated region
    $region62: #{tpu_custom_call.1} parent=1 // pred_check
      _
    $region63: #{tpu_custom_call.1} parent=1 // pred_check_branch
      %105 = sbr.rel (0) target = $region65
    $region64: #{tpu_custom_call.1} parent=1 // pred_region
      %106 = dma.done [#allocation9], 1024
    $region65: #{tpu_custom_call.1} parent=1 // pred_fallthru
      _
    %v107 = vld [vmem:[#allocation2] sm:$0xff]
    %v108 = vld [vmem:[#allocation2 + $0x8] sm:$0xff]
    %v109 = vld [vmem:[#allocation5] sm:$0xff]
    %v110 = vld [vmem:[#allocation5 + $0x8] sm:$0xff]
    %v111 = vld [vmem:[#allocation7] sm:$0xff]
    %v112 = vld [vmem:[#allocation7 + $0x8] sm:$0xff]
    %v113 = vld [vmem:[#allocation8] sm:$0xff]
    %v114 = vld [vmem:[#allocation8 + $0x8] sm:$0xff]
    %v115 = vld [vmem:[%s4] sm:$0xff]
    %v116 = vld [vmem:[%s4 + $0x8] sm:$0xff]
    %v117 = vld [vmem:[%s4 + $0x10] sm:$0xff]
    %v118 = vld [vmem:[%s4 + $0x18] sm:$0xff]
    %v119 = vld [vmem:[%s4 + $0x20] sm:$0xff]
    %v120 = vld [vmem:[%s4 + $0x28] sm:$0xff]
    %v121 = vld [vmem:[%s4 + $0x30] sm:$0xff]
    %v122 = vld [vmem:[%s4 + $0x38] sm:$0xff]
    %v123 = vld [vmem:[#allocation10] sm:$0xff]
    %v124 = vld [vmem:[#allocation10 + $0x8] sm:$0xff]
    %v125 = vld [vmem:[#allocation10 + $0x10] sm:$0xff]
    %v126 = vld [vmem:[#allocation10 + $0x18] sm:$0xff]
    %v127 = vld [vmem:[#allocation10 + $0x20] sm:$0xff]
    %v128 = vld [vmem:[#allocation10 + $0x28] sm:$0xff]
    %v129 = vld [vmem:[#allocation10 + $0x30] sm:$0xff]
    %v130 = vld [vmem:[#allocation10 + $0x38] sm:$0xff]
    %v131 = vld [vmem:[%s6] sm:$0xff]
    %v132 = vld [vmem:[%s6 + $0x8] sm:$0xff]
    %v133 = vld [vmem:[%s6 + $0x10] sm:$0xff]
    %v134 = vld [vmem:[%s6 + $0x18] sm:$0xff]
    %v135 = vld [vmem:[%s7] sm:$0xff]
    %v136 = vld [vmem:[%s7 + $0x8] sm:$0xff]
    %v137 = vld [vmem:[%s7 + $0x10] sm:$0xff]
    %v138 = vld [vmem:[%s7 + $0x18] sm:$0xff]
    %v139 = vld [vmem:[%s7 + $0x20] sm:$0xff]
    %v140 = vld [vmem:[%s7 + $0x28] sm:$0xff]
    %v141 = vld [vmem:[%s7 + $0x30] sm:$0xff]
    %v142 = vld [vmem:[%s7 + $0x38] sm:$0xff]
    %v143 = vld [vmem:[%s8] sm:$0x3]
    %v144 = vld [vmem:[%s9] sm:$0x1]
    %v145 = vld [vmem:[%s10] sm:$0xff]
    %v146 = vlaneseq
    %v147 = vshrl.u32 %v146, 7
    %v148 = vsub.s32 1, %v147
    %v149 = vrot.slane %v143, %v148
    %154 = vrot.lane.b32.xlu0 %v119, 96
    %v155 = vpop.permute.xlu0 %154
    %156 = vrot.lane.b32.xlu0 %v120, 96
    %v157 = vpop.permute.xlu0 %156
    %158 = vrot.lane.b32.xlu0 %v121, 96
    %v159 = vpop.permute.xlu0 %158
    %160 = vrot.lane.b32.xlu0 %v122, 96
    %v161 = vpop.permute.xlu0 %160
    %167 = vrot.lane.b32.xlu0 %v149, 96
    %v168 = vpop.permute.xlu0 %167
    %vm170 = vcmask 261120
    %v172 = vsel %vm170, %v109, 0
    %v175 = vsel %vm170, %v110, 0
    %177 = vmatprep.subr.mxu0 0.0
    %178 = vmatpush1.msra.mxu0 %v155
    %179 = vmatprep.subr.mxu0 0.0
    %180 = vmatpush1.msra.mxu0 %v157
    %181 = vmatprep.subr.mxu0 0.0
    %182 = vmatpush1.msra.mxu0 %v159
    %183 = vmatprep.subr.mxu0 0.0
    %184 = vmatpush1.msra.mxu0 %v161
    %185 = vmatprep.subr.mxu0 0.0
    %186 = vmatpush1.msra.mxu0 0.0
    %187 = vmatprep.subr.mxu0 0.0
    %188 = vmatpush1.msra.mxu0 0.0
    %189 = vmatprep.subr.mxu0 0.0
    %190 = vmatpush1.msra.mxu0 0.0
    %191 = vmatprep.subr.mxu0 0.0
    %192 = vmatpush1.msra.mxu0 0.0
    %193 = vmatprep.subr.mxu0 0.0
    %194 = vmatpush1.msra.mxu0 0.0
    %195 = vmatprep.subr.mxu0 0.0
    %196 = vmatpush1.msra.mxu0 0.0
    %197 = vmatprep.subr.mxu0 0.0
    %198 = vmatpush1.msra.mxu0 0.0
    %199 = vmatprep.subr.mxu0 0.0
    %200 = vmatpush1.msra.mxu0 0.0
    %201 = vmatprep.subr.mxu0 0.0
    %202 = vmatpush1.msra.mxu0 0.0
    %203 = vmatprep.subr.mxu0 0.0
    %204 = vmatpush1.msra.mxu0 0.0
    %205 = vmatprep.subr.mxu0 0.0
    %206 = vmatpush1.msra.mxu0 0.0
    %207 = vmatprep.subr.mxu0 0.0
    %208 = vmatpush1.msra.mxu0 0.0
    %209 = vmatprep.subr.mxu0 0.0
    %210 = vmatpush1.msra.mxu0 0.0
    %211 = vmatprep.subr.mxu0 0.0
    %212 = vmatpush1.msra.mxu0 0.0
    %213 = vmatprep.subr.mxu0 0.0
    %214 = vmatpush1.msra.mxu0 0.0
    %215 = vmatprep.subr.mxu0 0.0
    %216 = vmatpush1.msra.mxu0 0.0
    %217 = vmatprep.subr.mxu0 0.0
    %218 = vmatpush1.msra.mxu0 0.0
    %219 = vmatprep.subr.mxu0 0.0
    %220 = vmatpush1.msra.mxu0 0.0
    %221 = vmatprep.subr.mxu0 0.0
    %222 = vmatpush1.msra.mxu0 0.0
    %223 = vmatprep.subr.mxu0 0.0
    %224 = vmatpush1.msra.mxu0 0.0
    %225 = vmatprep.subr.mxu0 0.0
    %226 = vmatpush1.msra.mxu0 0.0
    %227 = vmatprep.subr.mxu0 0.0
    %228 = vmatpush1.msra.mxu0 0.0
    %229 = vmatprep.subr.mxu0 0.0
    %230 = vmatpush1.msra.mxu0 0.0
    %231 = vmatprep.subr.mxu0 0.0
    %232 = vmatpush1.msra.mxu0 0.0
    %233 = vmatprep.subr.mxu0 0.0
    %234 = vmatpush1.msra.mxu0 0.0
    %235 = vmatprep.subr.mxu0 0.0
    %236 = vmatpush1.msra.mxu0 0.0
    %237 = vmatprep.subr.mxu0 0.0
    %238 = vmatpush1.msra.mxu0 0.0
    %239 = vmatprep.subr.mxu0 0.0
    %240 = vmatpush1.msra.mxu0 0.0
    %241 = vmatprep.mubr.f32.mxu0 0.0
    %242 = vmatmul.mubr.f32.gmra.mrb[0].mxu0 %v172
    %v243 = vpop.f32.mrb[0].mxu0
    %v244 = vadd.f32 %v168, %v243
    %v245 = vpop.f32.mrb[0].mxu0
    %246 = vmatprep.mubr.f32.mxu0 0.0
    %247 = vmatmul.mubr.f32.gmra.mrb[0].mxu0 %v175
    %v248 = vpop.f32.mrb[0].mxu0
    %v249 = vadd.f32 %v168, %v248
    %v250 = vpop.f32.mrb[0].mxu0
    %251 = vdwg.mxu0
    %v252 = vsel %vm170, %v107, 0.0
    %253 = vadd.xlane.f32.xlu0 %v252
    %v254 = vpop.xlane.xlu0 %253
    %v255 = vsel %vm170, %v108, 0.0
    %256 = vadd.xlane.f32.xlu0 %v255
    %v257 = vpop.xlane.xlu0 %256
    %v258 = vrcp.pop 32.0
    %v259 = vmul.f32 %v254, %v258
    %v260 = vmul.f32 %v257, %v258
    %v261 = vsub.f32 %v107, %v259
    %v262 = vsub.f32 %v108, %v260
    %v263 = vmul.f32 %v261, %v261
    %v264 = vmul.f32 %v262, %v262
    %v265 = vsel %vm170, %v263, 0.0
    %266 = vadd.xlane.f32.xlu0 %v265
    %v267 = vpop.xlane.xlu0 %266
    %v268 = vsel %vm170, %v264, 0.0
    %269 = vadd.xlane.f32.xlu0 %v268
    %v270 = vpop.xlane.xlu0 %269
    %v271 = vmul.f32 %v267, %v258
    %v272 = vmul.f32 %v270, %v258
    %v273 = vadd.f32 %v271, 1e-05
    %v274 = vadd.f32 %v272, 1e-05
    %v275 = vrsqrt.pop %v273
    %v276 = vrsqrt.pop %v274
    %v277 = vmul.f32 %v261, %v275
    %v278 = vmul.f32 %v262, %v276
    %v279 = vlaneseq
    %v280 = vshrl.u32 %v279, 7
    %v281 = vsub.s32 0, %v280
    %v282 = vrot.slane %v145, %v281
    %v283 = vmul.f32 %v277, %v282
    %v284 = vmul.f32 %v278, %v282
    %v285 = vlaneseq
    %v286 = vshrl.u32 %v285, 7
    %v287 = vsub.s32 4, %v286
    %v288 = vrot.slane %v145, %v287
    %v289 = vadd.f32 %v283, %v288
    %v290 = vadd.f32 %v284, %v288
    %v291 = vlaneseq
    %v292 = vshrl.u32 %v291, 7
    %v293 = vsub.s32 0, %v292
    %v294 = vrot.slane %v143, %v293
    %v296 = vsel %vm170, %v289, 0
    %v299 = vsel %vm170, %v290, 0
    %301 = vmatprep.subr.mxu0 0.0
    %302 = vmatpush1.msra.mxu0 %v115
    %303 = vmatprep.subr.mxu0 0.0
    %304 = vmatpush1.msra.mxu0 %v116
    %305 = vmatprep.subr.mxu0 0.0
    %306 = vmatpush1.msra.mxu0 %v117
    %307 = vmatprep.subr.mxu0 0.0
    %308 = vmatpush1.msra.mxu0 %v118
    %309 = vmatprep.subr.mxu0 0.0
    %310 = vmatpush1.msra.mxu0 0.0
    %311 = vmatprep.subr.mxu0 0.0
    %312 = vmatpush1.msra.mxu0 0.0
    %313 = vmatprep.subr.mxu0 0.0
    %314 = vmatpush1.msra.mxu0 0.0
    %315 = vmatprep.subr.mxu0 0.0
    %316 = vmatpush1.msra.mxu0 0.0
    %317 = vmatprep.subr.mxu0 0.0
    %318 = vmatpush1.msra.mxu0 0.0
    %319 = vmatprep.subr.mxu0 0.0
    %320 = vmatpush1.msra.mxu0 0.0
    %321 = vmatprep.subr.mxu0 0.0
    %322 = vmatpush1.msra.mxu0 0.0
    %323 = vmatprep.subr.mxu0 0.0
    %324 = vmatpush1.msra.mxu0 0.0
    %325 = vmatprep.subr.mxu0 0.0
    %326 = vmatpush1.msra.mxu0 0.0
    %327 = vmatprep.subr.mxu0 0.0
    %328 = vmatpush1.msra.mxu0 0.0
    %329 = vmatprep.subr.mxu0 0.0
    %330 = vmatpush1.msra.mxu0 0.0
    %331 = vmatprep.subr.mxu0 0.0
    %332 = vmatpush1.msra.mxu0 0.0
    %333 = vmatprep.subr.mxu0 0.0
    %334 = vmatpush1.msra.mxu0 0.0
    %335 = vmatprep.subr.mxu0 0.0
    %336 = vmatpush1.msra.mxu0 0.0
    %337 = vmatprep.subr.mxu0 0.0
    %338 = vmatpush1.msra.mxu0 0.0
    %339 = vmatprep.subr.mxu0 0.0
    %340 = vmatpush1.msra.mxu0 0.0
    %341 = vmatprep.subr.mxu0 0.0
    %342 = vmatpush1.msra.mxu0 0.0
    %343 = vmatprep.subr.mxu0 0.0
    %344 = vmatpush1.msra.mxu0 0.0
    %345 = vmatprep.subr.mxu0 0.0
    %346 = vmatpush1.msra.mxu0 0.0
    %347 = vmatprep.subr.mxu0 0.0
    %348 = vmatpush1.msra.mxu0 0.0
    %349 = vmatprep.subr.mxu0 0.0
    %350 = vmatpush1.msra.mxu0 0.0
    %351 = vmatprep.subr.mxu0 0.0
    %352 = vmatpush1.msra.mxu0 0.0
    %353 = vmatprep.subr.mxu0 0.0
    %354 = vmatpush1.msra.mxu0 0.0
    %355 = vmatprep.subr.mxu0 0.0
    %356 = vmatpush1.msra.mxu0 0.0
    %357 = vmatprep.subr.mxu0 0.0
    %358 = vmatpush1.msra.mxu0 0.0
    %359 = vmatprep.subr.mxu0 0.0
    %360 = vmatpush1.msra.mxu0 0.0
    %361 = vmatprep.subr.mxu0 0.0
    %362 = vmatpush1.msra.mxu0 0.0
    %363 = vmatprep.subr.mxu0 0.0
    %364 = vmatpush1.msra.mxu0 0.0
    %365 = vmatprep.mubr.f32.mxu0 0.0
    %366 = vmatmul.mubr.f32.gmra.mrb[0].mxu0 %v296
    %v367 = vpop.f32.mrb[0].mxu0
    %v368 = vadd.f32 %v294, %v367
    %v369 = vpop.f32.mrb[0].mxu0
    %370 = vmatprep.mubr.f32.mxu0 0.0
    %371 = vmatmul.mubr.f32.gmra.mrb[0].mxu0 %v299
    %v372 = vpop.f32.mrb[0].mxu0
    %v373 = vadd.f32 %v294, %v372
    %v374 = vpop.f32.mrb[0].mxu0
    %375 = vdwg.mxu0
    %378 = vrot.lane.b32.xlu0 %v368, 96
    %v379 = vpop.permute.xlu0 %378
    %380 = vrot.lane.b32.xlu0 %v373, 96
    %v381 = vpop.permute.xlu0 %380
    %vm382 = vcmask 64512
    %v383 = vsel %vm382, %v368, 0
    %v385 = vsel %vm382, %v373, 0
    %v387 = vsel %vm382, %v379, 0
    %v389 = vsel %vm382, %v381, 0
    %391 = vmatprep.subr.mxu0 0.0
    %392 = vmatpush1.xpose.msra.mxu0 %v387
    %393 = vmatprep.subr.mxu0 0.0
    %394 = vmatpush1.xpose.msra.mxu0 %v389
    %395 = vmatprep.subr.mxu0 0.0
    %396 = vmatpush1.xpose.msra.mxu0 0.0
    %397 = vmatprep.subr.mxu0 0.0
    %398 = vmatpush1.xpose.msra.mxu0 0.0
    %399 = vmatprep.subr.mxu0 0.0
    %400 = vmatpush1.xpose.msra.mxu0 0.0
    %401 = vmatprep.subr.mxu0 0.0
    %402 = vmatpush1.xpose.msra.mxu0 0.0
    %403 = vmatprep.subr.mxu0 0.0
    %404 = vmatpush1.xpose.msra.mxu0 0.0
    %405 = vmatprep.subr.mxu0 0.0
    %406 = vmatpush1.xpose.msra.mxu0 0.0
    %407 = vmatprep.subr.mxu0 0.0
    %408 = vmatpush1.xpose.msra.mxu0 0.0
    %409 = vmatprep.subr.mxu0 0.0
    %410 = vmatpush1.xpose.msra.mxu0 0.0
    %411 = vmatprep.subr.mxu0 0.0
    %412 = vmatpush1.xpose.msra.mxu0 0.0
    %413 = vmatprep.subr.mxu0 0.0
    %414 = vmatpush1.xpose.msra.mxu0 0.0
    %415 = vmatprep.subr.mxu0 0.0
    %416 = vmatpush1.xpose.msra.mxu0 0.0
    %417 = vmatprep.subr.mxu0 0.0
    %418 = vmatpush1.xpose.msra.mxu0 0.0
    %419 = vmatprep.subr.mxu0 0.0
    %420 = vmatpush1.xpose.msra.mxu0 0.0
    %421 = vmatprep.subr.mxu0 0.0
    %422 = vmatpush1.xpose.msra.mxu0 0.0
    %423 = vmatprep.subr.mxu0 0.0
    %424 = vmatpush1.xpose.msra.mxu0 0.0
    %425 = vmatprep.subr.mxu0 0.0
    %426 = vmatpush1.xpose.msra.mxu0 0.0
    %427 = vmatprep.subr.mxu0 0.0
    %428 = vmatpush1.xpose.msra.mxu0 0.0
    %429 = vmatprep.subr.mxu0 0.0
    %430 = vmatpush1.xpose.msra.mxu0 0.0
    %431 = vmatprep.subr.mxu0 0.0
    %432 = vmatpush1.xpose.msra.mxu0 0.0
    %433 = vmatprep.subr.mxu0 0.0
    %434 = vmatpush1.xpose.msra.mxu0 0.0
    %435 = vmatprep.subr.mxu0 0.0
    %436 = vmatpush1.xpose.msra.mxu0 0.0
    %437 = vmatprep.subr.mxu0 0.0
    %438 = vmatpush1.xpose.msra.mxu0 0.0
    %439 = vmatprep.subr.mxu0 0.0
    %440 = vmatpush1.xpose.msra.mxu0 0.0
    %441 = vmatprep.subr.mxu0 0.0
    %442 = vmatpush1.xpose.msra.mxu0 0.0
    %443 = vmatprep.subr.mxu0 0.0
    %444 = vmatpush1.xpose.msra.mxu0 0.0
    %445 = vmatprep.subr.mxu0 0.0
    %446 = vmatpush1.xpose.msra.mxu0 0.0
    %447 = vmatprep.subr.mxu0 0.0
    %448 = vmatpush1.xpose.msra.mxu0 0.0
    %449 = vmatprep.subr.mxu0 0.0
    %450 = vmatpush1.xpose.msra.mxu0 0.0
    %451 = vmatprep.subr.mxu0 0.0
    %452 = vmatpush1.xpose.msra.mxu0 0.0
    %453 = vmatprep.subr.mxu0 0.0
    %454 = vmatpush1.xpose.msra.mxu0 0.0
    %455 = vmatprep.mubr.f32.mxu0 0.0
    %456 = vmatmul.mubr.f32.gmra.mrb[0].mxu0 %v383
    %v457 = vpop.f32.mrb[0].mxu0
    %v458 = vadd.f32 %v111, %v457
    %v459 = vpop.f32.mrb[0].mxu0
    %460 = vmatprep.mubr.f32.mxu0 0.0
    %461 = vmatmul.mubr.f32.gmra.mrb[0].mxu0 %v385
    %v462 = vpop.f32.mrb[0].mxu0
    %v463 = vadd.f32 %v112, %v462
    %v464 = vpop.f32.mrb[0].mxu0
    %465 = vdwg.mxu0
    %vm466 = vcmask 130048
    %v467 = vsel %vm466, %v458, -inf
    %468 = vmax.xlane.f32.xlu0 %v467
    %v469 = vpop.xlane.xlu0 %468
    %v470 = vsel %vm466, %v463, -inf
    %471 = vmax.xlane.f32.xlu0 %v470
    %v472 = vpop.xlane.xlu0 %471
    %v473 = vsub.f32 %v458, %v469
    %v474 = vsub.f32 %v463, %v472
    %v475 = vmul.f32 %v473, 1.442695
    %v476 = vpow.pop %v475
    %v477 = vmul.f32 %v474, 1.442695
    %v478 = vpow.pop %v477
    %v479 = vsel %vm466, %v476, 0.0
    %480 = vadd.xlane.f32.xlu0 %v479
    %v481 = vpop.xlane.xlu0 %480
    %v482 = vsel %vm466, %v478, 0.0
    %483 = vadd.xlane.f32.xlu0 %v482
    %v484 = vpop.xlane.xlu0 %483
    %v485 = vrcp.pop %v481
    %v486 = vrcp.pop %v484
    %v487 = vmul.f32 %v476, %v485
    %v488 = vmul.f32 %v478, %v486
    %489 = vrot.lane.b32.xlu0 %v368, 64
    %v490 = vpop.permute.xlu0 %489
    %491 = vrot.lane.b32.xlu0 %v373, 64
    %v492 = vpop.permute.xlu0 %491
    %v496 = vsel %vm466, %v487, 0
    %v499 = vsel %vm466, %v488, 0
    %501 = vmatprep.subr.mxu0 0.0
    %502 = vmatpush1.msra.mxu0 %v490
    %503 = vmatprep.subr.mxu0 0.0
    %504 = vmatpush1.msra.mxu0 %v492
    %505 = vmatprep.subr.mxu0 0.0
    %506 = vmatpush1.msra.mxu0 0.0
    %507 = vmatprep.subr.mxu0 0.0
    %508 = vmatpush1.msra.mxu0 0.0
    %509 = vmatprep.subr.mxu0 0.0
    %510 = vmatpush1.msra.mxu0 0.0
    %511 = vmatprep.subr.mxu0 0.0
    %512 = vmatpush1.msra.mxu0 0.0
    %513 = vmatprep.subr.mxu0 0.0
    %514 = vmatpush1.msra.mxu0 0.0
    %515 = vmatprep.subr.mxu0 0.0
    %516 = vmatpush1.msra.mxu0 0.0
    %517 = vmatprep.subr.mxu0 0.0
    %518 = vmatpush1.msra.mxu0 0.0
    %519 = vmatprep.subr.mxu0 0.0
    %520 = vmatpush1.msra.mxu0 0.0
    %521 = vmatprep.subr.mxu0 0.0
    %522 = vmatpush1.msra.mxu0 0.0
    %523 = vmatprep.subr.mxu0 0.0
    %524 = vmatpush1.msra.mxu0 0.0
    %525 = vmatprep.subr.mxu0 0.0
    %526 = vmatpush1.msra.mxu0 0.0
    %527 = vmatprep.subr.mxu0 0.0
    %528 = vmatpush1.msra.mxu0 0.0
    %529 = vmatprep.subr.mxu0 0.0
    %530 = vmatpush1.msra.mxu0 0.0
    %531 = vmatprep.subr.mxu0 0.0
    %532 = vmatpush1.msra.mxu0 0.0
    %533 = vmatprep.subr.mxu0 0.0
    %534 = vmatpush1.msra.mxu0 0.0
    %535 = vmatprep.subr.mxu0 0.0
    %536 = vmatpush1.msra.mxu0 0.0
    %537 = vmatprep.subr.mxu0 0.0
    %538 = vmatpush1.msra.mxu0 0.0
    %539 = vmatprep.subr.mxu0 0.0
    %540 = vmatpush1.msra.mxu0 0.0
    %541 = vmatprep.subr.mxu0 0.0
    %542 = vmatpush1.msra.mxu0 0.0
    %543 = vmatprep.subr.mxu0 0.0
    %544 = vmatpush1.msra.mxu0 0.0
    %545 = vmatprep.subr.mxu0 0.0
    %546 = vmatpush1.msra.mxu0 0.0
    %547 = vmatprep.subr.mxu0 0.0
    %548 = vmatpush1.msra.mxu0 0.0
    %549 = vmatprep.subr.mxu0 0.0
    %550 = vmatpush1.msra.mxu0 0.0
    %551 = vmatprep.subr.mxu0 0.0
    %552 = vmatpush1.msra.mxu0 0.0
    %553 = vmatprep.subr.mxu0 0.0
    %554 = vmatpush1.msra.mxu0 0.0
    %555 = vmatprep.subr.mxu0 0.0
    %556 = vmatpush1.msra.mxu0 0.0
    %557 = vmatprep.subr.mxu0 0.0
    %558 = vmatpush1.msra.mxu0 0.0
    %559 = vmatprep.subr.mxu0 0.0
    %560 = vmatpush1.msra.mxu0 0.0
    %561 = vmatprep.subr.mxu0 0.0
    %562 = vmatpush1.msra.mxu0 0.0
    %563 = vmatprep.subr.mxu0 0.0
    %564 = vmatpush1.msra.mxu0 0.0
    %565 = vmatprep.mubr.f32.mxu0 0.0
    %566 = vmatmul.mubr.f32.gmra.mrb[0].mxu0 %v496
    %v567 = vpop.f32.mrb[0].mxu0
    %v568 = vadd.f32 0.0, %v567
    %v569 = vpop.f32.mrb[0].mxu0
    %570 = vmatprep.mubr.f32.mxu0 0.0
    %571 = vmatmul.mubr.f32.gmra.mrb[0].mxu0 %v499
    %v572 = vpop.f32.mrb[0].mxu0
    %v573 = vadd.f32 0.0, %v572
    %v574 = vpop.f32.mrb[0].mxu0
    %575 = vdwg.mxu0
    %576 = vrot.lane.b32.xlu0 %v368, 120
    %v577 = vpop.permute.xlu0 %576
    %578 = vrot.lane.b32.xlu0 %v373, 120
    %v579 = vpop.permute.xlu0 %578
    %580 = vrot.lane.b32.xlu0 %v368, 88
    %v581 = vpop.permute.xlu0 %580
    %582 = vrot.lane.b32.xlu0 %v373, 88
    %v583 = vpop.permute.xlu0 %582
    %v584 = vsel %vm382, %v577, 0
    %v586 = vsel %vm382, %v579, 0
    %v588 = vsel %vm382, %v581, 0
    %v590 = vsel %vm382, %v583, 0
    %592 = vmatprep.subr.mxu0 0.0
    %593 = vmatpush1.xpose.msra.mxu0 %v588
    %594 = vmatprep.subr.mxu0 0.0
    %595 = vmatpush1.xpose.msra.mxu0 %v590
    %596 = vmatprep.subr.mxu0 0.0
    %597 = vmatpush1.xpose.msra.mxu0 0.0
    %598 = vmatprep.subr.mxu0 0.0
    %599 = vmatpush1.xpose.msra.mxu0 0.0
    %600 = vmatprep.subr.mxu0 0.0
    %601 = vmatpush1.xpose.msra.mxu0 0.0
    %602 = vmatprep.subr.mxu0 0.0
    %603 = vmatpush1.xpose.msra.mxu0 0.0
    %604 = vmatprep.subr.mxu0 0.0
    %605 = vmatpush1.xpose.msra.mxu0 0.0
    %606 = vmatprep.subr.mxu0 0.0
    %607 = vmatpush1.xpose.msra.mxu0 0.0
    %608 = vmatprep.subr.mxu0 0.0
    %609 = vmatpush1.xpose.msra.mxu0 0.0
    %610 = vmatprep.subr.mxu0 0.0
    %611 = vmatpush1.xpose.msra.mxu0 0.0
    %612 = vmatprep.subr.mxu0 0.0
    %613 = vmatpush1.xpose.msra.mxu0 0.0
    %614 = vmatprep.subr.mxu0 0.0
    %615 = vmatpush1.xpose.msra.mxu0 0.0
    %616 = vmatprep.subr.mxu0 0.0
    %617 = vmatpush1.xpose.msra.mxu0 0.0
    %618 = vmatprep.subr.mxu0 0.0
    %619 = vmatpush1.xpose.msra.mxu0 0.0
    %620 = vmatprep.subr.mxu0 0.0
    %621 = vmatpush1.xpose.msra.mxu0 0.0
    %622 = vmatprep.subr.mxu0 0.0
    %623 = vmatpush1.xpose.msra.mxu0 0.0
    %624 = vmatprep.subr.mxu0 0.0
    %625 = vmatpush1.xpose.msra.mxu0 0.0
    %626 = vmatprep.subr.mxu0 0.0
    %627 = vmatpush1.xpose.msra.mxu0 0.0
    %628 = vmatprep.subr.mxu0 0.0
    %629 = vmatpush1.xpose.msra.mxu0 0.0
    %630 = vmatprep.subr.mxu0 0.0
    %631 = vmatpush1.xpose.msra.mxu0 0.0
    %632 = vmatprep.subr.mxu0 0.0
    %633 = vmatpush1.xpose.msra.mxu0 0.0
    %634 = vmatprep.subr.mxu0 0.0
    %635 = vmatpush1.xpose.msra.mxu0 0.0
    %636 = vmatprep.subr.mxu0 0.0
    %637 = vmatpush1.xpose.msra.mxu0 0.0
    %638 = vmatprep.subr.mxu0 0.0
    %639 = vmatpush1.xpose.msra.mxu0 0.0
    %640 = vmatprep.subr.mxu0 0.0
    %641 = vmatpush1.xpose.msra.mxu0 0.0
    %642 = vmatprep.subr.mxu0 0.0
    %643 = vmatpush1.xpose.msra.mxu0 0.0
    %644 = vmatprep.subr.mxu0 0.0
    %645 = vmatpush1.xpose.msra.mxu0 0.0
    %646 = vmatprep.subr.mxu0 0.0
    %647 = vmatpush1.xpose.msra.mxu0 0.0
    %648 = vmatprep.subr.mxu0 0.0
    %649 = vmatpush1.xpose.msra.mxu0 0.0
    %650 = vmatprep.subr.mxu0 0.0
    %651 = vmatpush1.xpose.msra.mxu0 0.0
    %652 = vmatprep.subr.mxu0 0.0
    %653 = vmatpush1.xpose.msra.mxu0 0.0
    %654 = vmatprep.subr.mxu0 0.0
    %655 = vmatpush1.xpose.msra.mxu0 0.0
    %656 = vmatprep.mubr.f32.mxu0 0.0
    %657 = vmatmul.mubr.f32.gmra.mrb[0].mxu0 %v584
    %v658 = vpop.f32.mrb[0].mxu0
    %v659 = vadd.f32 %v111, %v658
    %v660 = vpop.f32.mrb[0].mxu0
    %661 = vmatprep.mubr.f32.mxu0 0.0
    %662 = vmatmul.mubr.f32.gmra.mrb[0].mxu0 %v586
    %v663 = vpop.f32.mrb[0].mxu0
    %v664 = vadd.f32 %v112, %v663
    %v665 = vpop.f32.mrb[0].mxu0
    %666 = vdwg.mxu0
    %v667 = vsel %vm466, %v659, -inf
    %668 = vmax.xlane.f32.xlu0 %v667
    %v669 = vpop.xlane.xlu0 %668
    %v670 = vsel %vm466, %v664, -inf
    %671 = vmax.xlane.f32.xlu0 %v670
    %v672 = vpop.xlane.xlu0 %671
    %v673 = vsub.f32 %v659, %v669
    %v674 = vsub.f32 %v664, %v672
    %v675 = vmul.f32 %v673, 1.442695
    %v676 = vpow.pop %v675
    %v677 = vmul.f32 %v674, 1.442695
    %v678 = vpow.pop %v677
    %v679 = vsel %vm466, %v676, 0.0
    %680 = vadd.xlane.f32.xlu0 %v679
    %v681 = vpop.xlane.xlu0 %680
    %v682 = vsel %vm466, %v678, 0.0
    %683 = vadd.xlane.f32.xlu0 %v682
    %v684 = vpop.xlane.xlu0 %683
    %v685 = vrcp.pop %v681
    %v686 = vrcp.pop %v684
    %v687 = vmul.f32 %v676, %v685
    %v688 = vmul.f32 %v678, %v686
    %689 = vrot.lane.b32.xlu0 %v368, 56
    %v690 = vpop.permute.xlu0 %689
    %691 = vrot.lane.b32.xlu0 %v373, 56
    %v692 = vpop.permute.xlu0 %691
    %v696 = vsel %vm466, %v687, 0
    %v699 = vsel %vm466, %v688, 0
    %701 = vmatprep.subr.mxu0 0.0
    %702 = vmatpush1.msra.mxu0 %v690
    %703 = vmatprep.subr.mxu0 0.0
    %704 = vmatpush1.msra.mxu0 %v692
    %705 = vmatprep.subr.mxu0 0.0
    %706 = vmatpush1.msra.mxu0 0.0
    %707 = vmatprep.subr.mxu0 0.0
    %708 = vmatpush1.msra.mxu0 0.0
    %709 = vmatprep.subr.mxu0 0.0
    %710 = vmatpush1.msra.mxu0 0.0
    %711 = vmatprep.subr.mxu0 0.0
    %712 = vmatpush1.msra.mxu0 0.0
    %713 = vmatprep.subr.mxu0 0.0
    %714 = vmatpush1.msra.mxu0 0.0
    %715 = vmatprep.subr.mxu0 0.0
    %716 = vmatpush1.msra.mxu0 0.0
    %717 = vmatprep.subr.mxu0 0.0
    %718 = vmatpush1.msra.mxu0 0.0
    %719 = vmatprep.subr.mxu0 0.0
    %720 = vmatpush1.msra.mxu0 0.0
    %721 = vmatprep.subr.mxu0 0.0
    %722 = vmatpush1.msra.mxu0 0.0
    %723 = vmatprep.subr.mxu0 0.0
    %724 = vmatpush1.msra.mxu0 0.0
    %725 = vmatprep.subr.mxu0 0.0
    %726 = vmatpush1.msra.mxu0 0.0
    %727 = vmatprep.subr.mxu0 0.0
    %728 = vmatpush1.msra.mxu0 0.0
    %729 = vmatprep.subr.mxu0 0.0
    %730 = vmatpush1.msra.mxu0 0.0
    %731 = vmatprep.subr.mxu0 0.0
    %732 = vmatpush1.msra.mxu0 0.0
    %733 = vmatprep.subr.mxu0 0.0
    %734 = vmatpush1.msra.mxu0 0.0
    %735 = vmatprep.subr.mxu0 0.0
    %736 = vmatpush1.msra.mxu0 0.0
    %737 = vmatprep.subr.mxu0 0.0
    %738 = vmatpush1.msra.mxu0 0.0
    %739 = vmatprep.subr.mxu0 0.0
    %740 = vmatpush1.msra.mxu0 0.0
    %741 = vmatprep.subr.mxu0 0.0
    %742 = vmatpush1.msra.mxu0 0.0
    %743 = vmatprep.subr.mxu0 0.0
    %744 = vmatpush1.msra.mxu0 0.0
    %745 = vmatprep.subr.mxu0 0.0
    %746 = vmatpush1.msra.mxu0 0.0
    %747 = vmatprep.subr.mxu0 0.0
    %748 = vmatpush1.msra.mxu0 0.0
    %749 = vmatprep.subr.mxu0 0.0
    %750 = vmatpush1.msra.mxu0 0.0
    %751 = vmatprep.subr.mxu0 0.0
    %752 = vmatpush1.msra.mxu0 0.0
    %753 = vmatprep.subr.mxu0 0.0
    %754 = vmatpush1.msra.mxu0 0.0
    %755 = vmatprep.subr.mxu0 0.0
    %756 = vmatpush1.msra.mxu0 0.0
    %757 = vmatprep.subr.mxu0 0.0
    %758 = vmatpush1.msra.mxu0 0.0
    %759 = vmatprep.subr.mxu0 0.0
    %760 = vmatpush1.msra.mxu0 0.0
    %761 = vmatprep.subr.mxu0 0.0
    %762 = vmatpush1.msra.mxu0 0.0
    %763 = vmatprep.subr.mxu0 0.0
    %764 = vmatpush1.msra.mxu0 0.0
    %765 = vmatprep.mubr.f32.mxu0 0.0
    %766 = vmatmul.mubr.f32.gmra.mrb[0].mxu0 %v696
    %v767 = vpop.f32.mrb[0].mxu0
    %v768 = vadd.f32 0.0, %v767
    %v769 = vpop.f32.mrb[0].mxu0
    %770 = vmatprep.mubr.f32.mxu0 0.0
    %771 = vmatmul.mubr.f32.gmra.mrb[0].mxu0 %v699
    %v772 = vpop.f32.mrb[0].mxu0
    %v773 = vadd.f32 0.0, %v772
    %v774 = vpop.f32.mrb[0].mxu0
    %775 = vdwg.mxu0
    %v777 = vsel %vm382, %v768, 0
    %v780 = vsel %vm382, %v773, 0
    %782 = vmatprep.subr.mxu0 0.0
    %783 = vmatpush1.msra.mxu0 %v124
    %784 = vmatprep.subr.mxu0 0.0
    %785 = vmatpush1.msra.mxu0 0.0
    %786 = vmatprep.subr.mxu0 0.0
    %787 = vmatpush1.msra.mxu0 0.0
    %788 = vmatprep.subr.mxu0 0.0
    %789 = vmatpush1.msra.mxu0 0.0
    %790 = vmatprep.subr.mxu0 0.0
    %791 = vmatpush1.msra.mxu0 0.0
    %792 = vmatprep.subr.mxu0 0.0
    %793 = vmatpush1.msra.mxu0 0.0
    %794 = vmatprep.subr.mxu0 0.0
    %795 = vmatpush1.msra.mxu0 0.0
    %796 = vmatprep.subr.mxu0 0.0
    %797 = vmatpush1.msra.mxu0 0.0
    %798 = vmatprep.subr.mxu0 0.0
    %799 = vmatpush1.msra.mxu0 0.0
    %800 = vmatprep.subr.mxu0 0.0
    %801 = vmatpush1.msra.mxu0 0.0
    %802 = vmatprep.subr.mxu0 0.0
    %803 = vmatpush1.msra.mxu0 0.0
    %804 = vmatprep.subr.mxu0 0.0
    %805 = vmatpush1.msra.mxu0 0.0
    %806 = vmatprep.subr.mxu0 0.0
    %807 = vmatpush1.msra.mxu0 0.0
    %808 = vmatprep.subr.mxu0 0.0
    %809 = vmatpush1.msra.mxu0 0.0
    %810 = vmatprep.subr.mxu0 0.0
    %811 = vmatpush1.msra.mxu0 0.0
    %812 = vmatprep.subr.mxu0 0.0
    %813 = vmatpush1.msra.mxu0 0.0
    %814 = vmatprep.subr.mxu0 0.0
    %815 = vmatpush1.msra.mxu0 0.0
    %816 = vmatprep.subr.mxu0 0.0
    %817 = vmatpush1.msra.mxu0 0.0
    %818 = vmatprep.subr.mxu0 0.0
    %819 = vmatpush1.msra.mxu0 0.0
    %820 = vmatprep.subr.mxu0 0.0
    %821 = vmatpush1.msra.mxu0 0.0
    %822 = vmatprep.subr.mxu0 0.0
    %823 = vmatpush1.msra.mxu0 0.0
    %824 = vmatprep.subr.mxu0 0.0
    %825 = vmatpush1.msra.mxu0 0.0
    %826 = vmatprep.subr.mxu0 0.0
    %827 = vmatpush1.msra.mxu0 0.0
    %828 = vmatprep.subr.mxu0 0.0
    %829 = vmatpush1.msra.mxu0 0.0
    %830 = vmatprep.subr.mxu0 0.0
    %831 = vmatpush1.msra.mxu0 0.0
    %832 = vmatprep.subr.mxu0 0.0
    %833 = vmatpush1.msra.mxu0 0.0
    %834 = vmatprep.subr.mxu0 0.0
    %835 = vmatpush1.msra.mxu0 0.0
    %836 = vmatprep.subr.mxu0 0.0
    %837 = vmatpush1.msra.mxu0 0.0
    %838 = vmatprep.subr.mxu0 0.0
    %839 = vmatpush1.msra.mxu0 0.0
    %840 = vmatprep.subr.mxu0 0.0
    %841 = vmatpush1.msra.mxu0 0.0
    %842 = vmatprep.subr.mxu0 0.0
    %843 = vmatpush1.msra.mxu0 0.0
    %844 = vmatprep.subr.mxu0 0.0
    %845 = vmatpush1.msra.mxu0 0.0
    %846 = vmatprep.mubr.f32.mxu0 0.0
    %847 = vmatmul.mubr.f32.gmra.mrb[0].mxu0 %v777
    %v848 = vpop.f32.mrb[0].mxu0
    %v849 = vadd.f32 0.0, %v848
    %v850 = vpop.f32.mrb[0].mxu0
    %851 = vmatprep.mubr.f32.mxu0 0.0
    %852 = vmatmul.mubr.f32.gmra.mrb[0].mxu0 %v780
    %v853 = vpop.f32.mrb[0].mxu0
    %v854 = vadd.f32 0.0, %v853
    %v855 = vpop.f32.mrb[0].mxu0
    %856 = vdwg.mxu0
    %v858 = vsel %vm382, %v568, 0
    %v861 = vsel %vm382, %v573, 0
    %863 = vmatprep.subr.mxu0 0.0
    %864 = vmatpush1.msra.mxu0 %v123
    %865 = vmatprep.subr.mxu0 0.0
    %866 = vmatpush1.msra.mxu0 0.0
    %867 = vmatprep.subr.mxu0 0.0
    %868 = vmatpush1.msra.mxu0 0.0
    %869 = vmatprep.subr.mxu0 0.0
    %870 = vmatpush1.msra.mxu0 0.0
    %871 = vmatprep.subr.mxu0 0.0
    %872 = vmatpush1.msra.mxu0 0.0
    %873 = vmatprep.subr.mxu0 0.0
    %874 = vmatpush1.msra.mxu0 0.0
    %875 = vmatprep.subr.mxu0 0.0
    %876 = vmatpush1.msra.mxu0 0.0
    %877 = vmatprep.subr.mxu0 0.0
    %878 = vmatpush1.msra.mxu0 0.0
    %879 = vmatprep.subr.mxu0 0.0
    %880 = vmatpush1.msra.mxu0 0.0
    %881 = vmatprep.subr.mxu0 0.0
    %882 = vmatpush1.msra.mxu0 0.0
    %883 = vmatprep.subr.mxu0 0.0
    %884 = vmatpush1.msra.mxu0 0.0
    %885 = vmatprep.subr.mxu0 0.0
    %886 = vmatpush1.msra.mxu0 0.0
    %887 = vmatprep.subr.mxu0 0.0
    %888 = vmatpush1.msra.mxu0 0.0
    %889 = vmatprep.subr.mxu0 0.0
    %890 = vmatpush1.msra.mxu0 0.0
    %891 = vmatprep.subr.mxu0 0.0
    %892 = vmatpush1.msra.mxu0 0.0
    %893 = vmatprep.subr.mxu0 0.0
    %894 = vmatpush1.msra.mxu0 0.0
    %895 = vmatprep.subr.mxu0 0.0
    %896 = vmatpush1.msra.mxu0 0.0
    %897 = vmatprep.subr.mxu0 0.0
    %898 = vmatpush1.msra.mxu0 0.0
    %899 = vmatprep.subr.mxu0 0.0
    %900 = vmatpush1.msra.mxu0 0.0
    %901 = vmatprep.subr.mxu0 0.0
    %902 = vmatpush1.msra.mxu0 0.0
    %903 = vmatprep.subr.mxu0 0.0
    %904 = vmatpush1.msra.mxu0 0.0
    %905 = vmatprep.subr.mxu0 0.0
    %906 = vmatpush1.msra.mxu0 0.0
    %907 = vmatprep.subr.mxu0 0.0
    %908 = vmatpush1.msra.mxu0 0.0
    %909 = vmatprep.subr.mxu0 0.0
    %910 = vmatpush1.msra.mxu0 0.0
    %911 = vmatprep.subr.mxu0 0.0
    %912 = vmatpush1.msra.mxu0 0.0
    %913 = vmatprep.subr.mxu0 0.0
    %914 = vmatpush1.msra.mxu0 0.0
    %915 = vmatprep.subr.mxu0 0.0
    %916 = vmatpush1.msra.mxu0 0.0
    %917 = vmatprep.subr.mxu0 0.0
    %918 = vmatpush1.msra.mxu0 0.0
    %919 = vmatprep.subr.mxu0 0.0
    %920 = vmatpush1.msra.mxu0 0.0
    %921 = vmatprep.subr.mxu0 0.0
    %922 = vmatpush1.msra.mxu0 0.0
    %923 = vmatprep.subr.mxu0 0.0
    %924 = vmatpush1.msra.mxu0 0.0
    %925 = vmatprep.subr.mxu0 0.0
    %926 = vmatpush1.msra.mxu0 0.0
    %927 = vmatprep.mubr.f32.mxu0 0.0
    %928 = vmatmul.mubr.f32.gmra.mrb[0].mxu0 %v858
    %v929 = vpop.f32.mrb[0].mxu0
    %v930 = vadd.f32 %v849, %v929
    %v931 = vpop.f32.mrb[0].mxu0
    %932 = vmatprep.mubr.f32.mxu0 0.0
    %933 = vmatmul.mubr.f32.gmra.mrb[0].mxu0 %v861
    %v934 = vpop.f32.mrb[0].mxu0
    %v935 = vadd.f32 %v854, %v934
    %v936 = vpop.f32.mrb[0].mxu0
    %937 = vdwg.mxu0
    %938 = vrot.lane.b32.xlu0 %v368, 112
    %v939 = vpop.permute.xlu0 %938
    %940 = vrot.lane.b32.xlu0 %v373, 112
    %v941 = vpop.permute.xlu0 %940
    %942 = vrot.lane.b32.xlu0 %v368, 80
    %v943 = vpop.permute.xlu0 %942
    %944 = vrot.lane.b32.xlu0 %v373, 80
    %v945 = vpop.permute.xlu0 %944
    %v946 = vsel %vm382, %v939, 0
    %v948 = vsel %vm382, %v941, 0
    %v950 = vsel %vm382, %v943, 0
    %v952 = vsel %vm382, %v945, 0
    %954 = vmatprep.subr.mxu0 0.0
    %955 = vmatpush1.xpose.msra.mxu0 %v950
    %956 = vmatprep.subr.mxu0 0.0
    %957 = vmatpush1.xpose.msra.mxu0 %v952
    %958 = vmatprep.subr.mxu0 0.0
    %959 = vmatpush1.xpose.msra.mxu0 0.0
    %960 = vmatprep.subr.mxu0 0.0
    %961 = vmatpush1.xpose.msra.mxu0 0.0
    %962 = vmatprep.subr.mxu0 0.0
    %963 = vmatpush1.xpose.msra.mxu0 0.0
    %964 = vmatprep.subr.mxu0 0.0
    %965 = vmatpush1.xpose.msra.mxu0 0.0
    %966 = vmatprep.subr.mxu0 0.0
    %967 = vmatpush1.xpose.msra.mxu0 0.0
    %968 = vmatprep.subr.mxu0 0.0
    %969 = vmatpush1.xpose.msra.mxu0 0.0
    %970 = vmatprep.subr.mxu0 0.0
    %971 = vmatpush1.xpose.msra.mxu0 0.0
    %972 = vmatprep.subr.mxu0 0.0
    %973 = vmatpush1.xpose.msra.mxu0 0.0
    %974 = vmatprep.subr.mxu0 0.0
    %975 = vmatpush1.xpose.msra.mxu0 0.0
    %976 = vmatprep.subr.mxu0 0.0
    %977 = vmatpush1.xpose.msra.mxu0 0.0
    %978 = vmatprep.subr.mxu0 0.0
    %979 = vmatpush1.xpose.msra.mxu0 0.0
    %980 = vmatprep.subr.mxu0 0.0
    %981 = vmatpush1.xpose.msra.mxu0 0.0
    %982 = vmatprep.subr.mxu0 0.0
    %983 = vmatpush1.xpose.msra.mxu0 0.0
    %984 = vmatprep.subr.mxu0 0.0
    %985 = vmatpush1.xpose.msra.mxu0 0.0
    %986 = vmatprep.subr.mxu0 0.0
    %987 = vmatpush1.xpose.msra.mxu0 0.0
    %988 = vmatprep.subr.mxu0 0.0
    %989 = vmatpush1.xpose.msra.mxu0 0.0
    %990 = vmatprep.subr.mxu0 0.0
    %991 = vmatpush1.xpose.msra.mxu0 0.0
    %992 = vmatprep.subr.mxu0 0.0
    %993 = vmatpush1.xpose.msra.mxu0 0.0
    %994 = vmatprep.subr.mxu0 0.0
    %995 = vmatpush1.xpose.msra.mxu0 0.0
    %996 = vmatprep.subr.mxu0 0.0
    %997 = vmatpush1.xpose.msra.mxu0 0.0
    %998 = vmatprep.subr.mxu0 0.0
    %999 = vmatpush1.xpose.msra.mxu0 0.0
    %1000 = vmatprep.subr.mxu0 0.0
    %1001 = vmatpush1.xpose.msra.mxu0 0.0
    %1002 = vmatprep.subr.mxu0 0.0
    %1003 = vmatpush1.xpose.msra.mxu0 0.0
    %1004 = vmatprep.subr.mxu0 0.0
    %1005 = vmatpush1.xpose.msra.mxu0 0.0
    %1006 = vmatprep.subr.mxu0 0.0
    %1007 = vmatpush1.xpose.msra.mxu0 0.0
    %1008 = vmatprep.subr.mxu0 0.0
    %1009 = vmatpush1.xpose.msra.mxu0 0.0
    %1010 = vmatprep.subr.mxu0 0.0
    %1011 = vmatpush1.xpose.msra.mxu0 0.0
    %1012 = vmatprep.subr.mxu0 0.0
    %1013 = vmatpush1.xpose.msra.mxu0 0.0
    %1014 = vmatprep.subr.mxu0 0.0
    %1015 = vmatpush1.xpose.msra.mxu0 0.0
    %1016 = vmatprep.subr.mxu0 0.0
    %1017 = vmatpush1.xpose.msra.mxu0 0.0
    %1018 = vmatprep.mubr.f32.mxu0 0.0
    %1019 = vmatmul.mubr.f32.gmra.mrb[0].mxu0 %v946
    %v1020 = vpop.f32.mrb[0].mxu0
    %v1021 = vadd.f32 %v111, %v1020
    %v1022 = vpop.f32.mrb[0].mxu0
    %1023 = vmatprep.mubr.f32.mxu0 0.0
    %1024 = vmatmul.mubr.f32.gmra.mrb[0].mxu0 %v948
    %v1025 = vpop.f32.mrb[0].mxu0
    %v1026 = vadd.f32 %v112, %v1025
    %v1027 = vpop.f32.mrb[0].mxu0
    %1028 = vdwg.mxu0
    %v1029 = vsel %vm466, %v1021, -inf
    %1030 = vmax.xlane.f32.xlu0 %v1029
    %v1031 = vpop.xlane.xlu0 %1030
    %v1032 = vsel %vm466, %v1026, -inf
    %1033 = vmax.xlane.f32.xlu0 %v1032
    %v1034 = vpop.xlane.xlu0 %1033
    %v1035 = vsub.f32 %v1021, %v1031
    %v1036 = vsub.f32 %v1026, %v1034
    %v1037 = vmul.f32 %v1035, 1.442695
    %v1038 = vpow.pop %v1037
    %v1039 = vmul.f32 %v1036, 1.442695
    %v1040 = vpow.pop %v1039
    %v1041 = vsel %vm466, %v1038, 0.0
    %1042 = vadd.xlane.f32.xlu0 %v1041
    %v1043 = vpop.xlane.xlu0 %1042
    %v1044 = vsel %vm466, %v1040, 0.0
    %1045 = vadd.xlane.f32.xlu0 %v1044
    %v1046 = vpop.xlane.xlu0 %1045
    %v1047 = vrcp.pop %v1043
    %v1048 = vrcp.pop %v1046
    %v1049 = vmul.f32 %v1038, %v1047
    %v1050 = vmul.f32 %v1040, %v1048
    %1051 = vrot.lane.b32.xlu0 %v368, 48
    %v1052 = vpop.permute.xlu0 %1051
    %1053 = vrot.lane.b32.xlu0 %v373, 48
    %v1054 = vpop.permute.xlu0 %1053
    %v1058 = vsel %vm466, %v1049, 0
    %v1061 = vsel %vm466, %v1050, 0
    %1063 = vmatprep.subr.mxu0 0.0
    %1064 = vmatpush1.msra.mxu0 %v1052
    %1065 = vmatprep.subr.mxu0 0.0
    %1066 = vmatpush1.msra.mxu0 %v1054
    %1067 = vmatprep.subr.mxu0 0.0
    %1068 = vmatpush1.msra.mxu0 0.0
    %1069 = vmatprep.subr.mxu0 0.0
    %1070 = vmatpush1.msra.mxu0 0.0
    %1071 = vmatprep.subr.mxu0 0.0
    %1072 = vmatpush1.msra.mxu0 0.0
    %1073 = vmatprep.subr.mxu0 0.0
    %1074 = vmatpush1.msra.mxu0 0.0
    %1075 = vmatprep.subr.mxu0 0.0
    %1076 = vmatpush1.msra.mxu0 0.0
    %1077 = vmatprep.subr.mxu0 0.0
    %1078 = vmatpush1.msra.mxu0 0.0
    %1079 = vmatprep.subr.mxu0 0.0
    %1080 = vmatpush1.msra.mxu0 0.0
    %1081 = vmatprep.subr.mxu0 0.0
    %1082 = vmatpush1.msra.mxu0 0.0
    %1083 = vmatprep.subr.mxu0 0.0
    %1084 = vmatpush1.msra.mxu0 0.0
    %1085 = vmatprep.subr.mxu0 0.0
    %1086 = vmatpush1.msra.mxu0 0.0
    %1087 = vmatprep.subr.mxu0 0.0
    %1088 = vmatpush1.msra.mxu0 0.0
    %1089 = vmatprep.subr.mxu0 0.0
    %1090 = vmatpush1.msra.mxu0 0.0
    %1091 = vmatprep.subr.mxu0 0.0
    %1092 = vmatpush1.msra.mxu0 0.0
    %1093 = vmatprep.subr.mxu0 0.0
    %1094 = vmatpush1.msra.mxu0 0.0
    %1095 = vmatprep.subr.mxu0 0.0
    %1096 = vmatpush1.msra.mxu0 0.0
    %1097 = vmatprep.subr.mxu0 0.0
    %1098 = vmatpush1.msra.mxu0 0.0
    %1099 = vmatprep.subr.mxu0 0.0
    %1100 = vmatpush1.msra.mxu0 0.0
    %1101 = vmatprep.subr.mxu0 0.0
    %1102 = vmatpush1.msra.mxu0 0.0
    %1103 = vmatprep.subr.mxu0 0.0
    %1104 = vmatpush1.msra.mxu0 0.0
    %1105 = vmatprep.subr.mxu0 0.0
    %1106 = vmatpush1.msra.mxu0 0.0
    %1107 = vmatprep.subr.mxu0 0.0
    %1108 = vmatpush1.msra.mxu0 0.0
    %1109 = vmatprep.subr.mxu0 0.0
    %1110 = vmatpush1.msra.mxu0 0.0
    %1111 = vmatprep.subr.mxu0 0.0
    %1112 = vmatpush1.msra.mxu0 0.0
    %1113 = vmatprep.subr.mxu0 0.0
    %1114 = vmatpush1.msra.mxu0 0.0
    %1115 = vmatprep.subr.mxu0 0.0
    %1116 = vmatpush1.msra.mxu0 0.0
    %1117 = vmatprep.subr.mxu0 0.0
    %1118 = vmatpush1.msra.mxu0 0.0
    %1119 = vmatprep.subr.mxu0 0.0
    %1120 = vmatpush1.msra.mxu0 0.0
    %1121 = vmatprep.subr.mxu0 0.0
    %1122 = vmatpush1.msra.mxu0 0.0
    %1123 = vmatprep.subr.mxu0 0.0
    %1124 = vmatpush1.msra.mxu0 0.0
    %1125 = vmatprep.subr.mxu0 0.0
    %1126 = vmatpush1.msra.mxu0 0.0
    %1127 = vmatprep.mubr.f32.mxu0 0.0
    %1128 = vmatmul.mubr.f32.gmra.mrb[0].mxu0 %v1058
    %v1129 = vpop.f32.mrb[0].mxu0
    %v1130 = vadd.f32 0.0, %v1129
    %v1131 = vpop.f32.mrb[0].mxu0
    %1132 = vmatprep.mubr.f32.mxu0 0.0
    %1133 = vmatmul.mubr.f32.gmra.mrb[0].mxu0 %v1061
    %v1134 = vpop.f32.mrb[0].mxu0
    %v1135 = vadd.f32 0.0, %v1134
    %v1136 = vpop.f32.mrb[0].mxu0
    %1137 = vdwg.mxu0
    %v1139 = vsel %vm382, %v1130, 0
    %v1142 = vsel %vm382, %v1135, 0
    %1144 = vmatprep.subr.mxu0 0.0
    %1145 = vmatpush1.msra.mxu0 %v125
    %1146 = vmatprep.subr.mxu0 0.0
    %1147 = vmatpush1.msra.mxu0 0.0
    %1148 = vmatprep.subr.mxu0 0.0
    %1149 = vmatpush1.msra.mxu0 0.0
    %1150 = vmatprep.subr.mxu0 0.0
    %1151 = vmatpush1.msra.mxu0 0.0
    %1152 = vmatprep.subr.mxu0 0.0
    %1153 = vmatpush1.msra.mxu0 0.0
    %1154 = vmatprep.subr.mxu0 0.0
    %1155 = vmatpush1.msra.mxu0 0.0
    %1156 = vmatprep.subr.mxu0 0.0
    %1157 = vmatpush1.msra.mxu0 0.0
    %1158 = vmatprep.subr.mxu0 0.0
    %1159 = vmatpush1.msra.mxu0 0.0
    %1160 = vmatprep.subr.mxu0 0.0
    %1161 = vmatpush1.msra.mxu0 0.0
    %1162 = vmatprep.subr.mxu0 0.0
    %1163 = vmatpush1.msra.mxu0 0.0
    %1164 = vmatprep.subr.mxu0 0.0
    %1165 = vmatpush1.msra.mxu0 0.0
    %1166 = vmatprep.subr.mxu0 0.0
    %1167 = vmatpush1.msra.mxu0 0.0
    %1168 = vmatprep.subr.mxu0 0.0
    %1169 = vmatpush1.msra.mxu0 0.0
    %1170 = vmatprep.subr.mxu0 0.0
    %1171 = vmatpush1.msra.mxu0 0.0
    %1172 = vmatprep.subr.mxu0 0.0
    %1173 = vmatpush1.msra.mxu0 0.0
    %1174 = vmatprep.subr.mxu0 0.0
    %1175 = vmatpush1.msra.mxu0 0.0
    %1176 = vmatprep.subr.mxu0 0.0
    %1177 = vmatpush1.msra.mxu0 0.0
    %1178 = vmatprep.subr.mxu0 0.0
    %1179 = vmatpush1.msra.mxu0 0.0
    %1180 = vmatprep.subr.mxu0 0.0
    %1181 = vmatpush1.msra.mxu0 0.0
    %1182 = vmatprep.subr.mxu0 0.0
    %1183 = vmatpush1.msra.mxu0 0.0
    %1184 = vmatprep.subr.mxu0 0.0
    %1185 = vmatpush1.msra.mxu0 0.0
    %1186 = vmatprep.subr.mxu0 0.0
    %1187 = vmatpush1.msra.mxu0 0.0
    %1188 = vmatprep.subr.mxu0 0.0
    %1189 = vmatpush1.msra.mxu0 0.0
    %1190 = vmatprep.subr.mxu0 0.0
    %1191 = vmatpush1.msra.mxu0 0.0
    %1192 = vmatprep.subr.mxu0 0.0
    %1193 = vmatpush1.msra.mxu0 0.0
    %1194 = vmatprep.subr.mxu0 0.0
    %1195 = vmatpush1.msra.mxu0 0.0
    %1196 = vmatprep.subr.mxu0 0.0
    %1197 = vmatpush1.msra.mxu0 0.0
    %1198 = vmatprep.subr.mxu0 0.0
    %1199 = vmatpush1.msra.mxu0 0.0
    %1200 = vmatprep.subr.mxu0 0.0
    %1201 = vmatpush1.msra.mxu0 0.0
    %1202 = vmatprep.subr.mxu0 0.0
    %1203 = vmatpush1.msra.mxu0 0.0
    %1204 = vmatprep.subr.mxu0 0.0
    %1205 = vmatpush1.msra.mxu0 0.0
    %1206 = vmatprep.subr.mxu0 0.0
    %1207 = vmatpush1.msra.mxu0 0.0
    %1208 = vmatprep.mubr.f32.mxu0 0.0
    %1209 = vmatmul.mubr.f32.gmra.mrb[0].mxu0 %v1139
    %v1210 = vpop.f32.mrb[0].mxu0
    %v1211 = vadd.f32 0.0, %v1210
    %v1212 = vpop.f32.mrb[0].mxu0
    %1213 = vmatprep.mubr.f32.mxu0 0.0
    %1214 = vmatmul.mubr.f32.gmra.mrb[0].mxu0 %v1142
    %v1215 = vpop.f32.mrb[0].mxu0
    %v1216 = vadd.f32 0.0, %v1215
    %v1217 = vpop.f32.mrb[0].mxu0
    %1218 = vdwg.mxu0
    %v1219 = vadd.f32 %v930, %v1211
    %v1220 = vadd.f32 %v935, %v1216
    %1221 = vrot.lane.b32.xlu0 %v368, 104
    %v1222 = vpop.permute.xlu0 %1221
    %1223 = vrot.lane.b32.xlu0 %v373, 104
    %v1224 = vpop.permute.xlu0 %1223
    %1225 = vrot.lane.b32.xlu0 %v368, 72
    %v1226 = vpop.permute.xlu0 %1225
    %1227 = vrot.lane.b32.xlu0 %v373, 72
    %v1228 = vpop.permute.xlu0 %1227
    %v1229 = vsel %vm382, %v1222, 0
    %v1231 = vsel %vm382, %v1224, 0
    %v1233 = vsel %vm382, %v1226, 0
    %v1235 = vsel %vm382, %v1228, 0
    %1237 = vmatprep.subr.mxu0 0.0
    %1238 = vmatpush1.xpose.msra.mxu0 %v1233
    %1239 = vmatprep.subr.mxu0 0.0
    %1240 = vmatpush1.xpose.msra.mxu0 %v1235
    %1241 = vmatprep.subr.mxu0 0.0
    %1242 = vmatpush1.xpose.msra.mxu0 0.0
    %1243 = vmatprep.subr.mxu0 0.0
    %1244 = vmatpush1.xpose.msra.mxu0 0.0
    %1245 = vmatprep.subr.mxu0 0.0
    %1246 = vmatpush1.xpose.msra.mxu0 0.0
    %1247 = vmatprep.subr.mxu0 0.0
    %1248 = vmatpush1.xpose.msra.mxu0 0.0
    %1249 = vmatprep.subr.mxu0 0.0
    %1250 = vmatpush1.xpose.msra.mxu0 0.0
    %1251 = vmatprep.subr.mxu0 0.0
    %1252 = vmatpush1.xpose.msra.mxu0 0.0
    %1253 = vmatprep.subr.mxu0 0.0
    %1254 = vmatpush1.xpose.msra.mxu0 0.0
    %1255 = vmatprep.subr.mxu0 0.0
    %1256 = vmatpush1.xpose.msra.mxu0 0.0
    %1257 = vmatprep.subr.mxu0 0.0
    %1258 = vmatpush1.xpose.msra.mxu0 0.0
    %1259 = vmatprep.subr.mxu0 0.0
    %1260 = vmatpush1.xpose.msra.mxu0 0.0
    %1261 = vmatprep.subr.mxu0 0.0
    %1262 = vmatpush1.xpose.msra.mxu0 0.0
    %1263 = vmatprep.subr.mxu0 0.0
    %1264 = vmatpush1.xpose.msra.mxu0 0.0
    %1265 = vmatprep.subr.mxu0 0.0
    %1266 = vmatpush1.xpose.msra.mxu0 0.0
    %1267 = vmatprep.subr.mxu0 0.0
    %1268 = vmatpush1.xpose.msra.mxu0 0.0
    %1269 = vmatprep.subr.mxu0 0.0
    %1270 = vmatpush1.xpose.msra.mxu0 0.0
    %1271 = vmatprep.subr.mxu0 0.0
    %1272 = vmatpush1.xpose.msra.mxu0 0.0
    %1273 = vmatprep.subr.mxu0 0.0
    %1274 = vmatpush1.xpose.msra.mxu0 0.0
    %1275 = vmatprep.subr.mxu0 0.0
    %1276 = vmatpush1.xpose.msra.mxu0 0.0
    %1277 = vmatprep.subr.mxu0 0.0
    %1278 = vmatpush1.xpose.msra.mxu0 0.0
    %1279 = vmatprep.subr.mxu0 0.0
    %1280 = vmatpush1.xpose.msra.mxu0 0.0
    %1281 = vmatprep.subr.mxu0 0.0
    %1282 = vmatpush1.xpose.msra.mxu0 0.0
    %1283 = vmatprep.subr.mxu0 0.0
    %1284 = vmatpush1.xpose.msra.mxu0 0.0
    %1285 = vmatprep.subr.mxu0 0.0
    %1286 = vmatpush1.xpose.msra.mxu0 0.0
    %1287 = vmatprep.subr.mxu0 0.0
    %1288 = vmatpush1.xpose.msra.mxu0 0.0
    %1289 = vmatprep.subr.mxu0 0.0
    %1290 = vmatpush1.xpose.msra.mxu0 0.0
    %1291 = vmatprep.subr.mxu0 0.0
    %1292 = vmatpush1.xpose.msra.mxu0 0.0
    %1293 = vmatprep.subr.mxu0 0.0
    %1294 = vmatpush1.xpose.msra.mxu0 0.0
    %1295 = vmatprep.subr.mxu0 0.0
    %1296 = vmatpush1.xpose.msra.mxu0 0.0
    %1297 = vmatprep.subr.mxu0 0.0
    %1298 = vmatpush1.xpose.msra.mxu0 0.0
    %1299 = vmatprep.subr.mxu0 0.0
    %1300 = vmatpush1.xpose.msra.mxu0 0.0
    %1301 = vmatprep.mubr.f32.mxu0 0.0
    %1302 = vmatmul.mubr.f32.gmra.mrb[0].mxu0 %v1229
    %v1303 = vpop.f32.mrb[0].mxu0
    %v1304 = vadd.f32 %v111, %v1303
    %v1305 = vpop.f32.mrb[0].mxu0
    %1306 = vmatprep.mubr.f32.mxu0 0.0
    %1307 = vmatmul.mubr.f32.gmra.mrb[0].mxu0 %v1231
    %v1308 = vpop.f32.mrb[0].mxu0
    %v1309 = vadd.f32 %v112, %v1308
    %v1310 = vpop.f32.mrb[0].mxu0
    %1311 = vdwg.mxu0
    %v1312 = vsel %vm466, %v1304, -inf
    %1313 = vmax.xlane.f32.xlu0 %v1312
    %v1314 = vpop.xlane.xlu0 %1313
    %v1315 = vsel %vm466, %v1309, -inf
    %1316 = vmax.xlane.f32.xlu0 %v1315
    %v1317 = vpop.xlane.xlu0 %1316
    %v1318 = vsub.f32 %v1304, %v1314
    %v1319 = vsub.f32 %v1309, %v1317
    %v1320 = vmul.f32 %v1318, 1.442695
    %v1321 = vpow.pop %v1320
    %v1322 = vmul.f32 %v1319, 1.442695
    %v1323 = vpow.pop %v1322
    %v1324 = vsel %vm466, %v1321, 0.0
    %1325 = vadd.xlane.f32.xlu0 %v1324
    %v1326 = vpop.xlane.xlu0 %1325
    %v1327 = vsel %vm466, %v1323, 0.0
    %1328 = vadd.xlane.f32.xlu0 %v1327
    %v1329 = vpop.xlane.xlu0 %1328
    %v1330 = vrcp.pop %v1326
    %v1331 = vrcp.pop %v1329
    %v1332 = vmul.f32 %v1321, %v1330
    %v1333 = vmul.f32 %v1323, %v1331
    %1334 = vrot.lane.b32.xlu0 %v368, 40
    %v1335 = vpop.permute.xlu0 %1334
    %1336 = vrot.lane.b32.xlu0 %v373, 40
    %v1337 = vpop.permute.xlu0 %1336
    %v1341 = vsel %vm466, %v1332, 0
    %v1344 = vsel %vm466, %v1333, 0
    %1346 = vmatprep.subr.mxu0 0.0
    %1347 = vmatpush1.msra.mxu0 %v1335
    %1348 = vmatprep.subr.mxu0 0.0
    %1349 = vmatpush1.msra.mxu0 %v1337
    %1350 = vmatprep.subr.mxu0 0.0
    %1351 = vmatpush1.msra.mxu0 0.0
    %1352 = vmatprep.subr.mxu0 0.0
    %1353 = vmatpush1.msra.mxu0 0.0
    %1354 = vmatprep.subr.mxu0 0.0
    %1355 = vmatpush1.msra.mxu0 0.0
    %1356 = vmatprep.subr.mxu0 0.0
    %1357 = vmatpush1.msra.mxu0 0.0
    %1358 = vmatprep.subr.mxu0 0.0
    %1359 = vmatpush1.msra.mxu0 0.0
    %1360 = vmatprep.subr.mxu0 0.0
    %1361 = vmatpush1.msra.mxu0 0.0
    %1362 = vmatprep.subr.mxu0 0.0
    %1363 = vmatpush1.msra.mxu0 0.0
    %1364 = vmatprep.subr.mxu0 0.0
    %1365 = vmatpush1.msra.mxu0 0.0
    %1366 = vmatprep.subr.mxu0 0.0
    %1367 = vmatpush1.msra.mxu0 0.0
    %1368 = vmatprep.subr.mxu0 0.0
    %1369 = vmatpush1.msra.mxu0 0.0
    %1370 = vmatprep.subr.mxu0 0.0
    %1371 = vmatpush1.msra.mxu0 0.0
    %1372 = vmatprep.subr.mxu0 0.0
    %1373 = vmatpush1.msra.mxu0 0.0
    %1374 = vmatprep.subr.mxu0 0.0
    %1375 = vmatpush1.msra.mxu0 0.0
    %1376 = vmatprep.subr.mxu0 0.0
    %1377 = vmatpush1.msra.mxu0 0.0
    %1378 = vmatprep.subr.mxu0 0.0
    %1379 = vmatpush1.msra.mxu0 0.0
    %1380 = vmatprep.subr.mxu0 0.0
    %1381 = vmatpush1.msra.mxu0 0.0
    %1382 = vmatprep.subr.mxu0 0.0
    %1383 = vmatpush1.msra.mxu0 0.0
    %1384 = vmatprep.subr.mxu0 0.0
    %1385 = vmatpush1.msra.mxu0 0.0
    %1386 = vmatprep.subr.mxu0 0.0
    %1387 = vmatpush1.msra.mxu0 0.0
    %1388 = vmatprep.subr.mxu0 0.0
    %1389 = vmatpush1.msra.mxu0 0.0
    %1390 = vmatprep.subr.mxu0 0.0
    %1391 = vmatpush1.msra.mxu0 0.0
    %1392 = vmatprep.subr.mxu0 0.0
    %1393 = vmatpush1.msra.mxu0 0.0
    %1394 = vmatprep.subr.mxu0 0.0
    %1395 = vmatpush1.msra.mxu0 0.0
    %1396 = vmatprep.subr.mxu0 0.0
    %1397 = vmatpush1.msra.mxu0 0.0
    %1398 = vmatprep.subr.mxu0 0.0
    %1399 = vmatpush1.msra.mxu0 0.0
    %1400 = vmatprep.subr.mxu0 0.0
    %1401 = vmatpush1.msra.mxu0 0.0
    %1402 = vmatprep.subr.mxu0 0.0
    %1403 = vmatpush1.msra.mxu0 0.0
    %1404 = vmatprep.subr.mxu0 0.0
    %1405 = vmatpush1.msra.mxu0 0.0
    %1406 = vmatprep.subr.mxu0 0.0
    %1407 = vmatpush1.msra.mxu0 0.0
    %1408 = vmatprep.subr.mxu0 0.0
    %1409 = vmatpush1.msra.mxu0 0.0
    %1410 = vmatprep.mubr.f32.mxu0 0.0
    %1411 = vmatmul.mubr.f32.gmra.mrb[0].mxu0 %v1341
    %v1412 = vpop.f32.mrb[0].mxu0
    %v1413 = vadd.f32 0.0, %v1412
    %v1414 = vpop.f32.mrb[0].mxu0
    %1415 = vmatprep.mubr.f32.mxu0 0.0
    %1416 = vmatmul.mubr.f32.gmra.mrb[0].mxu0 %v1344
    %v1417 = vpop.f32.mrb[0].mxu0
    %v1418 = vadd.f32 0.0, %v1417
    %v1419 = vpop.f32.mrb[0].mxu0
    %1420 = vdwg.mxu0
    %v1422 = vsel %vm382, %v1413, 0
    %v1425 = vsel %vm382, %v1418, 0
    %1427 = vmatprep.subr.mxu0 0.0
    %1428 = vmatpush1.msra.mxu0 %v126
    %1429 = vmatprep.subr.mxu0 0.0
    %1430 = vmatpush1.msra.mxu0 0.0
    %1431 = vmatprep.subr.mxu0 0.0
    %1432 = vmatpush1.msra.mxu0 0.0
    %1433 = vmatprep.subr.mxu0 0.0
    %1434 = vmatpush1.msra.mxu0 0.0
    %1435 = vmatprep.subr.mxu0 0.0
    %1436 = vmatpush1.msra.mxu0 0.0
    %1437 = vmatprep.subr.mxu0 0.0
    %1438 = vmatpush1.msra.mxu0 0.0
    %1439 = vmatprep.subr.mxu0 0.0
    %1440 = vmatpush1.msra.mxu0 0.0
    %1441 = vmatprep.subr.mxu0 0.0
    %1442 = vmatpush1.msra.mxu0 0.0
    %1443 = vmatprep.subr.mxu0 0.0
    %1444 = vmatpush1.msra.mxu0 0.0
    %1445 = vmatprep.subr.mxu0 0.0
    %1446 = vmatpush1.msra.mxu0 0.0
    %1447 = vmatprep.subr.mxu0 0.0
    %1448 = vmatpush1.msra.mxu0 0.0
    %1449 = vmatprep.subr.mxu0 0.0
    %1450 = vmatpush1.msra.mxu0 0.0
    %1451 = vmatprep.subr.mxu0 0.0
    %1452 = vmatpush1.msra.mxu0 0.0
    %1453 = vmatprep.subr.mxu0 0.0
    %1454 = vmatpush1.msra.mxu0 0.0
    %1455 = vmatprep.subr.mxu0 0.0
    %1456 = vmatpush1.msra.mxu0 0.0
    %1457 = vmatprep.subr.mxu0 0.0
    %1458 = vmatpush1.msra.mxu0 0.0
    %1459 = vmatprep.subr.mxu0 0.0
    %1460 = vmatpush1.msra.mxu0 0.0
    %1461 = vmatprep.subr.mxu0 0.0
    %1462 = vmatpush1.msra.mxu0 0.0
    %1463 = vmatprep.subr.mxu0 0.0
    %1464 = vmatpush1.msra.mxu0 0.0
    %1465 = vmatprep.subr.mxu0 0.0
    %1466 = vmatpush1.msra.mxu0 0.0
    %1467 = vmatprep.subr.mxu0 0.0
    %1468 = vmatpush1.msra.mxu0 0.0
    %1469 = vmatprep.subr.mxu0 0.0
    %1470 = vmatpush1.msra.mxu0 0.0
    %1471 = vmatprep.subr.mxu0 0.0
    %1472 = vmatpush1.msra.mxu0 0.0
    %1473 = vmatprep.subr.mxu0 0.0
    %1474 = vmatpush1.msra.mxu0 0.0
    %1475 = vmatprep.subr.mxu0 0.0
    %1476 = vmatpush1.msra.mxu0 0.0
    %1477 = vmatprep.subr.mxu0 0.0
    %1478 = vmatpush1.msra.mxu0 0.0
    %1479 = vmatprep.subr.mxu0 0.0
    %1480 = vmatpush1.msra.mxu0 0.0
    %1481 = vmatprep.subr.mxu0 0.0
    %1482 = vmatpush1.msra.mxu0 0.0
    %1483 = vmatprep.subr.mxu0 0.0
    %1484 = vmatpush1.msra.mxu0 0.0
    %1485 = vmatprep.subr.mxu0 0.0
    %1486 = vmatpush1.msra.mxu0 0.0
    %1487 = vmatprep.subr.mxu0 0.0
    %1488 = vmatpush1.msra.mxu0 0.0
    %1489 = vmatprep.subr.mxu0 0.0
    %1490 = vmatpush1.msra.mxu0 0.0
    %1491 = vmatprep.mubr.f32.mxu0 0.0
    %1492 = vmatmul.mubr.f32.gmra.mrb[0].mxu0 %v1422
    %v1493 = vpop.f32.mrb[0].mxu0
    %v1494 = vadd.f32 0.0, %v1493
    %v1495 = vpop.f32.mrb[0].mxu0
    %1496 = vmatprep.mubr.f32.mxu0 0.0
    %1497 = vmatmul.mubr.f32.gmra.mrb[0].mxu0 %v1425
    %v1498 = vpop.f32.mrb[0].mxu0
    %v1499 = vadd.f32 0.0, %v1498
    %v1500 = vpop.f32.mrb[0].mxu0
    %1501 = vdwg.mxu0
    %v1502 = vadd.f32 %v1219, %v1494
    %v1503 = vadd.f32 %v1220, %v1499
    %v1504 = vadd.f32 %v107, %v1502
    %v1505 = vadd.f32 %v108, %v1503
    %1507 = vrot.lane.b32.xlu0 %v294, 32
    %v1508 = vpop.permute.xlu0 %1507
    %v1510 = vadd.f32 %v1504, %v1508
    %v1511 = vadd.f32 %v1505, %v1508
    %v1512 = vsel %vm170, %v1510, 0.0
    %1513 = vadd.xlane.f32.xlu0 %v1512
    %v1514 = vpop.xlane.xlu0 %1513
    %v1515 = vsel %vm170, %v1511, 0.0
    %1516 = vadd.xlane.f32.xlu0 %v1515
    %v1517 = vpop.xlane.xlu0 %1516
    %v1518 = vmul.f32 %v1514, %v258
    %v1519 = vmul.f32 %v1517, %v258
    %v1520 = vsub.f32 %v1510, %v1518
    %v1521 = vsub.f32 %v1511, %v1519
    %v1522 = vmul.f32 %v1520, %v1520
    %v1523 = vmul.f32 %v1521, %v1521
    %v1524 = vsel %vm170, %v1522, 0.0
    %1525 = vadd.xlane.f32.xlu0 %v1524
    %v1526 = vpop.xlane.xlu0 %1525
    %v1527 = vsel %vm170, %v1523, 0.0
    %1528 = vadd.xlane.f32.xlu0 %v1527
    %v1529 = vpop.xlane.xlu0 %1528
    %v1530 = vmul.f32 %v1526, %v258
    %v1531 = vmul.f32 %v1529, %v258
    %v1532 = vadd.f32 %v1530, 1e-05
    %v1533 = vadd.f32 %v1531, 1e-05
    %v1534 = vrsqrt.pop %v1532
    %v1535 = vrsqrt.pop %v1533
    %v1536 = vmul.f32 %v1520, %v1534
    %v1537 = vmul.f32 %v1521, %v1535
    %v1538 = vlaneseq
    %v1539 = vshrl.u32 %v1538, 7
    %v1540 = vsub.s32 1, %v1539
    %v1541 = vrot.slane %v145, %v1540
    %v1542 = vmul.f32 %v1536, %v1541
    %v1543 = vmul.f32 %v1537, %v1541
    %v1544 = vlaneseq
    %v1545 = vshrl.u32 %v1544, 7
    %v1546 = vsub.s32 5, %v1545
    %v1547 = vrot.slane %v145, %v1546
    %v1548 = vadd.f32 %v1542, %v1547
    %v1549 = vadd.f32 %v1543, %v1547
    %v1551 = vsel %vm170, %v1548, 0
    %v1554 = vsel %vm170, %v1549, 0
    %1556 = vmatprep.subr.mxu0 0.0
    %1557 = vmatpush1.msra.mxu0 %v119
    %1558 = vmatprep.subr.mxu0 0.0
    %1559 = vmatpush1.msra.mxu0 %v120
    %1560 = vmatprep.subr.mxu0 0.0
    %1561 = vmatpush1.msra.mxu0 %v121
    %1562 = vmatprep.subr.mxu0 0.0
    %1563 = vmatpush1.msra.mxu0 %v122
    %1564 = vmatprep.subr.mxu0 0.0
    %1565 = vmatpush1.msra.mxu0 0.0
    %1566 = vmatprep.subr.mxu0 0.0
    %1567 = vmatpush1.msra.mxu0 0.0
    %1568 = vmatprep.subr.mxu0 0.0
    %1569 = vmatpush1.msra.mxu0 0.0
    %1570 = vmatprep.subr.mxu0 0.0
    %1571 = vmatpush1.msra.mxu0 0.0
    %1572 = vmatprep.subr.mxu0 0.0
    %1573 = vmatpush1.msra.mxu0 0.0
    %1574 = vmatprep.subr.mxu0 0.0
    %1575 = vmatpush1.msra.mxu0 0.0
    %1576 = vmatprep.subr.mxu0 0.0
    %1577 = vmatpush1.msra.mxu0 0.0
    %1578 = vmatprep.subr.mxu0 0.0
    %1579 = vmatpush1.msra.mxu0 0.0
    %1580 = vmatprep.subr.mxu0 0.0
    %1581 = vmatpush1.msra.mxu0 0.0
    %1582 = vmatprep.subr.mxu0 0.0
    %1583 = vmatpush1.msra.mxu0 0.0
    %1584 = vmatprep.subr.mxu0 0.0
    %1585 = vmatpush1.msra.mxu0 0.0
    %1586 = vmatprep.subr.mxu0 0.0
    %1587 = vmatpush1.msra.mxu0 0.0
    %1588 = vmatprep.subr.mxu0 0.0
    %1589 = vmatpush1.msra.mxu0 0.0
    %1590 = vmatprep.subr.mxu0 0.0
    %1591 = vmatpush1.msra.mxu0 0.0
    %1592 = vmatprep.subr.mxu0 0.0
    %1593 = vmatpush1.msra.mxu0 0.0
    %1594 = vmatprep.subr.mxu0 0.0
    %1595 = vmatpush1.msra.mxu0 0.0
    %1596 = vmatprep.subr.mxu0 0.0
    %1597 = vmatpush1.msra.mxu0 0.0
    %1598 = vmatprep.subr.mxu0 0.0
    %1599 = vmatpush1.msra.mxu0 0.0
    %1600 = vmatprep.subr.mxu0 0.0
    %1601 = vmatpush1.msra.mxu0 0.0
    %1602 = vmatprep.subr.mxu0 0.0
    %1603 = vmatpush1.msra.mxu0 0.0
    %1604 = vmatprep.subr.mxu0 0.0
    %1605 = vmatpush1.msra.mxu0 0.0
    %1606 = vmatprep.subr.mxu0 0.0
    %1607 = vmatpush1.msra.mxu0 0.0
    %1608 = vmatprep.subr.mxu0 0.0
    %1609 = vmatpush1.msra.mxu0 0.0
    %1610 = vmatprep.subr.mxu0 0.0
    %1611 = vmatpush1.msra.mxu0 0.0
    %1612 = vmatprep.subr.mxu0 0.0
    %1613 = vmatpush1.msra.mxu0 0.0
    %1614 = vmatprep.subr.mxu0 0.0
    %1615 = vmatpush1.msra.mxu0 0.0
    %1616 = vmatprep.subr.mxu0 0.0
    %1617 = vmatpush1.msra.mxu0 0.0
    %1618 = vmatprep.subr.mxu0 0.0
    %1619 = vmatpush1.msra.mxu0 0.0
    %1620 = vmatprep.mubr.f32.mxu0 0.0
    %1621 = vmatmul.mubr.f32.gmra.mrb[0].mxu0 %v1551
    %v1622 = vpop.f32.mrb[0].mxu0
    %v1623 = vadd.f32 %v149, %v1622
    %v1624 = vpop.f32.mrb[0].mxu0
    %1625 = vmatprep.mubr.f32.mxu0 0.0
    %1626 = vmatmul.mubr.f32.gmra.mrb[0].mxu0 %v1554
    %v1627 = vpop.f32.mrb[0].mxu0
    %v1628 = vadd.f32 %v149, %v1627
    %v1629 = vpop.f32.mrb[0].mxu0
    %1630 = vdwg.mxu0
    %v1632 = vsel %vm382, %v1623, 0
    %v1635 = vsel %vm382, %v1628, 0
    %v1638 = vsel %vm382, %v244, 0
    %v1641 = vsel %vm382, %v249, 0
    %1643 = vmatprep.subr.mxu0 0.0
    %1644 = vmatpush1.xpose.msra.mxu0 %v1638
    %1645 = vmatprep.subr.mxu0 0.0
    %1646 = vmatpush1.xpose.msra.mxu0 %v1641
    %1647 = vmatprep.subr.mxu0 0.0
    %1648 = vmatpush1.xpose.msra.mxu0 0.0
    %1649 = vmatprep.subr.mxu0 0.0
    %1650 = vmatpush1.xpose.msra.mxu0 0.0
    %1651 = vmatprep.subr.mxu0 0.0
    %1652 = vmatpush1.xpose.msra.mxu0 0.0
    %1653 = vmatprep.subr.mxu0 0.0
    %1654 = vmatpush1.xpose.msra.mxu0 0.0
    %1655 = vmatprep.subr.mxu0 0.0
    %1656 = vmatpush1.xpose.msra.mxu0 0.0
    %1657 = vmatprep.subr.mxu0 0.0
    %1658 = vmatpush1.xpose.msra.mxu0 0.0
    %1659 = vmatprep.subr.mxu0 0.0
    %1660 = vmatpush1.xpose.msra.mxu0 0.0
    %1661 = vmatprep.subr.mxu0 0.0
    %1662 = vmatpush1.xpose.msra.mxu0 0.0
    %1663 = vmatprep.subr.mxu0 0.0
    %1664 = vmatpush1.xpose.msra.mxu0 0.0
    %1665 = vmatprep.subr.mxu0 0.0
    %1666 = vmatpush1.xpose.msra.mxu0 0.0
    %1667 = vmatprep.subr.mxu0 0.0
    %1668 = vmatpush1.xpose.msra.mxu0 0.0
    %1669 = vmatprep.subr.mxu0 0.0
    %1670 = vmatpush1.xpose.msra.mxu0 0.0
    %1671 = vmatprep.subr.mxu0 0.0
    %1672 = vmatpush1.xpose.msra.mxu0 0.0
    %1673 = vmatprep.subr.mxu0 0.0
    %1674 = vmatpush1.xpose.msra.mxu0 0.0
    %1675 = vmatprep.subr.mxu0 0.0
    %1676 = vmatpush1.xpose.msra.mxu0 0.0
    %1677 = vmatprep.subr.mxu0 0.0
    %1678 = vmatpush1.xpose.msra.mxu0 0.0
    %1679 = vmatprep.subr.mxu0 0.0
    %1680 = vmatpush1.xpose.msra.mxu0 0.0
    %1681 = vmatprep.subr.mxu0 0.0
    %1682 = vmatpush1.xpose.msra.mxu0 0.0
    %1683 = vmatprep.subr.mxu0 0.0
    %1684 = vmatpush1.xpose.msra.mxu0 0.0
    %1685 = vmatprep.subr.mxu0 0.0
    %1686 = vmatpush1.xpose.msra.mxu0 0.0
    %1687 = vmatprep.subr.mxu0 0.0
    %1688 = vmatpush1.xpose.msra.mxu0 0.0
    %1689 = vmatprep.subr.mxu0 0.0
    %1690 = vmatpush1.xpose.msra.mxu0 0.0
    %1691 = vmatprep.subr.mxu0 0.0
    %1692 = vmatpush1.xpose.msra.mxu0 0.0
    %1693 = vmatprep.subr.mxu0 0.0
    %1694 = vmatpush1.xpose.msra.mxu0 0.0
    %1695 = vmatprep.subr.mxu0 0.0
    %1696 = vmatpush1.xpose.msra.mxu0 0.0
    %1697 = vmatprep.subr.mxu0 0.0
    %1698 = vmatpush1.xpose.msra.mxu0 0.0
    %1699 = vmatprep.subr.mxu0 0.0
    %1700 = vmatpush1.xpose.msra.mxu0 0.0
    %1701 = vmatprep.subr.mxu0 0.0
    %1702 = vmatpush1.xpose.msra.mxu0 0.0
    %1703 = vmatprep.subr.mxu0 0.0
    %1704 = vmatpush1.xpose.msra.mxu0 0.0
    %1705 = vmatprep.subr.mxu0 0.0
    %1706 = vmatpush1.xpose.msra.mxu0 0.0
    %1707 = vmatprep.mubr.f32.mxu0 0.0
    %1708 = vmatmul.mubr.f32.gmra.mrb[0].mxu0 %v1632
    %v1709 = vpop.f32.mrb[0].mxu0
    %v1710 = vadd.f32 %v113, %v1709
    %v1711 = vpop.f32.mrb[0].mxu0
    %1712 = vmatprep.mubr.f32.mxu0 0.0
    %1713 = vmatmul.mubr.f32.gmra.mrb[0].mxu0 %v1635
    %v1714 = vpop.f32.mrb[0].mxu0
    %v1715 = vadd.f32 %v114, %v1714
    %v1716 = vpop.f32.mrb[0].mxu0
    %1717 = vdwg.mxu0
    %v1718 = vsel %vm466, %v1710, -inf
    %1719 = vmax.xlane.f32.xlu0 %v1718
    %v1720 = vpop.xlane.xlu0 %1719
    %v1721 = vsel %vm466, %v1715, -inf
    %1722 = vmax.xlane.f32.xlu0 %v1721
    %v1723 = vpop.xlane.xlu0 %1722
    %v1724 = vsub.f32 %v1710, %v1720
    %v1725 = vsub.f32 %v1715, %v1723
    %v1726 = vmul.f32 %v1724, 1.442695
    %v1727 = vpow.pop %v1726
    %v1728 = vmul.f32 %v1725, 1.442695
    %v1729 = vpow.pop %v1728
    %v1730 = vsel %vm466, %v1727, 0.0
    %1731 = vadd.xlane.f32.xlu0 %v1730
    %v1732 = vpop.xlane.xlu0 %1731
    %v1733 = vsel %vm466, %v1729, 0.0
    %1734 = vadd.xlane.f32.xlu0 %v1733
    %v1735 = vpop.xlane.xlu0 %1734
    %v1736 = vrcp.pop %v1732
    %v1737 = vrcp.pop %v1735
    %v1738 = vmul.f32 %v1727, %v1736
    %v1739 = vmul.f32 %v1729, %v1737
    %1740 = vrot.lane.b32.xlu0 %v244, 96
    %v1741 = vpop.permute.xlu0 %1740
    %1742 = vrot.lane.b32.xlu0 %v249, 96
    %v1743 = vpop.permute.xlu0 %1742
    %v1747 = vsel %vm466, %v1738, 0
    %v1750 = vsel %vm466, %v1739, 0
    %1752 = vmatprep.subr.mxu0 0.0
    %1753 = vmatpush1.msra.mxu0 %v1741
    %1754 = vmatprep.subr.mxu0 0.0
    %1755 = vmatpush1.msra.mxu0 %v1743
    %1756 = vmatprep.subr.mxu0 0.0
    %1757 = vmatpush1.msra.mxu0 0.0
    %1758 = vmatprep.subr.mxu0 0.0
    %1759 = vmatpush1.msra.mxu0 0.0
    %1760 = vmatprep.subr.mxu0 0.0
    %1761 = vmatpush1.msra.mxu0 0.0
    %1762 = vmatprep.subr.mxu0 0.0
    %1763 = vmatpush1.msra.mxu0 0.0
    %1764 = vmatprep.subr.mxu0 0.0
    %1765 = vmatpush1.msra.mxu0 0.0
    %1766 = vmatprep.subr.mxu0 0.0
    %1767 = vmatpush1.msra.mxu0 0.0
    %1768 = vmatprep.subr.mxu0 0.0
    %1769 = vmatpush1.msra.mxu0 0.0
    %1770 = vmatprep.subr.mxu0 0.0
    %1771 = vmatpush1.msra.mxu0 0.0
    %1772 = vmatprep.subr.mxu0 0.0
    %1773 = vmatpush1.msra.mxu0 0.0
    %1774 = vmatprep.subr.mxu0 0.0
    %1775 = vmatpush1.msra.mxu0 0.0
    %1776 = vmatprep.subr.mxu0 0.0
    %1777 = vmatpush1.msra.mxu0 0.0
    %1778 = vmatprep.subr.mxu0 0.0
    %1779 = vmatpush1.msra.mxu0 0.0
    %1780 = vmatprep.subr.mxu0 0.0
    %1781 = vmatpush1.msra.mxu0 0.0
    %1782 = vmatprep.subr.mxu0 0.0
    %1783 = vmatpush1.msra.mxu0 0.0
    %1784 = vmatprep.subr.mxu0 0.0
    %1785 = vmatpush1.msra.mxu0 0.0
    %1786 = vmatprep.subr.mxu0 0.0
    %1787 = vmatpush1.msra.mxu0 0.0
    %1788 = vmatprep.subr.mxu0 0.0
    %1789 = vmatpush1.msra.mxu0 0.0
    %1790 = vmatprep.subr.mxu0 0.0
    %1791 = vmatpush1.msra.mxu0 0.0
    %1792 = vmatprep.subr.mxu0 0.0
    %1793 = vmatpush1.msra.mxu0 0.0
    %1794 = vmatprep.subr.mxu0 0.0
    %1795 = vmatpush1.msra.mxu0 0.0
    %1796 = vmatprep.subr.mxu0 0.0
    %1797 = vmatpush1.msra.mxu0 0.0
    %1798 = vmatprep.subr.mxu0 0.0
    %1799 = vmatpush1.msra.mxu0 0.0
    %1800 = vmatprep.subr.mxu0 0.0
    %1801 = vmatpush1.msra.mxu0 0.0
    %1802 = vmatprep.subr.mxu0 0.0
    %1803 = vmatpush1.msra.mxu0 0.0
    %1804 = vmatprep.subr.mxu0 0.0
    %1805 = vmatpush1.msra.mxu0 0.0
    %1806 = vmatprep.subr.mxu0 0.0
    %1807 = vmatpush1.msra.mxu0 0.0
    %1808 = vmatprep.subr.mxu0 0.0
    %1809 = vmatpush1.msra.mxu0 0.0
    %1810 = vmatprep.subr.mxu0 0.0
    %1811 = vmatpush1.msra.mxu0 0.0
    %1812 = vmatprep.subr.mxu0 0.0
    %1813 = vmatpush1.msra.mxu0 0.0
    %1814 = vmatprep.subr.mxu0 0.0
    %1815 = vmatpush1.msra.mxu0 0.0
    %1816 = vmatprep.mubr.f32.mxu0 0.0
    %1817 = vmatmul.mubr.f32.gmra.mrb[0].mxu0 %v1747
    %v1818 = vpop.f32.mrb[0].mxu0
    %v1819 = vadd.f32 0.0, %v1818
    %v1820 = vpop.f32.mrb[0].mxu0
    %1821 = vmatprep.mubr.f32.mxu0 0.0
    %1822 = vmatmul.mubr.f32.gmra.mrb[0].mxu0 %v1750
    %v1823 = vpop.f32.mrb[0].mxu0
    %v1824 = vadd.f32 0.0, %v1823
    %v1825 = vpop.f32.mrb[0].mxu0
    %1826 = vdwg.mxu0
    %1827 = vrot.lane.b32.xlu0 %v1623, 120
    %v1828 = vpop.permute.xlu0 %1827
    %1829 = vrot.lane.b32.xlu0 %v1628, 120
    %v1830 = vpop.permute.xlu0 %1829
    %1831 = vrot.lane.b32.xlu0 %v244, 120
    %v1832 = vpop.permute.xlu0 %1831
    %1833 = vrot.lane.b32.xlu0 %v249, 120
    %v1834 = vpop.permute.xlu0 %1833
    %v1835 = vsel %vm382, %v1828, 0
    %v1837 = vsel %vm382, %v1830, 0
    %v1839 = vsel %vm382, %v1832, 0
    %v1841 = vsel %vm382, %v1834, 0
    %1843 = vmatprep.subr.mxu0 0.0
    %1844 = vmatpush1.xpose.msra.mxu0 %v1839
    %1845 = vmatprep.subr.mxu0 0.0
    %1846 = vmatpush1.xpose.msra.mxu0 %v1841
    %1847 = vmatprep.subr.mxu0 0.0
    %1848 = vmatpush1.xpose.msra.mxu0 0.0
    %1849 = vmatprep.subr.mxu0 0.0
    %1850 = vmatpush1.xpose.msra.mxu0 0.0
    %1851 = vmatprep.subr.mxu0 0.0
    %1852 = vmatpush1.xpose.msra.mxu0 0.0
    %1853 = vmatprep.subr.mxu0 0.0
    %1854 = vmatpush1.xpose.msra.mxu0 0.0
    %1855 = vmatprep.subr.mxu0 0.0
    %1856 = vmatpush1.xpose.msra.mxu0 0.0
    %1857 = vmatprep.subr.mxu0 0.0
    %1858 = vmatpush1.xpose.msra.mxu0 0.0
    %1859 = vmatprep.subr.mxu0 0.0
    %1860 = vmatpush1.xpose.msra.mxu0 0.0
    %1861 = vmatprep.subr.mxu0 0.0
    %1862 = vmatpush1.xpose.msra.mxu0 0.0
    %1863 = vmatprep.subr.mxu0 0.0
    %1864 = vmatpush1.xpose.msra.mxu0 0.0
    %1865 = vmatprep.subr.mxu0 0.0
    %1866 = vmatpush1.xpose.msra.mxu0 0.0
    %1867 = vmatprep.subr.mxu0 0.0
    %1868 = vmatpush1.xpose.msra.mxu0 0.0
    %1869 = vmatprep.subr.mxu0 0.0
    %1870 = vmatpush1.xpose.msra.mxu0 0.0
    %1871 = vmatprep.subr.mxu0 0.0
    %1872 = vmatpush1.xpose.msra.mxu0 0.0
    %1873 = vmatprep.subr.mxu0 0.0
    %1874 = vmatpush1.xpose.msra.mxu0 0.0
    %1875 = vmatprep.subr.mxu0 0.0
    %1876 = vmatpush1.xpose.msra.mxu0 0.0
    %1877 = vmatprep.subr.mxu0 0.0
    %1878 = vmatpush1.xpose.msra.mxu0 0.0
    %1879 = vmatprep.subr.mxu0 0.0
    %1880 = vmatpush1.xpose.msra.mxu0 0.0
    %1881 = vmatprep.subr.mxu0 0.0
    %1882 = vmatpush1.xpose.msra.mxu0 0.0
    %1883 = vmatprep.subr.mxu0 0.0
    %1884 = vmatpush1.xpose.msra.mxu0 0.0
    %1885 = vmatprep.subr.mxu0 0.0
    %1886 = vmatpush1.xpose.msra.mxu0 0.0
    %1887 = vmatprep.subr.mxu0 0.0
    %1888 = vmatpush1.xpose.msra.mxu0 0.0
    %1889 = vmatprep.subr.mxu0 0.0
    %1890 = vmatpush1.xpose.msra.mxu0 0.0
    %1891 = vmatprep.subr.mxu0 0.0
    %1892 = vmatpush1.xpose.msra.mxu0 0.0
    %1893 = vmatprep.subr.mxu0 0.0
    %1894 = vmatpush1.xpose.msra.mxu0 0.0
    %1895 = vmatprep.subr.mxu0 0.0
    %1896 = vmatpush1.xpose.msra.mxu0 0.0
    %1897 = vmatprep.subr.mxu0 0.0
    %1898 = vmatpush1.xpose.msra.mxu0 0.0
    %1899 = vmatprep.subr.mxu0 0.0
    %1900 = vmatpush1.xpose.msra.mxu0 0.0
    %1901 = vmatprep.subr.mxu0 0.0
    %1902 = vmatpush1.xpose.msra.mxu0 0.0
    %1903 = vmatprep.subr.mxu0 0.0
    %1904 = vmatpush1.xpose.msra.mxu0 0.0
    %1905 = vmatprep.subr.mxu0 0.0
    %1906 = vmatpush1.xpose.msra.mxu0 0.0
    %1907 = vmatprep.mubr.f32.mxu0 0.0
    %1908 = vmatmul.mubr.f32.gmra.mrb[0].mxu0 %v1835
    %v1909 = vpop.f32.mrb[0].mxu0
    %v1910 = vadd.f32 %v113, %v1909
    %v1911 = vpop.f32.mrb[0].mxu0
    %1912 = vmatprep.mubr.f32.mxu0 0.0
    %1913 = vmatmul.mubr.f32.gmra.mrb[0].mxu0 %v1837
    %v1914 = vpop.f32.mrb[0].mxu0
    %v1915 = vadd.f32 %v114, %v1914
    %v1916 = vpop.f32.mrb[0].mxu0
    %1917 = vdwg.mxu0
    %v1918 = vsel %vm466, %v1910, -inf
    %1919 = vmax.xlane.f32.xlu0 %v1918
    %v1920 = vpop.xlane.xlu0 %1919
    %v1921 = vsel %vm466, %v1915, -inf
    %1922 = vmax.xlane.f32.xlu0 %v1921
    %v1923 = vpop.xlane.xlu0 %1922
    %v1924 = vsub.f32 %v1910, %v1920
    %v1925 = vsub.f32 %v1915, %v1923
    %v1926 = vmul.f32 %v1924, 1.442695
    %v1927 = vpow.pop %v1926
    %v1928 = vmul.f32 %v1925, 1.442695
    %v1929 = vpow.pop %v1928
    %v1930 = vsel %vm466, %v1927, 0.0
    %1931 = vadd.xlane.f32.xlu0 %v1930
    %v1932 = vpop.xlane.xlu0 %1931
    %v1933 = vsel %vm466, %v1929, 0.0
    %1934 = vadd.xlane.f32.xlu0 %v1933
    %v1935 = vpop.xlane.xlu0 %1934
    %v1936 = vrcp.pop %v1932
    %v1937 = vrcp.pop %v1935
    %v1938 = vmul.f32 %v1927, %v1936
    %v1939 = vmul.f32 %v1929, %v1937
    %1940 = vrot.lane.b32.xlu0 %v244, 88
    %v1941 = vpop.permute.xlu0 %1940
    %1942 = vrot.lane.b32.xlu0 %v249, 88
    %v1943 = vpop.permute.xlu0 %1942
    %v1947 = vsel %vm466, %v1938, 0
    %v1950 = vsel %vm466, %v1939, 0
    %1952 = vmatprep.subr.mxu0 0.0
    %1953 = vmatpush1.msra.mxu0 %v1941
    %1954 = vmatprep.subr.mxu0 0.0
    %1955 = vmatpush1.msra.mxu0 %v1943
    %1956 = vmatprep.subr.mxu0 0.0
    %1957 = vmatpush1.msra.mxu0 0.0
    %1958 = vmatprep.subr.mxu0 0.0
    %1959 = vmatpush1.msra.mxu0 0.0
    %1960 = vmatprep.subr.mxu0 0.0
    %1961 = vmatpush1.msra.mxu0 0.0
    %1962 = vmatprep.subr.mxu0 0.0
    %1963 = vmatpush1.msra.mxu0 0.0
    %1964 = vmatprep.subr.mxu0 0.0
    %1965 = vmatpush1.msra.mxu0 0.0
    %1966 = vmatprep.subr.mxu0 0.0
    %1967 = vmatpush1.msra.mxu0 0.0
    %1968 = vmatprep.subr.mxu0 0.0
    %1969 = vmatpush1.msra.mxu0 0.0
    %1970 = vmatprep.subr.mxu0 0.0
    %1971 = vmatpush1.msra.mxu0 0.0
    %1972 = vmatprep.subr.mxu0 0.0
    %1973 = vmatpush1.msra.mxu0 0.0
    %1974 = vmatprep.subr.mxu0 0.0
    %1975 = vmatpush1.msra.mxu0 0.0
    %1976 = vmatprep.subr.mxu0 0.0
    %1977 = vmatpush1.msra.mxu0 0.0
    %1978 = vmatprep.subr.mxu0 0.0
    %1979 = vmatpush1.msra.mxu0 0.0
    %1980 = vmatprep.subr.mxu0 0.0
    %1981 = vmatpush1.msra.mxu0 0.0
    %1982 = vmatprep.subr.mxu0 0.0
    %1983 = vmatpush1.msra.mxu0 0.0
    %1984 = vmatprep.subr.mxu0 0.0
    %1985 = vmatpush1.msra.mxu0 0.0
    %1986 = vmatprep.subr.mxu0 0.0
    %1987 = vmatpush1.msra.mxu0 0.0
    %1988 = vmatprep.subr.mxu0 0.0
    %1989 = vmatpush1.msra.mxu0 0.0
    %1990 = vmatprep.subr.mxu0 0.0
    %1991 = vmatpush1.msra.mxu0 0.0
    %1992 = vmatprep.subr.mxu0 0.0
    %1993 = vmatpush1.msra.mxu0 0.0
    %1994 = vmatprep.subr.mxu0 0.0
    %1995 = vmatpush1.msra.mxu0 0.0
    %1996 = vmatprep.subr.mxu0 0.0
    %1997 = vmatpush1.msra.mxu0 0.0
    %1998 = vmatprep.subr.mxu0 0.0
    %1999 = vmatpush1.msra.mxu0 0.0
    %2000 = vmatprep.subr.mxu0 0.0
    %2001 = vmatpush1.msra.mxu0 0.0
    %2002 = vmatprep.subr.mxu0 0.0
    %2003 = vmatpush1.msra.mxu0 0.0
    %2004 = vmatprep.subr.mxu0 0.0
    %2005 = vmatpush1.msra.mxu0 0.0
    %2006 = vmatprep.subr.mxu0 0.0
    %2007 = vmatpush1.msra.mxu0 0.0
    %2008 = vmatprep.subr.mxu0 0.0
    %2009 = vmatpush1.msra.mxu0 0.0
    %2010 = vmatprep.subr.mxu0 0.0
    %2011 = vmatpush1.msra.mxu0 0.0
    %2012 = vmatprep.subr.mxu0 0.0
    %2013 = vmatpush1.msra.mxu0 0.0
    %2014 = vmatprep.subr.mxu0 0.0
    %2015 = vmatpush1.msra.mxu0 0.0
    %2016 = vmatprep.mubr.f32.mxu0 0.0
    %2017 = vmatmul.mubr.f32.gmra.mrb[0].mxu0 %v1947
    %v2018 = vpop.f32.mrb[0].mxu0
    %v2019 = vadd.f32 0.0, %v2018
    %v2020 = vpop.f32.mrb[0].mxu0
    %2021 = vmatprep.mubr.f32.mxu0 0.0
    %2022 = vmatmul.mubr.f32.gmra.mrb[0].mxu0 %v1950
    %v2023 = vpop.f32.mrb[0].mxu0
    %v2024 = vadd.f32 0.0, %v2023
    %v2025 = vpop.f32.mrb[0].mxu0
    %2026 = vdwg.mxu0
    %v2028 = vsel %vm382, %v2019, 0
    %v2031 = vsel %vm382, %v2024, 0
    %2033 = vmatprep.subr.mxu0 0.0
    %2034 = vmatpush1.msra.mxu0 %v128
    %2035 = vmatprep.subr.mxu0 0.0
    %2036 = vmatpush1.msra.mxu0 0.0
    %2037 = vmatprep.subr.mxu0 0.0
    %2038 = vmatpush1.msra.mxu0 0.0
    %2039 = vmatprep.subr.mxu0 0.0
    %2040 = vmatpush1.msra.mxu0 0.0
    %2041 = vmatprep.subr.mxu0 0.0
    %2042 = vmatpush1.msra.mxu0 0.0
    %2043 = vmatprep.subr.mxu0 0.0
    %2044 = vmatpush1.msra.mxu0 0.0
    %2045 = vmatprep.subr.mxu0 0.0
    %2046 = vmatpush1.msra.mxu0 0.0
    %2047 = vmatprep.subr.mxu0 0.0
    %2048 = vmatpush1.msra.mxu0 0.0
    %2049 = vmatprep.subr.mxu0 0.0
    %2050 = vmatpush1.msra.mxu0 0.0
    %2051 = vmatprep.subr.mxu0 0.0
    %2052 = vmatpush1.msra.mxu0 0.0
    %2053 = vmatprep.subr.mxu0 0.0
    %2054 = vmatpush1.msra.mxu0 0.0
    %2055 = vmatprep.subr.mxu0 0.0
    %2056 = vmatpush1.msra.mxu0 0.0
    %2057 = vmatprep.subr.mxu0 0.0
    %2058 = vmatpush1.msra.mxu0 0.0
    %2059 = vmatprep.subr.mxu0 0.0
    %2060 = vmatpush1.msra.mxu0 0.0
    %2061 = vmatprep.subr.mxu0 0.0
    %2062 = vmatpush1.msra.mxu0 0.0
    %2063 = vmatprep.subr.mxu0 0.0
    %2064 = vmatpush1.msra.mxu0 0.0
    %2065 = vmatprep.subr.mxu0 0.0
    %2066 = vmatpush1.msra.mxu0 0.0
    %2067 = vmatprep.subr.mxu0 0.0
    %2068 = vmatpush1.msra.mxu0 0.0
    %2069 = vmatprep.subr.mxu0 0.0
    %2070 = vmatpush1.msra.mxu0 0.0
    %2071 = vmatprep.subr.mxu0 0.0
    %2072 = vmatpush1.msra.mxu0 0.0
    %2073 = vmatprep.subr.mxu0 0.0
    %2074 = vmatpush1.msra.mxu0 0.0
    %2075 = vmatprep.subr.mxu0 0.0
    %2076 = vmatpush1.msra.mxu0 0.0
    %2077 = vmatprep.subr.mxu0 0.0
    %2078 = vmatpush1.msra.mxu0 0.0
    %2079 = vmatprep.subr.mxu0 0.0
    %2080 = vmatpush1.msra.mxu0 0.0
    %2081 = vmatprep.subr.mxu0 0.0
    %2082 = vmatpush1.msra.mxu0 0.0
    %2083 = vmatprep.subr.mxu0 0.0
    %2084 = vmatpush1.msra.mxu0 0.0
    %2085 = vmatprep.subr.mxu0 0.0
    %2086 = vmatpush1.msra.mxu0 0.0
    %2087 = vmatprep.subr.mxu0 0.0
    %2088 = vmatpush1.msra.mxu0 0.0
    %2089 = vmatprep.subr.mxu0 0.0
    %2090 = vmatpush1.msra.mxu0 0.0
    %2091 = vmatprep.subr.mxu0 0.0
    %2092 = vmatpush1.msra.mxu0 0.0
    %2093 = vmatprep.subr.mxu0 0.0
    %2094 = vmatpush1.msra.mxu0 0.0
    %2095 = vmatprep.subr.mxu0 0.0
    %2096 = vmatpush1.msra.mxu0 0.0
    %2097 = vmatprep.mubr.f32.mxu0 0.0
    %2098 = vmatmul.mubr.f32.gmra.mrb[0].mxu0 %v2028
    %v2099 = vpop.f32.mrb[0].mxu0
    %v2100 = vadd.f32 0.0, %v2099
    %v2101 = vpop.f32.mrb[0].mxu0
    %2102 = vmatprep.mubr.f32.mxu0 0.0
    %2103 = vmatmul.mubr.f32.gmra.mrb[0].mxu0 %v2031
    %v2104 = vpop.f32.mrb[0].mxu0
    %v2105 = vadd.f32 0.0, %v2104
    %v2106 = vpop.f32.mrb[0].mxu0
    %2107 = vdwg.mxu0
    %v2109 = vsel %vm382, %v1819, 0
    %v2112 = vsel %vm382, %v1824, 0
    %2114 = vmatprep.subr.mxu0 0.0
    %2115 = vmatpush1.msra.mxu0 %v127
    %2116 = vmatprep.subr.mxu0 0.0
    %2117 = vmatpush1.msra.mxu0 0.0
    %2118 = vmatprep.subr.mxu0 0.0
    %2119 = vmatpush1.msra.mxu0 0.0
    %2120 = vmatprep.subr.mxu0 0.0
    %2121 = vmatpush1.msra.mxu0 0.0
    %2122 = vmatprep.subr.mxu0 0.0
    %2123 = vmatpush1.msra.mxu0 0.0
    %2124 = vmatprep.subr.mxu0 0.0
    %2125 = vmatpush1.msra.mxu0 0.0
    %2126 = vmatprep.subr.mxu0 0.0
    %2127 = vmatpush1.msra.mxu0 0.0
    %2128 = vmatprep.subr.mxu0 0.0
    %2129 = vmatpush1.msra.mxu0 0.0
    %2130 = vmatprep.subr.mxu0 0.0
    %2131 = vmatpush1.msra.mxu0 0.0
    %2132 = vmatprep.subr.mxu0 0.0
    %2133 = vmatpush1.msra.mxu0 0.0
    %2134 = vmatprep.subr.mxu0 0.0
    %2135 = vmatpush1.msra.mxu0 0.0
    %2136 = vmatprep.subr.mxu0 0.0
    %2137 = vmatpush1.msra.mxu0 0.0
    %2138 = vmatprep.subr.mxu0 0.0
    %2139 = vmatpush1.msra.mxu0 0.0
    %2140 = vmatprep.subr.mxu0 0.0
    %2141 = vmatpush1.msra.mxu0 0.0
    %2142 = vmatprep.subr.mxu0 0.0
    %2143 = vmatpush1.msra.mxu0 0.0
    %2144 = vmatprep.subr.mxu0 0.0
    %2145 = vmatpush1.msra.mxu0 0.0
    %2146 = vmatprep.subr.mxu0 0.0
    %2147 = vmatpush1.msra.mxu0 0.0
    %2148 = vmatprep.subr.mxu0 0.0
    %2149 = vmatpush1.msra.mxu0 0.0
    %2150 = vmatprep.subr.mxu0 0.0
    %2151 = vmatpush1.msra.mxu0 0.0
    %2152 = vmatprep.subr.mxu0 0.0
    %2153 = vmatpush1.msra.mxu0 0.0
    %2154 = vmatprep.subr.mxu0 0.0
    %2155 = vmatpush1.msra.mxu0 0.0
    %2156 = vmatprep.subr.mxu0 0.0
    %2157 = vmatpush1.msra.mxu0 0.0
    %2158 = vmatprep.subr.mxu0 0.0
    %2159 = vmatpush1.msra.mxu0 0.0
    %2160 = vmatprep.subr.mxu0 0.0
    %2161 = vmatpush1.msra.mxu0 0.0
    %2162 = vmatprep.subr.mxu0 0.0
    %2163 = vmatpush1.msra.mxu0 0.0
    %2164 = vmatprep.subr.mxu0 0.0
    %2165 = vmatpush1.msra.mxu0 0.0
    %2166 = vmatprep.subr.mxu0 0.0
    %2167 = vmatpush1.msra.mxu0 0.0
    %2168 = vmatprep.subr.mxu0 0.0
    %2169 = vmatpush1.msra.mxu0 0.0
    %2170 = vmatprep.subr.mxu0 0.0
    %2171 = vmatpush1.msra.mxu0 0.0
    %2172 = vmatprep.subr.mxu0 0.0
    %2173 = vmatpush1.msra.mxu0 0.0
    %2174 = vmatprep.subr.mxu0 0.0
    %2175 = vmatpush1.msra.mxu0 0.0
    %2176 = vmatprep.subr.mxu0 0.0
    %2177 = vmatpush1.msra.mxu0 0.0
    %2178 = vmatprep.mubr.f32.mxu0 0.0
    %2179 = vmatmul.mubr.f32.gmra.mrb[0].mxu0 %v2109
    %v2180 = vpop.f32.mrb[0].mxu0
    %v2181 = vadd.f32 %v2100, %v2180
    %v2182 = vpop.f32.mrb[0].mxu0
    %2183 = vmatprep.mubr.f32.mxu0 0.0
    %2184 = vmatmul.mubr.f32.gmra.mrb[0].mxu0 %v2112
    %v2185 = vpop.f32.mrb[0].mxu0
    %v2186 = vadd.f32 %v2105, %v2185
    %v2187 = vpop.f32.mrb[0].mxu0
    %2188 = vdwg.mxu0
    %2189 = vrot.lane.b32.xlu0 %v1623, 112
    %v2190 = vpop.permute.xlu0 %2189
    %2191 = vrot.lane.b32.xlu0 %v1628, 112
    %v2192 = vpop.permute.xlu0 %2191
    %2193 = vrot.lane.b32.xlu0 %v244, 112
    %v2194 = vpop.permute.xlu0 %2193
    %2195 = vrot.lane.b32.xlu0 %v249, 112
    %v2196 = vpop.permute.xlu0 %2195
    %v2197 = vsel %vm382, %v2190, 0
    %v2199 = vsel %vm382, %v2192, 0
    %v2201 = vsel %vm382, %v2194, 0
    %v2203 = vsel %vm382, %v2196, 0
    %2205 = vmatprep.subr.mxu0 0.0
    %2206 = vmatpush1.xpose.msra.mxu0 %v2201
    %2207 = vmatprep.subr.mxu0 0.0
    %2208 = vmatpush1.xpose.msra.mxu0 %v2203
    %2209 = vmatprep.subr.mxu0 0.0
    %2210 = vmatpush1.xpose.msra.mxu0 0.0
    %2211 = vmatprep.subr.mxu0 0.0
    %2212 = vmatpush1.xpose.msra.mxu0 0.0
    %2213 = vmatprep.subr.mxu0 0.0
    %2214 = vmatpush1.xpose.msra.mxu0 0.0
    %2215 = vmatprep.subr.mxu0 0.0
    %2216 = vmatpush1.xpose.msra.mxu0 0.0
    %2217 = vmatprep.subr.mxu0 0.0
    %2218 = vmatpush1.xpose.msra.mxu0 0.0
    %2219 = vmatprep.subr.mxu0 0.0
    %2220 = vmatpush1.xpose.msra.mxu0 0.0
    %2221 = vmatprep.subr.mxu0 0.0
    %2222 = vmatpush1.xpose.msra.mxu0 0.0
    %2223 = vmatprep.subr.mxu0 0.0
    %2224 = vmatpush1.xpose.msra.mxu0 0.0
    %2225 = vmatprep.subr.mxu0 0.0
    %2226 = vmatpush1.xpose.msra.mxu0 0.0
    %2227 = vmatprep.subr.mxu0 0.0
    %2228 = vmatpush1.xpose.msra.mxu0 0.0
    %2229 = vmatprep.subr.mxu0 0.0
    %2230 = vmatpush1.xpose.msra.mxu0 0.0
    %2231 = vmatprep.subr.mxu0 0.0
    %2232 = vmatpush1.xpose.msra.mxu0 0.0
    %2233 = vmatprep.subr.mxu0 0.0
    %2234 = vmatpush1.xpose.msra.mxu0 0.0
    %2235 = vmatprep.subr.mxu0 0.0
    %2236 = vmatpush1.xpose.msra.mxu0 0.0
    %2237 = vmatprep.subr.mxu0 0.0
    %2238 = vmatpush1.xpose.msra.mxu0 0.0
    %2239 = vmatprep.subr.mxu0 0.0
    %2240 = vmatpush1.xpose.msra.mxu0 0.0
    %2241 = vmatprep.subr.mxu0 0.0
    %2242 = vmatpush1.xpose.msra.mxu0 0.0
    %2243 = vmatprep.subr.mxu0 0.0
    %2244 = vmatpush1.xpose.msra.mxu0 0.0
    %2245 = vmatprep.subr.mxu0 0.0
    %2246 = vmatpush1.xpose.msra.mxu0 0.0
    %2247 = vmatprep.subr.mxu0 0.0
    %2248 = vmatpush1.xpose.msra.mxu0 0.0
    %2249 = vmatprep.subr.mxu0 0.0
    %2250 = vmatpush1.xpose.msra.mxu0 0.0
    %2251 = vmatprep.subr.mxu0 0.0
    %2252 = vmatpush1.xpose.msra.mxu0 0.0
    %2253 = vmatprep.subr.mxu0 0.0
    %2254 = vmatpush1.xpose.msra.mxu0 0.0
    %2255 = vmatprep.subr.mxu0 0.0
    %2256 = vmatpush1.xpose.msra.mxu0 0.0
    %2257 = vmatprep.subr.mxu0 0.0
    %2258 = vmatpush1.xpose.msra.mxu0 0.0
    %2259 = vmatprep.subr.mxu0 0.0
    %2260 = vmatpush1.xpose.msra.mxu0 0.0
    %2261 = vmatprep.subr.mxu0 0.0
    %2262 = vmatpush1.xpose.msra.mxu0 0.0
    %2263 = vmatprep.subr.mxu0 0.0
    %2264 = vmatpush1.xpose.msra.mxu0 0.0
    %2265 = vmatprep.subr.mxu0 0.0
    %2266 = vmatpush1.xpose.msra.mxu0 0.0
    %2267 = vmatprep.subr.mxu0 0.0
    %2268 = vmatpush1.xpose.msra.mxu0 0.0
    %2269 = vmatprep.mubr.f32.mxu0 0.0
    %2270 = vmatmul.mubr.f32.gmra.mrb[0].mxu0 %v2197
    %v2271 = vpop.f32.mrb[0].mxu0
    %v2272 = vadd.f32 %v113, %v2271
    %v2273 = vpop.f32.mrb[0].mxu0
    %2274 = vmatprep.mubr.f32.mxu0 0.0
    %2275 = vmatmul.mubr.f32.gmra.mrb[0].mxu0 %v2199
    %v2276 = vpop.f32.mrb[0].mxu0
    %v2277 = vadd.f32 %v114, %v2276
    %v2278 = vpop.f32.mrb[0].mxu0
    %2279 = vdwg.mxu0
    %v2280 = vsel %vm466, %v2272, -inf
    %2281 = vmax.xlane.f32.xlu0 %v2280
    %v2282 = vpop.xlane.xlu0 %2281
    %v2283 = vsel %vm466, %v2277, -inf
    %2284 = vmax.xlane.f32.xlu0 %v2283
    %v2285 = vpop.xlane.xlu0 %2284
    %v2286 = vsub.f32 %v2272, %v2282
    %v2287 = vsub.f32 %v2277, %v2285
    %v2288 = vmul.f32 %v2286, 1.442695
    %v2289 = vpow.pop %v2288
    %v2290 = vmul.f32 %v2287, 1.442695
    %v2291 = vpow.pop %v2290
    %v2292 = vsel %vm466, %v2289, 0.0
    %2293 = vadd.xlane.f32.xlu0 %v2292
    %v2294 = vpop.xlane.xlu0 %2293
    %v2295 = vsel %vm466, %v2291, 0.0
    %2296 = vadd.xlane.f32.xlu0 %v2295
    %v2297 = vpop.xlane.xlu0 %2296
    %v2298 = vrcp.pop %v2294
    %v2299 = vrcp.pop %v2297
    %v2300 = vmul.f32 %v2289, %v2298
    %v2301 = vmul.f32 %v2291, %v2299
    %2302 = vrot.lane.b32.xlu0 %v244, 80
    %v2303 = vpop.permute.xlu0 %2302
    %2304 = vrot.lane.b32.xlu0 %v249, 80
    %v2305 = vpop.permute.xlu0 %2304
    %v2309 = vsel %vm466, %v2300, 0
    %v2312 = vsel %vm466, %v2301, 0
    %2314 = vmatprep.subr.mxu0 0.0
    %2315 = vmatpush1.msra.mxu0 %v2303
    %2316 = vmatprep.subr.mxu0 0.0
    %2317 = vmatpush1.msra.mxu0 %v2305
    %2318 = vmatprep.subr.mxu0 0.0
    %2319 = vmatpush1.msra.mxu0 0.0
    %2320 = vmatprep.subr.mxu0 0.0
    %2321 = vmatpush1.msra.mxu0 0.0
    %2322 = vmatprep.subr.mxu0 0.0
    %2323 = vmatpush1.msra.mxu0 0.0
    %2324 = vmatprep.subr.mxu0 0.0
    %2325 = vmatpush1.msra.mxu0 0.0
    %2326 = vmatprep.subr.mxu0 0.0
    %2327 = vmatpush1.msra.mxu0 0.0
    %2328 = vmatprep.subr.mxu0 0.0
    %2329 = vmatpush1.msra.mxu0 0.0
    %2330 = vmatprep.subr.mxu0 0.0
    %2331 = vmatpush1.msra.mxu0 0.0
    %2332 = vmatprep.subr.mxu0 0.0
    %2333 = vmatpush1.msra.mxu0 0.0
    %2334 = vmatprep.subr.mxu0 0.0
    %2335 = vmatpush1.msra.mxu0 0.0
    %2336 = vmatprep.subr.mxu0 0.0
    %2337 = vmatpush1.msra.mxu0 0.0
    %2338 = vmatprep.subr.mxu0 0.0
    %2339 = vmatpush1.msra.mxu0 0.0
    %2340 = vmatprep.subr.mxu0 0.0
    %2341 = vmatpush1.msra.mxu0 0.0
    %2342 = vmatprep.subr.mxu0 0.0
    %2343 = vmatpush1.msra.mxu0 0.0
    %2344 = vmatprep.subr.mxu0 0.0
    %2345 = vmatpush1.msra.mxu0 0.0
    %2346 = vmatprep.subr.mxu0 0.0
    %2347 = vmatpush1.msra.mxu0 0.0
    %2348 = vmatprep.subr.mxu0 0.0
    %2349 = vmatpush1.msra.mxu0 0.0
    %2350 = vmatprep.subr.mxu0 0.0
    %2351 = vmatpush1.msra.mxu0 0.0
    %2352 = vmatprep.subr.mxu0 0.0
    %2353 = vmatpush1.msra.mxu0 0.0
    %2354 = vmatprep.subr.mxu0 0.0
    %2355 = vmatpush1.msra.mxu0 0.0
    %2356 = vmatprep.subr.mxu0 0.0
    %2357 = vmatpush1.msra.mxu0 0.0
    %2358 = vmatprep.subr.mxu0 0.0
    %2359 = vmatpush1.msra.mxu0 0.0
    %2360 = vmatprep.subr.mxu0 0.0
    %2361 = vmatpush1.msra.mxu0 0.0
    %2362 = vmatprep.subr.mxu0 0.0
    %2363 = vmatpush1.msra.mxu0 0.0
    %2364 = vmatprep.subr.mxu0 0.0
    %2365 = vmatpush1.msra.mxu0 0.0
    %2366 = vmatprep.subr.mxu0 0.0
    %2367 = vmatpush1.msra.mxu0 0.0
    %2368 = vmatprep.subr.mxu0 0.0
    %2369 = vmatpush1.msra.mxu0 0.0
    %2370 = vmatprep.subr.mxu0 0.0
    %2371 = vmatpush1.msra.mxu0 0.0
    %2372 = vmatprep.subr.mxu0 0.0
    %2373 = vmatpush1.msra.mxu0 0.0
    %2374 = vmatprep.subr.mxu0 0.0
    %2375 = vmatpush1.msra.mxu0 0.0
    %2376 = vmatprep.subr.mxu0 0.0
    %2377 = vmatpush1.msra.mxu0 0.0
    %2378 = vmatprep.mubr.f32.mxu0 0.0
    %2379 = vmatmul.mubr.f32.gmra.mrb[0].mxu0 %v2309
    %v2380 = vpop.f32.mrb[0].mxu0
    %v2381 = vadd.f32 0.0, %v2380
    %v2382 = vpop.f32.mrb[0].mxu0
    %2383 = vmatprep.mubr.f32.mxu0 0.0
    %2384 = vmatmul.mubr.f32.gmra.mrb[0].mxu0 %v2312
    %v2385 = vpop.f32.mrb[0].mxu0
    %v2386 = vadd.f32 0.0, %v2385
    %v2387 = vpop.f32.mrb[0].mxu0
    %2388 = vdwg.mxu0
    %v2390 = vsel %vm382, %v2381, 0
    %v2393 = vsel %vm382, %v2386, 0
    %2395 = vmatprep.subr.mxu0 0.0
    %2396 = vmatpush1.msra.mxu0 %v129
    %2397 = vmatprep.subr.mxu0 0.0
    %2398 = vmatpush1.msra.mxu0 0.0
    %2399 = vmatprep.subr.mxu0 0.0
    %2400 = vmatpush1.msra.mxu0 0.0
    %2401 = vmatprep.subr.mxu0 0.0
    %2402 = vmatpush1.msra.mxu0 0.0
    %2403 = vmatprep.subr.mxu0 0.0
    %2404 = vmatpush1.msra.mxu0 0.0
    %2405 = vmatprep.subr.mxu0 0.0
    %2406 = vmatpush1.msra.mxu0 0.0
    %2407 = vmatprep.subr.mxu0 0.0
    %2408 = vmatpush1.msra.mxu0 0.0
    %2409 = vmatprep.subr.mxu0 0.0
    %2410 = vmatpush1.msra.mxu0 0.0
    %2411 = vmatprep.subr.mxu0 0.0
    %2412 = vmatpush1.msra.mxu0 0.0
    %2413 = vmatprep.subr.mxu0 0.0
    %2414 = vmatpush1.msra.mxu0 0.0
    %2415 = vmatprep.subr.mxu0 0.0
    %2416 = vmatpush1.msra.mxu0 0.0
    %2417 = vmatprep.subr.mxu0 0.0
    %2418 = vmatpush1.msra.mxu0 0.0
    %2419 = vmatprep.subr.mxu0 0.0
    %2420 = vmatpush1.msra.mxu0 0.0
    %2421 = vmatprep.subr.mxu0 0.0
    %2422 = vmatpush1.msra.mxu0 0.0
    %2423 = vmatprep.subr.mxu0 0.0
    %2424 = vmatpush1.msra.mxu0 0.0
    %2425 = vmatprep.subr.mxu0 0.0
    %2426 = vmatpush1.msra.mxu0 0.0
    %2427 = vmatprep.subr.mxu0 0.0
    %2428 = vmatpush1.msra.mxu0 0.0
    %2429 = vmatprep.subr.mxu0 0.0
    %2430 = vmatpush1.msra.mxu0 0.0
    %2431 = vmatprep.subr.mxu0 0.0
    %2432 = vmatpush1.msra.mxu0 0.0
    %2433 = vmatprep.subr.mxu0 0.0
    %2434 = vmatpush1.msra.mxu0 0.0
    %2435 = vmatprep.subr.mxu0 0.0
    %2436 = vmatpush1.msra.mxu0 0.0
    %2437 = vmatprep.subr.mxu0 0.0
    %2438 = vmatpush1.msra.mxu0 0.0
    %2439 = vmatprep.subr.mxu0 0.0
    %2440 = vmatpush1.msra.mxu0 0.0
    %2441 = vmatprep.subr.mxu0 0.0
    %2442 = vmatpush1.msra.mxu0 0.0
    %2443 = vmatprep.subr.mxu0 0.0
    %2444 = vmatpush1.msra.mxu0 0.0
    %2445 = vmatprep.subr.mxu0 0.0
    %2446 = vmatpush1.msra.mxu0 0.0
    %2447 = vmatprep.subr.mxu0 0.0
    %2448 = vmatpush1.msra.mxu0 0.0
    %2449 = vmatprep.subr.mxu0 0.0
    %2450 = vmatpush1.msra.mxu0 0.0
    %2451 = vmatprep.subr.mxu0 0.0
    %2452 = vmatpush1.msra.mxu0 0.0
    %2453 = vmatprep.subr.mxu0 0.0
    %2454 = vmatpush1.msra.mxu0 0.0
    %2455 = vmatprep.subr.mxu0 0.0
    %2456 = vmatpush1.msra.mxu0 0.0
    %2457 = vmatprep.subr.mxu0 0.0
    %2458 = vmatpush1.msra.mxu0 0.0
    %2459 = vmatprep.mubr.f32.mxu0 0.0
    %2460 = vmatmul.mubr.f32.gmra.mrb[0].mxu0 %v2390
    %v2461 = vpop.f32.mrb[0].mxu0
    %v2462 = vadd.f32 0.0, %v2461
    %v2463 = vpop.f32.mrb[0].mxu0
    %2464 = vmatprep.mubr.f32.mxu0 0.0
    %2465 = vmatmul.mubr.f32.gmra.mrb[0].mxu0 %v2393
    %v2466 = vpop.f32.mrb[0].mxu0
    %v2467 = vadd.f32 0.0, %v2466
    %v2468 = vpop.f32.mrb[0].mxu0
    %2469 = vdwg.mxu0
    %v2470 = vadd.f32 %v2181, %v2462
    %v2471 = vadd.f32 %v2186, %v2467
    %2472 = vrot.lane.b32.xlu0 %v1623, 104
    %v2473 = vpop.permute.xlu0 %2472
    %2474 = vrot.lane.b32.xlu0 %v1628, 104
    %v2475 = vpop.permute.xlu0 %2474
    %2476 = vrot.lane.b32.xlu0 %v244, 104
    %v2477 = vpop.permute.xlu0 %2476
    %2478 = vrot.lane.b32.xlu0 %v249, 104
    %v2479 = vpop.permute.xlu0 %2478
    %v2480 = vsel %vm382, %v2473, 0
    %v2482 = vsel %vm382, %v2475, 0
    %v2484 = vsel %vm382, %v2477, 0
    %v2486 = vsel %vm382, %v2479, 0
    %2488 = vmatprep.subr.mxu0 0.0
    %2489 = vmatpush1.xpose.msra.mxu0 %v2484
    %2490 = vmatprep.subr.mxu0 0.0
    %2491 = vmatpush1.xpose.msra.mxu0 %v2486
    %2492 = vmatprep.subr.mxu0 0.0
    %2493 = vmatpush1.xpose.msra.mxu0 0.0
    %2494 = vmatprep.subr.mxu0 0.0
    %2495 = vmatpush1.xpose.msra.mxu0 0.0
    %2496 = vmatprep.subr.mxu0 0.0
    %2497 = vmatpush1.xpose.msra.mxu0 0.0
    %2498 = vmatprep.subr.mxu0 0.0
    %2499 = vmatpush1.xpose.msra.mxu0 0.0
    %2500 = vmatprep.subr.mxu0 0.0
    %2501 = vmatpush1.xpose.msra.mxu0 0.0
    %2502 = vmatprep.subr.mxu0 0.0
    %2503 = vmatpush1.xpose.msra.mxu0 0.0
    %2504 = vmatprep.subr.mxu0 0.0
    %2505 = vmatpush1.xpose.msra.mxu0 0.0
    %2506 = vmatprep.subr.mxu0 0.0
    %2507 = vmatpush1.xpose.msra.mxu0 0.0
    %2508 = vmatprep.subr.mxu0 0.0
    %2509 = vmatpush1.xpose.msra.mxu0 0.0
    %2510 = vmatprep.subr.mxu0 0.0
    %2511 = vmatpush1.xpose.msra.mxu0 0.0
    %2512 = vmatprep.subr.mxu0 0.0
    %2513 = vmatpush1.xpose.msra.mxu0 0.0
    %2514 = vmatprep.subr.mxu0 0.0
    %2515 = vmatpush1.xpose.msra.mxu0 0.0
    %2516 = vmatprep.subr.mxu0 0.0
    %2517 = vmatpush1.xpose.msra.mxu0 0.0
    %2518 = vmatprep.subr.mxu0 0.0
    %2519 = vmatpush1.xpose.msra.mxu0 0.0
    %2520 = vmatprep.subr.mxu0 0.0
    %2521 = vmatpush1.xpose.msra.mxu0 0.0
    %2522 = vmatprep.subr.mxu0 0.0
    %2523 = vmatpush1.xpose.msra.mxu0 0.0
    %2524 = vmatprep.subr.mxu0 0.0
    %2525 = vmatpush1.xpose.msra.mxu0 0.0
    %2526 = vmatprep.subr.mxu0 0.0
    %2527 = vmatpush1.xpose.msra.mxu0 0.0
    %2528 = vmatprep.subr.mxu0 0.0
    %2529 = vmatpush1.xpose.msra.mxu0 0.0
    %2530 = vmatprep.subr.mxu0 0.0
    %2531 = vmatpush1.xpose.msra.mxu0 0.0
    %2532 = vmatprep.subr.mxu0 0.0
    %2533 = vmatpush1.xpose.msra.mxu0 0.0
    %2534 = vmatprep.subr.mxu0 0.0
    %2535 = vmatpush1.xpose.msra.mxu0 0.0
    %2536 = vmatprep.subr.mxu0 0.0
    %2537 = vmatpush1.xpose.msra.mxu0 0.0
    %2538 = vmatprep.subr.mxu0 0.0
    %2539 = vmatpush1.xpose.msra.mxu0 0.0
    %2540 = vmatprep.subr.mxu0 0.0
    %2541 = vmatpush1.xpose.msra.mxu0 0.0
    %2542 = vmatprep.subr.mxu0 0.0
    %2543 = vmatpush1.xpose.msra.mxu0 0.0
    %2544 = vmatprep.subr.mxu0 0.0
    %2545 = vmatpush1.xpose.msra.mxu0 0.0
    %2546 = vmatprep.subr.mxu0 0.0
    %2547 = vmatpush1.xpose.msra.mxu0 0.0
    %2548 = vmatprep.subr.mxu0 0.0
    %2549 = vmatpush1.xpose.msra.mxu0 0.0
    %2550 = vmatprep.subr.mxu0 0.0
    %2551 = vmatpush1.xpose.msra.mxu0 0.0
    %2552 = vmatprep.mubr.f32.mxu0 0.0
    %2553 = vmatmul.mubr.f32.gmra.mrb[0].mxu0 %v2480
    %v2554 = vpop.f32.mrb[0].mxu0
    %v2555 = vadd.f32 %v113, %v2554
    %v2556 = vpop.f32.mrb[0].mxu0
    %2557 = vmatprep.mubr.f32.mxu0 0.0
    %2558 = vmatmul.mubr.f32.gmra.mrb[0].mxu0 %v2482
    %v2559 = vpop.f32.mrb[0].mxu0
    %v2560 = vadd.f32 %v114, %v2559
    %v2561 = vpop.f32.mrb[0].mxu0
    %2562 = vdwg.mxu0
    %v2563 = vsel %vm466, %v2555, -inf
    %2564 = vmax.xlane.f32.xlu0 %v2563
    %v2565 = vpop.xlane.xlu0 %2564
    %v2566 = vsel %vm466, %v2560, -inf
    %2567 = vmax.xlane.f32.xlu0 %v2566
    %v2568 = vpop.xlane.xlu0 %2567
    %v2569 = vsub.f32 %v2555, %v2565
    %v2570 = vsub.f32 %v2560, %v2568
    %v2571 = vmul.f32 %v2569, 1.442695
    %v2572 = vpow.pop %v2571
    %v2573 = vmul.f32 %v2570, 1.442695
    %v2574 = vpow.pop %v2573
    %v2575 = vsel %vm466, %v2572, 0.0
    %2576 = vadd.xlane.f32.xlu0 %v2575
    %v2577 = vpop.xlane.xlu0 %2576
    %v2578 = vsel %vm466, %v2574, 0.0
    %2579 = vadd.xlane.f32.xlu0 %v2578
    %v2580 = vpop.xlane.xlu0 %2579
    %v2581 = vrcp.pop %v2577
    %v2582 = vrcp.pop %v2580
    %v2583 = vmul.f32 %v2572, %v2581
    %v2584 = vmul.f32 %v2574, %v2582
    %2585 = vrot.lane.b32.xlu0 %v244, 72
    %v2586 = vpop.permute.xlu0 %2585
    %2587 = vrot.lane.b32.xlu0 %v249, 72
    %v2588 = vpop.permute.xlu0 %2587
    %v2592 = vsel %vm466, %v2583, 0
    %v2595 = vsel %vm466, %v2584, 0
    %2597 = vmatprep.subr.mxu0 0.0
    %2598 = vmatpush1.msra.mxu0 %v2586
    %2599 = vmatprep.subr.mxu0 0.0
    %2600 = vmatpush1.msra.mxu0 %v2588
    %2601 = vmatprep.subr.mxu0 0.0
    %2602 = vmatpush1.msra.mxu0 0.0
    %2603 = vmatprep.subr.mxu0 0.0
    %2604 = vmatpush1.msra.mxu0 0.0
    %2605 = vmatprep.subr.mxu0 0.0
    %2606 = vmatpush1.msra.mxu0 0.0
    %2607 = vmatprep.subr.mxu0 0.0
    %2608 = vmatpush1.msra.mxu0 0.0
    %2609 = vmatprep.subr.mxu0 0.0
    %2610 = vmatpush1.msra.mxu0 0.0
    %2611 = vmatprep.subr.mxu0 0.0
    %2612 = vmatpush1.msra.mxu0 0.0
    %2613 = vmatprep.subr.mxu0 0.0
    %2614 = vmatpush1.msra.mxu0 0.0
    %2615 = vmatprep.subr.mxu0 0.0
    %2616 = vmatpush1.msra.mxu0 0.0
    %2617 = vmatprep.subr.mxu0 0.0
    %2618 = vmatpush1.msra.mxu0 0.0
    %2619 = vmatprep.subr.mxu0 0.0
    %2620 = vmatpush1.msra.mxu0 0.0
    %2621 = vmatprep.subr.mxu0 0.0
    %2622 = vmatpush1.msra.mxu0 0.0
    %2623 = vmatprep.subr.mxu0 0.0
    %2624 = vmatpush1.msra.mxu0 0.0
    %2625 = vmatprep.subr.mxu0 0.0
    %2626 = vmatpush1.msra.mxu0 0.0
    %2627 = vmatprep.subr.mxu0 0.0
    %2628 = vmatpush1.msra.mxu0 0.0
    %2629 = vmatprep.subr.mxu0 0.0
    %2630 = vmatpush1.msra.mxu0 0.0
    %2631 = vmatprep.subr.mxu0 0.0
    %2632 = vmatpush1.msra.mxu0 0.0
    %2633 = vmatprep.subr.mxu0 0.0
    %2634 = vmatpush1.msra.mxu0 0.0
    %2635 = vmatprep.subr.mxu0 0.0
    %2636 = vmatpush1.msra.mxu0 0.0
    %2637 = vmatprep.subr.mxu0 0.0
    %2638 = vmatpush1.msra.mxu0 0.0
    %2639 = vmatprep.subr.mxu0 0.0
    %2640 = vmatpush1.msra.mxu0 0.0
    %2641 = vmatprep.subr.mxu0 0.0
    %2642 = vmatpush1.msra.mxu0 0.0
    %2643 = vmatprep.subr.mxu0 0.0
    %2644 = vmatpush1.msra.mxu0 0.0
    %2645 = vmatprep.subr.mxu0 0.0
    %2646 = vmatpush1.msra.mxu0 0.0
    %2647 = vmatprep.subr.mxu0 0.0
    %2648 = vmatpush1.msra.mxu0 0.0
    %2649 = vmatprep.subr.mxu0 0.0
    %2650 = vmatpush1.msra.mxu0 0.0
    %2651 = vmatprep.subr.mxu0 0.0
    %2652 = vmatpush1.msra.mxu0 0.0
    %2653 = vmatprep.subr.mxu0 0.0
    %2654 = vmatpush1.msra.mxu0 0.0
    %2655 = vmatprep.subr.mxu0 0.0
    %2656 = vmatpush1.msra.mxu0 0.0
    %2657 = vmatprep.subr.mxu0 0.0
    %2658 = vmatpush1.msra.mxu0 0.0
    %2659 = vmatprep.subr.mxu0 0.0
    %2660 = vmatpush1.msra.mxu0 0.0
    %2661 = vmatprep.mubr.f32.mxu0 0.0
    %2662 = vmatmul.mubr.f32.gmra.mrb[0].mxu0 %v2592
    %v2663 = vpop.f32.mrb[0].mxu0
    %v2664 = vadd.f32 0.0, %v2663
    %v2665 = vpop.f32.mrb[0].mxu0
    %2666 = vmatprep.mubr.f32.mxu0 0.0
    %2667 = vmatmul.mubr.f32.gmra.mrb[0].mxu0 %v2595
    %v2668 = vpop.f32.mrb[0].mxu0
    %v2669 = vadd.f32 0.0, %v2668
    %v2670 = vpop.f32.mrb[0].mxu0
    %2671 = vdwg.mxu0
    %v2673 = vsel %vm382, %v2664, 0
    %v2676 = vsel %vm382, %v2669, 0
    %2678 = vmatprep.subr.mxu0 0.0
    %2679 = vmatpush1.msra.mxu0 %v130
    %2680 = vmatprep.subr.mxu0 0.0
    %2681 = vmatpush1.msra.mxu0 0.0
    %2682 = vmatprep.subr.mxu0 0.0
    %2683 = vmatpush1.msra.mxu0 0.0
    %2684 = vmatprep.subr.mxu0 0.0
    %2685 = vmatpush1.msra.mxu0 0.0
    %2686 = vmatprep.subr.mxu0 0.0
    %2687 = vmatpush1.msra.mxu0 0.0
    %2688 = vmatprep.subr.mxu0 0.0
    %2689 = vmatpush1.msra.mxu0 0.0
    %2690 = vmatprep.subr.mxu0 0.0
    %2691 = vmatpush1.msra.mxu0 0.0
    %2692 = vmatprep.subr.mxu0 0.0
    %2693 = vmatpush1.msra.mxu0 0.0
    %2694 = vmatprep.subr.mxu0 0.0
    %2695 = vmatpush1.msra.mxu0 0.0
    %2696 = vmatprep.subr.mxu0 0.0
    %2697 = vmatpush1.msra.mxu0 0.0
    %2698 = vmatprep.subr.mxu0 0.0
    %2699 = vmatpush1.msra.mxu0 0.0
    %2700 = vmatprep.subr.mxu0 0.0
    %2701 = vmatpush1.msra.mxu0 0.0
    %2702 = vmatprep.subr.mxu0 0.0
    %2703 = vmatpush1.msra.mxu0 0.0
    %2704 = vmatprep.subr.mxu0 0.0
    %2705 = vmatpush1.msra.mxu0 0.0
    %2706 = vmatprep.subr.mxu0 0.0
    %2707 = vmatpush1.msra.mxu0 0.0
    %2708 = vmatprep.subr.mxu0 0.0
    %2709 = vmatpush1.msra.mxu0 0.0
    %2710 = vmatprep.subr.mxu0 0.0
    %2711 = vmatpush1.msra.mxu0 0.0
    %2712 = vmatprep.subr.mxu0 0.0
    %2713 = vmatpush1.msra.mxu0 0.0
    %2714 = vmatprep.subr.mxu0 0.0
    %2715 = vmatpush1.msra.mxu0 0.0
    %2716 = vmatprep.subr.mxu0 0.0
    %2717 = vmatpush1.msra.mxu0 0.0
    %2718 = vmatprep.subr.mxu0 0.0
    %2719 = vmatpush1.msra.mxu0 0.0
    %2720 = vmatprep.subr.mxu0 0.0
    %2721 = vmatpush1.msra.mxu0 0.0
    %2722 = vmatprep.subr.mxu0 0.0
    %2723 = vmatpush1.msra.mxu0 0.0
    %2724 = vmatprep.subr.mxu0 0.0
    %2725 = vmatpush1.msra.mxu0 0.0
    %2726 = vmatprep.subr.mxu0 0.0
    %2727 = vmatpush1.msra.mxu0 0.0
    %2728 = vmatprep.subr.mxu0 0.0
    %2729 = vmatpush1.msra.mxu0 0.0
    %2730 = vmatprep.subr.mxu0 0.0
    %2731 = vmatpush1.msra.mxu0 0.0
    %2732 = vmatprep.subr.mxu0 0.0
    %2733 = vmatpush1.msra.mxu0 0.0
    %2734 = vmatprep.subr.mxu0 0.0
    %2735 = vmatpush1.msra.mxu0 0.0
    %2736 = vmatprep.subr.mxu0 0.0
    %2737 = vmatpush1.msra.mxu0 0.0
    %2738 = vmatprep.subr.mxu0 0.0
    %2739 = vmatpush1.msra.mxu0 0.0
    %2740 = vmatprep.subr.mxu0 0.0
    %2741 = vmatpush1.msra.mxu0 0.0
    %2742 = vmatprep.mubr.f32.mxu0 0.0
    %2743 = vmatmul.mubr.f32.gmra.mrb[0].mxu0 %v2673
    %v2744 = vpop.f32.mrb[0].mxu0
    %v2745 = vadd.f32 0.0, %v2744
    %v2746 = vpop.f32.mrb[0].mxu0
    %2747 = vmatprep.mubr.f32.mxu0 0.0
    %2748 = vmatmul.mubr.f32.gmra.mrb[0].mxu0 %v2676
    %v2749 = vpop.f32.mrb[0].mxu0
    %v2750 = vadd.f32 0.0, %v2749
    %v2751 = vpop.f32.mrb[0].mxu0
    %2752 = vdwg.mxu0
    %v2753 = vadd.f32 %v2470, %v2745
    %v2754 = vadd.f32 %v2471, %v2750
    %v2755 = vadd.f32 %v1510, %v2753
    %v2756 = vadd.f32 %v1511, %v2754
    %2757 = vrot.lane.b32.xlu0 %v149, 32
    %v2758 = vpop.permute.xlu0 %2757
    %v2760 = vadd.f32 %v2755, %v2758
    %v2761 = vadd.f32 %v2756, %v2758
    %v2762 = vsel %vm170, %v2760, 0.0
    %2763 = vadd.xlane.f32.xlu0 %v2762
    %v2764 = vpop.xlane.xlu0 %2763
    %v2765 = vsel %vm170, %v2761, 0.0
    %2766 = vadd.xlane.f32.xlu0 %v2765
    %v2767 = vpop.xlane.xlu0 %2766
    %v2768 = vmul.f32 %v2764, %v258
    %v2769 = vmul.f32 %v2767, %v258
    %v2770 = vsub.f32 %v2760, %v2768
    %v2771 = vsub.f32 %v2761, %v2769
    %v2772 = vmul.f32 %v2770, %v2770
    %v2773 = vmul.f32 %v2771, %v2771
    %v2774 = vsel %vm170, %v2772, 0.0
    %2775 = vadd.xlane.f32.xlu0 %v2774
    %v2776 = vpop.xlane.xlu0 %2775
    %v2777 = vsel %vm170, %v2773, 0.0
    %2778 = vadd.xlane.f32.xlu0 %v2777
    %v2779 = vpop.xlane.xlu0 %2778
    %v2780 = vmul.f32 %v2776, %v258
    %v2781 = vmul.f32 %v2779, %v258
    %v2782 = vadd.f32 %v2780, 1e-05
    %v2783 = vadd.f32 %v2781, 1e-05
    %v2784 = vrsqrt.pop %v2782
    %v2785 = vrsqrt.pop %v2783
    %v2786 = vmul.f32 %v2770, %v2784
    %v2787 = vmul.f32 %v2771, %v2785
    %v2788 = vlaneseq
    %v2789 = vshrl.u32 %v2788, 7
    %v2790 = vsub.s32 2, %v2789
    %v2791 = vrot.slane %v145, %v2790
    %v2792 = vmul.f32 %v2786, %v2791
    %v2793 = vmul.f32 %v2787, %v2791
    %v2794 = vlaneseq
    %v2795 = vshrl.u32 %v2794, 7
    %v2796 = vsub.s32 6, %v2795
    %v2797 = vrot.slane %v145, %v2796
    %v2798 = vadd.f32 %v2792, %v2797
    %v2799 = vadd.f32 %v2793, %v2797
    %v2801 = vlaneseq
    %v2802 = vshrl.u32 %v2801, 7
    %v2803 = vsub.s32 0, %v2802
    %v2804 = vrot.slane %v144, %v2803
    %v2807 = vsel %vm170, %v2798, 0
    %v2810 = vsel %vm170, %v2799, 0
    %2812 = vmatprep.subr.mxu0 0.0
    %2813 = vmatpush1.msra.mxu0 %v131
    %2814 = vmatprep.subr.mxu0 0.0
    %2815 = vmatpush1.msra.mxu0 %v132
    %2816 = vmatprep.subr.mxu0 0.0
    %2817 = vmatpush1.msra.mxu0 %v133
    %2818 = vmatprep.subr.mxu0 0.0
    %2819 = vmatpush1.msra.mxu0 %v134
    %2820 = vmatprep.subr.mxu0 0.0
    %2821 = vmatpush1.msra.mxu0 0.0
    %2822 = vmatprep.subr.mxu0 0.0
    %2823 = vmatpush1.msra.mxu0 0.0
    %2824 = vmatprep.subr.mxu0 0.0
    %2825 = vmatpush1.msra.mxu0 0.0
    %2826 = vmatprep.subr.mxu0 0.0
    %2827 = vmatpush1.msra.mxu0 0.0
    %2828 = vmatprep.subr.mxu0 0.0
    %2829 = vmatpush1.msra.mxu0 0.0
    %2830 = vmatprep.subr.mxu0 0.0
    %2831 = vmatpush1.msra.mxu0 0.0
    %2832 = vmatprep.subr.mxu0 0.0
    %2833 = vmatpush1.msra.mxu0 0.0
    %2834 = vmatprep.subr.mxu0 0.0
    %2835 = vmatpush1.msra.mxu0 0.0
    %2836 = vmatprep.subr.mxu0 0.0
    %2837 = vmatpush1.msra.mxu0 0.0
    %2838 = vmatprep.subr.mxu0 0.0
    %2839 = vmatpush1.msra.mxu0 0.0
    %2840 = vmatprep.subr.mxu0 0.0
    %2841 = vmatpush1.msra.mxu0 0.0
    %2842 = vmatprep.subr.mxu0 0.0
    %2843 = vmatpush1.msra.mxu0 0.0
    %2844 = vmatprep.subr.mxu0 0.0
    %2845 = vmatpush1.msra.mxu0 0.0
    %2846 = vmatprep.subr.mxu0 0.0
    %2847 = vmatpush1.msra.mxu0 0.0
    %2848 = vmatprep.subr.mxu0 0.0
    %2849 = vmatpush1.msra.mxu0 0.0
    %2850 = vmatprep.subr.mxu0 0.0
    %2851 = vmatpush1.msra.mxu0 0.0
    %2852 = vmatprep.subr.mxu0 0.0
    %2853 = vmatpush1.msra.mxu0 0.0
    %2854 = vmatprep.subr.mxu0 0.0
    %2855 = vmatpush1.msra.mxu0 0.0
    %2856 = vmatprep.subr.mxu0 0.0
    %2857 = vmatpush1.msra.mxu0 0.0
    %2858 = vmatprep.subr.mxu0 0.0
    %2859 = vmatpush1.msra.mxu0 0.0
    %2860 = vmatprep.subr.mxu0 0.0
    %2861 = vmatpush1.msra.mxu0 0.0
    %2862 = vmatprep.subr.mxu0 0.0
    %2863 = vmatpush1.msra.mxu0 0.0
    %2864 = vmatprep.subr.mxu0 0.0
    %2865 = vmatpush1.msra.mxu0 0.0
    %2866 = vmatprep.subr.mxu0 0.0
    %2867 = vmatpush1.msra.mxu0 0.0
    %2868 = vmatprep.subr.mxu0 0.0
    %2869 = vmatpush1.msra.mxu0 0.0
    %2870 = vmatprep.subr.mxu0 0.0
    %2871 = vmatpush1.msra.mxu0 0.0
    %2872 = vmatprep.subr.mxu0 0.0
    %2873 = vmatpush1.msra.mxu0 0.0
    %2874 = vmatprep.subr.mxu0 0.0
    %2875 = vmatpush1.msra.mxu0 0.0
    %2876 = vmatprep.mubr.f32.mxu0 0.0
    %2877 = vmatmul.mubr.f32.gmra.mrb[0].mxu0 %v2807
    %v2878 = vpop.f32.mrb[0].mxu0
    %v2879 = vadd.f32 %v2804, %v2878
    %v2880 = vpop.f32.mrb[0].mxu0
    %2881 = vmatprep.mubr.f32.mxu0 0.0
    %2882 = vmatmul.mubr.f32.gmra.mrb[0].mxu0 %v2810
    %v2883 = vpop.f32.mrb[0].mxu0
    %v2884 = vadd.f32 %v2804, %v2883
    %v2885 = vpop.f32.mrb[0].mxu0
    %2886 = vdwg.mxu0
    %v2887 = vmax.f32 %v2879, 0.0
    %v2888 = vmax.f32 %v2884, 0.0
    %vm2889 = vcmask 523264
    %v2891 = vsel %vm2889, %v2887, 0
    %v2894 = vsel %vm2889, %v2888, 0
    %2896 = vmatprep.subr.mxu0 0.0
    %2897 = vmatpush1.msra.mxu0 %v135
    %2898 = vmatprep.subr.mxu0 0.0
    %2899 = vmatpush1.msra.mxu0 %v136
    %2900 = vmatprep.subr.mxu0 0.0
    %2901 = vmatpush1.msra.mxu0 %v137
    %2902 = vmatprep.subr.mxu0 0.0
    %2903 = vmatpush1.msra.mxu0 %v138
    %2904 = vmatprep.subr.mxu0 0.0
    %2905 = vmatpush1.msra.mxu0 %v139
    %2906 = vmatprep.subr.mxu0 0.0
    %2907 = vmatpush1.msra.mxu0 %v140
    %2908 = vmatprep.subr.mxu0 0.0
    %2909 = vmatpush1.msra.mxu0 %v141
    %2910 = vmatprep.subr.mxu0 0.0
    %2911 = vmatpush1.msra.mxu0 %v142
    %2912 = vmatprep.subr.mxu0 0.0
    %2913 = vmatpush1.msra.mxu0 0.0
    %2914 = vmatprep.subr.mxu0 0.0
    %2915 = vmatpush1.msra.mxu0 0.0
    %2916 = vmatprep.subr.mxu0 0.0
    %2917 = vmatpush1.msra.mxu0 0.0
    %2918 = vmatprep.subr.mxu0 0.0
    %2919 = vmatpush1.msra.mxu0 0.0
    %2920 = vmatprep.subr.mxu0 0.0
    %2921 = vmatpush1.msra.mxu0 0.0
    %2922 = vmatprep.subr.mxu0 0.0
    %2923 = vmatpush1.msra.mxu0 0.0
    %2924 = vmatprep.subr.mxu0 0.0
    %2925 = vmatpush1.msra.mxu0 0.0
    %2926 = vmatprep.subr.mxu0 0.0
    %2927 = vmatpush1.msra.mxu0 0.0
    %2928 = vmatprep.subr.mxu0 0.0
    %2929 = vmatpush1.msra.mxu0 0.0
    %2930 = vmatprep.subr.mxu0 0.0
    %2931 = vmatpush1.msra.mxu0 0.0
    %2932 = vmatprep.subr.mxu0 0.0
    %2933 = vmatpush1.msra.mxu0 0.0
    %2934 = vmatprep.subr.mxu0 0.0
    %2935 = vmatpush1.msra.mxu0 0.0
    %2936 = vmatprep.subr.mxu0 0.0
    %2937 = vmatpush1.msra.mxu0 0.0
    %2938 = vmatprep.subr.mxu0 0.0
    %2939 = vmatpush1.msra.mxu0 0.0
    %2940 = vmatprep.subr.mxu0 0.0
    %2941 = vmatpush1.msra.mxu0 0.0
    %2942 = vmatprep.subr.mxu0 0.0
    %2943 = vmatpush1.msra.mxu0 0.0
    %2944 = vmatprep.subr.mxu0 0.0
    %2945 = vmatpush1.msra.mxu0 0.0
    %2946 = vmatprep.subr.mxu0 0.0
    %2947 = vmatpush1.msra.mxu0 0.0
    %2948 = vmatprep.subr.mxu0 0.0
    %2949 = vmatpush1.msra.mxu0 0.0
    %2950 = vmatprep.subr.mxu0 0.0
    %2951 = vmatpush1.msra.mxu0 0.0
    %2952 = vmatprep.subr.mxu0 0.0
    %2953 = vmatpush1.msra.mxu0 0.0
    %2954 = vmatprep.subr.mxu0 0.0
    %2955 = vmatpush1.msra.mxu0 0.0
    %2956 = vmatprep.subr.mxu0 0.0
    %2957 = vmatpush1.msra.mxu0 0.0
    %2958 = vmatprep.subr.mxu0 0.0
    %2959 = vmatpush1.msra.mxu0 0.0
    %2960 = vmatprep.mubr.f32.mxu0 0.0
    %2961 = vmatmul.mubr.f32.gmra.mrb[0].mxu0 %v2891
    %v2962 = vpop.f32.mrb[0].mxu0
    %v2963 = vadd.f32 0.0, %v2962
    %v2964 = vpop.f32.mrb[0].mxu0
    %2965 = vmatprep.mubr.f32.mxu0 0.0
    %2966 = vmatmul.mubr.f32.gmra.mrb[0].mxu0 %v2894
    %v2967 = vpop.f32.mrb[0].mxu0
    %v2968 = vadd.f32 0.0, %v2967
    %v2969 = vpop.f32.mrb[0].mxu0
    %2970 = vdwg.mxu0
    %v2971 = vadd.f32 %v2760, %v2963
    %v2972 = vadd.f32 %v2761, %v2968
    %2973 = vrot.lane.b32.xlu0 %v2804, 64
    %v2974 = vpop.permute.xlu0 %2973
    %v2976 = vadd.f32 %v2971, %v2974
    %v2977 = vadd.f32 %v2972, %v2974
    %v2978 = vsel %vm170, %v2976, 0.0
    %2979 = vadd.xlane.f32.xlu0 %v2978
    %v2980 = vpop.xlane.xlu0 %2979
    %v2981 = vsel %vm170, %v2977, 0.0
    %2982 = vadd.xlane.f32.xlu0 %v2981
    %v2983 = vpop.xlane.xlu0 %2982
    %v2984 = vmul.f32 %v2980, %v258
    %v2985 = vmul.f32 %v2983, %v258
    %v2986 = vsub.f32 %v2976, %v2984
    %v2987 = vsub.f32 %v2977, %v2985
    %v2988 = vmul.f32 %v2986, %v2986
    %v2989 = vmul.f32 %v2987, %v2987
    %v2990 = vsel %vm170, %v2988, 0.0
    %2991 = vadd.xlane.f32.xlu0 %v2990
    %v2992 = vpop.xlane.xlu0 %2991
    %v2993 = vsel %vm170, %v2989, 0.0
    %2994 = vadd.xlane.f32.xlu0 %v2993
    %v2995 = vpop.xlane.xlu0 %2994
    %v2996 = vmul.f32 %v2992, %v258
    %v2997 = vmul.f32 %v2995, %v258
    %v2998 = vadd.f32 %v2996, 1e-05
    %v2999 = vadd.f32 %v2997, 1e-05
    %v3000 = vrsqrt.pop %v2998
    %v3001 = vrsqrt.pop %v2999
    %v3002 = vmul.f32 %v2986, %v3000
    %v3003 = vmul.f32 %v2987, %v3001
    %v3004 = vmul.f32 %v3002, %v282
    %v3005 = vmul.f32 %v3003, %v282
    %v3006 = vadd.f32 %v3004, %v288
    %v3007 = vadd.f32 %v3005, %v288
    %v3009 = vsel %vm170, %v3006, 0
    %v3012 = vsel %vm170, %v3007, 0
    %3014 = vmatprep.subr.mxu0 0.0
    %3015 = vmatpush1.msra.mxu0 %v115
    %3016 = vmatprep.subr.mxu0 0.0
    %3017 = vmatpush1.msra.mxu0 %v116
    %3018 = vmatprep.subr.mxu0 0.0
    %3019 = vmatpush1.msra.mxu0 %v117
    %3020 = vmatprep.subr.mxu0 0.0
    %3021 = vmatpush1.msra.mxu0 %v118
    %3022 = vmatprep.subr.mxu0 0.0
    %3023 = vmatpush1.msra.mxu0 0.0
    %3024 = vmatprep.subr.mxu0 0.0
    %3025 = vmatpush1.msra.mxu0 0.0
    %3026 = vmatprep.subr.mxu0 0.0
    %3027 = vmatpush1.msra.mxu0 0.0
    %3028 = vmatprep.subr.mxu0 0.0
    %3029 = vmatpush1.msra.mxu0 0.0
    %3030 = vmatprep.subr.mxu0 0.0
    %3031 = vmatpush1.msra.mxu0 0.0
    %3032 = vmatprep.subr.mxu0 0.0
    %3033 = vmatpush1.msra.mxu0 0.0
    %3034 = vmatprep.subr.mxu0 0.0
    %3035 = vmatpush1.msra.mxu0 0.0
    %3036 = vmatprep.subr.mxu0 0.0
    %3037 = vmatpush1.msra.mxu0 0.0
    %3038 = vmatprep.subr.mxu0 0.0
    %3039 = vmatpush1.msra.mxu0 0.0
    %3040 = vmatprep.subr.mxu0 0.0
    %3041 = vmatpush1.msra.mxu0 0.0
    %3042 = vmatprep.subr.mxu0 0.0
    %3043 = vmatpush1.msra.mxu0 0.0
    %3044 = vmatprep.subr.mxu0 0.0
    %3045 = vmatpush1.msra.mxu0 0.0
    %3046 = vmatprep.subr.mxu0 0.0
    %3047 = vmatpush1.msra.mxu0 0.0
    %3048 = vmatprep.subr.mxu0 0.0
    %3049 = vmatpush1.msra.mxu0 0.0
    %3050 = vmatprep.subr.mxu0 0.0
    %3051 = vmatpush1.msra.mxu0 0.0
    %3052 = vmatprep.subr.mxu0 0.0
    %3053 = vmatpush1.msra.mxu0 0.0
    %3054 = vmatprep.subr.mxu0 0.0
    %3055 = vmatpush1.msra.mxu0 0.0
    %3056 = vmatprep.subr.mxu0 0.0
    %3057 = vmatpush1.msra.mxu0 0.0
    %3058 = vmatprep.subr.mxu0 0.0
    %3059 = vmatpush1.msra.mxu0 0.0
    %3060 = vmatprep.subr.mxu0 0.0
    %3061 = vmatpush1.msra.mxu0 0.0
    %3062 = vmatprep.subr.mxu0 0.0
    %3063 = vmatpush1.msra.mxu0 0.0
    %3064 = vmatprep.subr.mxu0 0.0
    %3065 = vmatpush1.msra.mxu0 0.0
    %3066 = vmatprep.subr.mxu0 0.0
    %3067 = vmatpush1.msra.mxu0 0.0
    %3068 = vmatprep.subr.mxu0 0.0
    %3069 = vmatpush1.msra.mxu0 0.0
    %3070 = vmatprep.subr.mxu0 0.0
    %3071 = vmatpush1.msra.mxu0 0.0
    %3072 = vmatprep.subr.mxu0 0.0
    %3073 = vmatpush1.msra.mxu0 0.0
    %3074 = vmatprep.subr.mxu0 0.0
    %3075 = vmatpush1.msra.mxu0 0.0
    %3076 = vmatprep.subr.mxu0 0.0
    %3077 = vmatpush1.msra.mxu0 0.0
    %3078 = vmatprep.mubr.f32.mxu0 0.0
    %3079 = vmatmul.mubr.f32.gmra.mrb[0].mxu0 %v3009
    %v3080 = vpop.f32.mrb[0].mxu0
    %v3081 = vadd.f32 %v294, %v3080
    %v3082 = vpop.f32.mrb[0].mxu0
    %3083 = vmatprep.mubr.f32.mxu0 0.0
    %3084 = vmatmul.mubr.f32.gmra.mrb[0].mxu0 %v3012
    %v3085 = vpop.f32.mrb[0].mxu0
    %v3086 = vadd.f32 %v294, %v3085
    %v3087 = vpop.f32.mrb[0].mxu0
    %3088 = vdwg.mxu0
    %3091 = vrot.lane.b32.xlu0 %v3081, 96
    %v3092 = vpop.permute.xlu0 %3091
    %3093 = vrot.lane.b32.xlu0 %v3086, 96
    %v3094 = vpop.permute.xlu0 %3093
    %v3095 = vsel %vm382, %v3081, 0
    %v3097 = vsel %vm382, %v3086, 0
    %v3099 = vsel %vm382, %v3092, 0
    %v3101 = vsel %vm382, %v3094, 0
    %3103 = vmatprep.subr.mxu0 0.0
    %3104 = vmatpush1.xpose.msra.mxu0 %v3099
    %3105 = vmatprep.subr.mxu0 0.0
    %3106 = vmatpush1.xpose.msra.mxu0 %v3101
    %3107 = vmatprep.subr.mxu0 0.0
    %3108 = vmatpush1.xpose.msra.mxu0 0.0
    %3109 = vmatprep.subr.mxu0 0.0
    %3110 = vmatpush1.xpose.msra.mxu0 0.0
    %3111 = vmatprep.subr.mxu0 0.0
    %3112 = vmatpush1.xpose.msra.mxu0 0.0
    %3113 = vmatprep.subr.mxu0 0.0
    %3114 = vmatpush1.xpose.msra.mxu0 0.0
    %3115 = vmatprep.subr.mxu0 0.0
    %3116 = vmatpush1.xpose.msra.mxu0 0.0
    %3117 = vmatprep.subr.mxu0 0.0
    %3118 = vmatpush1.xpose.msra.mxu0 0.0
    %3119 = vmatprep.subr.mxu0 0.0
    %3120 = vmatpush1.xpose.msra.mxu0 0.0
    %3121 = vmatprep.subr.mxu0 0.0
    %3122 = vmatpush1.xpose.msra.mxu0 0.0
    %3123 = vmatprep.subr.mxu0 0.0
    %3124 = vmatpush1.xpose.msra.mxu0 0.0
    %3125 = vmatprep.subr.mxu0 0.0
    %3126 = vmatpush1.xpose.msra.mxu0 0.0
    %3127 = vmatprep.subr.mxu0 0.0
    %3128 = vmatpush1.xpose.msra.mxu0 0.0
    %3129 = vmatprep.subr.mxu0 0.0
    %3130 = vmatpush1.xpose.msra.mxu0 0.0
    %3131 = vmatprep.subr.mxu0 0.0
    %3132 = vmatpush1.xpose.msra.mxu0 0.0
    %3133 = vmatprep.subr.mxu0 0.0
    %3134 = vmatpush1.xpose.msra.mxu0 0.0
    %3135 = vmatprep.subr.mxu0 0.0
    %3136 = vmatpush1.xpose.msra.mxu0 0.0
    %3137 = vmatprep.subr.mxu0 0.0
    %3138 = vmatpush1.xpose.msra.mxu0 0.0
    %3139 = vmatprep.subr.mxu0 0.0
    %3140 = vmatpush1.xpose.msra.mxu0 0.0
    %3141 = vmatprep.subr.mxu0 0.0
    %3142 = vmatpush1.xpose.msra.mxu0 0.0
    %3143 = vmatprep.subr.mxu0 0.0
    %3144 = vmatpush1.xpose.msra.mxu0 0.0
    %3145 = vmatprep.subr.mxu0 0.0
    %3146 = vmatpush1.xpose.msra.mxu0 0.0
    %3147 = vmatprep.subr.mxu0 0.0
    %3148 = vmatpush1.xpose.msra.mxu0 0.0
    %3149 = vmatprep.subr.mxu0 0.0
    %3150 = vmatpush1.xpose.msra.mxu0 0.0
    %3151 = vmatprep.subr.mxu0 0.0
    %3152 = vmatpush1.xpose.msra.mxu0 0.0
    %3153 = vmatprep.subr.mxu0 0.0
    %3154 = vmatpush1.xpose.msra.mxu0 0.0
    %3155 = vmatprep.subr.mxu0 0.0
    %3156 = vmatpush1.xpose.msra.mxu0 0.0
    %3157 = vmatprep.subr.mxu0 0.0
    %3158 = vmatpush1.xpose.msra.mxu0 0.0
    %3159 = vmatprep.subr.mxu0 0.0
    %3160 = vmatpush1.xpose.msra.mxu0 0.0
    %3161 = vmatprep.subr.mxu0 0.0
    %3162 = vmatpush1.xpose.msra.mxu0 0.0
    %3163 = vmatprep.subr.mxu0 0.0
    %3164 = vmatpush1.xpose.msra.mxu0 0.0
    %3165 = vmatprep.subr.mxu0 0.0
    %3166 = vmatpush1.xpose.msra.mxu0 0.0
    %3167 = vmatprep.mubr.f32.mxu0 0.0
    %3168 = vmatmul.mubr.f32.gmra.mrb[0].mxu0 %v3095
    %v3169 = vpop.f32.mrb[0].mxu0
    %v3170 = vadd.f32 %v111, %v3169
    %v3171 = vpop.f32.mrb[0].mxu0
    %3172 = vmatprep.mubr.f32.mxu0 0.0
    %3173 = vmatmul.mubr.f32.gmra.mrb[0].mxu0 %v3097
    %v3174 = vpop.f32.mrb[0].mxu0
    %v3175 = vadd.f32 %v112, %v3174
    %v3176 = vpop.f32.mrb[0].mxu0
    %3177 = vdwg.mxu0
    %v3178 = vsel %vm466, %v3170, -inf
    %3179 = vmax.xlane.f32.xlu0 %v3178
    %v3180 = vpop.xlane.xlu0 %3179
    %v3181 = vsel %vm466, %v3175, -inf
    %3182 = vmax.xlane.f32.xlu0 %v3181
    %v3183 = vpop.xlane.xlu0 %3182
    %v3184 = vsub.f32 %v3170, %v3180
    %v3185 = vsub.f32 %v3175, %v3183
    %v3186 = vmul.f32 %v3184, 1.442695
    %v3187 = vpow.pop %v3186
    %v3188 = vmul.f32 %v3185, 1.442695
    %v3189 = vpow.pop %v3188
    %v3190 = vsel %vm466, %v3187, 0.0
    %3191 = vadd.xlane.f32.xlu0 %v3190
    %v3192 = vpop.xlane.xlu0 %3191
    %v3193 = vsel %vm466, %v3189, 0.0
    %3194 = vadd.xlane.f32.xlu0 %v3193
    %v3195 = vpop.xlane.xlu0 %3194
    %v3196 = vrcp.pop %v3192
    %v3197 = vrcp.pop %v3195
    %v3198 = vmul.f32 %v3187, %v3196
    %v3199 = vmul.f32 %v3189, %v3197
    %3200 = vrot.lane.b32.xlu0 %v3081, 64
    %v3201 = vpop.permute.xlu0 %3200
    %3202 = vrot.lane.b32.xlu0 %v3086, 64
    %v3203 = vpop.permute.xlu0 %3202
    %v3207 = vsel %vm466, %v3198, 0
    %v3210 = vsel %vm466, %v3199, 0
    %3212 = vmatprep.subr.mxu0 0.0
    %3213 = vmatpush1.msra.mxu0 %v3201
    %3214 = vmatprep.subr.mxu0 0.0
    %3215 = vmatpush1.msra.mxu0 %v3203
    %3216 = vmatprep.subr.mxu0 0.0
    %3217 = vmatpush1.msra.mxu0 0.0
    %3218 = vmatprep.subr.mxu0 0.0
    %3219 = vmatpush1.msra.mxu0 0.0
    %3220 = vmatprep.subr.mxu0 0.0
    %3221 = vmatpush1.msra.mxu0 0.0
    %3222 = vmatprep.subr.mxu0 0.0
    %3223 = vmatpush1.msra.mxu0 0.0
    %3224 = vmatprep.subr.mxu0 0.0
    %3225 = vmatpush1.msra.mxu0 0.0
    %3226 = vmatprep.subr.mxu0 0.0
    %3227 = vmatpush1.msra.mxu0 0.0
    %3228 = vmatprep.subr.mxu0 0.0
    %3229 = vmatpush1.msra.mxu0 0.0
    %3230 = vmatprep.subr.mxu0 0.0
    %3231 = vmatpush1.msra.mxu0 0.0
    %3232 = vmatprep.subr.mxu0 0.0
    %3233 = vmatpush1.msra.mxu0 0.0
    %3234 = vmatprep.subr.mxu0 0.0
    %3235 = vmatpush1.msra.mxu0 0.0
    %3236 = vmatprep.subr.mxu0 0.0
    %3237 = vmatpush1.msra.mxu0 0.0
    %3238 = vmatprep.subr.mxu0 0.0
    %3239 = vmatpush1.msra.mxu0 0.0
    %3240 = vmatprep.subr.mxu0 0.0
    %3241 = vmatpush1.msra.mxu0 0.0
    %3242 = vmatprep.subr.mxu0 0.0
    %3243 = vmatpush1.msra.mxu0 0.0
    %3244 = vmatprep.subr.mxu0 0.0
    %3245 = vmatpush1.msra.mxu0 0.0
    %3246 = vmatprep.subr.mxu0 0.0
    %3247 = vmatpush1.msra.mxu0 0.0
    %3248 = vmatprep.subr.mxu0 0.0
    %3249 = vmatpush1.msra.mxu0 0.0
    %3250 = vmatprep.subr.mxu0 0.0
    %3251 = vmatpush1.msra.mxu0 0.0
    %3252 = vmatprep.subr.mxu0 0.0
    %3253 = vmatpush1.msra.mxu0 0.0
    %3254 = vmatprep.subr.mxu0 0.0
    %3255 = vmatpush1.msra.mxu0 0.0
    %3256 = vmatprep.subr.mxu0 0.0
    %3257 = vmatpush1.msra.mxu0 0.0
    %3258 = vmatprep.subr.mxu0 0.0
    %3259 = vmatpush1.msra.mxu0 0.0
    %3260 = vmatprep.subr.mxu0 0.0
    %3261 = vmatpush1.msra.mxu0 0.0
    %3262 = vmatprep.subr.mxu0 0.0
    %3263 = vmatpush1.msra.mxu0 0.0
    %3264 = vmatprep.subr.mxu0 0.0
    %3265 = vmatpush1.msra.mxu0 0.0
    %3266 = vmatprep.subr.mxu0 0.0
    %3267 = vmatpush1.msra.mxu0 0.0
    %3268 = vmatprep.subr.mxu0 0.0
    %3269 = vmatpush1.msra.mxu0 0.0
    %3270 = vmatprep.subr.mxu0 0.0
    %3271 = vmatpush1.msra.mxu0 0.0
    %3272 = vmatprep.subr.mxu0 0.0
    %3273 = vmatpush1.msra.mxu0 0.0
    %3274 = vmatprep.subr.mxu0 0.0
    %3275 = vmatpush1.msra.mxu0 0.0
    %3276 = vmatprep.mubr.f32.mxu0 0.0
    %3277 = vmatmul.mubr.f32.gmra.mrb[0].mxu0 %v3207
    %v3278 = vpop.f32.mrb[0].mxu0
    %v3279 = vadd.f32 0.0, %v3278
    %v3280 = vpop.f32.mrb[0].mxu0
    %3281 = vmatprep.mubr.f32.mxu0 0.0
    %3282 = vmatmul.mubr.f32.gmra.mrb[0].mxu0 %v3210
    %v3283 = vpop.f32.mrb[0].mxu0
    %v3284 = vadd.f32 0.0, %v3283
    %v3285 = vpop.f32.mrb[0].mxu0
    %3286 = vdwg.mxu0
    %3287 = vrot.lane.b32.xlu0 %v3081, 120
    %v3288 = vpop.permute.xlu0 %3287
    %3289 = vrot.lane.b32.xlu0 %v3086, 120
    %v3290 = vpop.permute.xlu0 %3289
    %3291 = vrot.lane.b32.xlu0 %v3081, 88
    %v3292 = vpop.permute.xlu0 %3291
    %3293 = vrot.lane.b32.xlu0 %v3086, 88
    %v3294 = vpop.permute.xlu0 %3293
    %v3295 = vsel %vm382, %v3288, 0
    %v3297 = vsel %vm382, %v3290, 0
    %v3299 = vsel %vm382, %v3292, 0
    %v3301 = vsel %vm382, %v3294, 0
    %3303 = vmatprep.subr.mxu0 0.0
    %3304 = vmatpush1.xpose.msra.mxu0 %v3299
    %3305 = vmatprep.subr.mxu0 0.0
    %3306 = vmatpush1.xpose.msra.mxu0 %v3301
    %3307 = vmatprep.subr.mxu0 0.0
    %3308 = vmatpush1.xpose.msra.mxu0 0.0
    %3309 = vmatprep.subr.mxu0 0.0
    %3310 = vmatpush1.xpose.msra.mxu0 0.0
    %3311 = vmatprep.subr.mxu0 0.0
    %3312 = vmatpush1.xpose.msra.mxu0 0.0
    %3313 = vmatprep.subr.mxu0 0.0
    %3314 = vmatpush1.xpose.msra.mxu0 0.0
    %3315 = vmatprep.subr.mxu0 0.0
    %3316 = vmatpush1.xpose.msra.mxu0 0.0
    %3317 = vmatprep.subr.mxu0 0.0
    %3318 = vmatpush1.xpose.msra.mxu0 0.0
    %3319 = vmatprep.subr.mxu0 0.0
    %3320 = vmatpush1.xpose.msra.mxu0 0.0
    %3321 = vmatprep.subr.mxu0 0.0
    %3322 = vmatpush1.xpose.msra.mxu0 0.0
    %3323 = vmatprep.subr.mxu0 0.0
    %3324 = vmatpush1.xpose.msra.mxu0 0.0
    %3325 = vmatprep.subr.mxu0 0.0
    %3326 = vmatpush1.xpose.msra.mxu0 0.0
    %3327 = vmatprep.subr.mxu0 0.0
    %3328 = vmatpush1.xpose.msra.mxu0 0.0
    %3329 = vmatprep.subr.mxu0 0.0
    %3330 = vmatpush1.xpose.msra.mxu0 0.0
    %3331 = vmatprep.subr.mxu0 0.0
    %3332 = vmatpush1.xpose.msra.mxu0 0.0
    %3333 = vmatprep.subr.mxu0 0.0
    %3334 = vmatpush1.xpose.msra.mxu0 0.0
    %3335 = vmatprep.subr.mxu0 0.0
    %3336 = vmatpush1.xpose.msra.mxu0 0.0
    %3337 = vmatprep.subr.mxu0 0.0
    %3338 = vmatpush1.xpose.msra.mxu0 0.0
    %3339 = vmatprep.subr.mxu0 0.0
    %3340 = vmatpush1.xpose.msra.mxu0 0.0
    %3341 = vmatprep.subr.mxu0 0.0
    %3342 = vmatpush1.xpose.msra.mxu0 0.0
    %3343 = vmatprep.subr.mxu0 0.0
    %3344 = vmatpush1.xpose.msra.mxu0 0.0
    %3345 = vmatprep.subr.mxu0 0.0
    %3346 = vmatpush1.xpose.msra.mxu0 0.0
    %3347 = vmatprep.subr.mxu0 0.0
    %3348 = vmatpush1.xpose.msra.mxu0 0.0
    %3349 = vmatprep.subr.mxu0 0.0
    %3350 = vmatpush1.xpose.msra.mxu0 0.0
    %3351 = vmatprep.subr.mxu0 0.0
    %3352 = vmatpush1.xpose.msra.mxu0 0.0
    %3353 = vmatprep.subr.mxu0 0.0
    %3354 = vmatpush1.xpose.msra.mxu0 0.0
    %3355 = vmatprep.subr.mxu0 0.0
    %3356 = vmatpush1.xpose.msra.mxu0 0.0
    %3357 = vmatprep.subr.mxu0 0.0
    %3358 = vmatpush1.xpose.msra.mxu0 0.0
    %3359 = vmatprep.subr.mxu0 0.0
    %3360 = vmatpush1.xpose.msra.mxu0 0.0
    %3361 = vmatprep.subr.mxu0 0.0
    %3362 = vmatpush1.xpose.msra.mxu0 0.0
    %3363 = vmatprep.subr.mxu0 0.0
    %3364 = vmatpush1.xpose.msra.mxu0 0.0
    %3365 = vmatprep.subr.mxu0 0.0
    %3366 = vmatpush1.xpose.msra.mxu0 0.0
    %3367 = vmatprep.mubr.f32.mxu0 0.0
    %3368 = vmatmul.mubr.f32.gmra.mrb[0].mxu0 %v3295
    %v3369 = vpop.f32.mrb[0].mxu0
    %v3370 = vadd.f32 %v111, %v3369
    %v3371 = vpop.f32.mrb[0].mxu0
    %3372 = vmatprep.mubr.f32.mxu0 0.0
    %3373 = vmatmul.mubr.f32.gmra.mrb[0].mxu0 %v3297
    %v3374 = vpop.f32.mrb[0].mxu0
    %v3375 = vadd.f32 %v112, %v3374
    %v3376 = vpop.f32.mrb[0].mxu0
    %3377 = vdwg.mxu0
    %v3378 = vsel %vm466, %v3370, -inf
    %3379 = vmax.xlane.f32.xlu0 %v3378
    %v3380 = vpop.xlane.xlu0 %3379
    %v3381 = vsel %vm466, %v3375, -inf
    %3382 = vmax.xlane.f32.xlu0 %v3381
    %v3383 = vpop.xlane.xlu0 %3382
    %v3384 = vsub.f32 %v3370, %v3380
    %v3385 = vsub.f32 %v3375, %v3383
    %v3386 = vmul.f32 %v3384, 1.442695
    %v3387 = vpow.pop %v3386
    %v3388 = vmul.f32 %v3385, 1.442695
    %v3389 = vpow.pop %v3388
    %v3390 = vsel %vm466, %v3387, 0.0
    %3391 = vadd.xlane.f32.xlu0 %v3390
    %v3392 = vpop.xlane.xlu0 %3391
    %v3393 = vsel %vm466, %v3389, 0.0
    %3394 = vadd.xlane.f32.xlu0 %v3393
    %v3395 = vpop.xlane.xlu0 %3394
    %v3396 = vrcp.pop %v3392
    %v3397 = vrcp.pop %v3395
    %v3398 = vmul.f32 %v3387, %v3396
    %v3399 = vmul.f32 %v3389, %v3397
    %3400 = vrot.lane.b32.xlu0 %v3081, 56
    %v3401 = vpop.permute.xlu0 %3400
    %3402 = vrot.lane.b32.xlu0 %v3086, 56
    %v3403 = vpop.permute.xlu0 %3402
    %v3407 = vsel %vm466, %v3398, 0
    %v3410 = vsel %vm466, %v3399, 0
    %3412 = vmatprep.subr.mxu0 0.0
    %3413 = vmatpush1.msra.mxu0 %v3401
    %3414 = vmatprep.subr.mxu0 0.0
    %3415 = vmatpush1.msra.mxu0 %v3403
    %3416 = vmatprep.subr.mxu0 0.0
    %3417 = vmatpush1.msra.mxu0 0.0
    %3418 = vmatprep.subr.mxu0 0.0
    %3419 = vmatpush1.msra.mxu0 0.0
    %3420 = vmatprep.subr.mxu0 0.0
    %3421 = vmatpush1.msra.mxu0 0.0
    %3422 = vmatprep.subr.mxu0 0.0
    %3423 = vmatpush1.msra.mxu0 0.0
    %3424 = vmatprep.subr.mxu0 0.0
    %3425 = vmatpush1.msra.mxu0 0.0
    %3426 = vmatprep.subr.mxu0 0.0
    %3427 = vmatpush1.msra.mxu0 0.0
    %3428 = vmatprep.subr.mxu0 0.0
    %3429 = vmatpush1.msra.mxu0 0.0
    %3430 = vmatprep.subr.mxu0 0.0
    %3431 = vmatpush1.msra.mxu0 0.0
    %3432 = vmatprep.subr.mxu0 0.0
    %3433 = vmatpush1.msra.mxu0 0.0
    %3434 = vmatprep.subr.mxu0 0.0
    %3435 = vmatpush1.msra.mxu0 0.0
    %3436 = vmatprep.subr.mxu0 0.0
    %3437 = vmatpush1.msra.mxu0 0.0
    %3438 = vmatprep.subr.mxu0 0.0
    %3439 = vmatpush1.msra.mxu0 0.0
    %3440 = vmatprep.subr.mxu0 0.0
    %3441 = vmatpush1.msra.mxu0 0.0
    %3442 = vmatprep.subr.mxu0 0.0
    %3443 = vmatpush1.msra.mxu0 0.0
    %3444 = vmatprep.subr.mxu0 0.0
    %3445 = vmatpush1.msra.mxu0 0.0
    %3446 = vmatprep.subr.mxu0 0.0
    %3447 = vmatpush1.msra.mxu0 0.0
    %3448 = vmatprep.subr.mxu0 0.0
    %3449 = vmatpush1.msra.mxu0 0.0
    %3450 = vmatprep.subr.mxu0 0.0
    %3451 = vmatpush1.msra.mxu0 0.0
    %3452 = vmatprep.subr.mxu0 0.0
    %3453 = vmatpush1.msra.mxu0 0.0
    %3454 = vmatprep.subr.mxu0 0.0
    %3455 = vmatpush1.msra.mxu0 0.0
    %3456 = vmatprep.subr.mxu0 0.0
    %3457 = vmatpush1.msra.mxu0 0.0
    %3458 = vmatprep.subr.mxu0 0.0
    %3459 = vmatpush1.msra.mxu0 0.0
    %3460 = vmatprep.subr.mxu0 0.0
    %3461 = vmatpush1.msra.mxu0 0.0
    %3462 = vmatprep.subr.mxu0 0.0
    %3463 = vmatpush1.msra.mxu0 0.0
    %3464 = vmatprep.subr.mxu0 0.0
    %3465 = vmatpush1.msra.mxu0 0.0
    %3466 = vmatprep.subr.mxu0 0.0
    %3467 = vmatpush1.msra.mxu0 0.0
    %3468 = vmatprep.subr.mxu0 0.0
    %3469 = vmatpush1.msra.mxu0 0.0
    %3470 = vmatprep.subr.mxu0 0.0
    %3471 = vmatpush1.msra.mxu0 0.0
    %3472 = vmatprep.subr.mxu0 0.0
    %3473 = vmatpush1.msra.mxu0 0.0
    %3474 = vmatprep.subr.mxu0 0.0
    %3475 = vmatpush1.msra.mxu0 0.0
    %3476 = vmatprep.mubr.f32.mxu0 0.0
    %3477 = vmatmul.mubr.f32.gmra.mrb[0].mxu0 %v3407
    %v3478 = vpop.f32.mrb[0].mxu0
    %v3479 = vadd.f32 0.0, %v3478
    %v3480 = vpop.f32.mrb[0].mxu0
    %3481 = vmatprep.mubr.f32.mxu0 0.0
    %3482 = vmatmul.mubr.f32.gmra.mrb[0].mxu0 %v3410
    %v3483 = vpop.f32.mrb[0].mxu0
    %v3484 = vadd.f32 0.0, %v3483
    %v3485 = vpop.f32.mrb[0].mxu0
    %3486 = vdwg.mxu0
    %v3488 = vsel %vm382, %v3479, 0
    %v3491 = vsel %vm382, %v3484, 0
    %3493 = vmatprep.subr.mxu0 0.0
    %3494 = vmatpush1.msra.mxu0 %v124
    %3495 = vmatprep.subr.mxu0 0.0
    %3496 = vmatpush1.msra.mxu0 0.0
    %3497 = vmatprep.subr.mxu0 0.0
    %3498 = vmatpush1.msra.mxu0 0.0
    %3499 = vmatprep.subr.mxu0 0.0
    %3500 = vmatpush1.msra.mxu0 0.0
    %3501 = vmatprep.subr.mxu0 0.0
    %3502 = vmatpush1.msra.mxu0 0.0
    %3503 = vmatprep.subr.mxu0 0.0
    %3504 = vmatpush1.msra.mxu0 0.0
    %3505 = vmatprep.subr.mxu0 0.0
    %3506 = vmatpush1.msra.mxu0 0.0
    %3507 = vmatprep.subr.mxu0 0.0
    %3508 = vmatpush1.msra.mxu0 0.0
    %3509 = vmatprep.subr.mxu0 0.0
    %3510 = vmatpush1.msra.mxu0 0.0
    %3511 = vmatprep.subr.mxu0 0.0
    %3512 = vmatpush1.msra.mxu0 0.0
    %3513 = vmatprep.subr.mxu0 0.0
    %3514 = vmatpush1.msra.mxu0 0.0
    %3515 = vmatprep.subr.mxu0 0.0
    %3516 = vmatpush1.msra.mxu0 0.0
    %3517 = vmatprep.subr.mxu0 0.0
    %3518 = vmatpush1.msra.mxu0 0.0
    %3519 = vmatprep.subr.mxu0 0.0
    %3520 = vmatpush1.msra.mxu0 0.0
    %3521 = vmatprep.subr.mxu0 0.0
    %3522 = vmatpush1.msra.mxu0 0.0
    %3523 = vmatprep.subr.mxu0 0.0
    %3524 = vmatpush1.msra.mxu0 0.0
    %3525 = vmatprep.subr.mxu0 0.0
    %3526 = vmatpush1.msra.mxu0 0.0
    %3527 = vmatprep.subr.mxu0 0.0
    %3528 = vmatpush1.msra.mxu0 0.0
    %3529 = vmatprep.subr.mxu0 0.0
    %3530 = vmatpush1.msra.mxu0 0.0
    %3531 = vmatprep.subr.mxu0 0.0
    %3532 = vmatpush1.msra.mxu0 0.0
    %3533 = vmatprep.subr.mxu0 0.0
    %3534 = vmatpush1.msra.mxu0 0.0
    %3535 = vmatprep.subr.mxu0 0.0
    %3536 = vmatpush1.msra.mxu0 0.0
    %3537 = vmatprep.subr.mxu0 0.0
    %3538 = vmatpush1.msra.mxu0 0.0
    %3539 = vmatprep.subr.mxu0 0.0
    %3540 = vmatpush1.msra.mxu0 0.0
    %3541 = vmatprep.subr.mxu0 0.0
    %3542 = vmatpush1.msra.mxu0 0.0
    %3543 = vmatprep.subr.mxu0 0.0
    %3544 = vmatpush1.msra.mxu0 0.0
    %3545 = vmatprep.subr.mxu0 0.0
    %3546 = vmatpush1.msra.mxu0 0.0
    %3547 = vmatprep.subr.mxu0 0.0
    %3548 = vmatpush1.msra.mxu0 0.0
    %3549 = vmatprep.subr.mxu0 0.0
    %3550 = vmatpush1.msra.mxu0 0.0
    %3551 = vmatprep.subr.mxu0 0.0
    %3552 = vmatpush1.msra.mxu0 0.0
    %3553 = vmatprep.subr.mxu0 0.0
    %3554 = vmatpush1.msra.mxu0 0.0
    %3555 = vmatprep.subr.mxu0 0.0
    %3556 = vmatpush1.msra.mxu0 0.0
    %3557 = vmatprep.mubr.f32.mxu0 0.0
    %3558 = vmatmul.mubr.f32.gmra.mrb[0].mxu0 %v3488
    %v3559 = vpop.f32.mrb[0].mxu0
    %v3560 = vadd.f32 0.0, %v3559
    %v3561 = vpop.f32.mrb[0].mxu0
    %3562 = vmatprep.mubr.f32.mxu0 0.0
    %3563 = vmatmul.mubr.f32.gmra.mrb[0].mxu0 %v3491
    %v3564 = vpop.f32.mrb[0].mxu0
    %v3565 = vadd.f32 0.0, %v3564
    %v3566 = vpop.f32.mrb[0].mxu0
    %3567 = vdwg.mxu0
    %v3569 = vsel %vm382, %v3279, 0
    %v3572 = vsel %vm382, %v3284, 0
    %3574 = vmatprep.subr.mxu0 0.0
    %3575 = vmatpush1.msra.mxu0 %v123
    %3576 = vmatprep.subr.mxu0 0.0
    %3577 = vmatpush1.msra.mxu0 0.0
    %3578 = vmatprep.subr.mxu0 0.0
    %3579 = vmatpush1.msra.mxu0 0.0
    %3580 = vmatprep.subr.mxu0 0.0
    %3581 = vmatpush1.msra.mxu0 0.0
    %3582 = vmatprep.subr.mxu0 0.0
    %3583 = vmatpush1.msra.mxu0 0.0
    %3584 = vmatprep.subr.mxu0 0.0
    %3585 = vmatpush1.msra.mxu0 0.0
    %3586 = vmatprep.subr.mxu0 0.0
    %3587 = vmatpush1.msra.mxu0 0.0
    %3588 = vmatprep.subr.mxu0 0.0
    %3589 = vmatpush1.msra.mxu0 0.0
    %3590 = vmatprep.subr.mxu0 0.0
    %3591 = vmatpush1.msra.mxu0 0.0
    %3592 = vmatprep.subr.mxu0 0.0
    %3593 = vmatpush1.msra.mxu0 0.0
    %3594 = vmatprep.subr.mxu0 0.0
    %3595 = vmatpush1.msra.mxu0 0.0
    %3596 = vmatprep.subr.mxu0 0.0
    %3597 = vmatpush1.msra.mxu0 0.0
    %3598 = vmatprep.subr.mxu0 0.0
    %3599 = vmatpush1.msra.mxu0 0.0
    %3600 = vmatprep.subr.mxu0 0.0
    %3601 = vmatpush1.msra.mxu0 0.0
    %3602 = vmatprep.subr.mxu0 0.0
    %3603 = vmatpush1.msra.mxu0 0.0
    %3604 = vmatprep.subr.mxu0 0.0
    %3605 = vmatpush1.msra.mxu0 0.0
    %3606 = vmatprep.subr.mxu0 0.0
    %3607 = vmatpush1.msra.mxu0 0.0
    %3608 = vmatprep.subr.mxu0 0.0
    %3609 = vmatpush1.msra.mxu0 0.0
    %3610 = vmatprep.subr.mxu0 0.0
    %3611 = vmatpush1.msra.mxu0 0.0
    %3612 = vmatprep.subr.mxu0 0.0
    %3613 = vmatpush1.msra.mxu0 0.0
    %3614 = vmatprep.subr.mxu0 0.0
    %3615 = vmatpush1.msra.mxu0 0.0
    %3616 = vmatprep.subr.mxu0 0.0
    %3617 = vmatpush1.msra.mxu0 0.0
    %3618 = vmatprep.subr.mxu0 0.0
    %3619 = vmatpush1.msra.mxu0 0.0
    %3620 = vmatprep.subr.mxu0 0.0
    %3621 = vmatpush1.msra.mxu0 0.0
    %3622 = vmatprep.subr.mxu0 0.0
    %3623 = vmatpush1.msra.mxu0 0.0
    %3624 = vmatprep.subr.mxu0 0.0
    %3625 = vmatpush1.msra.mxu0 0.0
    %3626 = vmatprep.subr.mxu0 0.0
    %3627 = vmatpush1.msra.mxu0 0.0
    %3628 = vmatprep.subr.mxu0 0.0
    %3629 = vmatpush1.msra.mxu0 0.0
    %3630 = vmatprep.subr.mxu0 0.0
    %3631 = vmatpush1.msra.mxu0 0.0
    %3632 = vmatprep.subr.mxu0 0.0
    %3633 = vmatpush1.msra.mxu0 0.0
    %3634 = vmatprep.subr.mxu0 0.0
    %3635 = vmatpush1.msra.mxu0 0.0
    %3636 = vmatprep.subr.mxu0 0.0
    %3637 = vmatpush1.msra.mxu0 0.0
    %3638 = vmatprep.mubr.f32.mxu0 0.0
    %3639 = vmatmul.mubr.f32.gmra.mrb[0].mxu0 %v3569
    %v3640 = vpop.f32.mrb[0].mxu0
    %v3641 = vadd.f32 %v3560, %v3640
    %v3642 = vpop.f32.mrb[0].mxu0
    %3643 = vmatprep.mubr.f32.mxu0 0.0
    %3644 = vmatmul.mubr.f32.gmra.mrb[0].mxu0 %v3572
    %v3645 = vpop.f32.mrb[0].mxu0
    %v3646 = vadd.f32 %v3565, %v3645
    %v3647 = vpop.f32.mrb[0].mxu0
    %3648 = vdwg.mxu0
    %3649 = vrot.lane.b32.xlu0 %v3081, 112
    %v3650 = vpop.permute.xlu0 %3649
    %3651 = vrot.lane.b32.xlu0 %v3086, 112
    %v3652 = vpop.permute.xlu0 %3651
    %3653 = vrot.lane.b32.xlu0 %v3081, 80
    %v3654 = vpop.permute.xlu0 %3653
    %3655 = vrot.lane.b32.xlu0 %v3086, 80
    %v3656 = vpop.permute.xlu0 %3655
    %v3657 = vsel %vm382, %v3650, 0
    %v3659 = vsel %vm382, %v3652, 0
    %v3661 = vsel %vm382, %v3654, 0
    %v3663 = vsel %vm382, %v3656, 0
    %3665 = vmatprep.subr.mxu0 0.0
    %3666 = vmatpush1.xpose.msra.mxu0 %v3661
    %3667 = vmatprep.subr.mxu0 0.0
    %3668 = vmatpush1.xpose.msra.mxu0 %v3663
    %3669 = vmatprep.subr.mxu0 0.0
    %3670 = vmatpush1.xpose.msra.mxu0 0.0
    %3671 = vmatprep.subr.mxu0 0.0
    %3672 = vmatpush1.xpose.msra.mxu0 0.0
    %3673 = vmatprep.subr.mxu0 0.0
    %3674 = vmatpush1.xpose.msra.mxu0 0.0
    %3675 = vmatprep.subr.mxu0 0.0
    %3676 = vmatpush1.xpose.msra.mxu0 0.0
    %3677 = vmatprep.subr.mxu0 0.0
    %3678 = vmatpush1.xpose.msra.mxu0 0.0
    %3679 = vmatprep.subr.mxu0 0.0
    %3680 = vmatpush1.xpose.msra.mxu0 0.0
    %3681 = vmatprep.subr.mxu0 0.0
    %3682 = vmatpush1.xpose.msra.mxu0 0.0
    %3683 = vmatprep.subr.mxu0 0.0
    %3684 = vmatpush1.xpose.msra.mxu0 0.0
    %3685 = vmatprep.subr.mxu0 0.0
    %3686 = vmatpush1.xpose.msra.mxu0 0.0
    %3687 = vmatprep.subr.mxu0 0.0
    %3688 = vmatpush1.xpose.msra.mxu0 0.0
    %3689 = vmatprep.subr.mxu0 0.0
    %3690 = vmatpush1.xpose.msra.mxu0 0.0
    %3691 = vmatprep.subr.mxu0 0.0
    %3692 = vmatpush1.xpose.msra.mxu0 0.0
    %3693 = vmatprep.subr.mxu0 0.0
    %3694 = vmatpush1.xpose.msra.mxu0 0.0
    %3695 = vmatprep.subr.mxu0 0.0
    %3696 = vmatpush1.xpose.msra.mxu0 0.0
    %3697 = vmatprep.subr.mxu0 0.0
    %3698 = vmatpush1.xpose.msra.mxu0 0.0
    %3699 = vmatprep.subr.mxu0 0.0
    %3700 = vmatpush1.xpose.msra.mxu0 0.0
    %3701 = vmatprep.subr.mxu0 0.0
    %3702 = vmatpush1.xpose.msra.mxu0 0.0
    %3703 = vmatprep.subr.mxu0 0.0
    %3704 = vmatpush1.xpose.msra.mxu0 0.0
    %3705 = vmatprep.subr.mxu0 0.0
    %3706 = vmatpush1.xpose.msra.mxu0 0.0
    %3707 = vmatprep.subr.mxu0 0.0
    %3708 = vmatpush1.xpose.msra.mxu0 0.0
    %3709 = vmatprep.subr.mxu0 0.0
    %3710 = vmatpush1.xpose.msra.mxu0 0.0
    %3711 = vmatprep.subr.mxu0 0.0
    %3712 = vmatpush1.xpose.msra.mxu0 0.0
    %3713 = vmatprep.subr.mxu0 0.0
    %3714 = vmatpush1.xpose.msra.mxu0 0.0
    %3715 = vmatprep.subr.mxu0 0.0
    %3716 = vmatpush1.xpose.msra.mxu0 0.0
    %3717 = vmatprep.subr.mxu0 0.0
    %3718 = vmatpush1.xpose.msra.mxu0 0.0
    %3719 = vmatprep.subr.mxu0 0.0
    %3720 = vmatpush1.xpose.msra.mxu0 0.0
    %3721 = vmatprep.subr.mxu0 0.0
    %3722 = vmatpush1.xpose.msra.mxu0 0.0
    %3723 = vmatprep.subr.mxu0 0.0
    %3724 = vmatpush1.xpose.msra.mxu0 0.0
    %3725 = vmatprep.subr.mxu0 0.0
    %3726 = vmatpush1.xpose.msra.mxu0 0.0
    %3727 = vmatprep.subr.mxu0 0.0
    %3728 = vmatpush1.xpose.msra.mxu0 0.0
    %3729 = vmatprep.mubr.f32.mxu0 0.0
    %3730 = vmatmul.mubr.f32.gmra.mrb[0].mxu0 %v3657
    %v3731 = vpop.f32.mrb[0].mxu0
    %v3732 = vadd.f32 %v111, %v3731
    %v3733 = vpop.f32.mrb[0].mxu0
    %3734 = vmatprep.mubr.f32.mxu0 0.0
    %3735 = vmatmul.mubr.f32.gmra.mrb[0].mxu0 %v3659
    %v3736 = vpop.f32.mrb[0].mxu0
    %v3737 = vadd.f32 %v112, %v3736
    %v3738 = vpop.f32.mrb[0].mxu0
    %3739 = vdwg.mxu0
    %v3740 = vsel %vm466, %v3732, -inf
    %3741 = vmax.xlane.f32.xlu0 %v3740
    %v3742 = vpop.xlane.xlu0 %3741
    %v3743 = vsel %vm466, %v3737, -inf
    %3744 = vmax.xlane.f32.xlu0 %v3743
    %v3745 = vpop.xlane.xlu0 %3744
    %v3746 = vsub.f32 %v3732, %v3742
    %v3747 = vsub.f32 %v3737, %v3745
    %v3748 = vmul.f32 %v3746, 1.442695
    %v3749 = vpow.pop %v3748
    %v3750 = vmul.f32 %v3747, 1.442695
    %v3751 = vpow.pop %v3750
    %v3752 = vsel %vm466, %v3749, 0.0
    %3753 = vadd.xlane.f32.xlu0 %v3752
    %v3754 = vpop.xlane.xlu0 %3753
    %v3755 = vsel %vm466, %v3751, 0.0
    %3756 = vadd.xlane.f32.xlu0 %v3755
    %v3757 = vpop.xlane.xlu0 %3756
    %v3758 = vrcp.pop %v3754
    %v3759 = vrcp.pop %v3757
    %v3760 = vmul.f32 %v3749, %v3758
    %v3761 = vmul.f32 %v3751, %v3759
    %3762 = vrot.lane.b32.xlu0 %v3081, 48
    %v3763 = vpop.permute.xlu0 %3762
    %3764 = vrot.lane.b32.xlu0 %v3086, 48
    %v3765 = vpop.permute.xlu0 %3764
    %v3769 = vsel %vm466, %v3760, 0
    %v3772 = vsel %vm466, %v3761, 0
    %3774 = vmatprep.subr.mxu0 0.0
    %3775 = vmatpush1.msra.mxu0 %v3763
    %3776 = vmatprep.subr.mxu0 0.0
    %3777 = vmatpush1.msra.mxu0 %v3765
    %3778 = vmatprep.subr.mxu0 0.0
    %3779 = vmatpush1.msra.mxu0 0.0
    %3780 = vmatprep.subr.mxu0 0.0
    %3781 = vmatpush1.msra.mxu0 0.0
    %3782 = vmatprep.subr.mxu0 0.0
    %3783 = vmatpush1.msra.mxu0 0.0
    %3784 = vmatprep.subr.mxu0 0.0
    %3785 = vmatpush1.msra.mxu0 0.0
    %3786 = vmatprep.subr.mxu0 0.0
    %3787 = vmatpush1.msra.mxu0 0.0
    %3788 = vmatprep.subr.mxu0 0.0
    %3789 = vmatpush1.msra.mxu0 0.0
    %3790 = vmatprep.subr.mxu0 0.0
    %3791 = vmatpush1.msra.mxu0 0.0
    %3792 = vmatprep.subr.mxu0 0.0
    %3793 = vmatpush1.msra.mxu0 0.0
    %3794 = vmatprep.subr.mxu0 0.0
    %3795 = vmatpush1.msra.mxu0 0.0
    %3796 = vmatprep.subr.mxu0 0.0
    %3797 = vmatpush1.msra.mxu0 0.0
    %3798 = vmatprep.subr.mxu0 0.0
    %3799 = vmatpush1.msra.mxu0 0.0
    %3800 = vmatprep.subr.mxu0 0.0
    %3801 = vmatpush1.msra.mxu0 0.0
    %3802 = vmatprep.subr.mxu0 0.0
    %3803 = vmatpush1.msra.mxu0 0.0
    %3804 = vmatprep.subr.mxu0 0.0
    %3805 = vmatpush1.msra.mxu0 0.0
    %3806 = vmatprep.subr.mxu0 0.0
    %3807 = vmatpush1.msra.mxu0 0.0
    %3808 = vmatprep.subr.mxu0 0.0
    %3809 = vmatpush1.msra.mxu0 0.0
    %3810 = vmatprep.subr.mxu0 0.0
    %3811 = vmatpush1.msra.mxu0 0.0
    %3812 = vmatprep.subr.mxu0 0.0
    %3813 = vmatpush1.msra.mxu0 0.0
    %3814 = vmatprep.subr.mxu0 0.0
    %3815 = vmatpush1.msra.mxu0 0.0
    %3816 = vmatprep.subr.mxu0 0.0
    %3817 = vmatpush1.msra.mxu0 0.0
    %3818 = vmatprep.subr.mxu0 0.0
    %3819 = vmatpush1.msra.mxu0 0.0
    %3820 = vmatprep.subr.mxu0 0.0
    %3821 = vmatpush1.msra.mxu0 0.0
    %3822 = vmatprep.subr.mxu0 0.0
    %3823 = vmatpush1.msra.mxu0 0.0
    %3824 = vmatprep.subr.mxu0 0.0
    %3825 = vmatpush1.msra.mxu0 0.0
    %3826 = vmatprep.subr.mxu0 0.0
    %3827 = vmatpush1.msra.mxu0 0.0
    %3828 = vmatprep.subr.mxu0 0.0
    %3829 = vmatpush1.msra.mxu0 0.0
    %3830 = vmatprep.subr.mxu0 0.0
    %3831 = vmatpush1.msra.mxu0 0.0
    %3832 = vmatprep.subr.mxu0 0.0
    %3833 = vmatpush1.msra.mxu0 0.0
    %3834 = vmatprep.subr.mxu0 0.0
    %3835 = vmatpush1.msra.mxu0 0.0
    %3836 = vmatprep.subr.mxu0 0.0
    %3837 = vmatpush1.msra.mxu0 0.0
    %3838 = vmatprep.mubr.f32.mxu0 0.0
    %3839 = vmatmul.mubr.f32.gmra.mrb[0].mxu0 %v3769
    %v3840 = vpop.f32.mrb[0].mxu0
    %v3841 = vadd.f32 0.0, %v3840
    %v3842 = vpop.f32.mrb[0].mxu0
    %3843 = vmatprep.mubr.f32.mxu0 0.0
    %3844 = vmatmul.mubr.f32.gmra.mrb[0].mxu0 %v3772
    %v3845 = vpop.f32.mrb[0].mxu0
    %v3846 = vadd.f32 0.0, %v3845
    %v3847 = vpop.f32.mrb[0].mxu0
    %3848 = vdwg.mxu0
    %v3850 = vsel %vm382, %v3841, 0
    %v3853 = vsel %vm382, %v3846, 0
    %3855 = vmatprep.subr.mxu0 0.0
    %3856 = vmatpush1.msra.mxu0 %v125
    %3857 = vmatprep.subr.mxu0 0.0
    %3858 = vmatpush1.msra.mxu0 0.0
    %3859 = vmatprep.subr.mxu0 0.0
    %3860 = vmatpush1.msra.mxu0 0.0
    %3861 = vmatprep.subr.mxu0 0.0
    %3862 = vmatpush1.msra.mxu0 0.0
    %3863 = vmatprep.subr.mxu0 0.0
    %3864 = vmatpush1.msra.mxu0 0.0
    %3865 = vmatprep.subr.mxu0 0.0
    %3866 = vmatpush1.msra.mxu0 0.0
    %3867 = vmatprep.subr.mxu0 0.0
    %3868 = vmatpush1.msra.mxu0 0.0
    %3869 = vmatprep.subr.mxu0 0.0
    %3870 = vmatpush1.msra.mxu0 0.0
    %3871 = vmatprep.subr.mxu0 0.0
    %3872 = vmatpush1.msra.mxu0 0.0
    %3873 = vmatprep.subr.mxu0 0.0
    %3874 = vmatpush1.msra.mxu0 0.0
    %3875 = vmatprep.subr.mxu0 0.0
    %3876 = vmatpush1.msra.mxu0 0.0
    %3877 = vmatprep.subr.mxu0 0.0
    %3878 = vmatpush1.msra.mxu0 0.0
    %3879 = vmatprep.subr.mxu0 0.0
    %3880 = vmatpush1.msra.mxu0 0.0
    %3881 = vmatprep.subr.mxu0 0.0
    %3882 = vmatpush1.msra.mxu0 0.0
    %3883 = vmatprep.subr.mxu0 0.0
    %3884 = vmatpush1.msra.mxu0 0.0
    %3885 = vmatprep.subr.mxu0 0.0
    %3886 = vmatpush1.msra.mxu0 0.0
    %3887 = vmatprep.subr.mxu0 0.0
    %3888 = vmatpush1.msra.mxu0 0.0
    %3889 = vmatprep.subr.mxu0 0.0
    %3890 = vmatpush1.msra.mxu0 0.0
    %3891 = vmatprep.subr.mxu0 0.0
    %3892 = vmatpush1.msra.mxu0 0.0
    %3893 = vmatprep.subr.mxu0 0.0
    %3894 = vmatpush1.msra.mxu0 0.0
    %3895 = vmatprep.subr.mxu0 0.0
    %3896 = vmatpush1.msra.mxu0 0.0
    %3897 = vmatprep.subr.mxu0 0.0
    %3898 = vmatpush1.msra.mxu0 0.0
    %3899 = vmatprep.subr.mxu0 0.0
    %3900 = vmatpush1.msra.mxu0 0.0
    %3901 = vmatprep.subr.mxu0 0.0
    %3902 = vmatpush1.msra.mxu0 0.0
    %3903 = vmatprep.subr.mxu0 0.0
    %3904 = vmatpush1.msra.mxu0 0.0
    %3905 = vmatprep.subr.mxu0 0.0
    %3906 = vmatpush1.msra.mxu0 0.0
    %3907 = vmatprep.subr.mxu0 0.0
    %3908 = vmatpush1.msra.mxu0 0.0
    %3909 = vmatprep.subr.mxu0 0.0
    %3910 = vmatpush1.msra.mxu0 0.0
    %3911 = vmatprep.subr.mxu0 0.0
    %3912 = vmatpush1.msra.mxu0 0.0
    %3913 = vmatprep.subr.mxu0 0.0
    %3914 = vmatpush1.msra.mxu0 0.0
    %3915 = vmatprep.subr.mxu0 0.0
    %3916 = vmatpush1.msra.mxu0 0.0
    %3917 = vmatprep.subr.mxu0 0.0
    %3918 = vmatpush1.msra.mxu0 0.0
    %3919 = vmatprep.mubr.f32.mxu0 0.0
    %3920 = vmatmul.mubr.f32.gmra.mrb[0].mxu0 %v3850
    %v3921 = vpop.f32.mrb[0].mxu0
    %v3922 = vadd.f32 0.0, %v3921
    %v3923 = vpop.f32.mrb[0].mxu0
    %3924 = vmatprep.mubr.f32.mxu0 0.0
    %3925 = vmatmul.mubr.f32.gmra.mrb[0].mxu0 %v3853
    %v3926 = vpop.f32.mrb[0].mxu0
    %v3927 = vadd.f32 0.0, %v3926
    %v3928 = vpop.f32.mrb[0].mxu0
    %3929 = vdwg.mxu0
    %v3930 = vadd.f32 %v3641, %v3922
    %v3931 = vadd.f32 %v3646, %v3927
    %3932 = vrot.lane.b32.xlu0 %v3081, 104
    %v3933 = vpop.permute.xlu0 %3932
    %3934 = vrot.lane.b32.xlu0 %v3086, 104
    %v3935 = vpop.permute.xlu0 %3934
    %3936 = vrot.lane.b32.xlu0 %v3081, 72
    %v3937 = vpop.permute.xlu0 %3936
    %3938 = vrot.lane.b32.xlu0 %v3086, 72
    %v3939 = vpop.permute.xlu0 %3938
    %v3940 = vsel %vm382, %v3933, 0
    %v3942 = vsel %vm382, %v3935, 0
    %v3944 = vsel %vm382, %v3937, 0
    %v3946 = vsel %vm382, %v3939, 0
    %3948 = vmatprep.subr.mxu0 0.0
    %3949 = vmatpush1.xpose.msra.mxu0 %v3944
    %3950 = vmatprep.subr.mxu0 0.0
    %3951 = vmatpush1.xpose.msra.mxu0 %v3946
    %3952 = vmatprep.subr.mxu0 0.0
    %3953 = vmatpush1.xpose.msra.mxu0 0.0
    %3954 = vmatprep.subr.mxu0 0.0
    %3955 = vmatpush1.xpose.msra.mxu0 0.0
    %3956 = vmatprep.subr.mxu0 0.0
    %3957 = vmatpush1.xpose.msra.mxu0 0.0
    %3958 = vmatprep.subr.mxu0 0.0
    %3959 = vmatpush1.xpose.msra.mxu0 0.0
    %3960 = vmatprep.subr.mxu0 0.0
    %3961 = vmatpush1.xpose.msra.mxu0 0.0
    %3962 = vmatprep.subr.mxu0 0.0
    %3963 = vmatpush1.xpose.msra.mxu0 0.0
    %3964 = vmatprep.subr.mxu0 0.0
    %3965 = vmatpush1.xpose.msra.mxu0 0.0
    %3966 = vmatprep.subr.mxu0 0.0
    %3967 = vmatpush1.xpose.msra.mxu0 0.0
    %3968 = vmatprep.subr.mxu0 0.0
    %3969 = vmatpush1.xpose.msra.mxu0 0.0
    %3970 = vmatprep.subr.mxu0 0.0
    %3971 = vmatpush1.xpose.msra.mxu0 0.0
    %3972 = vmatprep.subr.mxu0 0.0
    %3973 = vmatpush1.xpose.msra.mxu0 0.0
    %3974 = vmatprep.subr.mxu0 0.0
    %3975 = vmatpush1.xpose.msra.mxu0 0.0
    %3976 = vmatprep.subr.mxu0 0.0
    %3977 = vmatpush1.xpose.msra.mxu0 0.0
    %3978 = vmatprep.subr.mxu0 0.0
    %3979 = vmatpush1.xpose.msra.mxu0 0.0
    %3980 = vmatprep.subr.mxu0 0.0
    %3981 = vmatpush1.xpose.msra.mxu0 0.0
    %3982 = vmatprep.subr.mxu0 0.0
    %3983 = vmatpush1.xpose.msra.mxu0 0.0
    %3984 = vmatprep.subr.mxu0 0.0
    %3985 = vmatpush1.xpose.msra.mxu0 0.0
    %3986 = vmatprep.subr.mxu0 0.0
    %3987 = vmatpush1.xpose.msra.mxu0 0.0
    %3988 = vmatprep.subr.mxu0 0.0
    %3989 = vmatpush1.xpose.msra.mxu0 0.0
    %3990 = vmatprep.subr.mxu0 0.0
    %3991 = vmatpush1.xpose.msra.mxu0 0.0
    %3992 = vmatprep.subr.mxu0 0.0
    %3993 = vmatpush1.xpose.msra.mxu0 0.0
    %3994 = vmatprep.subr.mxu0 0.0
    %3995 = vmatpush1.xpose.msra.mxu0 0.0
    %3996 = vmatprep.subr.mxu0 0.0
    %3997 = vmatpush1.xpose.msra.mxu0 0.0
    %3998 = vmatprep.subr.mxu0 0.0
    %3999 = vmatpush1.xpose.msra.mxu0 0.0
    %4000 = vmatprep.subr.mxu0 0.0
    %4001 = vmatpush1.xpose.msra.mxu0 0.0
    %4002 = vmatprep.subr.mxu0 0.0
    %4003 = vmatpush1.xpose.msra.mxu0 0.0
    %4004 = vmatprep.subr.mxu0 0.0
    %4005 = vmatpush1.xpose.msra.mxu0 0.0
    %4006 = vmatprep.subr.mxu0 0.0
    %4007 = vmatpush1.xpose.msra.mxu0 0.0
    %4008 = vmatprep.subr.mxu0 0.0
    %4009 = vmatpush1.xpose.msra.mxu0 0.0
    %4010 = vmatprep.subr.mxu0 0.0
    %4011 = vmatpush1.xpose.msra.mxu0 0.0
    %4012 = vmatprep.mubr.f32.mxu0 0.0
    %4013 = vmatmul.mubr.f32.gmra.mrb[0].mxu0 %v3940
    %v4014 = vpop.f32.mrb[0].mxu0
    %v4015 = vadd.f32 %v111, %v4014
    %v4016 = vpop.f32.mrb[0].mxu0
    %4017 = vmatprep.mubr.f32.mxu0 0.0
    %4018 = vmatmul.mubr.f32.gmra.mrb[0].mxu0 %v3942
    %v4019 = vpop.f32.mrb[0].mxu0
    %v4020 = vadd.f32 %v112, %v4019
    %v4021 = vpop.f32.mrb[0].mxu0
    %4022 = vdwg.mxu0
    %v4023 = vsel %vm466, %v4015, -inf
    %4024 = vmax.xlane.f32.xlu0 %v4023
    %v4025 = vpop.xlane.xlu0 %4024
    %v4026 = vsel %vm466, %v4020, -inf
    %4027 = vmax.xlane.f32.xlu0 %v4026
    %v4028 = vpop.xlane.xlu0 %4027
    %v4029 = vsub.f32 %v4015, %v4025
    %v4030 = vsub.f32 %v4020, %v4028
    %v4031 = vmul.f32 %v4029, 1.442695
    %v4032 = vpow.pop %v4031
    %v4033 = vmul.f32 %v4030, 1.442695
    %v4034 = vpow.pop %v4033
    %v4035 = vsel %vm466, %v4032, 0.0
    %4036 = vadd.xlane.f32.xlu0 %v4035
    %v4037 = vpop.xlane.xlu0 %4036
    %v4038 = vsel %vm466, %v4034, 0.0
    %4039 = vadd.xlane.f32.xlu0 %v4038
    %v4040 = vpop.xlane.xlu0 %4039
    %v4041 = vrcp.pop %v4037
    %v4042 = vrcp.pop %v4040
    %v4043 = vmul.f32 %v4032, %v4041
    %v4044 = vmul.f32 %v4034, %v4042
    %4045 = vrot.lane.b32.xlu0 %v3081, 40
    %v4046 = vpop.permute.xlu0 %4045
    %4047 = vrot.lane.b32.xlu0 %v3086, 40
    %v4048 = vpop.permute.xlu0 %4047
    %v4052 = vsel %vm466, %v4043, 0
    %v4055 = vsel %vm466, %v4044, 0
    %4057 = vmatprep.subr.mxu0 0.0
    %4058 = vmatpush1.msra.mxu0 %v4046
    %4059 = vmatprep.subr.mxu0 0.0
    %4060 = vmatpush1.msra.mxu0 %v4048
    %4061 = vmatprep.subr.mxu0 0.0
    %4062 = vmatpush1.msra.mxu0 0.0
    %4063 = vmatprep.subr.mxu0 0.0
    %4064 = vmatpush1.msra.mxu0 0.0
    %4065 = vmatprep.subr.mxu0 0.0
    %4066 = vmatpush1.msra.mxu0 0.0
    %4067 = vmatprep.subr.mxu0 0.0
    %4068 = vmatpush1.msra.mxu0 0.0
    %4069 = vmatprep.subr.mxu0 0.0
    %4070 = vmatpush1.msra.mxu0 0.0
    %4071 = vmatprep.subr.mxu0 0.0
    %4072 = vmatpush1.msra.mxu0 0.0
    %4073 = vmatprep.subr.mxu0 0.0
    %4074 = vmatpush1.msra.mxu0 0.0
    %4075 = vmatprep.subr.mxu0 0.0
    %4076 = vmatpush1.msra.mxu0 0.0
    %4077 = vmatprep.subr.mxu0 0.0
    %4078 = vmatpush1.msra.mxu0 0.0
    %4079 = vmatprep.subr.mxu0 0.0
    %4080 = vmatpush1.msra.mxu0 0.0
    %4081 = vmatprep.subr.mxu0 0.0
    %4082 = vmatpush1.msra.mxu0 0.0
    %4083 = vmatprep.subr.mxu0 0.0
    %4084 = vmatpush1.msra.mxu0 0.0
    %4085 = vmatprep.subr.mxu0 0.0
    %4086 = vmatpush1.msra.mxu0 0.0
    %4087 = vmatprep.subr.mxu0 0.0
    %4088 = vmatpush1.msra.mxu0 0.0
    %4089 = vmatprep.subr.mxu0 0.0
    %4090 = vmatpush1.msra.mxu0 0.0
    %4091 = vmatprep.subr.mxu0 0.0
    %4092 = vmatpush1.msra.mxu0 0.0
    %4093 = vmatprep.subr.mxu0 0.0
    %4094 = vmatpush1.msra.mxu0 0.0
    %4095 = vmatprep.subr.mxu0 0.0
    %4096 = vmatpush1.msra.mxu0 0.0
    %4097 = vmatprep.subr.mxu0 0.0
    %4098 = vmatpush1.msra.mxu0 0.0
    %4099 = vmatprep.subr.mxu0 0.0
    %4100 = vmatpush1.msra.mxu0 0.0
    %4101 = vmatprep.subr.mxu0 0.0
    %4102 = vmatpush1.msra.mxu0 0.0
    %4103 = vmatprep.subr.mxu0 0.0
    %4104 = vmatpush1.msra.mxu0 0.0
    %4105 = vmatprep.subr.mxu0 0.0
    %4106 = vmatpush1.msra.mxu0 0.0
    %4107 = vmatprep.subr.mxu0 0.0
    %4108 = vmatpush1.msra.mxu0 0.0
    %4109 = vmatprep.subr.mxu0 0.0
    %4110 = vmatpush1.msra.mxu0 0.0
    %4111 = vmatprep.subr.mxu0 0.0
    %4112 = vmatpush1.msra.mxu0 0.0
    %4113 = vmatprep.subr.mxu0 0.0
    %4114 = vmatpush1.msra.mxu0 0.0
    %4115 = vmatprep.subr.mxu0 0.0
    %4116 = vmatpush1.msra.mxu0 0.0
    %4117 = vmatprep.subr.mxu0 0.0
    %4118 = vmatpush1.msra.mxu0 0.0
    %4119 = vmatprep.subr.mxu0 0.0
    %4120 = vmatpush1.msra.mxu0 0.0
    %4121 = vmatprep.mubr.f32.mxu0 0.0
    %4122 = vmatmul.mubr.f32.gmra.mrb[0].mxu0 %v4052
    %v4123 = vpop.f32.mrb[0].mxu0
    %v4124 = vadd.f32 0.0, %v4123
    %v4125 = vpop.f32.mrb[0].mxu0
    %4126 = vmatprep.mubr.f32.mxu0 0.0
    %4127 = vmatmul.mubr.f32.gmra.mrb[0].mxu0 %v4055
    %v4128 = vpop.f32.mrb[0].mxu0
    %v4129 = vadd.f32 0.0, %v4128
    %v4130 = vpop.f32.mrb[0].mxu0
    %4131 = vdwg.mxu0
    %v4133 = vsel %vm382, %v4124, 0
    %v4136 = vsel %vm382, %v4129, 0
    %4138 = vmatprep.subr.mxu0 0.0
    %4139 = vmatpush1.msra.mxu0 %v126
    %4140 = vmatprep.subr.mxu0 0.0
    %4141 = vmatpush1.msra.mxu0 0.0
    %4142 = vmatprep.subr.mxu0 0.0
    %4143 = vmatpush1.msra.mxu0 0.0
    %4144 = vmatprep.subr.mxu0 0.0
    %4145 = vmatpush1.msra.mxu0 0.0
    %4146 = vmatprep.subr.mxu0 0.0
    %4147 = vmatpush1.msra.mxu0 0.0
    %4148 = vmatprep.subr.mxu0 0.0
    %4149 = vmatpush1.msra.mxu0 0.0
    %4150 = vmatprep.subr.mxu0 0.0
    %4151 = vmatpush1.msra.mxu0 0.0
    %4152 = vmatprep.subr.mxu0 0.0
    %4153 = vmatpush1.msra.mxu0 0.0
    %4154 = vmatprep.subr.mxu0 0.0
    %4155 = vmatpush1.msra.mxu0 0.0
    %4156 = vmatprep.subr.mxu0 0.0
    %4157 = vmatpush1.msra.mxu0 0.0
    %4158 = vmatprep.subr.mxu0 0.0
    %4159 = vmatpush1.msra.mxu0 0.0
    %4160 = vmatprep.subr.mxu0 0.0
    %4161 = vmatpush1.msra.mxu0 0.0
    %4162 = vmatprep.subr.mxu0 0.0
    %4163 = vmatpush1.msra.mxu0 0.0
    %4164 = vmatprep.subr.mxu0 0.0
    %4165 = vmatpush1.msra.mxu0 0.0
    %4166 = vmatprep.subr.mxu0 0.0
    %4167 = vmatpush1.msra.mxu0 0.0
    %4168 = vmatprep.subr.mxu0 0.0
    %4169 = vmatpush1.msra.mxu0 0.0
    %4170 = vmatprep.subr.mxu0 0.0
    %4171 = vmatpush1.msra.mxu0 0.0
    %4172 = vmatprep.subr.mxu0 0.0
    %4173 = vmatpush1.msra.mxu0 0.0
    %4174 = vmatprep.subr.mxu0 0.0
    %4175 = vmatpush1.msra.mxu0 0.0
    %4176 = vmatprep.subr.mxu0 0.0
    %4177 = vmatpush1.msra.mxu0 0.0
    %4178 = vmatprep.subr.mxu0 0.0
    %4179 = vmatpush1.msra.mxu0 0.0
    %4180 = vmatprep.subr.mxu0 0.0
    %4181 = vmatpush1.msra.mxu0 0.0
    %4182 = vmatprep.subr.mxu0 0.0
    %4183 = vmatpush1.msra.mxu0 0.0
    %4184 = vmatprep.subr.mxu0 0.0
    %4185 = vmatpush1.msra.mxu0 0.0
    %4186 = vmatprep.subr.mxu0 0.0
    %4187 = vmatpush1.msra.mxu0 0.0
    %4188 = vmatprep.subr.mxu0 0.0
    %4189 = vmatpush1.msra.mxu0 0.0
    %4190 = vmatprep.subr.mxu0 0.0
    %4191 = vmatpush1.msra.mxu0 0.0
    %4192 = vmatprep.subr.mxu0 0.0
    %4193 = vmatpush1.msra.mxu0 0.0
    %4194 = vmatprep.subr.mxu0 0.0
    %4195 = vmatpush1.msra.mxu0 0.0
    %4196 = vmatprep.subr.mxu0 0.0
    %4197 = vmatpush1.msra.mxu0 0.0
    %4198 = vmatprep.subr.mxu0 0.0
    %4199 = vmatpush1.msra.mxu0 0.0
    %4200 = vmatprep.subr.mxu0 0.0
    %4201 = vmatpush1.msra.mxu0 0.0
    %4202 = vmatprep.mubr.f32.mxu0 0.0
    %4203 = vmatmul.mubr.f32.gmra.mrb[0].mxu0 %v4133
    %v4204 = vpop.f32.mrb[0].mxu0
    %v4205 = vadd.f32 0.0, %v4204
    %v4206 = vpop.f32.mrb[0].mxu0
    %4207 = vmatprep.mubr.f32.mxu0 0.0
    %4208 = vmatmul.mubr.f32.gmra.mrb[0].mxu0 %v4136
    %v4209 = vpop.f32.mrb[0].mxu0
    %v4210 = vadd.f32 0.0, %v4209
    %v4211 = vpop.f32.mrb[0].mxu0
    %4212 = vdwg.mxu0
    %v4213 = vadd.f32 %v3930, %v4205
    %v4214 = vadd.f32 %v3931, %v4210
    %v4215 = vadd.f32 %v2976, %v4213
    %v4216 = vadd.f32 %v2977, %v4214
    %v4217 = vadd.f32 %v4215, %v1508
    %v4218 = vadd.f32 %v4216, %v1508
    %v4219 = vsel %vm170, %v4217, 0.0
    %4220 = vadd.xlane.f32.xlu0 %v4219
    %v4221 = vpop.xlane.xlu0 %4220
    %v4222 = vsel %vm170, %v4218, 0.0
    %4223 = vadd.xlane.f32.xlu0 %v4222
    %v4224 = vpop.xlane.xlu0 %4223
    %v4225 = vmul.f32 %v4221, %v258
    %v4226 = vmul.f32 %v4224, %v258
    %v4227 = vsub.f32 %v4217, %v4225
    %v4228 = vsub.f32 %v4218, %v4226
    %v4229 = vmul.f32 %v4227, %v4227
    %v4230 = vmul.f32 %v4228, %v4228
    %v4231 = vsel %vm170, %v4229, 0.0
    %4232 = vadd.xlane.f32.xlu0 %v4231
    %v4233 = vpop.xlane.xlu0 %4232
    %v4234 = vsel %vm170, %v4230, 0.0
    %4235 = vadd.xlane.f32.xlu0 %v4234
    %v4236 = vpop.xlane.xlu0 %4235
    %v4237 = vmul.f32 %v4233, %v258
    %v4238 = vmul.f32 %v4236, %v258
    %v4239 = vadd.f32 %v4237, 1e-05
    %v4240 = vadd.f32 %v4238, 1e-05
    %v4241 = vrsqrt.pop %v4239
    %v4242 = vrsqrt.pop %v4240
    %v4243 = vmul.f32 %v4227, %v4241
    %v4244 = vmul.f32 %v4228, %v4242
    %v4245 = vmul.f32 %v4243, %v1541
    %v4246 = vmul.f32 %v4244, %v1541
    %v4247 = vadd.f32 %v4245, %v1547
    %v4248 = vadd.f32 %v4246, %v1547
    %v4250 = vsel %vm170, %v4247, 0
    %v4253 = vsel %vm170, %v4248, 0
    %4255 = vmatprep.subr.mxu0 0.0
    %4256 = vmatpush1.msra.mxu0 %v119
    %4257 = vmatprep.subr.mxu0 0.0
    %4258 = vmatpush1.msra.mxu0 %v120
    %4259 = vmatprep.subr.mxu0 0.0
    %4260 = vmatpush1.msra.mxu0 %v121
    %4261 = vmatprep.subr.mxu0 0.0
    %4262 = vmatpush1.msra.mxu0 %v122
    %4263 = vmatprep.subr.mxu0 0.0
    %4264 = vmatpush1.msra.mxu0 0.0
    %4265 = vmatprep.subr.mxu0 0.0
    %4266 = vmatpush1.msra.mxu0 0.0
    %4267 = vmatprep.subr.mxu0 0.0
    %4268 = vmatpush1.msra.mxu0 0.0
    %4269 = vmatprep.subr.mxu0 0.0
    %4270 = vmatpush1.msra.mxu0 0.0
    %4271 = vmatprep.subr.mxu0 0.0
    %4272 = vmatpush1.msra.mxu0 0.0
    %4273 = vmatprep.subr.mxu0 0.0
    %4274 = vmatpush1.msra.mxu0 0.0
    %4275 = vmatprep.subr.mxu0 0.0
    %4276 = vmatpush1.msra.mxu0 0.0
    %4277 = vmatprep.subr.mxu0 0.0
    %4278 = vmatpush1.msra.mxu0 0.0
    %4279 = vmatprep.subr.mxu0 0.0
    %4280 = vmatpush1.msra.mxu0 0.0
    %4281 = vmatprep.subr.mxu0 0.0
    %4282 = vmatpush1.msra.mxu0 0.0
    %4283 = vmatprep.subr.mxu0 0.0
    %4284 = vmatpush1.msra.mxu0 0.0
    %4285 = vmatprep.subr.mxu0 0.0
    %4286 = vmatpush1.msra.mxu0 0.0
    %4287 = vmatprep.subr.mxu0 0.0
    %4288 = vmatpush1.msra.mxu0 0.0
    %4289 = vmatprep.subr.mxu0 0.0
    %4290 = vmatpush1.msra.mxu0 0.0
    %4291 = vmatprep.subr.mxu0 0.0
    %4292 = vmatpush1.msra.mxu0 0.0
    %4293 = vmatprep.subr.mxu0 0.0
    %4294 = vmatpush1.msra.mxu0 0.0
    %4295 = vmatprep.subr.mxu0 0.0
    %4296 = vmatpush1.msra.mxu0 0.0
    %4297 = vmatprep.subr.mxu0 0.0
    %4298 = vmatpush1.msra.mxu0 0.0
    %4299 = vmatprep.subr.mxu0 0.0
    %4300 = vmatpush1.msra.mxu0 0.0
    %4301 = vmatprep.subr.mxu0 0.0
    %4302 = vmatpush1.msra.mxu0 0.0
    %4303 = vmatprep.subr.mxu0 0.0
    %4304 = vmatpush1.msra.mxu0 0.0
    %4305 = vmatprep.subr.mxu0 0.0
    %4306 = vmatpush1.msra.mxu0 0.0
    %4307 = vmatprep.subr.mxu0 0.0
    %4308 = vmatpush1.msra.mxu0 0.0
    %4309 = vmatprep.subr.mxu0 0.0
    %4310 = vmatpush1.msra.mxu0 0.0
    %4311 = vmatprep.subr.mxu0 0.0
    %4312 = vmatpush1.msra.mxu0 0.0
    %4313 = vmatprep.subr.mxu0 0.0
    %4314 = vmatpush1.msra.mxu0 0.0
    %4315 = vmatprep.subr.mxu0 0.0
    %4316 = vmatpush1.msra.mxu0 0.0
    %4317 = vmatprep.subr.mxu0 0.0
    %4318 = vmatpush1.msra.mxu0 0.0
    %4319 = vmatprep.mubr.f32.mxu0 0.0
    %4320 = vmatmul.mubr.f32.gmra.mrb[0].mxu0 %v4250
    %v4321 = vpop.f32.mrb[0].mxu0
    %v4322 = vadd.f32 %v149, %v4321
    %v4323 = vpop.f32.mrb[0].mxu0
    %4324 = vmatprep.mubr.f32.mxu0 0.0
    %4325 = vmatmul.mubr.f32.gmra.mrb[0].mxu0 %v4253
    %v4326 = vpop.f32.mrb[0].mxu0
    %v4327 = vadd.f32 %v149, %v4326
    %v4328 = vpop.f32.mrb[0].mxu0
    %4329 = vdwg.mxu0
    %v4331 = vsel %vm382, %v4322, 0
    %v4334 = vsel %vm382, %v4327, 0
    %4336 = vmatprep.subr.mxu0 0.0
    %4337 = vmatpush1.xpose.msra.mxu0 %v1638
    %4338 = vmatprep.subr.mxu0 0.0
    %4339 = vmatpush1.xpose.msra.mxu0 %v1641
    %4340 = vmatprep.subr.mxu0 0.0
    %4341 = vmatpush1.xpose.msra.mxu0 0.0
    %4342 = vmatprep.subr.mxu0 0.0
    %4343 = vmatpush1.xpose.msra.mxu0 0.0
    %4344 = vmatprep.subr.mxu0 0.0
    %4345 = vmatpush1.xpose.msra.mxu0 0.0
    %4346 = vmatprep.subr.mxu0 0.0
    %4347 = vmatpush1.xpose.msra.mxu0 0.0
    %4348 = vmatprep.subr.mxu0 0.0
    %4349 = vmatpush1.xpose.msra.mxu0 0.0
    %4350 = vmatprep.subr.mxu0 0.0
    %4351 = vmatpush1.xpose.msra.mxu0 0.0
    %4352 = vmatprep.subr.mxu0 0.0
    %4353 = vmatpush1.xpose.msra.mxu0 0.0
    %4354 = vmatprep.subr.mxu0 0.0
    %4355 = vmatpush1.xpose.msra.mxu0 0.0
    %4356 = vmatprep.subr.mxu0 0.0
    %4357 = vmatpush1.xpose.msra.mxu0 0.0
    %4358 = vmatprep.subr.mxu0 0.0
    %4359 = vmatpush1.xpose.msra.mxu0 0.0
    %4360 = vmatprep.subr.mxu0 0.0
    %4361 = vmatpush1.xpose.msra.mxu0 0.0
    %4362 = vmatprep.subr.mxu0 0.0
    %4363 = vmatpush1.xpose.msra.mxu0 0.0
    %4364 = vmatprep.subr.mxu0 0.0
    %4365 = vmatpush1.xpose.msra.mxu0 0.0
    %4366 = vmatprep.subr.mxu0 0.0
    %4367 = vmatpush1.xpose.msra.mxu0 0.0
    %4368 = vmatprep.subr.mxu0 0.0
    %4369 = vmatpush1.xpose.msra.mxu0 0.0
    %4370 = vmatprep.subr.mxu0 0.0
    %4371 = vmatpush1.xpose.msra.mxu0 0.0
    %4372 = vmatprep.subr.mxu0 0.0
    %4373 = vmatpush1.xpose.msra.mxu0 0.0
    %4374 = vmatprep.subr.mxu0 0.0
    %4375 = vmatpush1.xpose.msra.mxu0 0.0
    %4376 = vmatprep.subr.mxu0 0.0
    %4377 = vmatpush1.xpose.msra.mxu0 0.0
    %4378 = vmatprep.subr.mxu0 0.0
    %4379 = vmatpush1.xpose.msra.mxu0 0.0
    %4380 = vmatprep.subr.mxu0 0.0
    %4381 = vmatpush1.xpose.msra.mxu0 0.0
    %4382 = vmatprep.subr.mxu0 0.0
    %4383 = vmatpush1.xpose.msra.mxu0 0.0
    %4384 = vmatprep.subr.mxu0 0.0
    %4385 = vmatpush1.xpose.msra.mxu0 0.0
    %4386 = vmatprep.subr.mxu0 0.0
    %4387 = vmatpush1.xpose.msra.mxu0 0.0
    %4388 = vmatprep.subr.mxu0 0.0
    %4389 = vmatpush1.xpose.msra.mxu0 0.0
    %4390 = vmatprep.subr.mxu0 0.0
    %4391 = vmatpush1.xpose.msra.mxu0 0.0
    %4392 = vmatprep.subr.mxu0 0.0
    %4393 = vmatpush1.xpose.msra.mxu0 0.0
    %4394 = vmatprep.subr.mxu0 0.0
    %4395 = vmatpush1.xpose.msra.mxu0 0.0
    %4396 = vmatprep.subr.mxu0 0.0
    %4397 = vmatpush1.xpose.msra.mxu0 0.0
    %4398 = vmatprep.subr.mxu0 0.0
    %4399 = vmatpush1.xpose.msra.mxu0 0.0
    %4400 = vmatprep.mubr.f32.mxu0 0.0
    %4401 = vmatmul.mubr.f32.gmra.mrb[0].mxu0 %v4331
    %v4402 = vpop.f32.mrb[0].mxu0
    %v4403 = vadd.f32 %v113, %v4402
    %v4404 = vpop.f32.mrb[0].mxu0
    %4405 = vmatprep.mubr.f32.mxu0 0.0
    %4406 = vmatmul.mubr.f32.gmra.mrb[0].mxu0 %v4334
    %v4407 = vpop.f32.mrb[0].mxu0
    %v4408 = vadd.f32 %v114, %v4407
    %v4409 = vpop.f32.mrb[0].mxu0
    %4410 = vdwg.mxu0
    %v4411 = vsel %vm466, %v4403, -inf
    %4412 = vmax.xlane.f32.xlu0 %v4411
    %v4413 = vpop.xlane.xlu0 %4412
    %v4414 = vsel %vm466, %v4408, -inf
    %4415 = vmax.xlane.f32.xlu0 %v4414
    %v4416 = vpop.xlane.xlu0 %4415
    %v4417 = vsub.f32 %v4403, %v4413
    %v4418 = vsub.f32 %v4408, %v4416
    %v4419 = vmul.f32 %v4417, 1.442695
    %v4420 = vpow.pop %v4419
    %v4421 = vmul.f32 %v4418, 1.442695
    %v4422 = vpow.pop %v4421
    %v4423 = vsel %vm466, %v4420, 0.0
    %4424 = vadd.xlane.f32.xlu0 %v4423
    %v4425 = vpop.xlane.xlu0 %4424
    %v4426 = vsel %vm466, %v4422, 0.0
    %4427 = vadd.xlane.f32.xlu0 %v4426
    %v4428 = vpop.xlane.xlu0 %4427
    %v4429 = vrcp.pop %v4425
    %v4430 = vrcp.pop %v4428
    %v4431 = vmul.f32 %v4420, %v4429
    %v4432 = vmul.f32 %v4422, %v4430
    %v4434 = vsel %vm466, %v4431, 0
    %v4437 = vsel %vm466, %v4432, 0
    %4439 = vmatprep.subr.mxu0 0.0
    %4440 = vmatpush1.msra.mxu0 %v1741
    %4441 = vmatprep.subr.mxu0 0.0
    %4442 = vmatpush1.msra.mxu0 %v1743
    %4443 = vmatprep.subr.mxu0 0.0
    %4444 = vmatpush1.msra.mxu0 0.0
    %4445 = vmatprep.subr.mxu0 0.0
    %4446 = vmatpush1.msra.mxu0 0.0
    %4447 = vmatprep.subr.mxu0 0.0
    %4448 = vmatpush1.msra.mxu0 0.0
    %4449 = vmatprep.subr.mxu0 0.0
    %4450 = vmatpush1.msra.mxu0 0.0
    %4451 = vmatprep.subr.mxu0 0.0
    %4452 = vmatpush1.msra.mxu0 0.0
    %4453 = vmatprep.subr.mxu0 0.0
    %4454 = vmatpush1.msra.mxu0 0.0
    %4455 = vmatprep.subr.mxu0 0.0
    %4456 = vmatpush1.msra.mxu0 0.0
    %4457 = vmatprep.subr.mxu0 0.0
    %4458 = vmatpush1.msra.mxu0 0.0
    %4459 = vmatprep.subr.mxu0 0.0
    %4460 = vmatpush1.msra.mxu0 0.0
    %4461 = vmatprep.subr.mxu0 0.0
    %4462 = vmatpush1.msra.mxu0 0.0
    %4463 = vmatprep.subr.mxu0 0.0
    %4464 = vmatpush1.msra.mxu0 0.0
    %4465 = vmatprep.subr.mxu0 0.0
    %4466 = vmatpush1.msra.mxu0 0.0
    %4467 = vmatprep.subr.mxu0 0.0
    %4468 = vmatpush1.msra.mxu0 0.0
    %4469 = vmatprep.subr.mxu0 0.0
    %4470 = vmatpush1.msra.mxu0 0.0
    %4471 = vmatprep.subr.mxu0 0.0
    %4472 = vmatpush1.msra.mxu0 0.0
    %4473 = vmatprep.subr.mxu0 0.0
    %4474 = vmatpush1.msra.mxu0 0.0
    %4475 = vmatprep.subr.mxu0 0.0
    %4476 = vmatpush1.msra.mxu0 0.0
    %4477 = vmatprep.subr.mxu0 0.0
    %4478 = vmatpush1.msra.mxu0 0.0
    %4479 = vmatprep.subr.mxu0 0.0
    %4480 = vmatpush1.msra.mxu0 0.0
    %4481 = vmatprep.subr.mxu0 0.0
    %4482 = vmatpush1.msra.mxu0 0.0
    %4483 = vmatprep.subr.mxu0 0.0
    %4484 = vmatpush1.msra.mxu0 0.0
    %4485 = vmatprep.subr.mxu0 0.0
    %4486 = vmatpush1.msra.mxu0 0.0
    %4487 = vmatprep.subr.mxu0 0.0
    %4488 = vmatpush1.msra.mxu0 0.0
    %4489 = vmatprep.subr.mxu0 0.0
    %4490 = vmatpush1.msra.mxu0 0.0
    %4491 = vmatprep.subr.mxu0 0.0
    %4492 = vmatpush1.msra.mxu0 0.0
    %4493 = vmatprep.subr.mxu0 0.0
    %4494 = vmatpush1.msra.mxu0 0.0
    %4495 = vmatprep.subr.mxu0 0.0
    %4496 = vmatpush1.msra.mxu0 0.0
    %4497 = vmatprep.subr.mxu0 0.0
    %4498 = vmatpush1.msra.mxu0 0.0
    %4499 = vmatprep.subr.mxu0 0.0
    %4500 = vmatpush1.msra.mxu0 0.0
    %4501 = vmatprep.subr.mxu0 0.0
    %4502 = vmatpush1.msra.mxu0 0.0
    %4503 = vmatprep.mubr.f32.mxu0 0.0
    %4504 = vmatmul.mubr.f32.gmra.mrb[0].mxu0 %v4434
    %v4505 = vpop.f32.mrb[0].mxu0
    %v4506 = vadd.f32 0.0, %v4505
    %v4507 = vpop.f32.mrb[0].mxu0
    %4508 = vmatprep.mubr.f32.mxu0 0.0
    %4509 = vmatmul.mubr.f32.gmra.mrb[0].mxu0 %v4437
    %v4510 = vpop.f32.mrb[0].mxu0
    %v4511 = vadd.f32 0.0, %v4510
    %v4512 = vpop.f32.mrb[0].mxu0
    %4513 = vdwg.mxu0
    %4514 = vrot.lane.b32.xlu0 %v4322, 120
    %v4515 = vpop.permute.xlu0 %4514
    %4516 = vrot.lane.b32.xlu0 %v4327, 120
    %v4517 = vpop.permute.xlu0 %4516
    %v4518 = vsel %vm382, %v4515, 0
    %v4520 = vsel %vm382, %v4517, 0
    %4522 = vmatprep.subr.mxu0 0.0
    %4523 = vmatpush1.xpose.msra.mxu0 %v1839
    %4524 = vmatprep.subr.mxu0 0.0
    %4525 = vmatpush1.xpose.msra.mxu0 %v1841
    %4526 = vmatprep.subr.mxu0 0.0
    %4527 = vmatpush1.xpose.msra.mxu0 0.0
    %4528 = vmatprep.subr.mxu0 0.0
    %4529 = vmatpush1.xpose.msra.mxu0 0.0
    %4530 = vmatprep.subr.mxu0 0.0
    %4531 = vmatpush1.xpose.msra.mxu0 0.0
    %4532 = vmatprep.subr.mxu0 0.0
    %4533 = vmatpush1.xpose.msra.mxu0 0.0
    %4534 = vmatprep.subr.mxu0 0.0
    %4535 = vmatpush1.xpose.msra.mxu0 0.0
    %4536 = vmatprep.subr.mxu0 0.0
    %4537 = vmatpush1.xpose.msra.mxu0 0.0
    %4538 = vmatprep.subr.mxu0 0.0
    %4539 = vmatpush1.xpose.msra.mxu0 0.0
    %4540 = vmatprep.subr.mxu0 0.0
    %4541 = vmatpush1.xpose.msra.mxu0 0.0
    %4542 = vmatprep.subr.mxu0 0.0
    %4543 = vmatpush1.xpose.msra.mxu0 0.0
    %4544 = vmatprep.subr.mxu0 0.0
    %4545 = vmatpush1.xpose.msra.mxu0 0.0
    %4546 = vmatprep.subr.mxu0 0.0
    %4547 = vmatpush1.xpose.msra.mxu0 0.0
    %4548 = vmatprep.subr.mxu0 0.0
    %4549 = vmatpush1.xpose.msra.mxu0 0.0
    %4550 = vmatprep.subr.mxu0 0.0
    %4551 = vmatpush1.xpose.msra.mxu0 0.0
    %4552 = vmatprep.subr.mxu0 0.0
    %4553 = vmatpush1.xpose.msra.mxu0 0.0
    %4554 = vmatprep.subr.mxu0 0.0
    %4555 = vmatpush1.xpose.msra.mxu0 0.0
    %4556 = vmatprep.subr.mxu0 0.0
    %4557 = vmatpush1.xpose.msra.mxu0 0.0
    %4558 = vmatprep.subr.mxu0 0.0
    %4559 = vmatpush1.xpose.msra.mxu0 0.0
    %4560 = vmatprep.subr.mxu0 0.0
    %4561 = vmatpush1.xpose.msra.mxu0 0.0
    %4562 = vmatprep.subr.mxu0 0.0
    %4563 = vmatpush1.xpose.msra.mxu0 0.0
    %4564 = vmatprep.subr.mxu0 0.0
    %4565 = vmatpush1.xpose.msra.mxu0 0.0
    %4566 = vmatprep.subr.mxu0 0.0
    %4567 = vmatpush1.xpose.msra.mxu0 0.0
    %4568 = vmatprep.subr.mxu0 0.0
    %4569 = vmatpush1.xpose.msra.mxu0 0.0
    %4570 = vmatprep.subr.mxu0 0.0
    %4571 = vmatpush1.xpose.msra.mxu0 0.0
    %4572 = vmatprep.subr.mxu0 0.0
    %4573 = vmatpush1.xpose.msra.mxu0 0.0
    %4574 = vmatprep.subr.mxu0 0.0
    %4575 = vmatpush1.xpose.msra.mxu0 0.0
    %4576 = vmatprep.subr.mxu0 0.0
    %4577 = vmatpush1.xpose.msra.mxu0 0.0
    %4578 = vmatprep.subr.mxu0 0.0
    %4579 = vmatpush1.xpose.msra.mxu0 0.0
    %4580 = vmatprep.subr.mxu0 0.0
    %4581 = vmatpush1.xpose.msra.mxu0 0.0
    %4582 = vmatprep.subr.mxu0 0.0
    %4583 = vmatpush1.xpose.msra.mxu0 0.0
    %4584 = vmatprep.subr.mxu0 0.0
    %4585 = vmatpush1.xpose.msra.mxu0 0.0
    %4586 = vmatprep.mubr.f32.mxu0 0.0
    %4587 = vmatmul.mubr.f32.gmra.mrb[0].mxu0 %v4518
    %v4588 = vpop.f32.mrb[0].mxu0
    %v4589 = vadd.f32 %v113, %v4588
    %v4590 = vpop.f32.mrb[0].mxu0
    %4591 = vmatprep.mubr.f32.mxu0 0.0
    %4592 = vmatmul.mubr.f32.gmra.mrb[0].mxu0 %v4520
    %v4593 = vpop.f32.mrb[0].mxu0
    %v4594 = vadd.f32 %v114, %v4593
    %v4595 = vpop.f32.mrb[0].mxu0
    %4596 = vdwg.mxu0
    %v4597 = vsel %vm466, %v4589, -inf
    %4598 = vmax.xlane.f32.xlu0 %v4597
    %v4599 = vpop.xlane.xlu0 %4598
    %v4600 = vsel %vm466, %v4594, -inf
    %4601 = vmax.xlane.f32.xlu0 %v4600
    %v4602 = vpop.xlane.xlu0 %4601
    %v4603 = vsub.f32 %v4589, %v4599
    %v4604 = vsub.f32 %v4594, %v4602
    %v4605 = vmul.f32 %v4603, 1.442695
    %v4606 = vpow.pop %v4605
    %v4607 = vmul.f32 %v4604, 1.442695
    %v4608 = vpow.pop %v4607
    %v4609 = vsel %vm466, %v4606, 0.0
    %4610 = vadd.xlane.f32.xlu0 %v4609
    %v4611 = vpop.xlane.xlu0 %4610
    %v4612 = vsel %vm466, %v4608, 0.0
    %4613 = vadd.xlane.f32.xlu0 %v4612
    %v4614 = vpop.xlane.xlu0 %4613
    %v4615 = vrcp.pop %v4611
    %v4616 = vrcp.pop %v4614
    %v4617 = vmul.f32 %v4606, %v4615
    %v4618 = vmul.f32 %v4608, %v4616
    %v4620 = vsel %vm466, %v4617, 0
    %v4623 = vsel %vm466, %v4618, 0
    %4625 = vmatprep.subr.mxu0 0.0
    %4626 = vmatpush1.msra.mxu0 %v1941
    %4627 = vmatprep.subr.mxu0 0.0
    %4628 = vmatpush1.msra.mxu0 %v1943
    %4629 = vmatprep.subr.mxu0 0.0
    %4630 = vmatpush1.msra.mxu0 0.0
    %4631 = vmatprep.subr.mxu0 0.0
    %4632 = vmatpush1.msra.mxu0 0.0
    %4633 = vmatprep.subr.mxu0 0.0
    %4634 = vmatpush1.msra.mxu0 0.0
    %4635 = vmatprep.subr.mxu0 0.0
    %4636 = vmatpush1.msra.mxu0 0.0
    %4637 = vmatprep.subr.mxu0 0.0
    %4638 = vmatpush1.msra.mxu0 0.0
    %4639 = vmatprep.subr.mxu0 0.0
    %4640 = vmatpush1.msra.mxu0 0.0
    %4641 = vmatprep.subr.mxu0 0.0
    %4642 = vmatpush1.msra.mxu0 0.0
    %4643 = vmatprep.subr.mxu0 0.0
    %4644 = vmatpush1.msra.mxu0 0.0
    %4645 = vmatprep.subr.mxu0 0.0
    %4646 = vmatpush1.msra.mxu0 0.0
    %4647 = vmatprep.subr.mxu0 0.0
    %4648 = vmatpush1.msra.mxu0 0.0
    %4649 = vmatprep.subr.mxu0 0.0
    %4650 = vmatpush1.msra.mxu0 0.0
    %4651 = vmatprep.subr.mxu0 0.0
    %4652 = vmatpush1.msra.mxu0 0.0
    %4653 = vmatprep.subr.mxu0 0.0
    %4654 = vmatpush1.msra.mxu0 0.0
    %4655 = vmatprep.subr.mxu0 0.0
    %4656 = vmatpush1.msra.mxu0 0.0
    %4657 = vmatprep.subr.mxu0 0.0
    %4658 = vmatpush1.msra.mxu0 0.0
    %4659 = vmatprep.subr.mxu0 0.0
    %4660 = vmatpush1.msra.mxu0 0.0
    %4661 = vmatprep.subr.mxu0 0.0
    %4662 = vmatpush1.msra.mxu0 0.0
    %4663 = vmatprep.subr.mxu0 0.0
    %4664 = vmatpush1.msra.mxu0 0.0
    %4665 = vmatprep.subr.mxu0 0.0
    %4666 = vmatpush1.msra.mxu0 0.0
    %4667 = vmatprep.subr.mxu0 0.0
    %4668 = vmatpush1.msra.mxu0 0.0
    %4669 = vmatprep.subr.mxu0 0.0
    %4670 = vmatpush1.msra.mxu0 0.0
    %4671 = vmatprep.subr.mxu0 0.0
    %4672 = vmatpush1.msra.mxu0 0.0
    %4673 = vmatprep.subr.mxu0 0.0
    %4674 = vmatpush1.msra.mxu0 0.0
    %4675 = vmatprep.subr.mxu0 0.0
    %4676 = vmatpush1.msra.mxu0 0.0
    %4677 = vmatprep.subr.mxu0 0.0
    %4678 = vmatpush1.msra.mxu0 0.0
    %4679 = vmatprep.subr.mxu0 0.0
    %4680 = vmatpush1.msra.mxu0 0.0
    %4681 = vmatprep.subr.mxu0 0.0
    %4682 = vmatpush1.msra.mxu0 0.0
    %4683 = vmatprep.subr.mxu0 0.0
    %4684 = vmatpush1.msra.mxu0 0.0
    %4685 = vmatprep.subr.mxu0 0.0
    %4686 = vmatpush1.msra.mxu0 0.0
    %4687 = vmatprep.subr.mxu0 0.0
    %4688 = vmatpush1.msra.mxu0 0.0
    %4689 = vmatprep.mubr.f32.mxu0 0.0
    %4690 = vmatmul.mubr.f32.gmra.mrb[0].mxu0 %v4620
    %v4691 = vpop.f32.mrb[0].mxu0
    %v4692 = vadd.f32 0.0, %v4691
    %v4693 = vpop.f32.mrb[0].mxu0
    %4694 = vmatprep.mubr.f32.mxu0 0.0
    %4695 = vmatmul.mubr.f32.gmra.mrb[0].mxu0 %v4623
    %v4696 = vpop.f32.mrb[0].mxu0
    %v4697 = vadd.f32 0.0, %v4696
    %v4698 = vpop.f32.mrb[0].mxu0
    %4699 = vdwg.mxu0
    %v4701 = vsel %vm382, %v4692, 0
    %v4704 = vsel %vm382, %v4697, 0
    %4706 = vmatprep.subr.mxu0 0.0
    %4707 = vmatpush1.msra.mxu0 %v128
    %4708 = vmatprep.subr.mxu0 0.0
    %4709 = vmatpush1.msra.mxu0 0.0
    %4710 = vmatprep.subr.mxu0 0.0
    %4711 = vmatpush1.msra.mxu0 0.0
    %4712 = vmatprep.subr.mxu0 0.0
    %4713 = vmatpush1.msra.mxu0 0.0
    %4714 = vmatprep.subr.mxu0 0.0
    %4715 = vmatpush1.msra.mxu0 0.0
    %4716 = vmatprep.subr.mxu0 0.0
    %4717 = vmatpush1.msra.mxu0 0.0
    %4718 = vmatprep.subr.mxu0 0.0
    %4719 = vmatpush1.msra.mxu0 0.0
    %4720 = vmatprep.subr.mxu0 0.0
    %4721 = vmatpush1.msra.mxu0 0.0
    %4722 = vmatprep.subr.mxu0 0.0
    %4723 = vmatpush1.msra.mxu0 0.0
    %4724 = vmatprep.subr.mxu0 0.0
    %4725 = vmatpush1.msra.mxu0 0.0
    %4726 = vmatprep.subr.mxu0 0.0
    %4727 = vmatpush1.msra.mxu0 0.0
    %4728 = vmatprep.subr.mxu0 0.0
    %4729 = vmatpush1.msra.mxu0 0.0
    %4730 = vmatprep.subr.mxu0 0.0
    %4731 = vmatpush1.msra.mxu0 0.0
    %4732 = vmatprep.subr.mxu0 0.0
    %4733 = vmatpush1.msra.mxu0 0.0
    %4734 = vmatprep.subr.mxu0 0.0
    %4735 = vmatpush1.msra.mxu0 0.0
    %4736 = vmatprep.subr.mxu0 0.0
    %4737 = vmatpush1.msra.mxu0 0.0
    %4738 = vmatprep.subr.mxu0 0.0
    %4739 = vmatpush1.msra.mxu0 0.0
    %4740 = vmatprep.subr.mxu0 0.0
    %4741 = vmatpush1.msra.mxu0 0.0
    %4742 = vmatprep.subr.mxu0 0.0
    %4743 = vmatpush1.msra.mxu0 0.0
    %4744 = vmatprep.subr.mxu0 0.0
    %4745 = vmatpush1.msra.mxu0 0.0
    %4746 = vmatprep.subr.mxu0 0.0
    %4747 = vmatpush1.msra.mxu0 0.0
    %4748 = vmatprep.subr.mxu0 0.0
    %4749 = vmatpush1.msra.mxu0 0.0
    %4750 = vmatprep.subr.mxu0 0.0
    %4751 = vmatpush1.msra.mxu0 0.0
    %4752 = vmatprep.subr.mxu0 0.0
    %4753 = vmatpush1.msra.mxu0 0.0
    %4754 = vmatprep.subr.mxu0 0.0
    %4755 = vmatpush1.msra.mxu0 0.0
    %4756 = vmatprep.subr.mxu0 0.0
    %4757 = vmatpush1.msra.mxu0 0.0
    %4758 = vmatprep.subr.mxu0 0.0
    %4759 = vmatpush1.msra.mxu0 0.0
    %4760 = vmatprep.subr.mxu0 0.0
    %4761 = vmatpush1.msra.mxu0 0.0
    %4762 = vmatprep.subr.mxu0 0.0
    %4763 = vmatpush1.msra.mxu0 0.0
    %4764 = vmatprep.subr.mxu0 0.0
    %4765 = vmatpush1.msra.mxu0 0.0
    %4766 = vmatprep.subr.mxu0 0.0
    %4767 = vmatpush1.msra.mxu0 0.0
    %4768 = vmatprep.subr.mxu0 0.0
    %4769 = vmatpush1.msra.mxu0 0.0
    %4770 = vmatprep.mubr.f32.mxu0 0.0
    %4771 = vmatmul.mubr.f32.gmra.mrb[0].mxu0 %v4701
    %v4772 = vpop.f32.mrb[0].mxu0
    %v4773 = vadd.f32 0.0, %v4772
    %v4774 = vpop.f32.mrb[0].mxu0
    %4775 = vmatprep.mubr.f32.mxu0 0.0
    %4776 = vmatmul.mubr.f32.gmra.mrb[0].mxu0 %v4704
    %v4777 = vpop.f32.mrb[0].mxu0
    %v4778 = vadd.f32 0.0, %v4777
    %v4779 = vpop.f32.mrb[0].mxu0
    %4780 = vdwg.mxu0
    %v4782 = vsel %vm382, %v4506, 0
    %v4785 = vsel %vm382, %v4511, 0
    %4787 = vmatprep.subr.mxu0 0.0
    %4788 = vmatpush1.msra.mxu0 %v127
    %4789 = vmatprep.subr.mxu0 0.0
    %4790 = vmatpush1.msra.mxu0 0.0
    %4791 = vmatprep.subr.mxu0 0.0
    %4792 = vmatpush1.msra.mxu0 0.0
    %4793 = vmatprep.subr.mxu0 0.0
    %4794 = vmatpush1.msra.mxu0 0.0
    %4795 = vmatprep.subr.mxu0 0.0
    %4796 = vmatpush1.msra.mxu0 0.0
    %4797 = vmatprep.subr.mxu0 0.0
    %4798 = vmatpush1.msra.mxu0 0.0
    %4799 = vmatprep.subr.mxu0 0.0
    %4800 = vmatpush1.msra.mxu0 0.0
    %4801 = vmatprep.subr.mxu0 0.0
    %4802 = vmatpush1.msra.mxu0 0.0
    %4803 = vmatprep.subr.mxu0 0.0
    %4804 = vmatpush1.msra.mxu0 0.0
    %4805 = vmatprep.subr.mxu0 0.0
    %4806 = vmatpush1.msra.mxu0 0.0
    %4807 = vmatprep.subr.mxu0 0.0
    %4808 = vmatpush1.msra.mxu0 0.0
    %4809 = vmatprep.subr.mxu0 0.0
    %4810 = vmatpush1.msra.mxu0 0.0
    %4811 = vmatprep.subr.mxu0 0.0
    %4812 = vmatpush1.msra.mxu0 0.0
    %4813 = vmatprep.subr.mxu0 0.0
    %4814 = vmatpush1.msra.mxu0 0.0
    %4815 = vmatprep.subr.mxu0 0.0
    %4816 = vmatpush1.msra.mxu0 0.0
    %4817 = vmatprep.subr.mxu0 0.0
    %4818 = vmatpush1.msra.mxu0 0.0
    %4819 = vmatprep.subr.mxu0 0.0
    %4820 = vmatpush1.msra.mxu0 0.0
    %4821 = vmatprep.subr.mxu0 0.0
    %4822 = vmatpush1.msra.mxu0 0.0
    %4823 = vmatprep.subr.mxu0 0.0
    %4824 = vmatpush1.msra.mxu0 0.0
    %4825 = vmatprep.subr.mxu0 0.0
    %4826 = vmatpush1.msra.mxu0 0.0
    %4827 = vmatprep.subr.mxu0 0.0
    %4828 = vmatpush1.msra.mxu0 0.0
    %4829 = vmatprep.subr.mxu0 0.0
    %4830 = vmatpush1.msra.mxu0 0.0
    %4831 = vmatprep.subr.mxu0 0.0
    %4832 = vmatpush1.msra.mxu0 0.0
    %4833 = vmatprep.subr.mxu0 0.0
    %4834 = vmatpush1.msra.mxu0 0.0
    %4835 = vmatprep.subr.mxu0 0.0
    %4836 = vmatpush1.msra.mxu0 0.0
    %4837 = vmatprep.subr.mxu0 0.0
    %4838 = vmatpush1.msra.mxu0 0.0
    %4839 = vmatprep.subr.mxu0 0.0
    %4840 = vmatpush1.msra.mxu0 0.0
    %4841 = vmatprep.subr.mxu0 0.0
    %4842 = vmatpush1.msra.mxu0 0.0
    %4843 = vmatprep.subr.mxu0 0.0
    %4844 = vmatpush1.msra.mxu0 0.0
    %4845 = vmatprep.subr.mxu0 0.0
    %4846 = vmatpush1.msra.mxu0 0.0
    %4847 = vmatprep.subr.mxu0 0.0
    %4848 = vmatpush1.msra.mxu0 0.0
    %4849 = vmatprep.subr.mxu0 0.0
    %4850 = vmatpush1.msra.mxu0 0.0
    %4851 = vmatprep.mubr.f32.mxu0 0.0
    %4852 = vmatmul.mubr.f32.gmra.mrb[0].mxu0 %v4782
    %v4853 = vpop.f32.mrb[0].mxu0
    %v4854 = vadd.f32 %v4773, %v4853
    %v4855 = vpop.f32.mrb[0].mxu0
    %4856 = vmatprep.mubr.f32.mxu0 0.0
    %4857 = vmatmul.mubr.f32.gmra.mrb[0].mxu0 %v4785
    %v4858 = vpop.f32.mrb[0].mxu0
    %v4859 = vadd.f32 %v4778, %v4858
    %v4860 = vpop.f32.mrb[0].mxu0
    %4861 = vdwg.mxu0
    %4862 = vrot.lane.b32.xlu0 %v4322, 112
    %v4863 = vpop.permute.xlu0 %4862
    %4864 = vrot.lane.b32.xlu0 %v4327, 112
    %v4865 = vpop.permute.xlu0 %4864
    %v4866 = vsel %vm382, %v4863, 0
    %v4868 = vsel %vm382, %v4865, 0
    %4870 = vmatprep.subr.mxu0 0.0
    %4871 = vmatpush1.xpose.msra.mxu0 %v2201
    %4872 = vmatprep.subr.mxu0 0.0
    %4873 = vmatpush1.xpose.msra.mxu0 %v2203
    %4874 = vmatprep.subr.mxu0 0.0
    %4875 = vmatpush1.xpose.msra.mxu0 0.0
    %4876 = vmatprep.subr.mxu0 0.0
    %4877 = vmatpush1.xpose.msra.mxu0 0.0
    %4878 = vmatprep.subr.mxu0 0.0
    %4879 = vmatpush1.xpose.msra.mxu0 0.0
    %4880 = vmatprep.subr.mxu0 0.0
    %4881 = vmatpush1.xpose.msra.mxu0 0.0
    %4882 = vmatprep.subr.mxu0 0.0
    %4883 = vmatpush1.xpose.msra.mxu0 0.0
    %4884 = vmatprep.subr.mxu0 0.0
    %4885 = vmatpush1.xpose.msra.mxu0 0.0
    %4886 = vmatprep.subr.mxu0 0.0
    %4887 = vmatpush1.xpose.msra.mxu0 0.0
    %4888 = vmatprep.subr.mxu0 0.0
    %4889 = vmatpush1.xpose.msra.mxu0 0.0
    %4890 = vmatprep.subr.mxu0 0.0
    %4891 = vmatpush1.xpose.msra.mxu0 0.0
    %4892 = vmatprep.subr.mxu0 0.0
    %4893 = vmatpush1.xpose.msra.mxu0 0.0
    %4894 = vmatprep.subr.mxu0 0.0
    %4895 = vmatpush1.xpose.msra.mxu0 0.0
    %4896 = vmatprep.subr.mxu0 0.0
    %4897 = vmatpush1.xpose.msra.mxu0 0.0
    %4898 = vmatprep.subr.mxu0 0.0
    %4899 = vmatpush1.xpose.msra.mxu0 0.0
    %4900 = vmatprep.subr.mxu0 0.0
    %4901 = vmatpush1.xpose.msra.mxu0 0.0
    %4902 = vmatprep.subr.mxu0 0.0
    %4903 = vmatpush1.xpose.msra.mxu0 0.0
    %4904 = vmatprep.subr.mxu0 0.0
    %4905 = vmatpush1.xpose.msra.mxu0 0.0
    %4906 = vmatprep.subr.mxu0 0.0
    %4907 = vmatpush1.xpose.msra.mxu0 0.0
    %4908 = vmatprep.subr.mxu0 0.0
    %4909 = vmatpush1.xpose.msra.mxu0 0.0
    %4910 = vmatprep.subr.mxu0 0.0
    %4911 = vmatpush1.xpose.msra.mxu0 0.0
    %4912 = vmatprep.subr.mxu0 0.0
    %4913 = vmatpush1.xpose.msra.mxu0 0.0
    %4914 = vmatprep.subr.mxu0 0.0
    %4915 = vmatpush1.xpose.msra.mxu0 0.0
    %4916 = vmatprep.subr.mxu0 0.0
    %4917 = vmatpush1.xpose.msra.mxu0 0.0
    %4918 = vmatprep.subr.mxu0 0.0
    %4919 = vmatpush1.xpose.msra.mxu0 0.0
    %4920 = vmatprep.subr.mxu0 0.0
    %4921 = vmatpush1.xpose.msra.mxu0 0.0
    %4922 = vmatprep.subr.mxu0 0.0
    %4923 = vmatpush1.xpose.msra.mxu0 0.0
    %4924 = vmatprep.subr.mxu0 0.0
    %4925 = vmatpush1.xpose.msra.mxu0 0.0
    %4926 = vmatprep.subr.mxu0 0.0
    %4927 = vmatpush1.xpose.msra.mxu0 0.0
    %4928 = vmatprep.subr.mxu0 0.0
    %4929 = vmatpush1.xpose.msra.mxu0 0.0
    %4930 = vmatprep.subr.mxu0 0.0
    %4931 = vmatpush1.xpose.msra.mxu0 0.0
    %4932 = vmatprep.subr.mxu0 0.0
    %4933 = vmatpush1.xpose.msra.mxu0 0.0
    %4934 = vmatprep.mubr.f32.mxu0 0.0
    %4935 = vmatmul.mubr.f32.gmra.mrb[0].mxu0 %v4866
    %v4936 = vpop.f32.mrb[0].mxu0
    %v4937 = vadd.f32 %v113, %v4936
    %v4938 = vpop.f32.mrb[0].mxu0
    %4939 = vmatprep.mubr.f32.mxu0 0.0
    %4940 = vmatmul.mubr.f32.gmra.mrb[0].mxu0 %v4868
    %v4941 = vpop.f32.mrb[0].mxu0
    %v4942 = vadd.f32 %v114, %v4941
    %v4943 = vpop.f32.mrb[0].mxu0
    %4944 = vdwg.mxu0
    %v4945 = vsel %vm466, %v4937, -inf
    %4946 = vmax.xlane.f32.xlu0 %v4945
    %v4947 = vpop.xlane.xlu0 %4946
    %v4948 = vsel %vm466, %v4942, -inf
    %4949 = vmax.xlane.f32.xlu0 %v4948
    %v4950 = vpop.xlane.xlu0 %4949
    %v4951 = vsub.f32 %v4937, %v4947
    %v4952 = vsub.f32 %v4942, %v4950
    %v4953 = vmul.f32 %v4951, 1.442695
    %v4954 = vpow.pop %v4953
    %v4955 = vmul.f32 %v4952, 1.442695
    %v4956 = vpow.pop %v4955
    %v4957 = vsel %vm466, %v4954, 0.0
    %4958 = vadd.xlane.f32.xlu0 %v4957
    %v4959 = vpop.xlane.xlu0 %4958
    %v4960 = vsel %vm466, %v4956, 0.0
    %4961 = vadd.xlane.f32.xlu0 %v4960
    %v4962 = vpop.xlane.xlu0 %4961
    %v4963 = vrcp.pop %v4959
    %v4964 = vrcp.pop %v4962
    %v4965 = vmul.f32 %v4954, %v4963
    %v4966 = vmul.f32 %v4956, %v4964
    %v4968 = vsel %vm466, %v4965, 0
    %v4971 = vsel %vm466, %v4966, 0
    %4973 = vmatprep.subr.mxu0 0.0
    %4974 = vmatpush1.msra.mxu0 %v2303
    %4975 = vmatprep.subr.mxu0 0.0
    %4976 = vmatpush1.msra.mxu0 %v2305
    %4977 = vmatprep.subr.mxu0 0.0
    %4978 = vmatpush1.msra.mxu0 0.0
    %4979 = vmatprep.subr.mxu0 0.0
    %4980 = vmatpush1.msra.mxu0 0.0
    %4981 = vmatprep.subr.mxu0 0.0
    %4982 = vmatpush1.msra.mxu0 0.0
    %4983 = vmatprep.subr.mxu0 0.0
    %4984 = vmatpush1.msra.mxu0 0.0
    %4985 = vmatprep.subr.mxu0 0.0
    %4986 = vmatpush1.msra.mxu0 0.0
    %4987 = vmatprep.subr.mxu0 0.0
    %4988 = vmatpush1.msra.mxu0 0.0
    %4989 = vmatprep.subr.mxu0 0.0
    %4990 = vmatpush1.msra.mxu0 0.0
    %4991 = vmatprep.subr.mxu0 0.0
    %4992 = vmatpush1.msra.mxu0 0.0
    %4993 = vmatprep.subr.mxu0 0.0
    %4994 = vmatpush1.msra.mxu0 0.0
    %4995 = vmatprep.subr.mxu0 0.0
    %4996 = vmatpush1.msra.mxu0 0.0
    %4997 = vmatprep.subr.mxu0 0.0
    %4998 = vmatpush1.msra.mxu0 0.0
    %4999 = vmatprep.subr.mxu0 0.0
    %5000 = vmatpush1.msra.mxu0 0.0
    %5001 = vmatprep.subr.mxu0 0.0
    %5002 = vmatpush1.msra.mxu0 0.0
    %5003 = vmatprep.subr.mxu0 0.0
    %5004 = vmatpush1.msra.mxu0 0.0
    %5005 = vmatprep.subr.mxu0 0.0
    %5006 = vmatpush1.msra.mxu0 0.0
    %5007 = vmatprep.subr.mxu0 0.0
    %5008 = vmatpush1.msra.mxu0 0.0
    %5009 = vmatprep.subr.mxu0 0.0
    %5010 = vmatpush1.msra.mxu0 0.0
    %5011 = vmatprep.subr.mxu0 0.0
    %5012 = vmatpush1.msra.mxu0 0.0
    %5013 = vmatprep.subr.mxu0 0.0
    %5014 = vmatpush1.msra.mxu0 0.0
    %5015 = vmatprep.subr.mxu0 0.0
    %5016 = vmatpush1.msra.mxu0 0.0
    %5017 = vmatprep.subr.mxu0 0.0
    %5018 = vmatpush1.msra.mxu0 0.0
    %5019 = vmatprep.subr.mxu0 0.0
    %5020 = vmatpush1.msra.mxu0 0.0
    %5021 = vmatprep.subr.mxu0 0.0
    %5022 = vmatpush1.msra.mxu0 0.0
    %5023 = vmatprep.subr.mxu0 0.0
    %5024 = vmatpush1.msra.mxu0 0.0
    %5025 = vmatprep.subr.mxu0 0.0
    %5026 = vmatpush1.msra.mxu0 0.0
    %5027 = vmatprep.subr.mxu0 0.0
    %5028 = vmatpush1.msra.mxu0 0.0
    %5029 = vmatprep.subr.mxu0 0.0
    %5030 = vmatpush1.msra.mxu0 0.0
    %5031 = vmatprep.subr.mxu0 0.0
    %5032 = vmatpush1.msra.mxu0 0.0
    %5033 = vmatprep.subr.mxu0 0.0
    %5034 = vmatpush1.msra.mxu0 0.0
    %5035 = vmatprep.subr.mxu0 0.0
    %5036 = vmatpush1.msra.mxu0 0.0
    %5037 = vmatprep.mubr.f32.mxu0 0.0
    %5038 = vmatmul.mubr.f32.gmra.mrb[0].mxu0 %v4968
    %v5039 = vpop.f32.mrb[0].mxu0
    %v5040 = vadd.f32 0.0, %v5039
    %v5041 = vpop.f32.mrb[0].mxu0
    %5042 = vmatprep.mubr.f32.mxu0 0.0
    %5043 = vmatmul.mubr.f32.gmra.mrb[0].mxu0 %v4971
    %v5044 = vpop.f32.mrb[0].mxu0
    %v5045 = vadd.f32 0.0, %v5044
    %v5046 = vpop.f32.mrb[0].mxu0
    %5047 = vdwg.mxu0
    %v5049 = vsel %vm382, %v5040, 0
    %v5052 = vsel %vm382, %v5045, 0
    %5054 = vmatprep.subr.mxu0 0.0
    %5055 = vmatpush1.msra.mxu0 %v129
    %5056 = vmatprep.subr.mxu0 0.0
    %5057 = vmatpush1.msra.mxu0 0.0
    %5058 = vmatprep.subr.mxu0 0.0
    %5059 = vmatpush1.msra.mxu0 0.0
    %5060 = vmatprep.subr.mxu0 0.0
    %5061 = vmatpush1.msra.mxu0 0.0
    %5062 = vmatprep.subr.mxu0 0.0
    %5063 = vmatpush1.msra.mxu0 0.0
    %5064 = vmatprep.subr.mxu0 0.0
    %5065 = vmatpush1.msra.mxu0 0.0
    %5066 = vmatprep.subr.mxu0 0.0
    %5067 = vmatpush1.msra.mxu0 0.0
    %5068 = vmatprep.subr.mxu0 0.0
    %5069 = vmatpush1.msra.mxu0 0.0
    %5070 = vmatprep.subr.mxu0 0.0
    %5071 = vmatpush1.msra.mxu0 0.0
    %5072 = vmatprep.subr.mxu0 0.0
    %5073 = vmatpush1.msra.mxu0 0.0
    %5074 = vmatprep.subr.mxu0 0.0
    %5075 = vmatpush1.msra.mxu0 0.0
    %5076 = vmatprep.subr.mxu0 0.0
    %5077 = vmatpush1.msra.mxu0 0.0
    %5078 = vmatprep.subr.mxu0 0.0
    %5079 = vmatpush1.msra.mxu0 0.0
    %5080 = vmatprep.subr.mxu0 0.0
    %5081 = vmatpush1.msra.mxu0 0.0
    %5082 = vmatprep.subr.mxu0 0.0
    %5083 = vmatpush1.msra.mxu0 0.0
    %5084 = vmatprep.subr.mxu0 0.0
    %5085 = vmatpush1.msra.mxu0 0.0
    %5086 = vmatprep.subr.mxu0 0.0
    %5087 = vmatpush1.msra.mxu0 0.0
    %5088 = vmatprep.subr.mxu0 0.0
    %5089 = vmatpush1.msra.mxu0 0.0
    %5090 = vmatprep.subr.mxu0 0.0
    %5091 = vmatpush1.msra.mxu0 0.0
    %5092 = vmatprep.subr.mxu0 0.0
    %5093 = vmatpush1.msra.mxu0 0.0
    %5094 = vmatprep.subr.mxu0 0.0
    %5095 = vmatpush1.msra.mxu0 0.0
    %5096 = vmatprep.subr.mxu0 0.0
    %5097 = vmatpush1.msra.mxu0 0.0
    %5098 = vmatprep.subr.mxu0 0.0
    %5099 = vmatpush1.msra.mxu0 0.0
    %5100 = vmatprep.subr.mxu0 0.0
    %5101 = vmatpush1.msra.mxu0 0.0
    %5102 = vmatprep.subr.mxu0 0.0
    %5103 = vmatpush1.msra.mxu0 0.0
    %5104 = vmatprep.subr.mxu0 0.0
    %5105 = vmatpush1.msra.mxu0 0.0
    %5106 = vmatprep.subr.mxu0 0.0
    %5107 = vmatpush1.msra.mxu0 0.0
    %5108 = vmatprep.subr.mxu0 0.0
    %5109 = vmatpush1.msra.mxu0 0.0
    %5110 = vmatprep.subr.mxu0 0.0
    %5111 = vmatpush1.msra.mxu0 0.0
    %5112 = vmatprep.subr.mxu0 0.0
    %5113 = vmatpush1.msra.mxu0 0.0
    %5114 = vmatprep.subr.mxu0 0.0
    %5115 = vmatpush1.msra.mxu0 0.0
    %5116 = vmatprep.subr.mxu0 0.0
    %5117 = vmatpush1.msra.mxu0 0.0
    %5118 = vmatprep.mubr.f32.mxu0 0.0
    %5119 = vmatmul.mubr.f32.gmra.mrb[0].mxu0 %v5049
    %v5120 = vpop.f32.mrb[0].mxu0
    %v5121 = vadd.f32 0.0, %v5120
    %v5122 = vpop.f32.mrb[0].mxu0
    %5123 = vmatprep.mubr.f32.mxu0 0.0
    %5124 = vmatmul.mubr.f32.gmra.mrb[0].mxu0 %v5052
    %v5125 = vpop.f32.mrb[0].mxu0
    %v5126 = vadd.f32 0.0, %v5125
    %v5127 = vpop.f32.mrb[0].mxu0
    %5128 = vdwg.mxu0
    %v5129 = vadd.f32 %v4854, %v5121
    %v5130 = vadd.f32 %v4859, %v5126
    %5131 = vrot.lane.b32.xlu0 %v4322, 104
    %v5132 = vpop.permute.xlu0 %5131
    %5133 = vrot.lane.b32.xlu0 %v4327, 104
    %v5134 = vpop.permute.xlu0 %5133
    %v5135 = vsel %vm382, %v5132, 0
    %v5137 = vsel %vm382, %v5134, 0
    %5139 = vmatprep.subr.mxu0 0.0
    %5140 = vmatpush1.xpose.msra.mxu0 %v2484
    %5141 = vmatprep.subr.mxu0 0.0
    %5142 = vmatpush1.xpose.msra.mxu0 %v2486
    %5143 = vmatprep.subr.mxu0 0.0
    %5144 = vmatpush1.xpose.msra.mxu0 0.0
    %5145 = vmatprep.subr.mxu0 0.0
    %5146 = vmatpush1.xpose.msra.mxu0 0.0
    %5147 = vmatprep.subr.mxu0 0.0
    %5148 = vmatpush1.xpose.msra.mxu0 0.0
    %5149 = vmatprep.subr.mxu0 0.0
    %5150 = vmatpush1.xpose.msra.mxu0 0.0
    %5151 = vmatprep.subr.mxu0 0.0
    %5152 = vmatpush1.xpose.msra.mxu0 0.0
    %5153 = vmatprep.subr.mxu0 0.0
    %5154 = vmatpush1.xpose.msra.mxu0 0.0
    %5155 = vmatprep.subr.mxu0 0.0
    %5156 = vmatpush1.xpose.msra.mxu0 0.0
    %5157 = vmatprep.subr.mxu0 0.0
    %5158 = vmatpush1.xpose.msra.mxu0 0.0
    %5159 = vmatprep.subr.mxu0 0.0
    %5160 = vmatpush1.xpose.msra.mxu0 0.0
    %5161 = vmatprep.subr.mxu0 0.0
    %5162 = vmatpush1.xpose.msra.mxu0 0.0
    %5163 = vmatprep.subr.mxu0 0.0
    %5164 = vmatpush1.xpose.msra.mxu0 0.0
    %5165 = vmatprep.subr.mxu0 0.0
    %5166 = vmatpush1.xpose.msra.mxu0 0.0
    %5167 = vmatprep.subr.mxu0 0.0
    %5168 = vmatpush1.xpose.msra.mxu0 0.0
    %5169 = vmatprep.subr.mxu0 0.0
    %5170 = vmatpush1.xpose.msra.mxu0 0.0
    %5171 = vmatprep.subr.mxu0 0.0
    %5172 = vmatpush1.xpose.msra.mxu0 0.0
    %5173 = vmatprep.subr.mxu0 0.0
    %5174 = vmatpush1.xpose.msra.mxu0 0.0
    %5175 = vmatprep.subr.mxu0 0.0
    %5176 = vmatpush1.xpose.msra.mxu0 0.0
    %5177 = vmatprep.subr.mxu0 0.0
    %5178 = vmatpush1.xpose.msra.mxu0 0.0
    %5179 = vmatprep.subr.mxu0 0.0
    %5180 = vmatpush1.xpose.msra.mxu0 0.0
    %5181 = vmatprep.subr.mxu0 0.0
    %5182 = vmatpush1.xpose.msra.mxu0 0.0
    %5183 = vmatprep.subr.mxu0 0.0
    %5184 = vmatpush1.xpose.msra.mxu0 0.0
    %5185 = vmatprep.subr.mxu0 0.0
    %5186 = vmatpush1.xpose.msra.mxu0 0.0
    %5187 = vmatprep.subr.mxu0 0.0
    %5188 = vmatpush1.xpose.msra.mxu0 0.0
    %5189 = vmatprep.subr.mxu0 0.0
    %5190 = vmatpush1.xpose.msra.mxu0 0.0
    %5191 = vmatprep.subr.mxu0 0.0
    %5192 = vmatpush1.xpose.msra.mxu0 0.0
    %5193 = vmatprep.subr.mxu0 0.0
    %5194 = vmatpush1.xpose.msra.mxu0 0.0
    %5195 = vmatprep.subr.mxu0 0.0
    %5196 = vmatpush1.xpose.msra.mxu0 0.0
    %5197 = vmatprep.subr.mxu0 0.0
    %5198 = vmatpush1.xpose.msra.mxu0 0.0
    %5199 = vmatprep.subr.mxu0 0.0
    %5200 = vmatpush1.xpose.msra.mxu0 0.0
    %5201 = vmatprep.subr.mxu0 0.0
    %5202 = vmatpush1.xpose.msra.mxu0 0.0
    %5203 = vmatprep.mubr.f32.mxu0 0.0
    %5204 = vmatmul.mubr.f32.gmra.mrb[0].mxu0 %v5135
    %v5205 = vpop.f32.mrb[0].mxu0
    %v5206 = vadd.f32 %v113, %v5205
    %v5207 = vpop.f32.mrb[0].mxu0
    %5208 = vmatprep.mubr.f32.mxu0 0.0
    %5209 = vmatmul.mubr.f32.gmra.mrb[0].mxu0 %v5137
    %v5210 = vpop.f32.mrb[0].mxu0
    %v5211 = vadd.f32 %v114, %v5210
    %v5212 = vpop.f32.mrb[0].mxu0
    %5213 = vdwg.mxu0
    %v5214 = vsel %vm466, %v5206, -inf
    %5215 = vmax.xlane.f32.xlu0 %v5214
    %v5216 = vpop.xlane.xlu0 %5215
    %v5217 = vsel %vm466, %v5211, -inf
    %5218 = vmax.xlane.f32.xlu0 %v5217
    %v5219 = vpop.xlane.xlu0 %5218
    %v5220 = vsub.f32 %v5206, %v5216
    %v5221 = vsub.f32 %v5211, %v5219
    %v5222 = vmul.f32 %v5220, 1.442695
    %v5223 = vpow.pop %v5222
    %v5224 = vmul.f32 %v5221, 1.442695
    %v5225 = vpow.pop %v5224
    %v5226 = vsel %vm466, %v5223, 0.0
    %5227 = vadd.xlane.f32.xlu0 %v5226
    %v5228 = vpop.xlane.xlu0 %5227
    %v5229 = vsel %vm466, %v5225, 0.0
    %5230 = vadd.xlane.f32.xlu0 %v5229
    %v5231 = vpop.xlane.xlu0 %5230
    %v5232 = vrcp.pop %v5228
    %v5233 = vrcp.pop %v5231
    %v5234 = vmul.f32 %v5223, %v5232
    %v5235 = vmul.f32 %v5225, %v5233
    %v5237 = vsel %vm466, %v5234, 0
    %v5240 = vsel %vm466, %v5235, 0
    %5242 = vmatprep.subr.mxu0 0.0
    %5243 = vmatpush1.msra.mxu0 %v2586
    %5244 = vmatprep.subr.mxu0 0.0
    %5245 = vmatpush1.msra.mxu0 %v2588
    %5246 = vmatprep.subr.mxu0 0.0
    %5247 = vmatpush1.msra.mxu0 0.0
    %5248 = vmatprep.subr.mxu0 0.0
    %5249 = vmatpush1.msra.mxu0 0.0
    %5250 = vmatprep.subr.mxu0 0.0
    %5251 = vmatpush1.msra.mxu0 0.0
    %5252 = vmatprep.subr.mxu0 0.0
    %5253 = vmatpush1.msra.mxu0 0.0
    %5254 = vmatprep.subr.mxu0 0.0
    %5255 = vmatpush1.msra.mxu0 0.0
    %5256 = vmatprep.subr.mxu0 0.0
    %5257 = vmatpush1.msra.mxu0 0.0
    %5258 = vmatprep.subr.mxu0 0.0
    %5259 = vmatpush1.msra.mxu0 0.0
    %5260 = vmatprep.subr.mxu0 0.0
    %5261 = vmatpush1.msra.mxu0 0.0
    %5262 = vmatprep.subr.mxu0 0.0
    %5263 = vmatpush1.msra.mxu0 0.0
    %5264 = vmatprep.subr.mxu0 0.0
    %5265 = vmatpush1.msra.mxu0 0.0
    %5266 = vmatprep.subr.mxu0 0.0
    %5267 = vmatpush1.msra.mxu0 0.0
    %5268 = vmatprep.subr.mxu0 0.0
    %5269 = vmatpush1.msra.mxu0 0.0
    %5270 = vmatprep.subr.mxu0 0.0
    %5271 = vmatpush1.msra.mxu0 0.0
    %5272 = vmatprep.subr.mxu0 0.0
    %5273 = vmatpush1.msra.mxu0 0.0
    %5274 = vmatprep.subr.mxu0 0.0
    %5275 = vmatpush1.msra.mxu0 0.0
    %5276 = vmatprep.subr.mxu0 0.0
    %5277 = vmatpush1.msra.mxu0 0.0
    %5278 = vmatprep.subr.mxu0 0.0
    %5279 = vmatpush1.msra.mxu0 0.0
    %5280 = vmatprep.subr.mxu0 0.0
    %5281 = vmatpush1.msra.mxu0 0.0
    %5282 = vmatprep.subr.mxu0 0.0
    %5283 = vmatpush1.msra.mxu0 0.0
    %5284 = vmatprep.subr.mxu0 0.0
    %5285 = vmatpush1.msra.mxu0 0.0
    %5286 = vmatprep.subr.mxu0 0.0
    %5287 = vmatpush1.msra.mxu0 0.0
    %5288 = vmatprep.subr.mxu0 0.0
    %5289 = vmatpush1.msra.mxu0 0.0
    %5290 = vmatprep.subr.mxu0 0.0
    %5291 = vmatpush1.msra.mxu0 0.0
    %5292 = vmatprep.subr.mxu0 0.0
    %5293 = vmatpush1.msra.mxu0 0.0
    %5294 = vmatprep.subr.mxu0 0.0
    %5295 = vmatpush1.msra.mxu0 0.0
    %5296 = vmatprep.subr.mxu0 0.0
    %5297 = vmatpush1.msra.mxu0 0.0
    %5298 = vmatprep.subr.mxu0 0.0
    %5299 = vmatpush1.msra.mxu0 0.0
    %5300 = vmatprep.subr.mxu0 0.0
    %5301 = vmatpush1.msra.mxu0 0.0
    %5302 = vmatprep.subr.mxu0 0.0
    %5303 = vmatpush1.msra.mxu0 0.0
    %5304 = vmatprep.subr.mxu0 0.0
    %5305 = vmatpush1.msra.mxu0 0.0
    %5306 = vmatprep.mubr.f32.mxu0 0.0
    %5307 = vmatmul.mubr.f32.gmra.mrb[0].mxu0 %v5237
    %v5308 = vpop.f32.mrb[0].mxu0
    %v5309 = vadd.f32 0.0, %v5308
    %v5310 = vpop.f32.mrb[0].mxu0
    %5311 = vmatprep.mubr.f32.mxu0 0.0
    %5312 = vmatmul.mubr.f32.gmra.mrb[0].mxu0 %v5240
    %v5313 = vpop.f32.mrb[0].mxu0
    %v5314 = vadd.f32 0.0, %v5313
    %v5315 = vpop.f32.mrb[0].mxu0
    %5316 = vdwg.mxu0
    %v5318 = vsel %vm382, %v5309, 0
    %v5321 = vsel %vm382, %v5314, 0
    %5323 = vmatprep.subr.mxu0 0.0
    %5324 = vmatpush1.msra.mxu0 %v130
    %5325 = vmatprep.subr.mxu0 0.0
    %5326 = vmatpush1.msra.mxu0 0.0
    %5327 = vmatprep.subr.mxu0 0.0
    %5328 = vmatpush1.msra.mxu0 0.0
    %5329 = vmatprep.subr.mxu0 0.0
    %5330 = vmatpush1.msra.mxu0 0.0
    %5331 = vmatprep.subr.mxu0 0.0
    %5332 = vmatpush1.msra.mxu0 0.0
    %5333 = vmatprep.subr.mxu0 0.0
    %5334 = vmatpush1.msra.mxu0 0.0
    %5335 = vmatprep.subr.mxu0 0.0
    %5336 = vmatpush1.msra.mxu0 0.0
    %5337 = vmatprep.subr.mxu0 0.0
    %5338 = vmatpush1.msra.mxu0 0.0
    %5339 = vmatprep.subr.mxu0 0.0
    %5340 = vmatpush1.msra.mxu0 0.0
    %5341 = vmatprep.subr.mxu0 0.0
    %5342 = vmatpush1.msra.mxu0 0.0
    %5343 = vmatprep.subr.mxu0 0.0
    %5344 = vmatpush1.msra.mxu0 0.0
    %5345 = vmatprep.subr.mxu0 0.0
    %5346 = vmatpush1.msra.mxu0 0.0
    %5347 = vmatprep.subr.mxu0 0.0
    %5348 = vmatpush1.msra.mxu0 0.0
    %5349 = vmatprep.subr.mxu0 0.0
    %5350 = vmatpush1.msra.mxu0 0.0
    %5351 = vmatprep.subr.mxu0 0.0
    %5352 = vmatpush1.msra.mxu0 0.0
    %5353 = vmatprep.subr.mxu0 0.0
    %5354 = vmatpush1.msra.mxu0 0.0
    %5355 = vmatprep.subr.mxu0 0.0
    %5356 = vmatpush1.msra.mxu0 0.0
    %5357 = vmatprep.subr.mxu0 0.0
    %5358 = vmatpush1.msra.mxu0 0.0
    %5359 = vmatprep.subr.mxu0 0.0
    %5360 = vmatpush1.msra.mxu0 0.0
    %5361 = vmatprep.subr.mxu0 0.0
    %5362 = vmatpush1.msra.mxu0 0.0
    %5363 = vmatprep.subr.mxu0 0.0
    %5364 = vmatpush1.msra.mxu0 0.0
    %5365 = vmatprep.subr.mxu0 0.0
    %5366 = vmatpush1.msra.mxu0 0.0
    %5367 = vmatprep.subr.mxu0 0.0
    %5368 = vmatpush1.msra.mxu0 0.0
    %5369 = vmatprep.subr.mxu0 0.0
    %5370 = vmatpush1.msra.mxu0 0.0
    %5371 = vmatprep.subr.mxu0 0.0
    %5372 = vmatpush1.msra.mxu0 0.0
    %5373 = vmatprep.subr.mxu0 0.0
    %5374 = vmatpush1.msra.mxu0 0.0
    %5375 = vmatprep.subr.mxu0 0.0
    %5376 = vmatpush1.msra.mxu0 0.0
    %5377 = vmatprep.subr.mxu0 0.0
    %5378 = vmatpush1.msra.mxu0 0.0
    %5379 = vmatprep.subr.mxu0 0.0
    %5380 = vmatpush1.msra.mxu0 0.0
    %5381 = vmatprep.subr.mxu0 0.0
    %5382 = vmatpush1.msra.mxu0 0.0
    %5383 = vmatprep.subr.mxu0 0.0
    %5384 = vmatpush1.msra.mxu0 0.0
    %5385 = vmatprep.subr.mxu0 0.0
    %5386 = vmatpush1.msra.mxu0 0.0
    %5387 = vmatprep.mubr.f32.mxu0 0.0
    %5388 = vmatmul.mubr.f32.gmra.mrb[0].mxu0 %v5318
    %v5389 = vpop.f32.mrb[0].mxu0
    %v5390 = vadd.f32 0.0, %v5389
    %v5391 = vpop.f32.mrb[0].mxu0
    %5392 = vmatprep.mubr.f32.mxu0 0.0
    %5393 = vmatmul.mubr.f32.gmra.mrb[0].mxu0 %v5321
    %v5394 = vpop.f32.mrb[0].mxu0
    %v5395 = vadd.f32 0.0, %v5394
    %v5396 = vpop.f32.mrb[0].mxu0
    %5397 = vdwg.mxu0
    %v5398 = vadd.f32 %v5129, %v5390
    %v5399 = vadd.f32 %v5130, %v5395
    %v5400 = vadd.f32 %v4217, %v5398
    %v5401 = vadd.f32 %v4218, %v5399
    %v5402 = vadd.f32 %v5400, %v2758
    %v5403 = vadd.f32 %v5401, %v2758
    %v5404 = vsel %vm170, %v5402, 0.0
    %5405 = vadd.xlane.f32.xlu0 %v5404
    %v5406 = vpop.xlane.xlu0 %5405
    %v5407 = vsel %vm170, %v5403, 0.0
    %5408 = vadd.xlane.f32.xlu0 %v5407
    %v5409 = vpop.xlane.xlu0 %5408
    %v5410 = vmul.f32 %v5406, %v258
    %v5411 = vmul.f32 %v5409, %v258
    %v5412 = vsub.f32 %v5402, %v5410
    %v5413 = vsub.f32 %v5403, %v5411
    %v5414 = vmul.f32 %v5412, %v5412
    %v5415 = vmul.f32 %v5413, %v5413
    %v5416 = vsel %vm170, %v5414, 0.0
    %5417 = vadd.xlane.f32.xlu0 %v5416
    %v5418 = vpop.xlane.xlu0 %5417
    %v5419 = vsel %vm170, %v5415, 0.0
    %5420 = vadd.xlane.f32.xlu0 %v5419
    %v5421 = vpop.xlane.xlu0 %5420
    %v5422 = vmul.f32 %v5418, %v258
    %v5423 = vmul.f32 %v5421, %v258
    %v5424 = vadd.f32 %v5422, 1e-05
    %v5425 = vadd.f32 %v5423, 1e-05
    %v5426 = vrsqrt.pop %v5424
    %v5427 = vrsqrt.pop %v5425
    %v5428 = vmul.f32 %v5412, %v5426
    %v5429 = vmul.f32 %v5413, %v5427
    %v5430 = vmul.f32 %v5428, %v2791
    %v5431 = vmul.f32 %v5429, %v2791
    %v5432 = vadd.f32 %v5430, %v2797
    %v5433 = vadd.f32 %v5431, %v2797
    %v5435 = vsel %vm170, %v5432, 0
    %v5438 = vsel %vm170, %v5433, 0
    %5440 = vmatprep.subr.mxu0 0.0
    %5441 = vmatpush1.msra.mxu0 %v131
    %5442 = vmatprep.subr.mxu0 0.0
    %5443 = vmatpush1.msra.mxu0 %v132
    %5444 = vmatprep.subr.mxu0 0.0
    %5445 = vmatpush1.msra.mxu0 %v133
    %5446 = vmatprep.subr.mxu0 0.0
    %5447 = vmatpush1.msra.mxu0 %v134
    %5448 = vmatprep.subr.mxu0 0.0
    %5449 = vmatpush1.msra.mxu0 0.0
    %5450 = vmatprep.subr.mxu0 0.0
    %5451 = vmatpush1.msra.mxu0 0.0
    %5452 = vmatprep.subr.mxu0 0.0
    %5453 = vmatpush1.msra.mxu0 0.0
    %5454 = vmatprep.subr.mxu0 0.0
    %5455 = vmatpush1.msra.mxu0 0.0
    %5456 = vmatprep.subr.mxu0 0.0
    %5457 = vmatpush1.msra.mxu0 0.0
    %5458 = vmatprep.subr.mxu0 0.0
    %5459 = vmatpush1.msra.mxu0 0.0
    %5460 = vmatprep.subr.mxu0 0.0
    %5461 = vmatpush1.msra.mxu0 0.0
    %5462 = vmatprep.subr.mxu0 0.0
    %5463 = vmatpush1.msra.mxu0 0.0
    %5464 = vmatprep.subr.mxu0 0.0
    %5465 = vmatpush1.msra.mxu0 0.0
    %5466 = vmatprep.subr.mxu0 0.0
    %5467 = vmatpush1.msra.mxu0 0.0
    %5468 = vmatprep.subr.mxu0 0.0
    %5469 = vmatpush1.msra.mxu0 0.0
    %5470 = vmatprep.subr.mxu0 0.0
    %5471 = vmatpush1.msra.mxu0 0.0
    %5472 = vmatprep.subr.mxu0 0.0
    %5473 = vmatpush1.msra.mxu0 0.0
    %5474 = vmatprep.subr.mxu0 0.0
    %5475 = vmatpush1.msra.mxu0 0.0
    %5476 = vmatprep.subr.mxu0 0.0
    %5477 = vmatpush1.msra.mxu0 0.0
    %5478 = vmatprep.subr.mxu0 0.0
    %5479 = vmatpush1.msra.mxu0 0.0
    %5480 = vmatprep.subr.mxu0 0.0
    %5481 = vmatpush1.msra.mxu0 0.0
    %5482 = vmatprep.subr.mxu0 0.0
    %5483 = vmatpush1.msra.mxu0 0.0
    %5484 = vmatprep.subr.mxu0 0.0
    %5485 = vmatpush1.msra.mxu0 0.0
    %5486 = vmatprep.subr.mxu0 0.0
    %5487 = vmatpush1.msra.mxu0 0.0
    %5488 = vmatprep.subr.mxu0 0.0
    %5489 = vmatpush1.msra.mxu0 0.0
    %5490 = vmatprep.subr.mxu0 0.0
    %5491 = vmatpush1.msra.mxu0 0.0
    %5492 = vmatprep.subr.mxu0 0.0
    %5493 = vmatpush1.msra.mxu0 0.0
    %5494 = vmatprep.subr.mxu0 0.0
    %5495 = vmatpush1.msra.mxu0 0.0
    %5496 = vmatprep.subr.mxu0 0.0
    %5497 = vmatpush1.msra.mxu0 0.0
    %5498 = vmatprep.subr.mxu0 0.0
    %5499 = vmatpush1.msra.mxu0 0.0
    %5500 = vmatprep.subr.mxu0 0.0
    %5501 = vmatpush1.msra.mxu0 0.0
    %5502 = vmatprep.subr.mxu0 0.0
    %5503 = vmatpush1.msra.mxu0 0.0
    %5504 = vmatprep.mubr.f32.mxu0 0.0
    %5505 = vmatmul.mubr.f32.gmra.mrb[0].mxu0 %v5435
    %v5506 = vpop.f32.mrb[0].mxu0
    %v5507 = vadd.f32 %v2804, %v5506
    %v5508 = vpop.f32.mrb[0].mxu0
    %5509 = vmatprep.mubr.f32.mxu0 0.0
    %5510 = vmatmul.mubr.f32.gmra.mrb[0].mxu0 %v5438
    %v5511 = vpop.f32.mrb[0].mxu0
    %v5512 = vadd.f32 %v2804, %v5511
    %v5513 = vpop.f32.mrb[0].mxu0
    %5514 = vdwg.mxu0
    %v5515 = vmax.f32 %v5507, 0.0
    %v5516 = vmax.f32 %v5512, 0.0
    %v5518 = vsel %vm2889, %v5515, 0
    %v5521 = vsel %vm2889, %v5516, 0
    %5523 = vmatprep.subr.mxu0 0.0
    %5524 = vmatpush1.msra.mxu0 %v135
    %5525 = vmatprep.subr.mxu0 0.0
    %5526 = vmatpush1.msra.mxu0 %v136
    %5527 = vmatprep.subr.mxu0 0.0
    %5528 = vmatpush1.msra.mxu0 %v137
    %5529 = vmatprep.subr.mxu0 0.0
    %5530 = vmatpush1.msra.mxu0 %v138
    %5531 = vmatprep.subr.mxu0 0.0
    %5532 = vmatpush1.msra.mxu0 %v139
    %5533 = vmatprep.subr.mxu0 0.0
    %5534 = vmatpush1.msra.mxu0 %v140
    %5535 = vmatprep.subr.mxu0 0.0
    %5536 = vmatpush1.msra.mxu0 %v141
    %5537 = vmatprep.subr.mxu0 0.0
    %5538 = vmatpush1.msra.mxu0 %v142
    %5539 = vmatprep.subr.mxu0 0.0
    %5540 = vmatpush1.msra.mxu0 0.0
    %5541 = vmatprep.subr.mxu0 0.0
    %5542 = vmatpush1.msra.mxu0 0.0
    %5543 = vmatprep.subr.mxu0 0.0
    %5544 = vmatpush1.msra.mxu0 0.0
    %5545 = vmatprep.subr.mxu0 0.0
    %5546 = vmatpush1.msra.mxu0 0.0
    %5547 = vmatprep.subr.mxu0 0.0
    %5548 = vmatpush1.msra.mxu0 0.0
    %5549 = vmatprep.subr.mxu0 0.0
    %5550 = vmatpush1.msra.mxu0 0.0
    %5551 = vmatprep.subr.mxu0 0.0
    %5552 = vmatpush1.msra.mxu0 0.0
    %5553 = vmatprep.subr.mxu0 0.0
    %5554 = vmatpush1.msra.mxu0 0.0
    %5555 = vmatprep.subr.mxu0 0.0
    %5556 = vmatpush1.msra.mxu0 0.0
    %5557 = vmatprep.subr.mxu0 0.0
    %5558 = vmatpush1.msra.mxu0 0.0
    %5559 = vmatprep.subr.mxu0 0.0
    %5560 = vmatpush1.msra.mxu0 0.0
    %5561 = vmatprep.subr.mxu0 0.0
    %5562 = vmatpush1.msra.mxu0 0.0
    %5563 = vmatprep.subr.mxu0 0.0
    %5564 = vmatpush1.msra.mxu0 0.0
    %5565 = vmatprep.subr.mxu0 0.0
    %5566 = vmatpush1.msra.mxu0 0.0
    %5567 = vmatprep.subr.mxu0 0.0
    %5568 = vmatpush1.msra.mxu0 0.0
    %5569 = vmatprep.subr.mxu0 0.0
    %5570 = vmatpush1.msra.mxu0 0.0
    %5571 = vmatprep.subr.mxu0 0.0
    %5572 = vmatpush1.msra.mxu0 0.0
    %5573 = vmatprep.subr.mxu0 0.0
    %5574 = vmatpush1.msra.mxu0 0.0
    %5575 = vmatprep.subr.mxu0 0.0
    %5576 = vmatpush1.msra.mxu0 0.0
    %5577 = vmatprep.subr.mxu0 0.0
    %5578 = vmatpush1.msra.mxu0 0.0
    %5579 = vmatprep.subr.mxu0 0.0
    %5580 = vmatpush1.msra.mxu0 0.0
    %5581 = vmatprep.subr.mxu0 0.0
    %5582 = vmatpush1.msra.mxu0 0.0
    %5583 = vmatprep.subr.mxu0 0.0
    %5584 = vmatpush1.msra.mxu0 0.0
    %5585 = vmatprep.subr.mxu0 0.0
    %5586 = vmatpush1.msra.mxu0 0.0
    %5587 = vmatprep.mubr.f32.mxu0 0.0
    %5588 = vmatmul.mubr.f32.gmra.mrb[0].mxu0 %v5518
    %v5589 = vpop.f32.mrb[0].mxu0
    %v5590 = vadd.f32 0.0, %v5589
    %v5591 = vpop.f32.mrb[0].mxu0
    %5592 = vmatprep.mubr.f32.mxu0 0.0
    %5593 = vmatmul.mubr.f32.gmra.mrb[0].mxu0 %v5521
    %v5594 = vpop.f32.mrb[0].mxu0
    %v5595 = vadd.f32 0.0, %v5594
    %v5596 = vpop.f32.mrb[0].mxu0
    %5597 = vdwg.mxu0
    %v5598 = vadd.f32 %v5402, %v5590
    %v5599 = vadd.f32 %v5403, %v5595
    %v5600 = vadd.f32 %v5598, %v2974
    %v5601 = vadd.f32 %v5599, %v2974
    %v5602 = vsel %vm170, %v5600, 0.0
    %5603 = vadd.xlane.f32.xlu0 %v5602
    %v5604 = vpop.xlane.xlu0 %5603
    %v5605 = vsel %vm170, %v5601, 0.0
    %5606 = vadd.xlane.f32.xlu0 %v5605
    %v5607 = vpop.xlane.xlu0 %5606
    %v5608 = vmul.f32 %v5604, %v258
    %v5609 = vmul.f32 %v5607, %v258
    %v5610 = vsub.f32 %v5600, %v5608
    %v5611 = vsub.f32 %v5601, %v5609
    %v5612 = vmul.f32 %v5610, %v5610
    %v5613 = vmul.f32 %v5611, %v5611
    %v5614 = vsel %vm170, %v5612, 0.0
    %5615 = vadd.xlane.f32.xlu0 %v5614
    %v5616 = vpop.xlane.xlu0 %5615
    %v5617 = vsel %vm170, %v5613, 0.0
    %5618 = vadd.xlane.f32.xlu0 %v5617
    %v5619 = vpop.xlane.xlu0 %5618
    %v5620 = vmul.f32 %v5616, %v258
    %v5621 = vmul.f32 %v5619, %v258
    %v5622 = vadd.f32 %v5620, 1e-05
    %v5623 = vadd.f32 %v5621, 1e-05
    %v5624 = vrsqrt.pop %v5622
    %v5625 = vrsqrt.pop %v5623
    %v5626 = vmul.f32 %v5610, %v5624
    %v5627 = vmul.f32 %v5611, %v5625
    %v5628 = vlaneseq
    %v5629 = vshrl.u32 %v5628, 7
    %v5630 = vsub.s32 3, %v5629
    %v5631 = vrot.slane %v145, %v5630
    %v5632 = vmul.f32 %v5626, %v5631
    %v5633 = vmul.f32 %v5627, %v5631
    %v5634 = vlaneseq
    %v5635 = vshrl.u32 %v5634, 7
    %v5636 = vsub.s32 7, %v5635
    %v5637 = vrot.slane %v145, %v5636
    %v5638 = vadd.f32 %v5632, %v5637
    %v5639 = vadd.f32 %v5633, %v5637
    %5640 = vst.msk [vmem:[#allocation11] sm:$0xff] %vm170, %v5638
    %5641 = vst.msk [vmem:[#allocation11 + $0x8] sm:$0xff] %vm170, %v5639
    // Predicated region
    $region66: #{tpu_custom_call.1} parent=1 // pred_check
      _
    $region67: #{tpu_custom_call.1} parent=1 // pred_check_branch
      %5643 = sbr.rel (0) target = $region69
    $region68: #{tpu_custom_call.1} parent=1 // pred_region
      %s5645 = ssub.s32 256, 256
      %5646 = vsyncadd [#allocation4], %s5645
      %s5647 = sshll.u32 [#allocation11], 4
      %s5648 = int_to_ptr.vmem [resolvable:$true] %s5647
      %5653 = dma.vmem_to_hbm [thread:$0]  %s5648, 256, %s11, [#allocation4], 128, 128, 8
    $region69: #{tpu_custom_call.1} parent=1 // pred_fallthru
      _
    // Predicated region
    $region70: #{tpu_custom_call.1} parent=1 // pred_check
      _
    $region71: #{tpu_custom_call.1} parent=1 // pred_check_branch
      %5655 = sbr.rel (0) target = $region73
    $region72: #{tpu_custom_call.1} parent=1 // pred_region
      %5656 = dma.done [#allocation4], 256
    $region73: #{tpu_custom_call.1} parent=1 // pred_fallthru
      _
    %5657 = vsyncpa [#allocation3], 1
    %5658 = vsyncpa [#allocation6], 1
    %5659 = vsyncpa [#allocation9], 1
    %5660 = vsyncpa [#allocation4], 1

</llo_original>
